<compile_context>
chip_gen: v6e
topology: v6e:2x2x1
jax: 0.10.0
libtpu: 0.0.40
codegen_flags: <defaults>
</compile_context>

<pallas_src>
import functools

import numpy as np
import jax
import jax.numpy as jnp
from jax import lax
from jax.experimental import pallas as pl
from jax.experimental.pallas import tpu as pltpu

CP = 128            # conv channel padding (lane width)
GAMMA_LANES = 128   # lane-dense gamma writeback width


def _round_up(x, m):
    return ((x + m - 1) // m) * m


# ----------------------------------------------------------------------------
# Kernel 1: fused 3x3 conv (pad=1, stride=1) + bias + ReLU + 2x2/2 max-pool
# on flat, halo-padded activations.
# ----------------------------------------------------------------------------
def _conv3x3_relu_pool_kernel(xf_ref, w_ref, b_ref, sel_ref, o_ref, *, H, W):
    # xf_ref : (1, (H+2)*(W+2), CP) bf16   flat spatially padded input image
    # w_ref  : (9, CP, CP)          bf16   conv taps [kh*3+kw, cin, cout]
    # b_ref  : (1, CP)              f32
    # sel_ref: (2, P_out, Lv)       bf16   even/odd width-pool one-hot scatter
    # o_ref  : (1, P_out, CP)       bf16   pooled output (flat, halo included
    #                                      when this is not the last layer)
    Wp = W + 2
    L = H * Wp - 2          # conv-accumulator rows (flat, incl. gutter cols)
    Lv = L - Wp             # rows after the vertical (row-pair) max

    # Whole-image conv: 9 tap matmuls with a full-height LHS.  Output pixel
    # (i, j) lives at flat accumulator row i*Wp + j; gutter rows are garbage
    # and are never selected by the pooling scatter below.
    acc = jnp.zeros((L, CP), jnp.float32)
    for kh in range(3):
        for kw in range(3):
            s = kh * Wp + kw
            a = xf_ref[0, s:s + L, :]                       # (L, CP) bf16
            acc = acc + jnp.dot(a, w_ref[kh * 3 + kw],
                                preferred_element_type=jnp.float32)

    y = jnp.maximum(acc + b_ref[...], 0.0)                  # bias + ReLU

    # 2x1 vertical max on the VPU: rows m and m + Wp are vertically adjacent.
    yv = jnp.maximum(y[:Lv, :], y[Wp:, :]).astype(jnp.bfloat16)   # (Lv, CP)

    # 1x2 horizontal max + scatter into the next layer's flat padded layout:
    # one batched even/odd one-hot selection matmul pair (exact, bf16 MXU).
    # Halo rows of sel are all-zero -> output halo is written as exact zeros.
    o_ref[0] = jnp.maximum(
        jnp.dot(sel_ref[0], yv, preferred_element_type=jnp.float32),
        jnp.dot(sel_ref[1], yv, preferred_element_type=jnp.float32),
    ).astype(o_ref.dtype)


def conv3x3_relu_pool(yf, w_taps, b_pad, sel_eo, *, H, W, pad_out):
    """yf: (B, (H+2)*(W+2), CP) bf16 flat padded activations."""
    # TODO(synk): for real VGG spatial sizes (e.g. 224x224) tile the grid over
    # row groups as well as batch (2-row halo per tile) to stay inside VMEM.
    B, p_in, _ = yf.shape
    assert p_in == (H + 2) * (W + 2)
    Ho, Wo = H // 2, W // 2
    p_out = (Ho + 2) * (Wo + 2) if pad_out else Ho * Wo
    assert sel_eo.shape[1] == p_out
    kernel = functools.partial(_conv3x3_relu_pool_kernel, H=H, W=W)
    return pl.pallas_call(
        kernel,
        out_shape=jax.ShapeDtypeStruct((B, p_out, CP), jnp.bfloat16),
        grid=(B,),
        in_specs=[pl.BlockSpec((1, p_in, CP), lambda b: (b, 0, 0)),
                  pl.BlockSpec((9, CP, CP), lambda b: (0, 0, 0)),
                  pl.BlockSpec((1, CP), lambda b: (0, 0)),
                  pl.BlockSpec(sel_eo.shape, lambda b: (0, 0, 0))],
        out_specs=pl.BlockSpec((1, p_out, CP), lambda b: (b, 0, 0)),
        compiler_params=pltpu.CompilerParams(
            dimension_semantics=("parallel",),
            vmem_limit_bytes=48 * 1024 * 1024),
    )(yf, w_taps, b_pad, sel_eo)


# ----------------------------------------------------------------------------
# Kernel 2: tiled linear  y = relu?(x @ w + b)   (bf16 MXU, f32 accumulator)
# ----------------------------------------------------------------------------
def _linear_kernel(x_ref, w_ref, b_ref, o_ref, acc_ref, *, relu):
    @pl.when(pl.program_id(2) == 0)
    def _init():
        # bias folded into the accumulator init (no separate bias pass)
        acc_ref[...] = jnp.zeros_like(acc_ref) + b_ref[...]

    acc_ref[...] += jnp.dot(x_ref[...], w_ref[...],
                            preferred_element_type=jnp.float32)

    @pl.when(pl.program_id(2) == pl.num_programs(2) - 1)
    def _finalize():
        y = acc_ref[...]
        if relu:
            y = jnp.maximum(y, 0.0)
        o_ref[...] = y.astype(o_ref.dtype)


def pallas_linear(x, w, b, *, relu=False, tm=256, tn=512, tk=512):
    """Remainder-safe tiled matmul; bf16 operands, f32 VMEM accumulator.

    Default tiles (256x512x512 bf16) keep double-buffered blocks to ~1-2 MiB,
    far inside v7x's 64 MiB VMEM while cutting the grid-step count for
    real fc_6 shapes (K=25088, N=4096).
    """
    M, K = x.shape
    K2, N = w.shape
    assert K == K2
    x = x.astype(jnp.bfloat16)
    w = w.astype(jnp.bfloat16)
    tm = min(tm, _round_up(M, 8))
    tn = min(tn, _round_up(N, 128))
    tk = min(tk, _round_up(K, 128))
    Mp, Kp, Np = _round_up(M, tm), _round_up(K, tk), _round_up(N, tn)
    if (Mp, Kp) != (M, K):
        x = jnp.pad(x, ((0, Mp - M), (0, Kp - K)))
    if (Kp, Np) != (K, N):
        w = jnp.pad(w, ((0, Kp - K), (0, Np - N)))
    b2 = jnp.pad(b.astype(jnp.float32).reshape(1, N), ((0, 0), (0, Np - N)))

    kernel = functools.partial(_linear_kernel, relu=relu)
    out = pl.pallas_call(
        kernel,
        out_shape=jax.ShapeDtypeStruct((Mp, Np), jnp.float32),
        grid=(Mp // tm, Np // tn, Kp // tk),
        in_specs=[pl.BlockSpec((tm, tk), lambda i, j, k: (i, k)),
                  pl.BlockSpec((tk, tn), lambda i, j, k: (k, j)),
                  pl.BlockSpec((1, tn), lambda i, j, k: (0, j))],
        out_specs=pl.BlockSpec((tm, tn), lambda i, j, k: (i, j)),
        scratch_shapes=[pltpu.VMEM((tm, tn), jnp.float32)],
        compiler_params=pltpu.CompilerParams(
            dimension_semantics=("parallel", "parallel", "arbitrary"),
            vmem_limit_bytes=48 * 1024 * 1024),
    )(x, w, b2)
    return out[:M, :N]


# ----------------------------------------------------------------------------
# Kernel 3a: AdapPool shift/cancel   xc[n, t] = x[n, t+1] - x[n, t]  (last t: -x)
# ----------------------------------------------------------------------------
def _shift_cancel_kernel(x_ref, o_ref):
    T = x_ref.shape[1]
    if T > 1:
        o_ref[0, :T - 1, :] = x_ref[0, 1:, :] - x_ref[0, :T - 1, :]
    o_ref[0, T - 1:, :] = -x_ref[0, T - 1:, :]


def shift_cancel(y3):
    N, T, D = y3.shape
    return pl.pallas_call(
        _shift_cancel_kernel,
        out_shape=jax.ShapeDtypeStruct((N, T, D), jnp.float32),
        grid=(N,),
        in_specs=[pl.BlockSpec((1, T, D), lambda n: (n, 0, 0))],
        out_specs=pl.BlockSpec((1, T, D), lambda n: (n, 0, 0)),
        compiler_params=pltpu.CompilerParams(
            dimension_semantics=("parallel",)),
    )(y3)


# ----------------------------------------------------------------------------
# Kernel 3b: per-segment gamma (second MLP layer) + phi reduction
# ----------------------------------------------------------------------------
def _gamma_phi_kernel(xc_ref, h_ref, w2_ref, b2_ref, phi_ref, gamma_ref):
    xc = xc_ref[0]                                       # (T, D) f32
    h = h_ref[0]                                         # (T, D) f32
    # Linear(D, 1) + ReLU as a VPU/XLU lane reduction (no 1-lane MXU op).
    g = jnp.sum(h * w2_ref[...], axis=-1, keepdims=True) + b2_ref[...]
    g = jnp.maximum(g, 0.0)                              # (T, 1) = gamma
    phi_ref[0] = jnp.sum(xc * g, axis=0, keepdims=True)  # (1, D)
    # lane-dense gamma writeback (broadcast across 128 lanes, sliced outside)
    gamma_ref[0] = jnp.broadcast_to(g, (g.shape[0], gamma_ref.shape[2]))


def gamma_phi(xc3, h3, w2_row, b2):
    N, T, D = xc3.shape
    return pl.pallas_call(
        _gamma_phi_kernel,
        out_shape=(jax.ShapeDtypeStruct((N, 1, D), jnp.float32),
                   jax.ShapeDtypeStruct((N, T, GAMMA_LANES), jnp.float32)),
        grid=(N,),
        in_specs=[pl.BlockSpec((1, T, D), lambda n: (n, 0, 0)),
                  pl.BlockSpec((1, T, D), lambda n: (n, 0, 0)),
                  pl.BlockSpec((1, D), lambda n: (0, 0)),
                  pl.BlockSpec((1, 1), lambda n: (0, 0))],
        out_specs=(pl.BlockSpec((1, 1, D), lambda n: (n, 0, 0)),
                   pl.BlockSpec((1, T, GAMMA_LANES), lambda n: (n, 0, 0))),
        compiler_params=pltpu.CompilerParams(
            dimension_semantics=("parallel",)),
    )(xc3, h3, w2_row, b2)


# ----------------------------------------------------------------------------
# VGG forward (Pallas)
# ----------------------------------------------------------------------------
def vgg_forward_pallas(x, pp, *, num_classes, head=True):
    N, T, C, H, W = x.shape
    B = N * T
    # One-time layout plumbing: NCHW -> NHWC bf16, channels padded to CP
    # lanes, 1-pixel spatial halo added ONCE and flattened; the conv kernels
    # carry the halo themselves from layer to layer (no further jnp.pad).
    y = x.reshape(B, C, H, W).transpose(0, 2, 3, 1)
    y = jnp.pad(y, ((0, 0), (1, 1), (1, 1), (0, CP - C))).astype(jnp.bfloat16)
    y = y.reshape(B, (H + 2) * (W + 2), CP)

    n_layers = len(pp["features"])
    hw = H
    for li, (w_taps, b_pad, sel_eo) in enumerate(pp["features"]):
        y = conv3x3_relu_pool(y, w_taps, b_pad, sel_eo, H=hw, W=hw,
                              pad_out=(li < n_layers - 1))
        hw //= 2

    y = y.reshape(B, -1)                                   # (B, h3*w3*CP) bf16
    y = pallas_linear(y, pp["fc6_w"], pp["fc6_b"], relu=True)   # (B, hid) f32
    hid = y.shape[1]

    # AdapPool + classifier: shift/cancel kernel, K-tiled Linear(D,D),
    # per-segment gamma/phi kernel, then the classifier linears.
    y3 = y.reshape(N, T, hid)
    xc3 = shift_cancel(y3)                                 # (N, T, hid) f32
    xc = xc3.reshape(B, hid)
    h_mlp = pallas_linear(xc, pp["mlp_w1"], pp["mlp_b1"], relu=True)
    phi3, gamma3 = gamma_phi(xc3, h_mlp.reshape(N, T, hid),
                             pp["mlp_w2r"], pp["mlp_b2"])
    phi = phi3.reshape(N, hid)
    gamma = gamma3[..., :1]                                # (N, T, 1)

    out = phi
    if head:
        c1 = pallas_linear(phi, pp["cls_w1"], pp["cls_b1"], relu=True)
        out = pallas_linear(c1, pp["cls_w2"], pp["cls_b2"], relu=False)
        assert out.shape == (N, num_classes)
    return out, gamma


# ----------------------------------------------------------------------------
# Pure-JAX reference (f32, literal PyTorch semantics)
# ----------------------------------------------------------------------------
def reference_forward(x, params, head=True):
    N, T, C, H, W = x.shape
    y = x.reshape(N * T, C, H, W)
    for (cw, cb) in params["features"]:
        y = lax.conv_general_dilated(
            y, cw, (1, 1), "SAME",
            dimension_numbers=("NCHW", "OIHW", "NCHW")) + cb[None, :, None, None]
        y = jnp.maximum(y, 0.0)
        B, Cc, Hh, Ww = y.shape
        y = y.reshape(B, Cc, Hh // 2, 2, Ww // 2, 2).max(axis=(3, 5))
    y = y.reshape(N * T, -1)
    y = jnp.maximum(y @ params["fc6_w"] + params["fc6_b"], 0.0)
    D = y.shape[1]
    y = y.reshape(N, T, D)
    x_shift = jnp.concatenate([y[:, 1:, :], jnp.zeros((N, 1, D), y.dtype)],
                              axis=1)
    # note: PyTorch's cat((x[:, :-1], 0)) then "shift - x" is equivalent to
    # shifting forward; follow the module literally:
    x_shift = jnp.concatenate([y[:, :-1, :], jnp.zeros((N, 1, D), y.dtype)],
                              axis=1)
    x_shift = jnp.roll(x_shift, -1, axis=1)
    x_shift = jnp.concatenate([y[:, 1:, :], jnp.zeros((N, 1, D), y.dtype)],
                              axis=1)
    xc = x_shift - y
    h = jnp.maximum(xc @ params["mlp_w1"] + params["mlp_b1"], 0.0)
    g = jnp.maximum(h @ params["mlp_w2"] + params["mlp_b2"], 0.0)    # (N,T,1)
    phi = jnp.sum(xc * g, axis=1)
    out = phi
    if head:
        out = jnp.maximum(out @ params["cls_w1"] + params["cls_b1"], 0.0)
        out = out @ params["cls_w2"] + params["cls_b2"]
    return out, g


# ----------------------------------------------------------------------------
# Parameter init (canonical PyTorch-style layouts) + Pallas-layout prep
# ----------------------------------------------------------------------------
def init_params(key, conv_channels, hidden, num_classes, feat_hw):
    n_keys = 2 * (len(conv_channels) - 1) + 10
    keys = iter(jax.random.split(key, n_keys))
    params = {"features": []}
    cin = conv_channels[0]
    for cout in conv_channels[1:]:
        cw = jax.random.normal(next(keys), (cout, cin, 3, 3), jnp.float32) * 0.2
        cb = jax.random.normal(next(keys), (cout,), jnp.float32) * 0.05
        params["features"].append((cw, cb))
        cin = cout
    feat_dim = conv_channels[-1] * feat_hw * feat_hw
    params["fc6_w"] = jax.random.normal(next(keys), (feat_dim, hidden), jnp.float32) * 0.1
    params["fc6_b"] = jax.random.normal(next(keys), (hidden,), jnp.float32) * 0.05
    params["mlp_w1"] = jax.random.normal(next(keys), (hidden, hidden), jnp.float32) * 0.1
    params["mlp_b1"] = jax.random.normal(next(keys), (hidden,), jnp.float32) * 0.05
    params["mlp_w2"] = jax.random.normal(next(keys), (hidden, 1), jnp.float32) * 0.1
    params["mlp_b2"] = jax.random.normal(next(keys), (1,), jnp.float32) * 0.05
    params["cls_w1"] = jax.random.normal(next(keys), (hidden, hidden), jnp.float32) * 0.1
    params["cls_b1"] = jax.random.normal(next(keys), (hidden,), jnp.float32) * 0.05
    params["cls_w2"] = jax.random.normal(next(keys), (hidden, num_classes), jnp.float32) * 0.1
    params["cls_b2"] = jax.random.normal(next(keys), (num_classes,), jnp.float32) * 0.05
    return params


def _pool_scatter_selectors(H, W, pad_out):
    """Even/odd one-hot matrices that 1x2-max-pool the vertically pooled conv
    rows AND scatter them straight into the next layer's flat padded layout."""
    Wp = W + 2
    Ho, Wo = H // 2, W // 2
    L = H * Wp - 2
    Lv = L - Wp
    p_out = (Ho + 2) * (Wo + 2) if pad_out else Ho * Wo
    sel = np.zeros((2, p_out, Lv), np.float32)
    for io in range(Ho):
        for jo in range(Wo):
            p = (io + 1) * (Wo + 2) + (jo + 1) if pad_out else io * Wo + jo
            m = 2 * io * Wp + 2 * jo
            sel[0, p, m] = 1.0
            sel[1, p, m + 1] = 1.0
    return jnp.asarray(sel, jnp.bfloat16)


def prepare_pallas_params(params, *, input_hw, feat_hw):
    """One-time conversion to the Pallas layouts (bf16, lane-dense, padded)."""
    pp = {"features": []}
    n_layers = len(params["features"])
    hw = input_hw
    for li, (cw, cb) in enumerate(params["features"]):
        cout, cin = cw.shape[0], cw.shape[1]
        wt = jnp.transpose(cw, (2, 3, 1, 0))                 # (3,3,Cin,Cout)
        wt = jnp.pad(wt, ((0, 0), (0, 0), (0, CP - cin), (0, CP - cout)))
        pp["features"].append(
            (wt.reshape(9, CP, CP).astype(jnp.bfloat16),
             jnp.pad(cb, (0, CP - cout)).reshape(1, CP).astype(jnp.float32),
             _pool_scatter_selectors(hw, hw, pad_out=(li < n_layers - 1))))
        hw //= 2
    # fc_6 rows reordered from the PyTorch (C,H,W) flatten to the kernel's
    # (H,W,CP) flatten; padded channels get zero rows.  Stored in bf16.
    c3 = params["features"][-1][0].shape[0]
    h3 = w3 = feat_hw
    hid = params["fc6_w"].shape[1]
    w6 = params["fc6_w"].reshape(c3, h3, w3, hid).transpose(1, 2, 0, 3)
    w6 = jnp.pad(w6, ((0, 0), (0, 0), (0, CP - c3), (0, 0)))
    pp["fc6_w"] = w6.reshape(h3 * w3 * CP, hid).astype(jnp.bfloat16)
    pp["fc6_b"] = params["fc6_b"]
    pp["mlp_w1"] = params["mlp_w1"].astype(jnp.bfloat16)
    pp["mlp_b1"] = params["mlp_b1"]
    pp["mlp_w2r"] = params["mlp_w2"].reshape(1, -1).astype(jnp.float32)
    pp["mlp_b2"] = params["mlp_b2"].reshape(1, 1).astype(jnp.float32)
    pp["cls_w1"] = params["cls_w1"].astype(jnp.bfloat16)
    pp["cls_b1"] = params["cls_b1"]
    pp["cls_w2"] = params["cls_w2"].astype(jnp.bfloat16)
    pp["cls_b2"] = params["cls_b2"]
    return pp


if __name__ == "__main__":
    # x: (N, T, C, H, W); features = 3 x [conv3x3 + ReLU + maxpool2] -> 32 x 2 x 2
    N, T, C, H, W = 2, 4, 3, 16, 16
    conv_channels = (3, 8, 16, 32)       # stands in for the VGG channel stack
    hidden = 128                         # stands in for 4096 (lane-dense)
    num_classes = 10
    n_pools = len(conv_channels) - 1
    feat_hw = H // (2 ** n_pools)        # 2

    key = jax.random.PRNGKey(0)
    kx, kp = jax.random.split(key)
    x = jax.random.normal(kx, (N, T, C, H, W), jnp.float32)
    params = init_params(kp, conv_channels, hidden, num_classes, feat_hw)
    pp = prepare_pallas_params(params, input_hw=H, feat_hw=feat_hw)

    fwd = jax.jit(functools.partial(vgg_forward_pallas,
                                    num_classes=num_classes, head=True))
    out, gamma = fwd(x, pp)
    out = jax.block_until_ready(out)
    gamma = jax.block_until_ready(gamma)

    ref_out, ref_gamma = reference_forward(x, params, head=True)
    assert out.shape == (N, num_classes) and gamma.shape == (N, T, 1)
    # tolerance accounts for bf16 MXU inputs / bf16 weights & activations
    assert jnp.allclose(out, ref_out, rtol=7.5e-2, atol=7.5e-2), \
        float(jnp.max(jnp.abs(out - ref_out)))
    assert jnp.allclose(gamma, ref_gamma, rtol=7.5e-2, atol=7.5e-2), \
        float(jnp.max(jnp.abs(gamma - ref_gamma)))

    print("KERNEL_OK")
</pallas_src>

<mosaic_0001>
module attributes {stable_mosaic.version = 11 : i64} {
  func.func @_conv3x3_relu_pool_kernel(%arg0: i32, %arg1: memref<1x324x128xbf16, #tpu.memory_space<vmem>>, %arg2: memref<9x128x128xbf16, #tpu.memory_space<vmem>>, %arg3: memref<1x128xf32, #tpu.memory_space<vmem>>, %arg4: memref<2x100x268xbf16, #tpu.memory_space<vmem>>, %arg5: memref<1x100x128xbf16, #tpu.memory_space<vmem>>) attributes {dimension_semantics = [#tpu.dimension_semantics<parallel>], iteration_bounds = array<i64: 8>, scalar_prefetch = 0 : i64, scratch_operands = 0 : i64, tpu.core_type = #tpu.core_type<tc>, window_params = [{transform_indices = @transform_0, window_bounds = array<i64: 1, 324, 128>}, {pipeline_mode = #tpu.pipeline_mode<synchronous>, transform_indices = @transform_1, window_bounds = array<i64: 9, 128, 128>}, {pipeline_mode = #tpu.pipeline_mode<synchronous>, transform_indices = @transform_2, window_bounds = array<i64: 1, 128>}, {pipeline_mode = #tpu.pipeline_mode<synchronous>, transform_indices = @transform_3, window_bounds = array<i64: 2, 100, 268>}, {transform_indices = @transform_4, window_bounds = array<i64: 1, 100, 128>}]} {
    %cst = arith.constant 0.000000e+00 : f32
    %0 = vector.broadcast %cst : f32 to vector<286x128xf32>
    %c0 = arith.constant 0 : index
    %c0_0 = arith.constant 0 : index
    %c0_1 = arith.constant 0 : index
    %1 = vector.load %arg1[%c0, %c0_0, %c0_1] : memref<1x324x128xbf16, #tpu.memory_space<vmem>>, vector<1x286x128xbf16>
    %2 = vector.shape_cast %1 : vector<1x286x128xbf16> to vector<286x128xbf16>
    %c0_2 = arith.constant 0 : index
    %c0_3 = arith.constant 0 : index
    %c0_4 = arith.constant 0 : index
    %3 = vector.load %arg2[%c0_2, %c0_3, %c0_4] : memref<9x128x128xbf16, #tpu.memory_space<vmem>>, vector<1x128x128xbf16>
    %4 = vector.shape_cast %3 : vector<1x128x128xbf16> to vector<128x128xbf16>
    %cst_5 = arith.constant dense<0.000000e+00> : vector<286x128xf32>
    %5 = tpu.matmul %2, %4, %cst_5 {dimension_numbers = #tpu.dot_dimension_numbers<[1], [0], [0], [1], [0, 0, 1, 1], [], []>} : vector<286x128xbf16>, vector<128x128xbf16>, vector<286x128xf32> -> vector<286x128xf32>
    %6 = arith.addf %0, %5 : vector<286x128xf32>
    %c0_6 = arith.constant 0 : index
    %c1 = arith.constant 1 : index
    %c0_7 = arith.constant 0 : index
    %7 = vector.load %arg1[%c0_6, %c1, %c0_7] : memref<1x324x128xbf16, #tpu.memory_space<vmem>>, vector<1x286x128xbf16>
    %8 = vector.shape_cast %7 : vector<1x286x128xbf16> to vector<286x128xbf16>
    %c1_8 = arith.constant 1 : index
    %c0_9 = arith.constant 0 : index
    %c0_10 = arith.constant 0 : index
    %9 = vector.load %arg2[%c1_8, %c0_9, %c0_10] : memref<9x128x128xbf16, #tpu.memory_space<vmem>>, vector<1x128x128xbf16>
    %10 = vector.shape_cast %9 : vector<1x128x128xbf16> to vector<128x128xbf16>
    %cst_11 = arith.constant dense<0.000000e+00> : vector<286x128xf32>
    %11 = tpu.matmul %8, %10, %cst_11 {dimension_numbers = #tpu.dot_dimension_numbers<[1], [0], [0], [1], [0, 0, 1, 1], [], []>} : vector<286x128xbf16>, vector<128x128xbf16>, vector<286x128xf32> -> vector<286x128xf32>
    %12 = arith.addf %6, %11 : vector<286x128xf32>
    %c0_12 = arith.constant 0 : index
    %c2 = arith.constant 2 : index
    %c0_13 = arith.constant 0 : index
    %13 = vector.load %arg1[%c0_12, %c2, %c0_13] : memref<1x324x128xbf16, #tpu.memory_space<vmem>>, vector<1x286x128xbf16>
    %14 = vector.shape_cast %13 : vector<1x286x128xbf16> to vector<286x128xbf16>
    %c2_14 = arith.constant 2 : index
    %c0_15 = arith.constant 0 : index
    %c0_16 = arith.constant 0 : index
    %15 = vector.load %arg2[%c2_14, %c0_15, %c0_16] : memref<9x128x128xbf16, #tpu.memory_space<vmem>>, vector<1x128x128xbf16>
    %16 = vector.shape_cast %15 : vector<1x128x128xbf16> to vector<128x128xbf16>
    %cst_17 = arith.constant dense<0.000000e+00> : vector<286x128xf32>
    %17 = tpu.matmul %14, %16, %cst_17 {dimension_numbers = #tpu.dot_dimension_numbers<[1], [0], [0], [1], [0, 0, 1, 1], [], []>} : vector<286x128xbf16>, vector<128x128xbf16>, vector<286x128xf32> -> vector<286x128xf32>
    %18 = arith.addf %12, %17 : vector<286x128xf32>
    %c0_18 = arith.constant 0 : index
    %c18 = arith.constant 18 : index
    %c0_19 = arith.constant 0 : index
    %19 = vector.load %arg1[%c0_18, %c18, %c0_19] : memref<1x324x128xbf16, #tpu.memory_space<vmem>>, vector<1x286x128xbf16>
    %20 = vector.shape_cast %19 : vector<1x286x128xbf16> to vector<286x128xbf16>
    %c3 = arith.constant 3 : index
    %c0_20 = arith.constant 0 : index
    %c0_21 = arith.constant 0 : index
    %21 = vector.load %arg2[%c3, %c0_20, %c0_21] : memref<9x128x128xbf16, #tpu.memory_space<vmem>>, vector<1x128x128xbf16>
    %22 = vector.shape_cast %21 : vector<1x128x128xbf16> to vector<128x128xbf16>
    %cst_22 = arith.constant dense<0.000000e+00> : vector<286x128xf32>
    %23 = tpu.matmul %20, %22, %cst_22 {dimension_numbers = #tpu.dot_dimension_numbers<[1], [0], [0], [1], [0, 0, 1, 1], [], []>} : vector<286x128xbf16>, vector<128x128xbf16>, vector<286x128xf32> -> vector<286x128xf32>
    %24 = arith.addf %18, %23 : vector<286x128xf32>
    %c0_23 = arith.constant 0 : index
    %c19 = arith.constant 19 : index
    %c0_24 = arith.constant 0 : index
    %25 = vector.load %arg1[%c0_23, %c19, %c0_24] : memref<1x324x128xbf16, #tpu.memory_space<vmem>>, vector<1x286x128xbf16>
    %26 = vector.shape_cast %25 : vector<1x286x128xbf16> to vector<286x128xbf16>
    %c4 = arith.constant 4 : index
    %c0_25 = arith.constant 0 : index
    %c0_26 = arith.constant 0 : index
    %27 = vector.load %arg2[%c4, %c0_25, %c0_26] : memref<9x128x128xbf16, #tpu.memory_space<vmem>>, vector<1x128x128xbf16>
    %28 = vector.shape_cast %27 : vector<1x128x128xbf16> to vector<128x128xbf16>
    %cst_27 = arith.constant dense<0.000000e+00> : vector<286x128xf32>
    %29 = tpu.matmul %26, %28, %cst_27 {dimension_numbers = #tpu.dot_dimension_numbers<[1], [0], [0], [1], [0, 0, 1, 1], [], []>} : vector<286x128xbf16>, vector<128x128xbf16>, vector<286x128xf32> -> vector<286x128xf32>
    %30 = arith.addf %24, %29 : vector<286x128xf32>
    %c0_28 = arith.constant 0 : index
    %c20 = arith.constant 20 : index
    %c0_29 = arith.constant 0 : index
    %31 = vector.load %arg1[%c0_28, %c20, %c0_29] : memref<1x324x128xbf16, #tpu.memory_space<vmem>>, vector<1x286x128xbf16>
    %32 = vector.shape_cast %31 : vector<1x286x128xbf16> to vector<286x128xbf16>
    %c5 = arith.constant 5 : index
    %c0_30 = arith.constant 0 : index
    %c0_31 = arith.constant 0 : index
    %33 = vector.load %arg2[%c5, %c0_30, %c0_31] : memref<9x128x128xbf16, #tpu.memory_space<vmem>>, vector<1x128x128xbf16>
    %34 = vector.shape_cast %33 : vector<1x128x128xbf16> to vector<128x128xbf16>
    %cst_32 = arith.constant dense<0.000000e+00> : vector<286x128xf32>
    %35 = tpu.matmul %32, %34, %cst_32 {dimension_numbers = #tpu.dot_dimension_numbers<[1], [0], [0], [1], [0, 0, 1, 1], [], []>} : vector<286x128xbf16>, vector<128x128xbf16>, vector<286x128xf32> -> vector<286x128xf32>
    %36 = arith.addf %30, %35 : vector<286x128xf32>
    %c0_33 = arith.constant 0 : index
    %c36 = arith.constant 36 : index
    %c0_34 = arith.constant 0 : index
    %37 = vector.load %arg1[%c0_33, %c36, %c0_34] : memref<1x324x128xbf16, #tpu.memory_space<vmem>>, vector<1x286x128xbf16>
    %38 = vector.shape_cast %37 : vector<1x286x128xbf16> to vector<286x128xbf16>
    %c6 = arith.constant 6 : index
    %c0_35 = arith.constant 0 : index
    %c0_36 = arith.constant 0 : index
    %39 = vector.load %arg2[%c6, %c0_35, %c0_36] : memref<9x128x128xbf16, #tpu.memory_space<vmem>>, vector<1x128x128xbf16>
    %40 = vector.shape_cast %39 : vector<1x128x128xbf16> to vector<128x128xbf16>
    %cst_37 = arith.constant dense<0.000000e+00> : vector<286x128xf32>
    %41 = tpu.matmul %38, %40, %cst_37 {dimension_numbers = #tpu.dot_dimension_numbers<[1], [0], [0], [1], [0, 0, 1, 1], [], []>} : vector<286x128xbf16>, vector<128x128xbf16>, vector<286x128xf32> -> vector<286x128xf32>
    %42 = arith.addf %36, %41 : vector<286x128xf32>
    %c0_38 = arith.constant 0 : index
    %c37 = arith.constant 37 : index
    %c0_39 = arith.constant 0 : index
    %43 = vector.load %arg1[%c0_38, %c37, %c0_39] : memref<1x324x128xbf16, #tpu.memory_space<vmem>>, vector<1x286x128xbf16>
    %44 = vector.shape_cast %43 : vector<1x286x128xbf16> to vector<286x128xbf16>
    %c7 = arith.constant 7 : index
    %c0_40 = arith.constant 0 : index
    %c0_41 = arith.constant 0 : index
    %45 = vector.load %arg2[%c7, %c0_40, %c0_41] : memref<9x128x128xbf16, #tpu.memory_space<vmem>>, vector<1x128x128xbf16>
    %46 = vector.shape_cast %45 : vector<1x128x128xbf16> to vector<128x128xbf16>
    %cst_42 = arith.constant dense<0.000000e+00> : vector<286x128xf32>
    %47 = tpu.matmul %44, %46, %cst_42 {dimension_numbers = #tpu.dot_dimension_numbers<[1], [0], [0], [1], [0, 0, 1, 1], [], []>} : vector<286x128xbf16>, vector<128x128xbf16>, vector<286x128xf32> -> vector<286x128xf32>
    %48 = arith.addf %42, %47 : vector<286x128xf32>
    %c0_43 = arith.constant 0 : index
    %c38 = arith.constant 38 : index
    %c0_44 = arith.constant 0 : index
    %49 = vector.load %arg1[%c0_43, %c38, %c0_44] : memref<1x324x128xbf16, #tpu.memory_space<vmem>>, vector<1x286x128xbf16>
    %50 = vector.shape_cast %49 : vector<1x286x128xbf16> to vector<286x128xbf16>
    %c8 = arith.constant 8 : index
    %c0_45 = arith.constant 0 : index
    %c0_46 = arith.constant 0 : index
    %51 = vector.load %arg2[%c8, %c0_45, %c0_46] : memref<9x128x128xbf16, #tpu.memory_space<vmem>>, vector<1x128x128xbf16>
    %52 = vector.shape_cast %51 : vector<1x128x128xbf16> to vector<128x128xbf16>
    %cst_47 = arith.constant dense<0.000000e+00> : vector<286x128xf32>
    %53 = tpu.matmul %50, %52, %cst_47 {dimension_numbers = #tpu.dot_dimension_numbers<[1], [0], [0], [1], [0, 0, 1, 1], [], []>} : vector<286x128xbf16>, vector<128x128xbf16>, vector<286x128xf32> -> vector<286x128xf32>
    %54 = arith.addf %48, %53 : vector<286x128xf32>
    %c0_48 = arith.constant 0 : index
    %c0_49 = arith.constant 0 : index
    %55 = vector.load %arg3[%c0_48, %c0_49] : memref<1x128xf32, #tpu.memory_space<vmem>>, vector<1x128xf32>
    %56 = vector.broadcast %55 : vector<1x128xf32> to vector<286x128xf32>
    %57 = arith.addf %54, %56 : vector<286x128xf32>
    %cst_50 = arith.constant 0.000000e+00 : f32
    %58 = vector.broadcast %cst_50 : f32 to vector<286x128xf32>
    %59 = arith.maximumf %57, %58 : vector<286x128xf32>
    %60 = vector.extract_strided_slice %59 {offsets = [0, 0], sizes = [268, 128], strides = [1, 1]} : vector<286x128xf32> to vector<268x128xf32>
    %61 = vector.extract_strided_slice %59 {offsets = [18, 0], sizes = [268, 128], strides = [1, 1]} : vector<286x128xf32> to vector<268x128xf32>
    %62 = arith.maximumf %60, %61 : vector<268x128xf32>
    %63 = arith.truncf %62 : vector<268x128xf32> to vector<268x128xbf16>
    %c0_51 = arith.constant 0 : index
    %c0_52 = arith.constant 0 : index
    %c0_53 = arith.constant 0 : index
    %64 = vector.load %arg4[%c0_51, %c0_52, %c0_53] : memref<2x100x268xbf16, #tpu.memory_space<vmem>>, vector<1x100x268xbf16>
    %65 = vector.shape_cast %64 : vector<1x100x268xbf16> to vector<100x268xbf16>
    %cst_54 = arith.constant dense<0.000000e+00> : vector<100x128xf32>
    %66 = tpu.matmul %65, %63, %cst_54 {dimension_numbers = #tpu.dot_dimension_numbers<[1], [0], [0], [1], [0, 0, 1, 1], [], []>} : vector<100x268xbf16>, vector<268x128xbf16>, vector<100x128xf32> -> vector<100x128xf32>
    %c1_55 = arith.constant 1 : index
    %c0_56 = arith.constant 0 : index
    %c0_57 = arith.constant 0 : index
    %67 = vector.load %arg4[%c1_55, %c0_56, %c0_57] : memref<2x100x268xbf16, #tpu.memory_space<vmem>>, vector<1x100x268xbf16>
    %68 = vector.shape_cast %67 : vector<1x100x268xbf16> to vector<100x268xbf16>
    %cst_58 = arith.constant dense<0.000000e+00> : vector<100x128xf32>
    %69 = tpu.matmul %68, %63, %cst_58 {dimension_numbers = #tpu.dot_dimension_numbers<[1], [0], [0], [1], [0, 0, 1, 1], [], []>} : vector<100x268xbf16>, vector<268x128xbf16>, vector<100x128xf32> -> vector<100x128xf32>
    %70 = arith.maximumf %66, %69 : vector<100x128xf32>
    %71 = arith.truncf %70 : vector<100x128xf32> to vector<100x128xbf16>
    %c0_59 = arith.constant 0 : index
    %c0_60 = arith.constant 0 : index
    %c0_61 = arith.constant 0 : index
    %72 = vector.load %arg5[%c0_59, %c0_60, %c0_61] : memref<1x100x128xbf16, #tpu.memory_space<vmem>>, vector<1x100x128xbf16>
    %73 = vector.shape_cast %72 : vector<1x100x128xbf16> to vector<100x128xbf16>
    %74 = vector.shape_cast %71 : vector<100x128xbf16> to vector<1x100x128xbf16>
    tpu.vector_store %arg5[%c0_59, %c0_60, %c0_61], %74 {strides = array<i32>} : memref<1x100x128xbf16, #tpu.memory_space<vmem>>, vector<1x100x128xbf16>,
    return
  }
  func.func @transform_0(%arg0: i32) -> (i32, i32, i32) {
    %c0_i32 = arith.constant 0 : i32
    %c0_i32_0 = arith.constant 0 : i32
    %c0_i32_1 = arith.constant 0 : i32
    return %arg0, %c0_i32, %c0_i32_0 : i32, i32, i32
  }
  func.func @transform_1(%arg0: i32) -> (i32, i32, i32) {
    %c0_i32 = arith.constant 0 : i32
    %c0_i32_0 = arith.constant 0 : i32
    %c0_i32_1 = arith.constant 0 : i32
    %c0_i32_2 = arith.constant 0 : i32
    return %c0_i32, %c0_i32_0, %c0_i32_1 : i32, i32, i32
  }
  func.func @transform_2(%arg0: i32) -> (i32, i32) {
    %c0_i32 = arith.constant 0 : i32
    %c0_i32_0 = arith.constant 0 : i32
    %c0_i32_1 = arith.constant 0 : i32
    return %c0_i32, %c0_i32_0 : i32, i32
  }
  func.func @transform_3(%arg0: i32) -> (i32, i32, i32) {
    %c0_i32 = arith.constant 0 : i32
    %c0_i32_0 = arith.constant 0 : i32
    %c0_i32_1 = arith.constant 0 : i32
    %c0_i32_2 = arith.constant 0 : i32
    return %c0_i32, %c0_i32_0, %c0_i32_1 : i32, i32, i32
  }
  func.func @transform_4(%arg0: i32) -> (i32, i32, i32) {
    %c0_i32 = arith.constant 0 : i32
    %c0_i32_0 = arith.constant 0 : i32
    %c0_i32_1 = arith.constant 0 : i32
    return %arg0, %c0_i32, %c0_i32_0 : i32, i32, i32
  }
}

module attributes {stable_mosaic.version = 11 : i64} {
  func.func @_conv3x3_relu_pool_kernel(%arg0: i32, %arg1: memref<1x100x128xbf16, #tpu.memory_space<vmem>>, %arg2: memref<9x128x128xbf16, #tpu.memory_space<vmem>>, %arg3: memref<1x128xf32, #tpu.memory_space<vmem>>, %arg4: memref<2x36x68xbf16, #tpu.memory_space<vmem>>, %arg5: memref<1x36x128xbf16, #tpu.memory_space<vmem>>) attributes {dimension_semantics = [#tpu.dimension_semantics<parallel>], iteration_bounds = array<i64: 8>, scalar_prefetch = 0 : i64, scratch_operands = 0 : i64, tpu.core_type = #tpu.core_type<tc>, window_params = [{transform_indices = @transform_0, window_bounds = array<i64: 1, 100, 128>}, {pipeline_mode = #tpu.pipeline_mode<synchronous>, transform_indices = @transform_1, window_bounds = array<i64: 9, 128, 128>}, {pipeline_mode = #tpu.pipeline_mode<synchronous>, transform_indices = @transform_2, window_bounds = array<i64: 1, 128>}, {pipeline_mode = #tpu.pipeline_mode<synchronous>, transform_indices = @transform_3, window_bounds = array<i64: 2, 36, 68>}, {transform_indices = @transform_4, window_bounds = array<i64: 1, 36, 128>}]} {
    %cst = arith.constant 0.000000e+00 : f32
    %0 = vector.broadcast %cst : f32 to vector<78x128xf32>
    %c0 = arith.constant 0 : index
    %c0_0 = arith.constant 0 : index
    %c0_1 = arith.constant 0 : index
    %1 = vector.load %arg1[%c0, %c0_0, %c0_1] : memref<1x100x128xbf16, #tpu.memory_space<vmem>>, vector<1x78x128xbf16>
    %2 = vector.shape_cast %1 : vector<1x78x128xbf16> to vector<78x128xbf16>
    %c0_2 = arith.constant 0 : index
    %c0_3 = arith.constant 0 : index
    %c0_4 = arith.constant 0 : index
    %3 = vector.load %arg2[%c0_2, %c0_3, %c0_4] : memref<9x128x128xbf16, #tpu.memory_space<vmem>>, vector<1x128x128xbf16>
    %4 = vector.shape_cast %3 : vector<1x128x128xbf16> to vector<128x128xbf16>
    %cst_5 = arith.constant dense<0.000000e+00> : vector<78x128xf32>
    %5 = tpu.matmul %2, %4, %cst_5 {dimension_numbers = #tpu.dot_dimension_numbers<[1], [0], [0], [1], [0, 0, 1, 1], [], []>} : vector<78x128xbf16>, vector<128x128xbf16>, vector<78x128xf32> -> vector<78x128xf32>
    %6 = arith.addf %0, %5 : vector<78x128xf32>
    %c0_6 = arith.constant 0 : index
    %c1 = arith.constant 1 : index
    %c0_7 = arith.constant 0 : index
    %7 = vector.load %arg1[%c0_6, %c1, %c0_7] : memref<1x100x128xbf16, #tpu.memory_space<vmem>>, vector<1x78x128xbf16>
    %8 = vector.shape_cast %7 : vector<1x78x128xbf16> to vector<78x128xbf16>
    %c1_8 = arith.constant 1 : index
    %c0_9 = arith.constant 0 : index
    %c0_10 = arith.constant 0 : index
    %9 = vector.load %arg2[%c1_8, %c0_9, %c0_10] : memref<9x128x128xbf16, #tpu.memory_space<vmem>>, vector<1x128x128xbf16>
    %10 = vector.shape_cast %9 : vector<1x128x128xbf16> to vector<128x128xbf16>
    %cst_11 = arith.constant dense<0.000000e+00> : vector<78x128xf32>
    %11 = tpu.matmul %8, %10, %cst_11 {dimension_numbers = #tpu.dot_dimension_numbers<[1], [0], [0], [1], [0, 0, 1, 1], [], []>} : vector<78x128xbf16>, vector<128x128xbf16>, vector<78x128xf32> -> vector<78x128xf32>
    %12 = arith.addf %6, %11 : vector<78x128xf32>
    %c0_12 = arith.constant 0 : index
    %c2 = arith.constant 2 : index
    %c0_13 = arith.constant 0 : index
    %13 = vector.load %arg1[%c0_12, %c2, %c0_13] : memref<1x100x128xbf16, #tpu.memory_space<vmem>>, vector<1x78x128xbf16>
    %14 = vector.shape_cast %13 : vector<1x78x128xbf16> to vector<78x128xbf16>
    %c2_14 = arith.constant 2 : index
    %c0_15 = arith.constant 0 : index
    %c0_16 = arith.constant 0 : index
    %15 = vector.load %arg2[%c2_14, %c0_15, %c0_16] : memref<9x128x128xbf16, #tpu.memory_space<vmem>>, vector<1x128x128xbf16>
    %16 = vector.shape_cast %15 : vector<1x128x128xbf16> to vector<128x128xbf16>
    %cst_17 = arith.constant dense<0.000000e+00> : vector<78x128xf32>
    %17 = tpu.matmul %14, %16, %cst_17 {dimension_numbers = #tpu.dot_dimension_numbers<[1], [0], [0], [1], [0, 0, 1, 1], [], []>} : vector<78x128xbf16>, vector<128x128xbf16>, vector<78x128xf32> -> vector<78x128xf32>
    %18 = arith.addf %12, %17 : vector<78x128xf32>
    %c0_18 = arith.constant 0 : index
    %c10 = arith.constant 10 : index
    %c0_19 = arith.constant 0 : index
    %19 = vector.load %arg1[%c0_18, %c10, %c0_19] : memref<1x100x128xbf16, #tpu.memory_space<vmem>>, vector<1x78x128xbf16>
    %20 = vector.shape_cast %19 : vector<1x78x128xbf16> to vector<78x128xbf16>
    %c3 = arith.constant 3 : index
    %c0_20 = arith.constant 0 : index
    %c0_21 = arith.constant 0 : index
    %21 = vector.load %arg2[%c3, %c0_20, %c0_21] : memref<9x128x128xbf16, #tpu.memory_space<vmem>>, vector<1x128x128xbf16>
    %22 = vector.shape_cast %21 : vector<1x128x128xbf16> to vector<128x128xbf16>
    %cst_22 = arith.constant dense<0.000000e+00> : vector<78x128xf32>
    %23 = tpu.matmul %20, %22, %cst_22 {dimension_numbers = #tpu.dot_dimension_numbers<[1], [0], [0], [1], [0, 0, 1, 1], [], []>} : vector<78x128xbf16>, vector<128x128xbf16>, vector<78x128xf32> -> vector<78x128xf32>
    %24 = arith.addf %18, %23 : vector<78x128xf32>
    %c0_23 = arith.constant 0 : index
    %c11 = arith.constant 11 : index
    %c0_24 = arith.constant 0 : index
    %25 = vector.load %arg1[%c0_23, %c11, %c0_24] : memref<1x100x128xbf16, #tpu.memory_space<vmem>>, vector<1x78x128xbf16>
    %26 = vector.shape_cast %25 : vector<1x78x128xbf16> to vector<78x128xbf16>
    %c4 = arith.constant 4 : index
    %c0_25 = arith.constant 0 : index
    %c0_26 = arith.constant 0 : index
    %27 = vector.load %arg2[%c4, %c0_25, %c0_26] : memref<9x128x128xbf16, #tpu.memory_space<vmem>>, vector<1x128x128xbf16>
    %28 = vector.shape_cast %27 : vector<1x128x128xbf16> to vector<128x128xbf16>
    %cst_27 = arith.constant dense<0.000000e+00> : vector<78x128xf32>
    %29 = tpu.matmul %26, %28, %cst_27 {dimension_numbers = #tpu.dot_dimension_numbers<[1], [0], [0], [1], [0, 0, 1, 1], [], []>} : vector<78x128xbf16>, vector<128x128xbf16>, vector<78x128xf32> -> vector<78x128xf32>
    %30 = arith.addf %24, %29 : vector<78x128xf32>
    %c0_28 = arith.constant 0 : index
    %c12 = arith.constant 12 : index
    %c0_29 = arith.constant 0 : index
    %31 = vector.load %arg1[%c0_28, %c12, %c0_29] : memref<1x100x128xbf16, #tpu.memory_space<vmem>>, vector<1x78x128xbf16>
    %32 = vector.shape_cast %31 : vector<1x78x128xbf16> to vector<78x128xbf16>
    %c5 = arith.constant 5 : index
    %c0_30 = arith.constant 0 : index
    %c0_31 = arith.constant 0 : index
    %33 = vector.load %arg2[%c5, %c0_30, %c0_31] : memref<9x128x128xbf16, #tpu.memory_space<vmem>>, vector<1x128x128xbf16>
    %34 = vector.shape_cast %33 : vector<1x128x128xbf16> to vector<128x128xbf16>
    %cst_32 = arith.constant dense<0.000000e+00> : vector<78x128xf32>
    %35 = tpu.matmul %32, %34, %cst_32 {dimension_numbers = #tpu.dot_dimension_numbers<[1], [0], [0], [1], [0, 0, 1, 1], [], []>} : vector<78x128xbf16>, vector<128x128xbf16>, vector<78x128xf32> -> vector<78x128xf32>
    %36 = arith.addf %30, %35 : vector<78x128xf32>
    %c0_33 = arith.constant 0 : index
    %c20 = arith.constant 20 : index
    %c0_34 = arith.constant 0 : index
    %37 = vector.load %arg1[%c0_33, %c20, %c0_34] : memref<1x100x128xbf16, #tpu.memory_space<vmem>>, vector<1x78x128xbf16>
    %38 = vector.shape_cast %37 : vector<1x78x128xbf16> to vector<78x128xbf16>
    %c6 = arith.constant 6 : index
    %c0_35 = arith.constant 0 : index
    %c0_36 = arith.constant 0 : index
    %39 = vector.load %arg2[%c6, %c0_35, %c0_36] : memref<9x128x128xbf16, #tpu.memory_space<vmem>>, vector<1x128x128xbf16>
    %40 = vector.shape_cast %39 : vector<1x128x128xbf16> to vector<128x128xbf16>
    %cst_37 = arith.constant dense<0.000000e+00> : vector<78x128xf32>
    %41 = tpu.matmul %38, %40, %cst_37 {dimension_numbers = #tpu.dot_dimension_numbers<[1], [0], [0], [1], [0, 0, 1, 1], [], []>} : vector<78x128xbf16>, vector<128x128xbf16>, vector<78x128xf32> -> vector<78x128xf32>
    %42 = arith.addf %36, %41 : vector<78x128xf32>
    %c0_38 = arith.constant 0 : index
    %c21 = arith.constant 21 : index
    %c0_39 = arith.constant 0 : index
    %43 = vector.load %arg1[%c0_38, %c21, %c0_39] : memref<1x100x128xbf16, #tpu.memory_space<vmem>>, vector<1x78x128xbf16>
    %44 = vector.shape_cast %43 : vector<1x78x128xbf16> to vector<78x128xbf16>
    %c7 = arith.constant 7 : index
    %c0_40 = arith.constant 0 : index
    %c0_41 = arith.constant 0 : index
    %45 = vector.load %arg2[%c7, %c0_40, %c0_41] : memref<9x128x128xbf16, #tpu.memory_space<vmem>>, vector<1x128x128xbf16>
    %46 = vector.shape_cast %45 : vector<1x128x128xbf16> to vector<128x128xbf16>
    %cst_42 = arith.constant dense<0.000000e+00> : vector<78x128xf32>
    %47 = tpu.matmul %44, %46, %cst_42 {dimension_numbers = #tpu.dot_dimension_numbers<[1], [0], [0], [1], [0, 0, 1, 1], [], []>} : vector<78x128xbf16>, vector<128x128xbf16>, vector<78x128xf32> -> vector<78x128xf32>
    %48 = arith.addf %42, %47 : vector<78x128xf32>
    %c0_43 = arith.constant 0 : index
    %c22 = arith.constant 22 : index
    %c0_44 = arith.constant 0 : index
    %49 = vector.load %arg1[%c0_43, %c22, %c0_44] : memref<1x100x128xbf16, #tpu.memory_space<vmem>>, vector<1x78x128xbf16>
    %50 = vector.shape_cast %49 : vector<1x78x128xbf16> to vector<78x128xbf16>
    %c8 = arith.constant 8 : index
    %c0_45 = arith.constant 0 : index
    %c0_46 = arith.constant 0 : index
    %51 = vector.load %arg2[%c8, %c0_45, %c0_46] : memref<9x128x128xbf16, #tpu.memory_space<vmem>>, vector<1x128x128xbf16>
    %52 = vector.shape_cast %51 : vector<1x128x128xbf16> to vector<128x128xbf16>
    %cst_47 = arith.constant dense<0.000000e+00> : vector<78x128xf32>
    %53 = tpu.matmul %50, %52, %cst_47 {dimension_numbers = #tpu.dot_dimension_numbers<[1], [0], [0], [1], [0, 0, 1, 1], [], []>} : vector<78x128xbf16>, vector<128x128xbf16>, vector<78x128xf32> -> vector<78x128xf32>
    %54 = arith.addf %48, %53 : vector<78x128xf32>
    %c0_48 = arith.constant 0 : index
    %c0_49 = arith.constant 0 : index
    %55 = vector.load %arg3[%c0_48, %c0_49] : memref<1x128xf32, #tpu.memory_space<vmem>>, vector<1x128xf32>
    %56 = vector.broadcast %55 : vector<1x128xf32> to vector<78x128xf32>
    %57 = arith.addf %54, %56 : vector<78x128xf32>
    %cst_50 = arith.constant 0.000000e+00 : f32
    %58 = vector.broadcast %cst_50 : f32 to vector<78x128xf32>
    %59 = arith.maximumf %57, %58 : vector<78x128xf32>
    %60 = vector.extract_strided_slice %59 {offsets = [0, 0], sizes = [68, 128], strides = [1, 1]} : vector<78x128xf32> to vector<68x128xf32>
    %61 = vector.extract_strided_slice %59 {offsets = [10, 0], sizes = [68, 128], strides = [1, 1]} : vector<78x128xf32> to vector<68x128xf32>
    %62 = arith.maximumf %60, %61 : vector<68x128xf32>
    %63 = arith.truncf %62 : vector<68x128xf32> to vector<68x128xbf16>
    %c0_51 = arith.constant 0 : index
    %c0_52 = arith.constant 0 : index
    %c0_53 = arith.constant 0 : index
    %64 = vector.load %arg4[%c0_51, %c0_52, %c0_53] : memref<2x36x68xbf16, #tpu.memory_space<vmem>>, vector<1x36x68xbf16>
    %65 = vector.shape_cast %64 : vector<1x36x68xbf16> to vector<36x68xbf16>
    %cst_54 = arith.constant dense<0.000000e+00> : vector<36x128xf32>
    %66 = tpu.matmul %65, %63, %cst_54 {dimension_numbers = #tpu.dot_dimension_numbers<[1], [0], [0], [1], [0, 0, 1, 1], [], []>} : vector<36x68xbf16>, vector<68x128xbf16>, vector<36x128xf32> -> vector<36x128xf32>
    %c1_55 = arith.constant 1 : index
    %c0_56 = arith.constant 0 : index
    %c0_57 = arith.constant 0 : index
    %67 = vector.load %arg4[%c1_55, %c0_56, %c0_57] : memref<2x36x68xbf16, #tpu.memory_space<vmem>>, vector<1x36x68xbf16>
    %68 = vector.shape_cast %67 : vector<1x36x68xbf16> to vector<36x68xbf16>
    %cst_58 = arith.constant dense<0.000000e+00> : vector<36x128xf32>
    %69 = tpu.matmul %68, %63, %cst_58 {dimension_numbers = #tpu.dot_dimension_numbers<[1], [0], [0], [1], [0, 0, 1, 1], [], []>} : vector<36x68xbf16>, vector<68x128xbf16>, vector<36x128xf32> -> vector<36x128xf32>
    %70 = arith.maximumf %66, %69 : vector<36x128xf32>
    %71 = arith.truncf %70 : vector<36x128xf32> to vector<36x128xbf16>
    %c0_59 = arith.constant 0 : index
    %c0_60 = arith.constant 0 : index
    %c0_61 = arith.constant 0 : index
    %72 = vector.load %arg5[%c0_59, %c0_60, %c0_61] : memref<1x36x128xbf16, #tpu.memory_space<vmem>>, vector<1x36x128xbf16>
    %73 = vector.shape_cast %72 : vector<1x36x128xbf16> to vector<36x128xbf16>
    %74 = vector.shape_cast %71 : vector<36x128xbf16> to vector<1x36x128xbf16>
    tpu.vector_store %arg5[%c0_59, %c0_60, %c0_61], %74 {strides = array<i32>} : memref<1x36x128xbf16, #tpu.memory_space<vmem>>, vector<1x36x128xbf16>,
    return
  }
  func.func @transform_0(%arg0: i32) -> (i32, i32, i32) {
    %c0_i32 = arith.constant 0 : i32
    %c0_i32_0 = arith.constant 0 : i32
    %c0_i32_1 = arith.constant 0 : i32
    return %arg0, %c0_i32, %c0_i32_0 : i32, i32, i32
  }
  func.func @transform_1(%arg0: i32) -> (i32, i32, i32) {
    %c0_i32 = arith.constant 0 : i32
    %c0_i32_0 = arith.constant 0 : i32
    %c0_i32_1 = arith.constant 0 : i32
    %c0_i32_2 = arith.constant 0 : i32
    return %c0_i32, %c0_i32_0, %c0_i32_1 : i32, i32, i32
  }
  func.func @transform_2(%arg0: i32) -> (i32, i32) {
    %c0_i32 = arith.constant 0 : i32
    %c0_i32_0 = arith.constant 0 : i32
    %c0_i32_1 = arith.constant 0 : i32
    return %c0_i32, %c0_i32_0 : i32, i32
  }
  func.func @transform_3(%arg0: i32) -> (i32, i32, i32) {
    %c0_i32 = arith.constant 0 : i32
    %c0_i32_0 = arith.constant 0 : i32
    %c0_i32_1 = arith.constant 0 : i32
    %c0_i32_2 = arith.constant 0 : i32
    return %c0_i32, %c0_i32_0, %c0_i32_1 : i32, i32, i32
  }
  func.func @transform_4(%arg0: i32) -> (i32, i32, i32) {
    %c0_i32 = arith.constant 0 : i32
    %c0_i32_0 = arith.constant 0 : i32
    %c0_i32_1 = arith.constant 0 : i32
    return %arg0, %c0_i32, %c0_i32_0 : i32, i32, i32
  }
}

module attributes {stable_mosaic.version = 11 : i64} {
  func.func @_conv3x3_relu_pool_kernel(%arg0: i32, %arg1: memref<1x36x128xbf16, #tpu.memory_space<vmem>>, %arg2: memref<9x128x128xbf16, #tpu.memory_space<vmem>>, %arg3: memref<1x128xf32, #tpu.memory_space<vmem>>, %arg4: memref<2x4x16xbf16, #tpu.memory_space<vmem>>, %arg5: memref<1x4x128xbf16, #tpu.memory_space<vmem>>) attributes {dimension_semantics = [#tpu.dimension_semantics<parallel>], iteration_bounds = array<i64: 8>, scalar_prefetch = 0 : i64, scratch_operands = 0 : i64, tpu.core_type = #tpu.core_type<tc>, window_params = [{transform_indices = @transform_0, window_bounds = array<i64: 1, 36, 128>}, {pipeline_mode = #tpu.pipeline_mode<synchronous>, transform_indices = @transform_1, window_bounds = array<i64: 9, 128, 128>}, {pipeline_mode = #tpu.pipeline_mode<synchronous>, transform_indices = @transform_2, window_bounds = array<i64: 1, 128>}, {pipeline_mode = #tpu.pipeline_mode<synchronous>, transform_indices = @transform_3, window_bounds = array<i64: 2, 4, 16>}, {transform_indices = @transform_4, window_bounds = array<i64: 1, 4, 128>}]} {
    %cst = arith.constant 0.000000e+00 : f32
    %0 = vector.broadcast %cst : f32 to vector<22x128xf32>
    %c0 = arith.constant 0 : index
    %c0_0 = arith.constant 0 : index
    %c0_1 = arith.constant 0 : index
    %1 = vector.load %arg1[%c0, %c0_0, %c0_1] : memref<1x36x128xbf16, #tpu.memory_space<vmem>>, vector<1x22x128xbf16>
    %2 = vector.shape_cast %1 : vector<1x22x128xbf16> to vector<22x128xbf16>
    %c0_2 = arith.constant 0 : index
    %c0_3 = arith.constant 0 : index
    %c0_4 = arith.constant 0 : index
    %3 = vector.load %arg2[%c0_2, %c0_3, %c0_4] : memref<9x128x128xbf16, #tpu.memory_space<vmem>>, vector<1x128x128xbf16>
    %4 = vector.shape_cast %3 : vector<1x128x128xbf16> to vector<128x128xbf16>
    %cst_5 = arith.constant dense<0.000000e+00> : vector<22x128xf32>
    %5 = tpu.matmul %2, %4, %cst_5 {dimension_numbers = #tpu.dot_dimension_numbers<[1], [0], [0], [1], [0, 0, 1, 1], [], []>} : vector<22x128xbf16>, vector<128x128xbf16>, vector<22x128xf32> -> vector<22x128xf32>
    %6 = arith.addf %0, %5 : vector<22x128xf32>
    %c0_6 = arith.constant 0 : index
    %c1 = arith.constant 1 : index
    %c0_7 = arith.constant 0 : index
    %7 = vector.load %arg1[%c0_6, %c1, %c0_7] : memref<1x36x128xbf16, #tpu.memory_space<vmem>>, vector<1x22x128xbf16>
    %8 = vector.shape_cast %7 : vector<1x22x128xbf16> to vector<22x128xbf16>
    %c1_8 = arith.constant 1 : index
    %c0_9 = arith.constant 0 : index
    %c0_10 = arith.constant 0 : index
    %9 = vector.load %arg2[%c1_8, %c0_9, %c0_10] : memref<9x128x128xbf16, #tpu.memory_space<vmem>>, vector<1x128x128xbf16>
    %10 = vector.shape_cast %9 : vector<1x128x128xbf16> to vector<128x128xbf16>
    %cst_11 = arith.constant dense<0.000000e+00> : vector<22x128xf32>
    %11 = tpu.matmul %8, %10, %cst_11 {dimension_numbers = #tpu.dot_dimension_numbers<[1], [0], [0], [1], [0, 0, 1, 1], [], []>} : vector<22x128xbf16>, vector<128x128xbf16>, vector<22x128xf32> -> vector<22x128xf32>
    %12 = arith.addf %6, %11 : vector<22x128xf32>
    %c0_12 = arith.constant 0 : index
    %c2 = arith.constant 2 : index
    %c0_13 = arith.constant 0 : index
    %13 = vector.load %arg1[%c0_12, %c2, %c0_13] : memref<1x36x128xbf16, #tpu.memory_space<vmem>>, vector<1x22x128xbf16>
    %14 = vector.shape_cast %13 : vector<1x22x128xbf16> to vector<22x128xbf16>
    %c2_14 = arith.constant 2 : index
    %c0_15 = arith.constant 0 : index
    %c0_16 = arith.constant 0 : index
    %15 = vector.load %arg2[%c2_14, %c0_15, %c0_16] : memref<9x128x128xbf16, #tpu.memory_space<vmem>>, vector<1x128x128xbf16>
    %16 = vector.shape_cast %15 : vector<1x128x128xbf16> to vector<128x128xbf16>
    %cst_17 = arith.constant dense<0.000000e+00> : vector<22x128xf32>
    %17 = tpu.matmul %14, %16, %cst_17 {dimension_numbers = #tpu.dot_dimension_numbers<[1], [0], [0], [1], [0, 0, 1, 1], [], []>} : vector<22x128xbf16>, vector<128x128xbf16>, vector<22x128xf32> -> vector<22x128xf32>
    %18 = arith.addf %12, %17 : vector<22x128xf32>
    %c0_18 = arith.constant 0 : index
    %c6 = arith.constant 6 : index
    %c0_19 = arith.constant 0 : index
    %19 = vector.load %arg1[%c0_18, %c6, %c0_19] : memref<1x36x128xbf16, #tpu.memory_space<vmem>>, vector<1x22x128xbf16>
    %20 = vector.shape_cast %19 : vector<1x22x128xbf16> to vector<22x128xbf16>
    %c3 = arith.constant 3 : index
    %c0_20 = arith.constant 0 : index
    %c0_21 = arith.constant 0 : index
    %21 = vector.load %arg2[%c3, %c0_20, %c0_21] : memref<9x128x128xbf16, #tpu.memory_space<vmem>>, vector<1x128x128xbf16>
    %22 = vector.shape_cast %21 : vector<1x128x128xbf16> to vector<128x128xbf16>
    %cst_22 = arith.constant dense<0.000000e+00> : vector<22x128xf32>
    %23 = tpu.matmul %20, %22, %cst_22 {dimension_numbers = #tpu.dot_dimension_numbers<[1], [0], [0], [1], [0, 0, 1, 1], [], []>} : vector<22x128xbf16>, vector<128x128xbf16>, vector<22x128xf32> -> vector<22x128xf32>
    %24 = arith.addf %18, %23 : vector<22x128xf32>
    %c0_23 = arith.constant 0 : index
    %c7 = arith.constant 7 : index
    %c0_24 = arith.constant 0 : index
    %25 = vector.load %arg1[%c0_23, %c7, %c0_24] : memref<1x36x128xbf16, #tpu.memory_space<vmem>>, vector<1x22x128xbf16>
    %26 = vector.shape_cast %25 : vector<1x22x128xbf16> to vector<22x128xbf16>
    %c4 = arith.constant 4 : index
    %c0_25 = arith.constant 0 : index
    %c0_26 = arith.constant 0 : index
    %27 = vector.load %arg2[%c4, %c0_25, %c0_26] : memref<9x128x128xbf16, #tpu.memory_space<vmem>>, vector<1x128x128xbf16>
    %28 = vector.shape_cast %27 : vector<1x128x128xbf16> to vector<128x128xbf16>
    %cst_27 = arith.constant dense<0.000000e+00> : vector<22x128xf32>
    %29 = tpu.matmul %26, %28, %cst_27 {dimension_numbers = #tpu.dot_dimension_numbers<[1], [0], [0], [1], [0, 0, 1, 1], [], []>} : vector<22x128xbf16>, vector<128x128xbf16>, vector<22x128xf32> -> vector<22x128xf32>
    %30 = arith.addf %24, %29 : vector<22x128xf32>
    %c0_28 = arith.constant 0 : index
    %c8 = arith.constant 8 : index
    %c0_29 = arith.constant 0 : index
    %31 = vector.load %arg1[%c0_28, %c8, %c0_29] : memref<1x36x128xbf16, #tpu.memory_space<vmem>>, vector<1x22x128xbf16>
    %32 = vector.shape_cast %31 : vector<1x22x128xbf16> to vector<22x128xbf16>
    %c5 = arith.constant 5 : index
    %c0_30 = arith.constant 0 : index
    %c0_31 = arith.constant 0 : index
    %33 = vector.load %arg2[%c5, %c0_30, %c0_31] : memref<9x128x128xbf16, #tpu.memory_space<vmem>>, vector<1x128x128xbf16>
    %34 = vector.shape_cast %33 : vector<1x128x128xbf16> to vector<128x128xbf16>
    %cst_32 = arith.constant dense<0.000000e+00> : vector<22x128xf32>
    %35 = tpu.matmul %32, %34, %cst_32 {dimension_numbers = #tpu.dot_dimension_numbers<[1], [0], [0], [1], [0, 0, 1, 1], [], []>} : vector<22x128xbf16>, vector<128x128xbf16>, vector<22x128xf32> -> vector<22x128xf32>
    %36 = arith.addf %30, %35 : vector<22x128xf32>
    %c0_33 = arith.constant 0 : index
    %c12 = arith.constant 12 : index
    %c0_34 = arith.constant 0 : index
    %37 = vector.load %arg1[%c0_33, %c12, %c0_34] : memref<1x36x128xbf16, #tpu.memory_space<vmem>>, vector<1x22x128xbf16>
    %38 = vector.shape_cast %37 : vector<1x22x128xbf16> to vector<22x128xbf16>
    %c6_35 = arith.constant 6 : index
    %c0_36 = arith.constant 0 : index
    %c0_37 = arith.constant 0 : index
    %39 = vector.load %arg2[%c6_35, %c0_36, %c0_37] : memref<9x128x128xbf16, #tpu.memory_space<vmem>>, vector<1x128x128xbf16>
    %40 = vector.shape_cast %39 : vector<1x128x128xbf16> to vector<128x128xbf16>
    %cst_38 = arith.constant dense<0.000000e+00> : vector<22x128xf32>
    %41 = tpu.matmul %38, %40, %cst_38 {dimension_numbers = #tpu.dot_dimension_numbers<[1], [0], [0], [1], [0, 0, 1, 1], [], []>} : vector<22x128xbf16>, vector<128x128xbf16>, vector<22x128xf32> -> vector<22x128xf32>
    %42 = arith.addf %36, %41 : vector<22x128xf32>
    %c0_39 = arith.constant 0 : index
    %c13 = arith.constant 13 : index
    %c0_40 = arith.constant 0 : index
    %43 = vector.load %arg1[%c0_39, %c13, %c0_40] : memref<1x36x128xbf16, #tpu.memory_space<vmem>>, vector<1x22x128xbf16>
    %44 = vector.shape_cast %43 : vector<1x22x128xbf16> to vector<22x128xbf16>
    %c7_41 = arith.constant 7 : index
    %c0_42 = arith.constant 0 : index
    %c0_43 = arith.constant 0 : index
    %45 = vector.load %arg2[%c7_41, %c0_42, %c0_43] : memref<9x128x128xbf16, #tpu.memory_space<vmem>>, vector<1x128x128xbf16>
    %46 = vector.shape_cast %45 : vector<1x128x128xbf16> to vector<128x128xbf16>
    %cst_44 = arith.constant dense<0.000000e+00> : vector<22x128xf32>
    %47 = tpu.matmul %44, %46, %cst_44 {dimension_numbers = #tpu.dot_dimension_numbers<[1], [0], [0], [1], [0, 0, 1, 1], [], []>} : vector<22x128xbf16>, vector<128x128xbf16>, vector<22x128xf32> -> vector<22x128xf32>
    %48 = arith.addf %42, %47 : vector<22x128xf32>
    %c0_45 = arith.constant 0 : index
    %c14 = arith.constant 14 : index
    %c0_46 = arith.constant 0 : index
    %49 = vector.load %arg1[%c0_45, %c14, %c0_46] : memref<1x36x128xbf16, #tpu.memory_space<vmem>>, vector<1x22x128xbf16>
    %50 = vector.shape_cast %49 : vector<1x22x128xbf16> to vector<22x128xbf16>
    %c8_47 = arith.constant 8 : index
    %c0_48 = arith.constant 0 : index
    %c0_49 = arith.constant 0 : index
    %51 = vector.load %arg2[%c8_47, %c0_48, %c0_49] : memref<9x128x128xbf16, #tpu.memory_space<vmem>>, vector<1x128x128xbf16>
    %52 = vector.shape_cast %51 : vector<1x128x128xbf16> to vector<128x128xbf16>
    %cst_50 = arith.constant dense<0.000000e+00> : vector<22x128xf32>
    %53 = tpu.matmul %50, %52, %cst_50 {dimension_numbers = #tpu.dot_dimension_numbers<[1], [0], [0], [1], [0, 0, 1, 1], [], []>} : vector<22x128xbf16>, vector<128x128xbf16>, vector<22x128xf32> -> vector<22x128xf32>
    %54 = arith.addf %48, %53 : vector<22x128xf32>
    %c0_51 = arith.constant 0 : index
    %c0_52 = arith.constant 0 : index
    %55 = vector.load %arg3[%c0_51, %c0_52] : memref<1x128xf32, #tpu.memory_space<vmem>>, vector<1x128xf32>
    %56 = vector.broadcast %55 : vector<1x128xf32> to vector<22x128xf32>
    %57 = arith.addf %54, %56 : vector<22x128xf32>
    %cst_53 = arith.constant 0.000000e+00 : f32
    %58 = vector.broadcast %cst_53 : f32 to vector<22x128xf32>
    %59 = arith.maximumf %57, %58 : vector<22x128xf32>
    %60 = vector.extract_strided_slice %59 {offsets = [0, 0], sizes = [16, 128], strides = [1, 1]} : vector<22x128xf32> to vector<16x128xf32>
    %61 = vector.extract_strided_slice %59 {offsets = [6, 0], sizes = [16, 128], strides = [1, 1]} : vector<22x128xf32> to vector<16x128xf32>
    %62 = arith.maximumf %60, %61 : vector<16x128xf32>
    %63 = arith.truncf %62 : vector<16x128xf32> to vector<16x128xbf16>
    %c0_54 = arith.constant 0 : index
    %c0_55 = arith.constant 0 : index
    %c0_56 = arith.constant 0 : index
    %64 = vector.load %arg4[%c0_54, %c0_55, %c0_56] : memref<2x4x16xbf16, #tpu.memory_space<vmem>>, vector<1x4x16xbf16>
    %65 = vector.shape_cast %64 : vector<1x4x16xbf16> to vector<4x16xbf16>
    %cst_57 = arith.constant dense<0.000000e+00> : vector<4x128xf32>
    %66 = tpu.matmul %65, %63, %cst_57 {dimension_numbers = #tpu.dot_dimension_numbers<[1], [0], [0], [1], [0, 0, 1, 1], [], []>} : vector<4x16xbf16>, vector<16x128xbf16>, vector<4x128xf32> -> vector<4x128xf32>
    %c1_58 = arith.constant 1 : index
    %c0_59 = arith.constant 0 : index
    %c0_60 = arith.constant 0 : index
    %67 = vector.load %arg4[%c1_58, %c0_59, %c0_60] : memref<2x4x16xbf16, #tpu.memory_space<vmem>>, vector<1x4x16xbf16>
    %68 = vector.shape_cast %67 : vector<1x4x16xbf16> to vector<4x16xbf16>
    %cst_61 = arith.constant dense<0.000000e+00> : vector<4x128xf32>
    %69 = tpu.matmul %68, %63, %cst_61 {dimension_numbers = #tpu.dot_dimension_numbers<[1], [0], [0], [1], [0, 0, 1, 1], [], []>} : vector<4x16xbf16>, vector<16x128xbf16>, vector<4x128xf32> -> vector<4x128xf32>
    %70 = arith.maximumf %66, %69 : vector<4x128xf32>
    %71 = arith.truncf %70 : vector<4x128xf32> to vector<4x128xbf16>
    %c0_62 = arith.constant 0 : index
    %c0_63 = arith.constant 0 : index
    %c0_64 = arith.constant 0 : index
    %72 = vector.load %arg5[%c0_62, %c0_63, %c0_64] : memref<1x4x128xbf16, #tpu.memory_space<vmem>>, vector<1x4x128xbf16>
    %73 = vector.shape_cast %72 : vector<1x4x128xbf16> to vector<4x128xbf16>
    %74 = vector.shape_cast %71 : vector<4x128xbf16> to vector<1x4x128xbf16>
    tpu.vector_store %arg5[%c0_62, %c0_63, %c0_64], %74 {strides = array<i32>} : memref<1x4x128xbf16, #tpu.memory_space<vmem>>, vector<1x4x128xbf16>,
    return
  }
  func.func @transform_0(%arg0: i32) -> (i32, i32, i32) {
    %c0_i32 = arith.constant 0 : i32
    %c0_i32_0 = arith.constant 0 : i32
    %c0_i32_1 = arith.constant 0 : i32
    return %arg0, %c0_i32, %c0_i32_0 : i32, i32, i32
  }
  func.func @transform_1(%arg0: i32) -> (i32, i32, i32) {
    %c0_i32 = arith.constant 0 : i32
    %c0_i32_0 = arith.constant 0 : i32
    %c0_i32_1 = arith.constant 0 : i32
    %c0_i32_2 = arith.constant 0 : i32
    return %c0_i32, %c0_i32_0, %c0_i32_1 : i32, i32, i32
  }
  func.func @transform_2(%arg0: i32) -> (i32, i32) {
    %c0_i32 = arith.constant 0 : i32
    %c0_i32_0 = arith.constant 0 : i32
    %c0_i32_1 = arith.constant 0 : i32
    return %c0_i32, %c0_i32_0 : i32, i32
  }
  func.func @transform_3(%arg0: i32) -> (i32, i32, i32) {
    %c0_i32 = arith.constant 0 : i32
    %c0_i32_0 = arith.constant 0 : i32
    %c0_i32_1 = arith.constant 0 : i32
    %c0_i32_2 = arith.constant 0 : i32
    return %c0_i32, %c0_i32_0, %c0_i32_1 : i32, i32, i32
  }
  func.func @transform_4(%arg0: i32) -> (i32, i32, i32) {
    %c0_i32 = arith.constant 0 : i32
    %c0_i32_0 = arith.constant 0 : i32
    %c0_i32_1 = arith.constant 0 : i32
    return %arg0, %c0_i32, %c0_i32_0 : i32, i32, i32
  }
}

module attributes {stable_mosaic.version = 11 : i64} {
  func.func @_linear_kernel(%arg0: i32, %arg1: i32, %arg2: i32, %arg3: memref<8x512xbf16, #tpu.memory_space<vmem>>, %arg4: memref<512x128xbf16, #tpu.memory_space<vmem>>, %arg5: memref<1x128xf32, #tpu.memory_space<vmem>>, %arg6: memref<8x128xf32, #tpu.memory_space<vmem>>, %arg7: memref<8x128xf32, #tpu.memory_space<vmem>>) attributes {dimension_semantics = [#tpu.dimension_semantics<parallel>, #tpu.dimension_semantics<parallel>, #tpu.dimension_semantics<arbitrary>], iteration_bounds = array<i64: 1, 1, 1>, scalar_prefetch = 0 : i64, scratch_operands = 1 : i64, tpu.core_type = #tpu.core_type<tc>, window_params = [{transform_indices = @transform_0, window_bounds = array<i64: 8, 512>}, {transform_indices = @transform_1, window_bounds = array<i64: 512, 128>}, {transform_indices = @transform_2, window_bounds = array<i64: 1, 128>}, {transform_indices = @transform_3, window_bounds = array<i64: 8, 128>}]} {
    %c0_i32 = arith.constant 0 : i32
    %0 = arith.cmpi eq, %arg2, %c0_i32 : i32
    %1 = arith.extui %0 : i1 to i32
    %c0_i32_0 = arith.constant 0 : i32
    %2 = arith.cmpi ne, %1, %c0_i32_0 : i32
    scf.if %2 {
      %cst_10 = arith.constant 0.000000e+00 : f32
      %12 = vector.broadcast %cst_10 : f32 to vector<8x128xf32>
      %c0_11 = arith.constant 0 : index
      %c0_12 = arith.constant 0 : index
      %13 = vector.load %arg5[%c0_11, %c0_12] : memref<1x128xf32, #tpu.memory_space<vmem>>, vector<1x128xf32>
      %14 = vector.broadcast %13 : vector<1x128xf32> to vector<8x128xf32>
      %15 = arith.addf %12, %14 : vector<8x128xf32>
      %c0_13 = arith.constant 0 : index
      %c0_14 = arith.constant 0 : index
      %16 = vector.load %arg7[%c0_13, %c0_14] : memref<8x128xf32, #tpu.memory_space<vmem>>, vector<8x128xf32>
      tpu.vector_store %arg7[%c0_13, %c0_14], %15 {strides = array<i32>} : memref<8x128xf32, #tpu.memory_space<vmem>>, vector<8x128xf32>,
    } else {
    }
    %c0 = arith.constant 0 : index
    %c0_1 = arith.constant 0 : index
    %3 = vector.load %arg7[%c0, %c0_1] : memref<8x128xf32, #tpu.memory_space<vmem>>, vector<8x128xf32>
    %c0_2 = arith.constant 0 : index
    %c0_3 = arith.constant 0 : index
    %4 = vector.load %arg3[%c0_2, %c0_3] : memref<8x512xbf16, #tpu.memory_space<vmem>>, vector<8x512xbf16>
    %c0_4 = arith.constant 0 : index
    %c0_5 = arith.constant 0 : index
    %5 = vector.load %arg4[%c0_4, %c0_5] : memref<512x128xbf16, #tpu.memory_space<vmem>>, vector<512x128xbf16>
    %cst = arith.constant dense<0.000000e+00> : vector<8x128xf32>
    %6 = tpu.matmul %4, %5, %cst {dimension_numbers = #tpu.dot_dimension_numbers<[1], [0], [0], [1], [0, 0, 1, 1], [], []>} : vector<8x512xbf16>, vector<512x128xbf16>, vector<8x128xf32> -> vector<8x128xf32>
    %7 = arith.addf %3, %6 : vector<8x128xf32>
    %c0_6 = arith.constant 0 : index
    %c0_7 = arith.constant 0 : index
    %8 = vector.load %arg7[%c0_6, %c0_7] : memref<8x128xf32, #tpu.memory_space<vmem>>, vector<8x128xf32>
    tpu.vector_store %arg7[%c0_6, %c0_7], %7 {strides = array<i32>} : memref<8x128xf32, #tpu.memory_space<vmem>>, vector<8x128xf32>,
    %c0_i32_8 = arith.constant 0 : i32
    %9 = arith.cmpi eq, %arg2, %c0_i32_8 : i32
    %10 = arith.extui %9 : i1 to i32
    %c0_i32_9 = arith.constant 0 : i32
    %11 = arith.cmpi ne, %10, %c0_i32_9 : i32
    scf.if %11 {
      %c0_10 = arith.constant 0 : index
      %c0_11 = arith.constant 0 : index
      %12 = vector.load %arg7[%c0_10, %c0_11] : memref<8x128xf32, #tpu.memory_space<vmem>>, vector<8x128xf32>
      %cst_12 = arith.constant 0.000000e+00 : f32
      %13 = vector.broadcast %cst_12 : f32 to vector<8x128xf32>
      %14 = arith.maximumf %12, %13 : vector<8x128xf32>
      %c0_13 = arith.constant 0 : index
      %c0_14 = arith.constant 0 : index
      %15 = vector.load %arg6[%c0_13, %c0_14] : memref<8x128xf32, #tpu.memory_space<vmem>>, vector<8x128xf32>
      tpu.vector_store %arg6[%c0_13, %c0_14], %14 {strides = array<i32>} : memref<8x128xf32, #tpu.memory_space<vmem>>, vector<8x128xf32>,
    } else {
    }
    return
  }
  func.func @transform_0(%arg0: i32, %arg1: i32, %arg2: i32) -> (i32, i32) {
    %c0_i32 = arith.constant 0 : i32
    return %arg0, %arg2 : i32, i32
  }
  func.func @transform_1(%arg0: i32, %arg1: i32, %arg2: i32) -> (i32, i32) {
    %c0_i32 = arith.constant 0 : i32
    return %arg2, %arg1 : i32, i32
  }
  func.func @transform_2(%arg0: i32, %arg1: i32, %arg2: i32) -> (i32, i32) {
    %c0_i32 = arith.constant 0 : i32
    %c0_i32_0 = arith.constant 0 : i32
    return %c0_i32, %arg1 : i32, i32
  }
  func.func @transform_3(%arg0: i32, %arg1: i32, %arg2: i32) -> (i32, i32) {
    %c0_i32 = arith.constant 0 : i32
    return %arg0, %arg1 : i32, i32
  }
}

module attributes {stable_mosaic.version = 11 : i64} {
  func.func @_shift_cancel_kernel(%arg0: i32, %arg1: memref<1x4x128xf32, #tpu.memory_space<vmem>>, %arg2: memref<1x4x128xf32, #tpu.memory_space<vmem>>) attributes {dimension_semantics = [#tpu.dimension_semantics<parallel>], iteration_bounds = array<i64: 2>, scalar_prefetch = 0 : i64, scratch_operands = 0 : i64, tpu.core_type = #tpu.core_type<tc>, window_params = [{transform_indices = @transform_0, window_bounds = array<i64: 1, 4, 128>}, {transform_indices = @transform_1, window_bounds = array<i64: 1, 4, 128>}]} {
    %c0 = arith.constant 0 : index
    %c1 = arith.constant 1 : index
    %c0_0 = arith.constant 0 : index
    %0 = vector.load %arg1[%c0, %c1, %c0_0] : memref<1x4x128xf32, #tpu.memory_space<vmem>>, vector<1x3x128xf32>
    %1 = vector.shape_cast %0 : vector<1x3x128xf32> to vector<3x128xf32>
    %c0_1 = arith.constant 0 : index
    %c0_2 = arith.constant 0 : index
    %c0_3 = arith.constant 0 : index
    %2 = vector.load %arg1[%c0_1, %c0_2, %c0_3] : memref<1x4x128xf32, #tpu.memory_space<vmem>>, vector<1x3x128xf32>
    %3 = vector.shape_cast %2 : vector<1x3x128xf32> to vector<3x128xf32>
    %4 = arith.subf %1, %3 : vector<3x128xf32>
    %c0_4 = arith.constant 0 : index
    %c0_5 = arith.constant 0 : index
    %c0_6 = arith.constant 0 : index
    %5 = vector.load %arg2[%c0_4, %c0_5, %c0_6] : memref<1x4x128xf32, #tpu.memory_space<vmem>>, vector<1x3x128xf32>
    %6 = vector.shape_cast %5 : vector<1x3x128xf32> to vector<3x128xf32>
    %7 = vector.shape_cast %4 : vector<3x128xf32> to vector<1x3x128xf32>
    tpu.vector_store %arg2[%c0_4, %c0_5, %c0_6], %7 {strides = array<i32>} : memref<1x4x128xf32, #tpu.memory_space<vmem>>, vector<1x3x128xf32>,
    %c0_7 = arith.constant 0 : index
    %c3 = arith.constant 3 : index
    %c0_8 = arith.constant 0 : index
    %8 = vector.load %arg1[%c0_7, %c3, %c0_8] : memref<1x4x128xf32, #tpu.memory_space<vmem>>, vector<1x1x128xf32>
    %9 = vector.shape_cast %8 : vector<1x1x128xf32> to vector<1x128xf32>
    %cst = arith.constant 0.000000e+00 : f32
    %10 = vector.broadcast %cst : f32 to vector<1x128xf32>
    %11 = arith.subf %10, %9 : vector<1x128xf32>
    %c0_9 = arith.constant 0 : index
    %c3_10 = arith.constant 3 : index
    %c0_11 = arith.constant 0 : index
    %12 = vector.load %arg2[%c0_9, %c3_10, %c0_11] : memref<1x4x128xf32, #tpu.memory_space<vmem>>, vector<1x1x128xf32>
    %13 = vector.shape_cast %12 : vector<1x1x128xf32> to vector<1x128xf32>
    %14 = vector.shape_cast %11 : vector<1x128xf32> to vector<1x1x128xf32>
    tpu.vector_store %arg2[%c0_9, %c3_10, %c0_11], %14 {strides = array<i32>} : memref<1x4x128xf32, #tpu.memory_space<vmem>>, vector<1x1x128xf32>,
    return
  }
  func.func @transform_0(%arg0: i32) -> (i32, i32, i32) {
    %c0_i32 = arith.constant 0 : i32
    %c0_i32_0 = arith.constant 0 : i32
    %c0_i32_1 = arith.constant 0 : i32
    return %arg0, %c0_i32, %c0_i32_0 : i32, i32, i32
  }
  func.func @transform_1(%arg0: i32) -> (i32, i32, i32) {
    %c0_i32 = arith.constant 0 : i32
    %c0_i32_0 = arith.constant 0 : i32
    %c0_i32_1 = arith.constant 0 : i32
    return %arg0, %c0_i32, %c0_i32_0 : i32, i32, i32
  }
}

module attributes {stable_mosaic.version = 11 : i64} {
  func.func @_gamma_phi_kernel(%arg0: i32, %arg1: memref<1x4x128xf32, #tpu.memory_space<vmem>>, %arg2: memref<1x4x128xf32, #tpu.memory_space<vmem>>, %arg3: memref<1x128xf32, #tpu.memory_space<vmem>>, %arg4: memref<1x1xf32, #tpu.memory_space<vmem>>, %arg5: memref<1x1x128xf32, #tpu.memory_space<vmem>>, %arg6: memref<1x4x128xf32, #tpu.memory_space<vmem>>) attributes {dimension_semantics = [#tpu.dimension_semantics<parallel>], iteration_bounds = array<i64: 2>, scalar_prefetch = 0 : i64, scratch_operands = 0 : i64, tpu.core_type = #tpu.core_type<tc>, window_params = [{transform_indices = @transform_0, window_bounds = array<i64: 1, 4, 128>}, {transform_indices = @transform_1, window_bounds = array<i64: 1, 4, 128>}, {pipeline_mode = #tpu.pipeline_mode<synchronous>, transform_indices = @transform_2, window_bounds = array<i64: 1, 128>}, {pipeline_mode = #tpu.pipeline_mode<synchronous>, transform_indices = @transform_3, window_bounds = array<i64: 1, 1>}, {transform_indices = @transform_4, window_bounds = array<i64: 1, 1, 128>}, {transform_indices = @transform_5, window_bounds = array<i64: 1, 4, 128>}]} {
    %c0 = arith.constant 0 : index
    %c0_0 = arith.constant 0 : index
    %c0_1 = arith.constant 0 : index
    %0 = vector.load %arg1[%c0, %c0_0, %c0_1] : memref<1x4x128xf32, #tpu.memory_space<vmem>>, vector<1x4x128xf32>
    %1 = vector.shape_cast %0 : vector<1x4x128xf32> to vector<4x128xf32>
    %c0_2 = arith.constant 0 : index
    %c0_3 = arith.constant 0 : index
    %c0_4 = arith.constant 0 : index
    %2 = vector.load %arg2[%c0_2, %c0_3, %c0_4] : memref<1x4x128xf32, #tpu.memory_space<vmem>>, vector<1x4x128xf32>
    %3 = vector.shape_cast %2 : vector<1x4x128xf32> to vector<4x128xf32>
    %c0_5 = arith.constant 0 : index
    %c0_6 = arith.constant 0 : index
    %4 = vector.load %arg3[%c0_5, %c0_6] : memref<1x128xf32, #tpu.memory_space<vmem>>, vector<1x128xf32>
    %5 = vector.broadcast %4 : vector<1x128xf32> to vector<4x128xf32>
    %6 = arith.mulf %3, %5 : vector<4x128xf32>
    %cst = arith.constant dense<0.000000e+00> : vector<4xf32>
    %7 = vector.multi_reduction <add>, %6, %cst [1] : vector<4x128xf32> to vector<4xf32>
    %8 = vector.shape_cast %7 : vector<4xf32> to vector<4x1xf32>
    %c0_7 = arith.constant 0 : index
    %c0_8 = arith.constant 0 : index
    %9 = vector.load %arg4[%c0_7, %c0_8] : memref<1x1xf32, #tpu.memory_space<vmem>>, vector<1x1xf32>
    %10 = vector.broadcast %9 : vector<1x1xf32> to vector<4x1xf32>
    %11 = arith.addf %8, %10 : vector<4x1xf32>
    %cst_9 = arith.constant 0.000000e+00 : f32
    %12 = vector.broadcast %cst_9 : f32 to vector<4x1xf32>
    %13 = arith.maximumf %11, %12 : vector<4x1xf32>
    %14 = vector.broadcast %13 : vector<4x1xf32> to vector<4x128xf32>
    %15 = arith.mulf %1, %14 : vector<4x128xf32>
    %cst_10 = arith.constant dense<0.000000e+00> : vector<128xf32>
    %16 = vector.multi_reduction <add>, %15, %cst_10 [0] : vector<4x128xf32> to vector<128xf32>
    %17 = vector.shape_cast %16 : vector<128xf32> to vector<1x128xf32>
    %c0_11 = arith.constant 0 : index
    %c0_12 = arith.constant 0 : index
    %c0_13 = arith.constant 0 : index
    %18 = vector.load %arg5[%c0_11, %c0_12, %c0_13] : memref<1x1x128xf32, #tpu.memory_space<vmem>>, vector<1x1x128xf32>
    %19 = vector.shape_cast %18 : vector<1x1x128xf32> to vector<1x128xf32>
    %20 = vector.shape_cast %17 : vector<1x128xf32> to vector<1x1x128xf32>
    tpu.vector_store %arg5[%c0_11, %c0_12, %c0_13], %20 {strides = array<i32>} : memref<1x1x128xf32, #tpu.memory_space<vmem>>, vector<1x1x128xf32>,
    %21 = vector.shape_cast %13 : vector<4x1xf32> to vector<4x1xf32>
    %22 = vector.broadcast %21 : vector<4x1xf32> to vector<4x128xf32>
    %c0_14 = arith.constant 0 : index
    %c0_15 = arith.constant 0 : index
    %c0_16 = arith.constant 0 : index
    %23 = vector.load %arg6[%c0_14, %c0_15, %c0_16] : memref<1x4x128xf32, #tpu.memory_space<vmem>>, vector<1x4x128xf32>
    %24 = vector.shape_cast %23 : vector<1x4x128xf32> to vector<4x128xf32>
    %25 = vector.shape_cast %22 : vector<4x128xf32> to vector<1x4x128xf32>
    tpu.vector_store %arg6[%c0_14, %c0_15, %c0_16], %25 {strides = array<i32>} : memref<1x4x128xf32, #tpu.memory_space<vmem>>, vector<1x4x128xf32>,
    return
  }
  func.func @transform_0(%arg0: i32) -> (i32, i32, i32) {
    %c0_i32 = arith.constant 0 : i32
    %c0_i32_0 = arith.constant 0 : i32
    %c0_i32_1 = arith.constant 0 : i32
    return %arg0, %c0_i32, %c0_i32_0 : i32, i32, i32
  }
  func.func @transform_1(%arg0: i32) -> (i32, i32, i32) {
    %c0_i32 = arith.constant 0 : i32
    %c0_i32_0 = arith.constant 0 : i32
    %c0_i32_1 = arith.constant 0 : i32
    return %arg0, %c0_i32, %c0_i32_0 : i32, i32, i32
  }
  func.func @transform_2(%arg0: i32) -> (i32, i32) {
    %c0_i32 = arith.constant 0 : i32
    %c0_i32_0 = arith.constant 0 : i32
    %c0_i32_1 = arith.constant 0 : i32
    return %c0_i32, %c0_i32_0 : i32, i32
  }
  func.func @transform_3(%arg0: i32) -> (i32, i32) {
    %c0_i32 = arith.constant 0 : i32
    %c0_i32_0 = arith.constant 0 : i32
    %c0_i32_1 = arith.constant 0 : i32
    return %c0_i32, %c0_i32_0 : i32, i32
  }
  func.func @transform_4(%arg0: i32) -> (i32, i32, i32) {
    %c0_i32 = arith.constant 0 : i32
    %c0_i32_0 = arith.constant 0 : i32
    %c0_i32_1 = arith.constant 0 : i32
    return %arg0, %c0_i32, %c0_i32_0 : i32, i32, i32
  }
  func.func @transform_5(%arg0: i32) -> (i32, i32, i32) {
    %c0_i32 = arith.constant 0 : i32
    %c0_i32_0 = arith.constant 0 : i32
    %c0_i32_1 = arith.constant 0 : i32
    return %arg0, %c0_i32, %c0_i32_0 : i32, i32, i32
  }
}

module attributes {stable_mosaic.version = 11 : i64} {
  func.func @_linear_kernel(%arg0: i32, %arg1: i32, %arg2: i32, %arg3: memref<8x128xbf16, #tpu.memory_space<vmem>>, %arg4: memref<128x128xbf16, #tpu.memory_space<vmem>>, %arg5: memref<1x128xf32, #tpu.memory_space<vmem>>, %arg6: memref<8x128xf32, #tpu.memory_space<vmem>>, %arg7: memref<8x128xf32, #tpu.memory_space<vmem>>) attributes {dimension_semantics = [#tpu.dimension_semantics<parallel>, #tpu.dimension_semantics<parallel>, #tpu.dimension_semantics<arbitrary>], iteration_bounds = array<i64: 1, 1, 1>, scalar_prefetch = 0 : i64, scratch_operands = 1 : i64, tpu.core_type = #tpu.core_type<tc>, window_params = [{transform_indices = @transform_0, window_bounds = array<i64: 8, 128>}, {transform_indices = @transform_1, window_bounds = array<i64: 128, 128>}, {transform_indices = @transform_2, window_bounds = array<i64: 1, 128>}, {transform_indices = @transform_3, window_bounds = array<i64: 8, 128>}]} {
    %c0_i32 = arith.constant 0 : i32
    %0 = arith.cmpi eq, %arg2, %c0_i32 : i32
    %1 = arith.extui %0 : i1 to i32
    %c0_i32_0 = arith.constant 0 : i32
    %2 = arith.cmpi ne, %1, %c0_i32_0 : i32
    scf.if %2 {
      %cst_10 = arith.constant 0.000000e+00 : f32
      %12 = vector.broadcast %cst_10 : f32 to vector<8x128xf32>
      %c0_11 = arith.constant 0 : index
      %c0_12 = arith.constant 0 : index
      %13 = vector.load %arg5[%c0_11, %c0_12] : memref<1x128xf32, #tpu.memory_space<vmem>>, vector<1x128xf32>
      %14 = vector.broadcast %13 : vector<1x128xf32> to vector<8x128xf32>
      %15 = arith.addf %12, %14 : vector<8x128xf32>
      %c0_13 = arith.constant 0 : index
      %c0_14 = arith.constant 0 : index
      %16 = vector.load %arg7[%c0_13, %c0_14] : memref<8x128xf32, #tpu.memory_space<vmem>>, vector<8x128xf32>
      tpu.vector_store %arg7[%c0_13, %c0_14], %15 {strides = array<i32>} : memref<8x128xf32, #tpu.memory_space<vmem>>, vector<8x128xf32>,
    } else {
    }
    %c0 = arith.constant 0 : index
    %c0_1 = arith.constant 0 : index
    %3 = vector.load %arg7[%c0, %c0_1] : memref<8x128xf32, #tpu.memory_space<vmem>>, vector<8x128xf32>
    %c0_2 = arith.constant 0 : index
    %c0_3 = arith.constant 0 : index
    %4 = vector.load %arg3[%c0_2, %c0_3] : memref<8x128xbf16, #tpu.memory_space<vmem>>, vector<8x128xbf16>
    %c0_4 = arith.constant 0 : index
    %c0_5 = arith.constant 0 : index
    %5 = vector.load %arg4[%c0_4, %c0_5] : memref<128x128xbf16, #tpu.memory_space<vmem>>, vector<128x128xbf16>
    %cst = arith.constant dense<0.000000e+00> : vector<8x128xf32>
    %6 = tpu.matmul %4, %5, %cst {dimension_numbers = #tpu.dot_dimension_numbers<[1], [0], [0], [1], [0, 0, 1, 1], [], []>} : vector<8x128xbf16>, vector<128x128xbf16>, vector<8x128xf32> -> vector<8x128xf32>
    %7 = arith.addf %3, %6 : vector<8x128xf32>
    %c0_6 = arith.constant 0 : index
    %c0_7 = arith.constant 0 : index
    %8 = vector.load %arg7[%c0_6, %c0_7] : memref<8x128xf32, #tpu.memory_space<vmem>>, vector<8x128xf32>
    tpu.vector_store %arg7[%c0_6, %c0_7], %7 {strides = array<i32>} : memref<8x128xf32, #tpu.memory_space<vmem>>, vector<8x128xf32>,
    %c0_i32_8 = arith.constant 0 : i32
    %9 = arith.cmpi eq, %arg2, %c0_i32_8 : i32
    %10 = arith.extui %9 : i1 to i32
    %c0_i32_9 = arith.constant 0 : i32
    %11 = arith.cmpi ne, %10, %c0_i32_9 : i32
    scf.if %11 {
      %c0_10 = arith.constant 0 : index
      %c0_11 = arith.constant 0 : index
      %12 = vector.load %arg7[%c0_10, %c0_11] : memref<8x128xf32, #tpu.memory_space<vmem>>, vector<8x128xf32>
      %cst_12 = arith.constant 0.000000e+00 : f32
      %13 = vector.broadcast %cst_12 : f32 to vector<8x128xf32>
      %14 = arith.maximumf %12, %13 : vector<8x128xf32>
      %c0_13 = arith.constant 0 : index
      %c0_14 = arith.constant 0 : index
      %15 = vector.load %arg6[%c0_13, %c0_14] : memref<8x128xf32, #tpu.memory_space<vmem>>, vector<8x128xf32>
      tpu.vector_store %arg6[%c0_13, %c0_14], %14 {strides = array<i32>} : memref<8x128xf32, #tpu.memory_space<vmem>>, vector<8x128xf32>,
    } else {
    }
    return
  }
  func.func @transform_0(%arg0: i32, %arg1: i32, %arg2: i32) -> (i32, i32) {
    %c0_i32 = arith.constant 0 : i32
    return %arg0, %arg2 : i32, i32
  }
  func.func @transform_1(%arg0: i32, %arg1: i32, %arg2: i32) -> (i32, i32) {
    %c0_i32 = arith.constant 0 : i32
    return %arg2, %arg1 : i32, i32
  }
  func.func @transform_2(%arg0: i32, %arg1: i32, %arg2: i32) -> (i32, i32) {
    %c0_i32 = arith.constant 0 : i32
    %c0_i32_0 = arith.constant 0 : i32
    return %c0_i32, %arg1 : i32, i32
  }
  func.func @transform_3(%arg0: i32, %arg1: i32, %arg2: i32) -> (i32, i32) {
    %c0_i32 = arith.constant 0 : i32
    return %arg0, %arg1 : i32, i32
  }
}

module attributes {stable_mosaic.version = 11 : i64} {
  func.func @_linear_kernel(%arg0: i32, %arg1: i32, %arg2: i32, %arg3: memref<8x128xbf16, #tpu.memory_space<vmem>>, %arg4: memref<128x128xbf16, #tpu.memory_space<vmem>>, %arg5: memref<1x128xf32, #tpu.memory_space<vmem>>, %arg6: memref<8x128xf32, #tpu.memory_space<vmem>>, %arg7: memref<8x128xf32, #tpu.memory_space<vmem>>) attributes {dimension_semantics = [#tpu.dimension_semantics<parallel>, #tpu.dimension_semantics<parallel>, #tpu.dimension_semantics<arbitrary>], iteration_bounds = array<i64: 1, 1, 1>, scalar_prefetch = 0 : i64, scratch_operands = 1 : i64, tpu.core_type = #tpu.core_type<tc>, window_params = [{transform_indices = @transform_0, window_bounds = array<i64: 8, 128>}, {transform_indices = @transform_1, window_bounds = array<i64: 128, 128>}, {transform_indices = @transform_2, window_bounds = array<i64: 1, 128>}, {transform_indices = @transform_3, window_bounds = array<i64: 8, 128>}]} {
    %c0_i32 = arith.constant 0 : i32
    %0 = arith.cmpi eq, %arg2, %c0_i32 : i32
    %1 = arith.extui %0 : i1 to i32
    %c0_i32_0 = arith.constant 0 : i32
    %2 = arith.cmpi ne, %1, %c0_i32_0 : i32
    scf.if %2 {
      %cst_10 = arith.constant 0.000000e+00 : f32
      %12 = vector.broadcast %cst_10 : f32 to vector<8x128xf32>
      %c0_11 = arith.constant 0 : index
      %c0_12 = arith.constant 0 : index
      %13 = vector.load %arg5[%c0_11, %c0_12] : memref<1x128xf32, #tpu.memory_space<vmem>>, vector<1x128xf32>
      %14 = vector.broadcast %13 : vector<1x128xf32> to vector<8x128xf32>
      %15 = arith.addf %12, %14 : vector<8x128xf32>
      %c0_13 = arith.constant 0 : index
      %c0_14 = arith.constant 0 : index
      %16 = vector.load %arg7[%c0_13, %c0_14] : memref<8x128xf32, #tpu.memory_space<vmem>>, vector<8x128xf32>
      tpu.vector_store %arg7[%c0_13, %c0_14], %15 {strides = array<i32>} : memref<8x128xf32, #tpu.memory_space<vmem>>, vector<8x128xf32>,
    } else {
    }
    %c0 = arith.constant 0 : index
    %c0_1 = arith.constant 0 : index
    %3 = vector.load %arg7[%c0, %c0_1] : memref<8x128xf32, #tpu.memory_space<vmem>>, vector<8x128xf32>
    %c0_2 = arith.constant 0 : index
    %c0_3 = arith.constant 0 : index
    %4 = vector.load %arg3[%c0_2, %c0_3] : memref<8x128xbf16, #tpu.memory_space<vmem>>, vector<8x128xbf16>
    %c0_4 = arith.constant 0 : index
    %c0_5 = arith.constant 0 : index
    %5 = vector.load %arg4[%c0_4, %c0_5] : memref<128x128xbf16, #tpu.memory_space<vmem>>, vector<128x128xbf16>
    %cst = arith.constant dense<0.000000e+00> : vector<8x128xf32>
    %6 = tpu.matmul %4, %5, %cst {dimension_numbers = #tpu.dot_dimension_numbers<[1], [0], [0], [1], [0, 0, 1, 1], [], []>} : vector<8x128xbf16>, vector<128x128xbf16>, vector<8x128xf32> -> vector<8x128xf32>
    %7 = arith.addf %3, %6 : vector<8x128xf32>
    %c0_6 = arith.constant 0 : index
    %c0_7 = arith.constant 0 : index
    %8 = vector.load %arg7[%c0_6, %c0_7] : memref<8x128xf32, #tpu.memory_space<vmem>>, vector<8x128xf32>
    tpu.vector_store %arg7[%c0_6, %c0_7], %7 {strides = array<i32>} : memref<8x128xf32, #tpu.memory_space<vmem>>, vector<8x128xf32>,
    %c0_i32_8 = arith.constant 0 : i32
    %9 = arith.cmpi eq, %arg2, %c0_i32_8 : i32
    %10 = arith.extui %9 : i1 to i32
    %c0_i32_9 = arith.constant 0 : i32
    %11 = arith.cmpi ne, %10, %c0_i32_9 : i32
    scf.if %11 {
      %c0_10 = arith.constant 0 : index
      %c0_11 = arith.constant 0 : index
      %12 = vector.load %arg7[%c0_10, %c0_11] : memref<8x128xf32, #tpu.memory_space<vmem>>, vector<8x128xf32>
      %c0_12 = arith.constant 0 : index
      %c0_13 = arith.constant 0 : index
      %13 = vector.load %arg6[%c0_12, %c0_13] : memref<8x128xf32, #tpu.memory_space<vmem>>, vector<8x128xf32>
      tpu.vector_store %arg6[%c0_12, %c0_13], %12 {strides = array<i32>} : memref<8x128xf32, #tpu.memory_space<vmem>>, vector<8x128xf32>,
    } else {
    }
    return
  }
  func.func @transform_0(%arg0: i32, %arg1: i32, %arg2: i32) -> (i32, i32) {
    %c0_i32 = arith.constant 0 : i32
    return %arg0, %arg2 : i32, i32
  }
  func.func @transform_1(%arg0: i32, %arg1: i32, %arg2: i32) -> (i32, i32) {
    %c0_i32 = arith.constant 0 : i32
    return %arg2, %arg1 : i32, i32
  }
  func.func @transform_2(%arg0: i32, %arg1: i32, %arg2: i32) -> (i32, i32) {
    %c0_i32 = arith.constant 0 : i32
    %c0_i32_0 = arith.constant 0 : i32
    return %c0_i32, %arg1 : i32, i32
  }
  func.func @transform_3(%arg0: i32, %arg1: i32, %arg2: i32) -> (i32, i32) {
    %c0_i32 = arith.constant 0 : i32
    return %arg0, %arg1 : i32, i32
  }
}

</mosaic_0001>

<llo_original>
// kernel: vgg_forward_pallas.11
$region0: #{vgg_forward_pallas.11}
  #allocation0 [shape = 'u32[]', space=smem, size = 0x4, offset = 0x4, fixed_abs, tag = 'smem constant byte address 0x4 - core index']
  #allocation1 [shape = 'u32[144,128]{1,0:T(1,128)}', space=vmem, size = 0x12000, scoped, tag = 'internal scratch']
  %s0 = inlined_call_operand.vmem [shape: bf16[8,36,128], index: 0, kind: input, shape index: {}]
  %s1 = inlined_call_operand.vmem [shape: bf16[9,128,128], index: 1, kind: input, shape index: {}]
  %s2 = inlined_call_operand.vmem [shape: f32[1,128], index: 2, kind: input, shape index: {}]
  %s3 = inlined_call_operand.vmem [shape: bf16[2,4,16], index: 3, kind: input, shape index: {}]
  %s4 = inlined_call_operand.vmem [shape: bf16[8,4,128], index: 4, kind: output, shape index: {}]
  %s5 = sld [smem:[#allocation0]]
  $region49: #{vgg_forward_pallas.11} parent=0
    _
  %s7 = ssub.s32 1, %s5
  %s8 = scalar_select 0, %s7, %s5
  loop: start=0, step=1, limit=10
  $region2: #{vgg_forward_pallas.11} parent=0 // loop_pre_header
    _
  $region3: #{vgg_forward_pallas.11} parent=0 // loop_header
    %s10 = sphi 0, %s14
    %p11 = scmp.ge.s32.totalorder %s10, 10
    %s20 = sphi 0, %s22
    %s23 = sphi 0, %s20
    %s24 = sphi 0, %s23
    %s40 = sphi 0, %s24
    %s44 = sphi 0, %s44
    %s46 = sphi 0, %s44
    %s47 = sphi 0, %s46
    %s61 = sphi 0, %s47
    %s65 = sphi 0, %s65
    %s67 = sphi 0, %s65
    %s68 = sphi 0, %s67
    %s82 = sphi 0, %s68
    %s86 = sphi 0, %s86
    %s88 = sphi 0, %s86
    %s89 = sphi 0, %s88
    %s103 = sphi 0, %s89
    %s109 = sphi 0, %s111
    %s112 = sphi 0, %s109
    %s113 = sphi 0, %s112
    %s129 = sphi 0, %s113
  $region4: #{vgg_forward_pallas.11} parent=0 // loop_header_branch
    %13 = sbr.rel (%p11) target = $region8
  $region5: #{vgg_forward_pallas.11} parent=0 // loop_body
    %s15 = ssub.s32 %s10, 1
    %s16 = ssub.s32 %s10, 2
    %s17 = sadd.s32 %s10, 1
    %s18 = ssub.s32 %s10, %s17
    %p19 = scmp.eq.s32.totalorder %s18, 0
    %s21 = sadd.s32 %s20, 1
    %s22 = scalar_select %p19, %s20, %s21
    %p25 = pneg %p19
    %p26 = scmp.eq.s32.totalorder %s10, 7
    %p27 = por %p25, %p26
    %p28 = scmp.ne.s32.totalorder %s20, %s23
    %p29 = scmp.eq.s32.totalorder %s10, 0
    %p30 = por %p28, %p29
    %p31 = scmp.ne.s32.totalorder %s20, %s23
    %p32 = scmp.eq.s32.totalorder %s15, 7
    %p33 = por %p31, %p32
    %p34 = scmp.ne.s32.totalorder %s23, %s24
    %p35 = scmp.eq.s32.totalorder %s15, 0
    %p36 = por %p34, %p35
    %p37 = scmp.ne.s32.totalorder %s23, %s24
    %p38 = scmp.eq.s32.totalorder %s16, 7
    %p39 = por %p37, %p38
    %p41 = scmp.ne.s32.totalorder %s24, %s40
    %p42 = scmp.eq.s32.totalorder %s16, 0
    %p43 = por %p41, %p42
    %s45 = sadd.s32 %s44, 1
    %p48 = scmp.eq.s32.totalorder %s10, 7
    %p49 = scmp.ne.s32.totalorder %s44, %s46
    %p50 = scmp.eq.s32.totalorder %s10, 0
    %p51 = por %p49, %p50
    %p52 = scmp.ne.s32.totalorder %s44, %s46
    %p53 = scmp.eq.s32.totalorder %s15, 7
    %p54 = por %p52, %p53
    %p55 = scmp.ne.s32.totalorder %s46, %s47
    %p56 = scmp.eq.s32.totalorder %s15, 0
    %p57 = por %p55, %p56
    %p58 = scmp.ne.s32.totalorder %s46, %s47
    %p59 = scmp.eq.s32.totalorder %s16, 7
    %p60 = por %p58, %p59
    %p62 = scmp.ne.s32.totalorder %s47, %s61
    %p63 = scmp.eq.s32.totalorder %s16, 0
    %p64 = por %p62, %p63
    %s66 = sadd.s32 %s65, 1
    %p69 = scmp.eq.s32.totalorder %s10, 7
    %p70 = scmp.ne.s32.totalorder %s65, %s67
    %p71 = scmp.eq.s32.totalorder %s10, 0
    %p72 = por %p70, %p71
    %p73 = scmp.ne.s32.totalorder %s65, %s67
    %p74 = scmp.eq.s32.totalorder %s15, 7
    %p75 = por %p73, %p74
    %p76 = scmp.ne.s32.totalorder %s67, %s68
    %p77 = scmp.eq.s32.totalorder %s15, 0
    %p78 = por %p76, %p77
    %p79 = scmp.ne.s32.totalorder %s67, %s68
    %p80 = scmp.eq.s32.totalorder %s16, 7
    %p81 = por %p79, %p80
    %p83 = scmp.ne.s32.totalorder %s68, %s82
    %p84 = scmp.eq.s32.totalorder %s16, 0
    %p85 = por %p83, %p84
    %s87 = sadd.s32 %s86, 1
    %p90 = scmp.eq.s32.totalorder %s10, 7
    %p91 = scmp.ne.s32.totalorder %s86, %s88
    %p92 = scmp.eq.s32.totalorder %s10, 0
    %p93 = por %p91, %p92
    %p94 = scmp.ne.s32.totalorder %s86, %s88
    %p95 = scmp.eq.s32.totalorder %s15, 7
    %p96 = por %p94, %p95
    %p97 = scmp.ne.s32.totalorder %s88, %s89
    %p98 = scmp.eq.s32.totalorder %s15, 0
    %p99 = por %p97, %p98
    %p100 = scmp.ne.s32.totalorder %s88, %s89
    %p101 = scmp.eq.s32.totalorder %s16, 7
    %p102 = por %p100, %p101
    %p104 = scmp.ne.s32.totalorder %s89, %s103
    %p105 = scmp.eq.s32.totalorder %s16, 0
    %p106 = por %p104, %p105
    %s107 = ssub.s32 %s10, %s17
    %p108 = scmp.eq.s32.totalorder %s107, 0
    %s110 = sadd.s32 %s109, 1
    %s111 = scalar_select %p108, %s109, %s110
    %p114 = pneg %p108
    %p115 = scmp.eq.s32.totalorder %s10, 7
    %p116 = por %p114, %p115
    %p117 = scmp.ne.s32.totalorder %s109, %s112
    %p118 = scmp.eq.s32.totalorder %s10, 0
    %p119 = por %p117, %p118
    %p120 = scmp.ne.s32.totalorder %s109, %s112
    %p121 = scmp.eq.s32.totalorder %s15, 7
    %p122 = por %p120, %p121
    %p123 = scmp.ne.s32.totalorder %s112, %s113
    %p124 = scmp.eq.s32.totalorder %s15, 0
    %p125 = por %p123, %p124
    %p126 = scmp.ne.s32.totalorder %s112, %s113
    %p127 = scmp.eq.s32.totalorder %s16, 7
    %p128 = por %p126, %p127
    %p130 = scmp.ne.s32.totalorder %s113, %s129
    %p131 = scmp.eq.s32.totalorder %s16, 0
    %p132 = por %p130, %p131
    %p133 = scmp.le.s32.totalorder 1, %s10
    %p134 = scmp.lt.s32.totalorder %s10, 9
    %p135 = pnand %p133, %p134
    %p136 = pneg %p135
    // Predicated region
    $region9: #{vgg_forward_pallas.11} parent=5 // pred_check
      _
    $region10: #{vgg_forward_pallas.11} parent=5 // pred_check_branch
      %138 = sbr.rel (%p135) target = $region12
    $region11: #{vgg_forward_pallas.11} parent=5 // pred_region
      %s139 = ssub.s32 %s10, 1
      // Predicated region
      $region13: #{vgg_forward_pallas.11} parent=11 // pred_check
        %p140 = pneg %p57
      $region14: #{vgg_forward_pallas.11} parent=11 // pred_check_branch
        %142 = sbr.rel (%p140) target = $region16
      $region15: #{vgg_forward_pallas.11} parent=11 // pred_region
        _
      $region16: #{vgg_forward_pallas.11} parent=11 // pred_fallthru
        _
      // Predicated region
      $region17: #{vgg_forward_pallas.11} parent=11 // pred_check
        %p143 = pneg %p78
      $region18: #{vgg_forward_pallas.11} parent=11 // pred_check_branch
        %145 = sbr.rel (%p143) target = $region20
      $region19: #{vgg_forward_pallas.11} parent=11 // pred_region
        _
      $region20: #{vgg_forward_pallas.11} parent=11 // pred_fallthru
        _
      // Predicated region
      $region21: #{vgg_forward_pallas.11} parent=11 // pred_check
        %p146 = pneg %p99
      $region22: #{vgg_forward_pallas.11} parent=11 // pred_check_branch
        %148 = sbr.rel (%p146) target = $region24
      $region23: #{vgg_forward_pallas.11} parent=11 // pred_region
        _
      $region24: #{vgg_forward_pallas.11} parent=11 // pred_fallthru
        _
    $region12: #{vgg_forward_pallas.11} parent=5 // pred_fallthru
      _
    %p149 = scmp.lt.s32.totalorder %s10, 8
    // Predicated region
    $region25: #{vgg_forward_pallas.11} parent=5 // pred_check
      %p150 = pneg %p149
    $region26: #{vgg_forward_pallas.11} parent=5 // pred_check_branch
      %152 = sbr.rel (%p150) target = $region28
    $region27: #{vgg_forward_pallas.11} parent=5 // pred_region
      // Predicated region
      $region29: #{vgg_forward_pallas.11} parent=27 // pred_check
        %p153 = pneg %p30
      $region30: #{vgg_forward_pallas.11} parent=27 // pred_check_branch
        %155 = sbr.rel (%p153) target = $region32
      $region31: #{vgg_forward_pallas.11} parent=27 // pred_region
        %p156 = scmp.lt.s32.totalorder %s10, 7
        %s157 = scalar_select %p156, %s10, 7
        %s158 = smul.addr %s157, 5
        %s159 = smul.addr %s158, 4
        %s160 = scalar_lea.vmem %s0, %s159
      $region32: #{vgg_forward_pallas.11} parent=27 // pred_fallthru
        _
    $region28: #{vgg_forward_pallas.11} parent=5 // pred_fallthru
      _
    %p161 = scmp.le.s32.totalorder 1, %s10
    %p162 = scmp.lt.s32.totalorder %s10, 9
    %p163 = pnand %p161, %p162
    %p164 = pneg %p163
    // Predicated region
    $region33: #{vgg_forward_pallas.11} parent=5 // pred_check
      _
    $region34: #{vgg_forward_pallas.11} parent=5 // pred_check_branch
      %166 = sbr.rel (%p163) target = $region36
    $region35: #{vgg_forward_pallas.11} parent=5 // pred_region
      %s167 = ssub.s32 %s10, 1
      %p168 = scmp.lt.s32.totalorder %s15, 7
      %s169 = scalar_select %p168, %s15, 7
      %s170 = smul.addr %s169, 5
      %s171 = smul.addr %s170, 4
      %s172 = scalar_lea.vmem %s0, %s171
      %p173 = pneg %p36
      %p174 = pneg %p33
      %p175 = pneg %p57
      %p176 = pneg %p54
      %p177 = pneg %p78
      %p178 = pneg %p75
      %p179 = pneg %p99
      %p180 = pneg %p96
      %p181 = pneg %p125
      %p182 = pneg %p122
      %p183 = scmp.lt.s32.totalorder %s15, 7
      %s184 = scalar_select %p183, %s15, 7
      %s185 = smul.addr %s184, 2
      %s186 = scalar_lea.vmem %s4, %s185
      %p187 = scmp.lt.s32.totalorder %s15, 7
      %s188 = scalar_select %p187, %s15, 7
      %s189 = smul.addr %s188, 5
      %s190 = smul.addr %s189, 4
      %s191 = scalar_lea.vmem %s0, %s190
      %p192 = scmp.lt.s32.totalorder %s15, 7
      %s193 = scalar_select %p192, %s15, 7
      %s194 = smul.addr %s193, 2
      %s195 = scalar_lea.vmem %s4, %s194
      %v197 = vld [vmem:[%s191] sm:$0xf]
      %v198 = vld [vmem:[%s191 + $0x4] sm:$0xf]
      %v199 = vld [vmem:[%s191 + $0x8] sm:$0x7]
      %v200 = vld [vmem:[%s1] sm:$0xf]
      %v201 = vld [vmem:[%s1 + $0x4] sm:$0xf]
      %v202 = vld [vmem:[%s1 + $0x8] sm:$0xf]
      %v203 = vld [vmem:[%s1 + $0xc] sm:$0xf]
      %v204 = vld [vmem:[%s1 + $0x10] sm:$0xf]
      %v205 = vld [vmem:[%s1 + $0x14] sm:$0xf]
      %v206 = vld [vmem:[%s1 + $0x18] sm:$0xf]
      %v207 = vld [vmem:[%s1 + $0x1c] sm:$0xf]
      %v208 = vld [vmem:[%s1 + $0x20] sm:$0xf]
      %v209 = vld [vmem:[%s1 + $0x24] sm:$0xf]
      %v210 = vld [vmem:[%s1 + $0x28] sm:$0xf]
      %v211 = vld [vmem:[%s1 + $0x2c] sm:$0xf]
      %v212 = vld [vmem:[%s1 + $0x30] sm:$0xf]
      %v213 = vld [vmem:[%s1 + $0x34] sm:$0xf]
      %v214 = vld [vmem:[%s1 + $0x38] sm:$0xf]
      %v215 = vld [vmem:[%s1 + $0x3c] sm:$0xf]
      %v216 = vld [vmem:[%s191 + $0x8] sm:$0xf]
      %s217 = scalar_lea.vmem %s1, 64
      %v218 = vld [vmem:[%s217] sm:$0xf]
      %v219 = vld [vmem:[%s217 + $0x4] sm:$0xf]
      %v220 = vld [vmem:[%s217 + $0x8] sm:$0xf]
      %v221 = vld [vmem:[%s217 + $0xc] sm:$0xf]
      %v222 = vld [vmem:[%s217 + $0x10] sm:$0xf]
      %v223 = vld [vmem:[%s217 + $0x14] sm:$0xf]
      %v224 = vld [vmem:[%s217 + $0x18] sm:$0xf]
      %v225 = vld [vmem:[%s217 + $0x1c] sm:$0xf]
      %v226 = vld [vmem:[%s217 + $0x20] sm:$0xf]
      %v227 = vld [vmem:[%s217 + $0x24] sm:$0xf]
      %v228 = vld [vmem:[%s217 + $0x28] sm:$0xf]
      %v229 = vld [vmem:[%s217 + $0x2c] sm:$0xf]
      %v230 = vld [vmem:[%s217 + $0x30] sm:$0xf]
      %v231 = vld [vmem:[%s217 + $0x34] sm:$0xf]
      %v232 = vld [vmem:[%s217 + $0x38] sm:$0xf]
      %v233 = vld [vmem:[%s217 + $0x3c] sm:$0xf]
      %v237 = vunpack.c.l.b16 %v197
      %v238 = vunpack.c.l.b16 %v198
      %v239 = vunpack.c.l.b16 %v216
      %v240 = vpack.c.b16 %v238, %v237
      %v241 = vpack.c.b16 %v239, %v239
      %vm242 = vsmask.f32 7424
      %v244 = vshrl.u32 %v240, 16
      %v246 = vshll.u32 %v240, 16
      %v248 = vrot.slane %v246, 1
      %v249 = vor.u32 %v244, %v248
      %v251 = vshll.u32 %v241, 16
      %v253 = vrot.slane %v251, 1
      %v254 = vsel %vm242, %v249, %v253
      %v255 = vshrl.u32 %v241, 16
      %v257 = vor.u32 %v255, %v253
      %v276 = vunpack.c.l.b16 %v218
      %v277 = vunpack.c.l.b16 %v219
      %v278 = vunpack.c.l.b16 %v220
      %v279 = vunpack.c.l.b16 %v221
      %v280 = vunpack.c.l.b16 %v222
      %v281 = vunpack.c.l.b16 %v223
      %v282 = vunpack.c.l.b16 %v224
      %v283 = vunpack.c.l.b16 %v225
      %v284 = vunpack.c.l.b16 %v226
      %v285 = vunpack.c.l.b16 %v227
      %v286 = vunpack.c.l.b16 %v228
      %v287 = vunpack.c.l.b16 %v229
      %v288 = vunpack.c.l.b16 %v230
      %v289 = vunpack.c.l.b16 %v231
      %v290 = vunpack.c.l.b16 %v232
      %v291 = vunpack.c.l.b16 %v233
      %v292 = vpack.c.b16 %v277, %v276
      %v293 = vpack.c.b16 %v279, %v278
      %v294 = vpack.c.b16 %v281, %v280
      %v295 = vpack.c.b16 %v283, %v282
      %v296 = vpack.c.b16 %v285, %v284
      %v297 = vpack.c.b16 %v287, %v286
      %v298 = vpack.c.b16 %v289, %v288
      %v299 = vpack.c.b16 %v291, %v290
      %308 = vmatprep.subr.bf16.mxu0 0
      %309 = vmatpush1.bf16.msra.mxu0 %v299
      %310 = vmatprep.subr.bf16.mxu0 0
      %311 = vmatpush1.bf16.msra.mxu0 %v298
      %312 = vmatprep.subr.bf16.mxu0 0
      %313 = vmatpush1.bf16.msra.mxu0 %v297
      %314 = vmatprep.subr.bf16.mxu0 0
      %315 = vmatpush1.bf16.msra.mxu0 %v296
      %316 = vmatprep.subr.bf16.mxu0 0
      %317 = vmatpush1.bf16.msra.mxu0 %v295
      %318 = vmatprep.subr.bf16.mxu0 0
      %319 = vmatpush1.bf16.msra.mxu0 %v294
      %320 = vmatprep.subr.bf16.mxu0 0
      %321 = vmatpush1.bf16.msra.mxu0 %v293
      %322 = vmatprep.subr.bf16.mxu0 0
      %323 = vmatpush1.bf16.msra.mxu0 %v292
      %324 = vmatprep.subr.bf16.mxu0 0
      %325 = vmatpush2.bf16.msra.mxu0 0
      %326 = vmatprep.subr.bf16.mxu0 0
      %327 = vmatpush2.bf16.msra.mxu0 0
      %328 = vmatprep.subr.bf16.mxu0 0
      %329 = vmatpush2.bf16.msra.mxu0 0
      %330 = vmatprep.subr.bf16.mxu0 0
      %331 = vmatpush2.bf16.msra.mxu0 0
      %332 = vmatprep.subr.bf16.mxu0 0
      %333 = vmatpush2.bf16.msra.mxu0 0
      %334 = vmatprep.subr.bf16.mxu0 0
      %335 = vmatpush2.bf16.msra.mxu0 0
      %336 = vmatprep.subr.bf16.mxu0 0
      %337 = vmatpush2.bf16.msra.mxu0 0
      %338 = vmatprep.subr.bf16.mxu0 0
      %339 = vmatpush2.bf16.msra.mxu0 0
      %340 = vmatprep.mubr.bf16.mxu0 0
      %341 = vmatmul.mubr.bf16.gmra.mxu0 %v254
      %v342 = vpop.f32.mrf.mxu0
      %v343 = vadd.f32 0.0, %v342
      %v344 = vpop.f32.mrf.mxu0
      %v345 = vpop.f32.mrf.mxu0
      %v346 = vadd.f32 0.0, %v345
      %v347 = vpop.f32.mrf.mxu0
      %348 = vmatprep.mubr.bf16.mxu0 0
      %349 = vmatmul.mubr.bf16.gmra.mxu0 %v257
      %v350 = vpop.f32.mrf.mxu0
      %v351 = vadd.f32 0.0, %v350
      %v352 = vpop.f32.mrf.mxu0
      %v353 = vpop.f32.mrf.mxu0
      %v354 = vpop.f32.mrf.mxu0
      %355 = vdwg.mxu0
      %v357 = vunpack.c.l.b16 %v199
      %v358 = vpack.c.b16 %v357, %v357
      %v377 = vunpack.c.l.b16 %v200
      %v378 = vunpack.c.l.b16 %v201
      %v379 = vunpack.c.l.b16 %v202
      %v380 = vunpack.c.l.b16 %v203
      %v381 = vunpack.c.l.b16 %v204
      %v382 = vunpack.c.l.b16 %v205
      %v383 = vunpack.c.l.b16 %v206
      %v384 = vunpack.c.l.b16 %v207
      %v385 = vunpack.c.l.b16 %v208
      %v386 = vunpack.c.l.b16 %v209
      %v387 = vunpack.c.l.b16 %v210
      %v388 = vunpack.c.l.b16 %v211
      %v389 = vunpack.c.l.b16 %v212
      %v390 = vunpack.c.l.b16 %v213
      %v391 = vunpack.c.l.b16 %v214
      %v392 = vunpack.c.l.b16 %v215
      %v393 = vpack.c.b16 %v378, %v377
      %v394 = vpack.c.b16 %v380, %v379
      %v395 = vpack.c.b16 %v382, %v381
      %v396 = vpack.c.b16 %v384, %v383
      %v397 = vpack.c.b16 %v386, %v385
      %v398 = vpack.c.b16 %v388, %v387
      %v399 = vpack.c.b16 %v390, %v389
      %v400 = vpack.c.b16 %v392, %v391
      %409 = vmatprep.subr.bf16.mxu0 0
      %410 = vmatpush1.bf16.msra.mxu0 %v400
      %411 = vmatprep.subr.bf16.mxu0 0
      %412 = vmatpush1.bf16.msra.mxu0 %v399
      %413 = vmatprep.subr.bf16.mxu0 0
      %414 = vmatpush1.bf16.msra.mxu0 %v398
      %415 = vmatprep.subr.bf16.mxu0 0
      %416 = vmatpush1.bf16.msra.mxu0 %v397
      %417 = vmatprep.subr.bf16.mxu0 0
      %418 = vmatpush1.bf16.msra.mxu0 %v396
      %419 = vmatprep.subr.bf16.mxu0 0
      %420 = vmatpush1.bf16.msra.mxu0 %v395
      %421 = vmatprep.subr.bf16.mxu0 0
      %422 = vmatpush1.bf16.msra.mxu0 %v394
      %423 = vmatprep.subr.bf16.mxu0 0
      %424 = vmatpush1.bf16.msra.mxu0 %v393
      %425 = vmatprep.subr.bf16.mxu0 0
      %426 = vmatpush2.bf16.msra.mxu0 0
      %427 = vmatprep.subr.bf16.mxu0 0
      %428 = vmatpush2.bf16.msra.mxu0 0
      %429 = vmatprep.subr.bf16.mxu0 0
      %430 = vmatpush2.bf16.msra.mxu0 0
      %431 = vmatprep.subr.bf16.mxu0 0
      %432 = vmatpush2.bf16.msra.mxu0 0
      %433 = vmatprep.subr.bf16.mxu0 0
      %434 = vmatpush2.bf16.msra.mxu0 0
      %435 = vmatprep.subr.bf16.mxu0 0
      %436 = vmatpush2.bf16.msra.mxu0 0
      %437 = vmatprep.subr.bf16.mxu0 0
      %438 = vmatpush2.bf16.msra.mxu0 0
      %439 = vmatprep.subr.bf16.mxu0 0
      %440 = vmatpush2.bf16.msra.mxu0 0
      %441 = vmatprep.mubr.bf16.mxu0 0
      %442 = vmatmul.mubr.bf16.gmra.mxu0 %v240
      %v443 = vpop.f32.mrf.mxu0
      %v444 = vadd.f32 %v343, %v443
      %v445 = vpop.f32.mrf.mxu0
      %v446 = vpop.f32.mrf.mxu0
      %v447 = vadd.f32 %v346, %v446
      %v448 = vpop.f32.mrf.mxu0
      %449 = vmatprep.mubr.bf16.mxu0 0
      %450 = vmatmul.mubr.bf16.gmra.mxu0 %v358
      %v451 = vpop.f32.mrf.mxu0
      %v452 = vadd.f32 %v351, %v451
      %v453 = vpop.f32.mrf.mxu0
      %v454 = vpop.f32.mrf.mxu0
      %v455 = vpop.f32.mrf.mxu0
      %456 = vdwg.mxu0
      %v457 = vld [vmem:[%s191] sm:$0xe]
      %s458 = scalar_lea.vmem %s1, 128
      %v459 = vld [vmem:[%s458] sm:$0xf]
      %v460 = vld [vmem:[%s458 + $0x4] sm:$0xf]
      %v461 = vld [vmem:[%s458 + $0x8] sm:$0xf]
      %v462 = vld [vmem:[%s458 + $0xc] sm:$0xf]
      %v463 = vld [vmem:[%s458 + $0x10] sm:$0xf]
      %v464 = vld [vmem:[%s458 + $0x14] sm:$0xf]
      %v465 = vld [vmem:[%s458 + $0x18] sm:$0xf]
      %v466 = vld [vmem:[%s458 + $0x1c] sm:$0xf]
      %v467 = vld [vmem:[%s458 + $0x20] sm:$0xf]
      %v468 = vld [vmem:[%s458 + $0x24] sm:$0xf]
      %v469 = vld [vmem:[%s458 + $0x28] sm:$0xf]
      %v470 = vld [vmem:[%s458 + $0x2c] sm:$0xf]
      %v471 = vld [vmem:[%s458 + $0x30] sm:$0xf]
      %v472 = vld [vmem:[%s458 + $0x34] sm:$0xf]
      %v473 = vld [vmem:[%s458 + $0x38] sm:$0xf]
      %v474 = vld [vmem:[%s458 + $0x3c] sm:$0xf]
      %v476 = vunpack.c.l.b16 %v457
      %v477 = vpack.c.b16 %v238, %v476
      %vm478 = vcmask 1046528
      %v479 = vrot.slane %v477, 1
      %v480 = vrot.slane %v241, 1
      %v481 = vsel %vm478, %v479, %v480
      %v500 = vunpack.c.l.b16 %v459
      %v501 = vunpack.c.l.b16 %v460
      %v502 = vunpack.c.l.b16 %v461
      %v503 = vunpack.c.l.b16 %v462
      %v504 = vunpack.c.l.b16 %v463
      %v505 = vunpack.c.l.b16 %v464
      %v506 = vunpack.c.l.b16 %v465
      %v507 = vunpack.c.l.b16 %v466
      %v508 = vunpack.c.l.b16 %v467
      %v509 = vunpack.c.l.b16 %v468
      %v510 = vunpack.c.l.b16 %v469
      %v511 = vunpack.c.l.b16 %v470
      %v512 = vunpack.c.l.b16 %v471
      %v513 = vunpack.c.l.b16 %v472
      %v514 = vunpack.c.l.b16 %v473
      %v515 = vunpack.c.l.b16 %v474
      %v516 = vpack.c.b16 %v501, %v500
      %v517 = vpack.c.b16 %v503, %v502
      %v518 = vpack.c.b16 %v505, %v504
      %v519 = vpack.c.b16 %v507, %v506
      %v520 = vpack.c.b16 %v509, %v508
      %v521 = vpack.c.b16 %v511, %v510
      %v522 = vpack.c.b16 %v513, %v512
      %v523 = vpack.c.b16 %v515, %v514
      %532 = vmatprep.subr.bf16.mxu0 0
      %533 = vmatpush1.bf16.msra.mxu0 %v523
      %534 = vmatprep.subr.bf16.mxu0 0
      %535 = vmatpush1.bf16.msra.mxu0 %v522
      %536 = vmatprep.subr.bf16.mxu0 0
      %537 = vmatpush1.bf16.msra.mxu0 %v521
      %538 = vmatprep.subr.bf16.mxu0 0
      %539 = vmatpush1.bf16.msra.mxu0 %v520
      %540 = vmatprep.subr.bf16.mxu0 0
      %541 = vmatpush1.bf16.msra.mxu0 %v519
      %542 = vmatprep.subr.bf16.mxu0 0
      %543 = vmatpush1.bf16.msra.mxu0 %v518
      %544 = vmatprep.subr.bf16.mxu0 0
      %545 = vmatpush1.bf16.msra.mxu0 %v517
      %546 = vmatprep.subr.bf16.mxu0 0
      %547 = vmatpush1.bf16.msra.mxu0 %v516
      %548 = vmatprep.subr.bf16.mxu0 0
      %549 = vmatpush2.bf16.msra.mxu0 0
      %550 = vmatprep.subr.bf16.mxu0 0
      %551 = vmatpush2.bf16.msra.mxu0 0
      %552 = vmatprep.subr.bf16.mxu0 0
      %553 = vmatpush2.bf16.msra.mxu0 0
      %554 = vmatprep.subr.bf16.mxu0 0
      %555 = vmatpush2.bf16.msra.mxu0 0
      %556 = vmatprep.subr.bf16.mxu0 0
      %557 = vmatpush2.bf16.msra.mxu0 0
      %558 = vmatprep.subr.bf16.mxu0 0
      %559 = vmatpush2.bf16.msra.mxu0 0
      %560 = vmatprep.subr.bf16.mxu0 0
      %561 = vmatpush2.bf16.msra.mxu0 0
      %562 = vmatprep.subr.bf16.mxu0 0
      %563 = vmatpush2.bf16.msra.mxu0 0
      %564 = vmatprep.mubr.bf16.mxu0 0
      %565 = vmatmul.mubr.bf16.gmra.mxu0 %v481
      %v566 = vpop.f32.mrf.mxu0
      %v567 = vadd.f32 0.0, %v566
      %v568 = vpop.f32.mrf.mxu0
      %v569 = vpop.f32.mrf.mxu0
      %v570 = vadd.f32 0.0, %v569
      %v571 = vpop.f32.mrf.mxu0
      %572 = vmatprep.mubr.bf16.mxu0 0
      %573 = vmatmul.mubr.bf16.gmra.mxu0 %v480
      %v574 = vpop.f32.mrf.mxu0
      %v575 = vadd.f32 0.0, %v574
      %v576 = vpop.f32.mrf.mxu0
      %v577 = vpop.f32.mrf.mxu0
      %v578 = vpop.f32.mrf.mxu0
      %579 = vdwg.mxu0
      %v580 = vadd.f32 %v444, %v567
      %v581 = vadd.f32 %v447, %v570
      %v582 = vadd.f32 %v452, %v575
      %v583 = vld [vmem:[%s191] sm:$0x8]
      %v584 = vld [vmem:[%s191 + $0x4] sm:$0xf]
      %v585 = vld [vmem:[%s191 + $0x8] sm:$0xf]
      %v586 = vld [vmem:[%s191 + $0xc] sm:$0x3]
      %s587 = scalar_lea.vmem %s1, 192
      %v588 = vld [vmem:[%s587] sm:$0xf]
      %v589 = vld [vmem:[%s587 + $0x4] sm:$0xf]
      %v590 = vld [vmem:[%s587 + $0x8] sm:$0xf]
      %v591 = vld [vmem:[%s587 + $0xc] sm:$0xf]
      %v592 = vld [vmem:[%s587 + $0x10] sm:$0xf]
      %v593 = vld [vmem:[%s587 + $0x14] sm:$0xf]
      %v594 = vld [vmem:[%s587 + $0x18] sm:$0xf]
      %v595 = vld [vmem:[%s587 + $0x1c] sm:$0xf]
      %v596 = vld [vmem:[%s587 + $0x20] sm:$0xf]
      %v597 = vld [vmem:[%s587 + $0x24] sm:$0xf]
      %v598 = vld [vmem:[%s587 + $0x28] sm:$0xf]
      %v599 = vld [vmem:[%s587 + $0x2c] sm:$0xf]
      %v600 = vld [vmem:[%s587 + $0x30] sm:$0xf]
      %v601 = vld [vmem:[%s587 + $0x34] sm:$0xf]
      %v602 = vld [vmem:[%s587 + $0x38] sm:$0xf]
      %v603 = vld [vmem:[%s587 + $0x3c] sm:$0xf]
      %v608 = vunpack.c.l.b16 %v583
      %v609 = vunpack.c.l.b16 %v584
      %v610 = vunpack.c.l.b16 %v585
      %v611 = vunpack.c.l.b16 %v586
      %v612 = vpack.c.b16 %v609, %v608
      %v613 = vpack.c.b16 %v611, %v610
      %vm614 = vcmask 1044480
      %v615 = vrot.slane %v612, 3
      %v616 = vrot.slane %v613, 3
      %v617 = vsel %vm614, %v615, %v616
      %v636 = vunpack.c.l.b16 %v588
      %v637 = vunpack.c.l.b16 %v589
      %v638 = vunpack.c.l.b16 %v590
      %v639 = vunpack.c.l.b16 %v591
      %v640 = vunpack.c.l.b16 %v592
      %v641 = vunpack.c.l.b16 %v593
      %v642 = vunpack.c.l.b16 %v594
      %v643 = vunpack.c.l.b16 %v595
      %v644 = vunpack.c.l.b16 %v596
      %v645 = vunpack.c.l.b16 %v597
      %v646 = vunpack.c.l.b16 %v598
      %v647 = vunpack.c.l.b16 %v599
      %v648 = vunpack.c.l.b16 %v600
      %v649 = vunpack.c.l.b16 %v601
      %v650 = vunpack.c.l.b16 %v602
      %v651 = vunpack.c.l.b16 %v603
      %v652 = vpack.c.b16 %v637, %v636
      %v653 = vpack.c.b16 %v639, %v638
      %v654 = vpack.c.b16 %v641, %v640
      %v655 = vpack.c.b16 %v643, %v642
      %v656 = vpack.c.b16 %v645, %v644
      %v657 = vpack.c.b16 %v647, %v646
      %v658 = vpack.c.b16 %v649, %v648
      %v659 = vpack.c.b16 %v651, %v650
      %668 = vmatprep.subr.bf16.mxu0 0
      %669 = vmatpush1.bf16.msra.mxu0 %v659
      %670 = vmatprep.subr.bf16.mxu0 0
      %671 = vmatpush1.bf16.msra.mxu0 %v658
      %672 = vmatprep.subr.bf16.mxu0 0
      %673 = vmatpush1.bf16.msra.mxu0 %v657
      %674 = vmatprep.subr.bf16.mxu0 0
      %675 = vmatpush1.bf16.msra.mxu0 %v656
      %676 = vmatprep.subr.bf16.mxu0 0
      %677 = vmatpush1.bf16.msra.mxu0 %v655
      %678 = vmatprep.subr.bf16.mxu0 0
      %679 = vmatpush1.bf16.msra.mxu0 %v654
      %680 = vmatprep.subr.bf16.mxu0 0
      %681 = vmatpush1.bf16.msra.mxu0 %v653
      %682 = vmatprep.subr.bf16.mxu0 0
      %683 = vmatpush1.bf16.msra.mxu0 %v652
      %684 = vmatprep.subr.bf16.mxu0 0
      %685 = vmatpush2.bf16.msra.mxu0 0
      %686 = vmatprep.subr.bf16.mxu0 0
      %687 = vmatpush2.bf16.msra.mxu0 0
      %688 = vmatprep.subr.bf16.mxu0 0
      %689 = vmatpush2.bf16.msra.mxu0 0
      %690 = vmatprep.subr.bf16.mxu0 0
      %691 = vmatpush2.bf16.msra.mxu0 0
      %692 = vmatprep.subr.bf16.mxu0 0
      %693 = vmatpush2.bf16.msra.mxu0 0
      %694 = vmatprep.subr.bf16.mxu0 0
      %695 = vmatpush2.bf16.msra.mxu0 0
      %696 = vmatprep.subr.bf16.mxu0 0
      %697 = vmatpush2.bf16.msra.mxu0 0
      %698 = vmatprep.subr.bf16.mxu0 0
      %699 = vmatpush2.bf16.msra.mxu0 0
      %700 = vmatprep.mubr.bf16.mxu0 0
      %701 = vmatmul.mubr.bf16.gmra.mxu0 %v617
      %v702 = vpop.f32.mrf.mxu0
      %v703 = vadd.f32 0.0, %v702
      %v704 = vpop.f32.mrf.mxu0
      %v705 = vpop.f32.mrf.mxu0
      %v706 = vadd.f32 0.0, %v705
      %v707 = vpop.f32.mrf.mxu0
      %708 = vmatprep.mubr.bf16.mxu0 0
      %709 = vmatmul.mubr.bf16.gmra.mxu0 %v616
      %v710 = vpop.f32.mrf.mxu0
      %v711 = vadd.f32 0.0, %v710
      %v712 = vpop.f32.mrf.mxu0
      %v713 = vpop.f32.mrf.mxu0
      %v714 = vpop.f32.mrf.mxu0
      %715 = vdwg.mxu0
      %v716 = vadd.f32 %v580, %v703
      %v717 = vadd.f32 %v581, %v706
      %v718 = vadd.f32 %v582, %v711
      %v719 = vld [vmem:[%s191 + $0xc] sm:$0x7]
      %s720 = scalar_lea.vmem %s1, 256
      %v721 = vld [vmem:[%s720] sm:$0xf]
      %v722 = vld [vmem:[%s720 + $0x4] sm:$0xf]
      %v723 = vld [vmem:[%s720 + $0x8] sm:$0xf]
      %v724 = vld [vmem:[%s720 + $0xc] sm:$0xf]
      %v725 = vld [vmem:[%s720 + $0x10] sm:$0xf]
      %v726 = vld [vmem:[%s720 + $0x14] sm:$0xf]
      %v727 = vld [vmem:[%s720 + $0x18] sm:$0xf]
      %v728 = vld [vmem:[%s720 + $0x1c] sm:$0xf]
      %v729 = vld [vmem:[%s720 + $0x20] sm:$0xf]
      %v730 = vld [vmem:[%s720 + $0x24] sm:$0xf]
      %v731 = vld [vmem:[%s720 + $0x28] sm:$0xf]
      %v732 = vld [vmem:[%s720 + $0x2c] sm:$0xf]
      %v733 = vld [vmem:[%s720 + $0x30] sm:$0xf]
      %v734 = vld [vmem:[%s720 + $0x34] sm:$0xf]
      %v735 = vld [vmem:[%s720 + $0x38] sm:$0xf]
      %v736 = vld [vmem:[%s720 + $0x3c] sm:$0xf]
      %v738 = vunpack.c.l.b16 %v719
      %v739 = vpack.c.b16 %v738, %v610
      %vm740 = vsmask.f32 4352
      %v742 = vshrl.u32 %v612, 16
      %v744 = vrot.slane %v742, 3
      %v745 = vshll.u32 %v612, 16
      %v747 = vrot.slane %v745, 4
      %v748 = vor.u32 %v744, %v747
      %v750 = vshrl.u32 %v739, 16
      %v752 = vrot.slane %v750, 3
      %v753 = vshll.u32 %v739, 16
      %v755 = vrot.slane %v753, 4
      %v756 = vor.u32 %v752, %v755
      %v757 = vsel %vm740, %v748, %v756
      %v776 = vunpack.c.l.b16 %v721
      %v777 = vunpack.c.l.b16 %v722
      %v778 = vunpack.c.l.b16 %v723
      %v779 = vunpack.c.l.b16 %v724
      %v780 = vunpack.c.l.b16 %v725
      %v781 = vunpack.c.l.b16 %v726
      %v782 = vunpack.c.l.b16 %v727
      %v783 = vunpack.c.l.b16 %v728
      %v784 = vunpack.c.l.b16 %v729
      %v785 = vunpack.c.l.b16 %v730
      %v786 = vunpack.c.l.b16 %v731
      %v787 = vunpack.c.l.b16 %v732
      %v788 = vunpack.c.l.b16 %v733
      %v789 = vunpack.c.l.b16 %v734
      %v790 = vunpack.c.l.b16 %v735
      %v791 = vunpack.c.l.b16 %v736
      %v792 = vpack.c.b16 %v777, %v776
      %v793 = vpack.c.b16 %v779, %v778
      %v794 = vpack.c.b16 %v781, %v780
      %v795 = vpack.c.b16 %v783, %v782
      %v796 = vpack.c.b16 %v785, %v784
      %v797 = vpack.c.b16 %v787, %v786
      %v798 = vpack.c.b16 %v789, %v788
      %v799 = vpack.c.b16 %v791, %v790
      %808 = vmatprep.subr.bf16.mxu0 0
      %809 = vmatpush1.bf16.msra.mxu0 %v799
      %810 = vmatprep.subr.bf16.mxu0 0
      %811 = vmatpush1.bf16.msra.mxu0 %v798
      %812 = vmatprep.subr.bf16.mxu0 0
      %813 = vmatpush1.bf16.msra.mxu0 %v797
      %814 = vmatprep.subr.bf16.mxu0 0
      %815 = vmatpush1.bf16.msra.mxu0 %v796
      %816 = vmatprep.subr.bf16.mxu0 0
      %817 = vmatpush1.bf16.msra.mxu0 %v795
      %818 = vmatprep.subr.bf16.mxu0 0
      %819 = vmatpush1.bf16.msra.mxu0 %v794
      %820 = vmatprep.subr.bf16.mxu0 0
      %821 = vmatpush1.bf16.msra.mxu0 %v793
      %822 = vmatprep.subr.bf16.mxu0 0
      %823 = vmatpush1.bf16.msra.mxu0 %v792
      %824 = vmatprep.subr.bf16.mxu0 0
      %825 = vmatpush2.bf16.msra.mxu0 0
      %826 = vmatprep.subr.bf16.mxu0 0
      %827 = vmatpush2.bf16.msra.mxu0 0
      %828 = vmatprep.subr.bf16.mxu0 0
      %829 = vmatpush2.bf16.msra.mxu0 0
      %830 = vmatprep.subr.bf16.mxu0 0
      %831 = vmatpush2.bf16.msra.mxu0 0
      %832 = vmatprep.subr.bf16.mxu0 0
      %833 = vmatpush2.bf16.msra.mxu0 0
      %834 = vmatprep.subr.bf16.mxu0 0
      %835 = vmatpush2.bf16.msra.mxu0 0
      %836 = vmatprep.subr.bf16.mxu0 0
      %837 = vmatpush2.bf16.msra.mxu0 0
      %838 = vmatprep.subr.bf16.mxu0 0
      %839 = vmatpush2.bf16.msra.mxu0 0
      %840 = vmatprep.mubr.bf16.mxu0 0
      %841 = vmatmul.mubr.bf16.gmra.mxu0 %v757
      %v842 = vpop.f32.mrf.mxu0
      %v843 = vadd.f32 0.0, %v842
      %v844 = vpop.f32.mrf.mxu0
      %v845 = vpop.f32.mrf.mxu0
      %v846 = vadd.f32 0.0, %v845
      %v847 = vpop.f32.mrf.mxu0
      %848 = vmatprep.mubr.bf16.mxu0 0
      %849 = vmatmul.mubr.bf16.gmra.mxu0 %v756
      %v850 = vpop.f32.mrf.mxu0
      %v851 = vadd.f32 0.0, %v850
      %v852 = vpop.f32.mrf.mxu0
      %v853 = vpop.f32.mrf.mxu0
      %v854 = vpop.f32.mrf.mxu0
      %855 = vdwg.mxu0
      %v856 = vadd.f32 %v716, %v843
      %v857 = vadd.f32 %v717, %v846
      %v858 = vadd.f32 %v718, %v851
      %s859 = scalar_lea.vmem %s1, 320
      %v860 = vld [vmem:[%s859] sm:$0xf]
      %v861 = vld [vmem:[%s859 + $0x4] sm:$0xf]
      %v862 = vld [vmem:[%s859 + $0x8] sm:$0xf]
      %v863 = vld [vmem:[%s859 + $0xc] sm:$0xf]
      %v864 = vld [vmem:[%s859 + $0x10] sm:$0xf]
      %v865 = vld [vmem:[%s859 + $0x14] sm:$0xf]
      %v866 = vld [vmem:[%s859 + $0x18] sm:$0xf]
      %v867 = vld [vmem:[%s859 + $0x1c] sm:$0xf]
      %v868 = vld [vmem:[%s859 + $0x20] sm:$0xf]
      %v869 = vld [vmem:[%s859 + $0x24] sm:$0xf]
      %v870 = vld [vmem:[%s859 + $0x28] sm:$0xf]
      %v871 = vld [vmem:[%s859 + $0x2c] sm:$0xf]
      %v872 = vld [vmem:[%s859 + $0x30] sm:$0xf]
      %v873 = vld [vmem:[%s859 + $0x34] sm:$0xf]
      %v874 = vld [vmem:[%s859 + $0x38] sm:$0xf]
      %v875 = vld [vmem:[%s859 + $0x3c] sm:$0xf]
      %v876 = vpack.c.b16 %v610, %v609
      %v877 = vpack.c.b16 %v738, %v738
      %v896 = vunpack.c.l.b16 %v860
      %v897 = vunpack.c.l.b16 %v861
      %v898 = vunpack.c.l.b16 %v862
      %v899 = vunpack.c.l.b16 %v863
      %v900 = vunpack.c.l.b16 %v864
      %v901 = vunpack.c.l.b16 %v865
      %v902 = vunpack.c.l.b16 %v866
      %v903 = vunpack.c.l.b16 %v867
      %v904 = vunpack.c.l.b16 %v868
      %v905 = vunpack.c.l.b16 %v869
      %v906 = vunpack.c.l.b16 %v870
      %v907 = vunpack.c.l.b16 %v871
      %v908 = vunpack.c.l.b16 %v872
      %v909 = vunpack.c.l.b16 %v873
      %v910 = vunpack.c.l.b16 %v874
      %v911 = vunpack.c.l.b16 %v875
      %v912 = vpack.c.b16 %v897, %v896
      %v913 = vpack.c.b16 %v899, %v898
      %v914 = vpack.c.b16 %v901, %v900
      %v915 = vpack.c.b16 %v903, %v902
      %v916 = vpack.c.b16 %v905, %v904
      %v917 = vpack.c.b16 %v907, %v906
      %v918 = vpack.c.b16 %v909, %v908
      %v919 = vpack.c.b16 %v911, %v910
      %928 = vmatprep.subr.bf16.mxu0 0
      %929 = vmatpush1.bf16.msra.mxu0 %v919
      %930 = vmatprep.subr.bf16.mxu0 0
      %931 = vmatpush1.bf16.msra.mxu0 %v918
      %932 = vmatprep.subr.bf16.mxu0 0
      %933 = vmatpush1.bf16.msra.mxu0 %v917
      %934 = vmatprep.subr.bf16.mxu0 0
      %935 = vmatpush1.bf16.msra.mxu0 %v916
      %936 = vmatprep.subr.bf16.mxu0 0
      %937 = vmatpush1.bf16.msra.mxu0 %v915
      %938 = vmatprep.subr.bf16.mxu0 0
      %939 = vmatpush1.bf16.msra.mxu0 %v914
      %940 = vmatprep.subr.bf16.mxu0 0
      %941 = vmatpush1.bf16.msra.mxu0 %v913
      %942 = vmatprep.subr.bf16.mxu0 0
      %943 = vmatpush1.bf16.msra.mxu0 %v912
      %944 = vmatprep.subr.bf16.mxu0 0
      %945 = vmatpush2.bf16.msra.mxu0 0
      %946 = vmatprep.subr.bf16.mxu0 0
      %947 = vmatpush2.bf16.msra.mxu0 0
      %948 = vmatprep.subr.bf16.mxu0 0
      %949 = vmatpush2.bf16.msra.mxu0 0
      %950 = vmatprep.subr.bf16.mxu0 0
      %951 = vmatpush2.bf16.msra.mxu0 0
      %952 = vmatprep.subr.bf16.mxu0 0
      %953 = vmatpush2.bf16.msra.mxu0 0
      %954 = vmatprep.subr.bf16.mxu0 0
      %955 = vmatpush2.bf16.msra.mxu0 0
      %956 = vmatprep.subr.bf16.mxu0 0
      %957 = vmatpush2.bf16.msra.mxu0 0
      %958 = vmatprep.subr.bf16.mxu0 0
      %959 = vmatpush2.bf16.msra.mxu0 0
      %960 = vmatprep.mubr.bf16.mxu0 0
      %961 = vmatmul.mubr.bf16.gmra.mxu0 %v876
      %v962 = vpop.f32.mrf.mxu0
      %v963 = vadd.f32 0.0, %v962
      %v964 = vpop.f32.mrf.mxu0
      %v965 = vpop.f32.mrf.mxu0
      %v966 = vadd.f32 0.0, %v965
      %v967 = vpop.f32.mrf.mxu0
      %968 = vmatprep.mubr.bf16.mxu0 0
      %969 = vmatmul.mubr.bf16.gmra.mxu0 %v877
      %v970 = vpop.f32.mrf.mxu0
      %v971 = vadd.f32 0.0, %v970
      %v972 = vpop.f32.mrf.mxu0
      %v973 = vpop.f32.mrf.mxu0
      %v974 = vpop.f32.mrf.mxu0
      %975 = vdwg.mxu0
      %v976 = vadd.f32 %v856, %v963
      %v977 = vadd.f32 %v857, %v966
      %v978 = vadd.f32 %v858, %v971
      %v979 = vld [vmem:[%s191 + $0x4] sm:$0xc]
      %v980 = vld [vmem:[%s191 + $0x8] sm:$0xf]
      %v981 = vld [vmem:[%s191 + $0xc] sm:$0xf]
      %v982 = vld [vmem:[%s191 + $0x10] sm:$0x1]
      %s983 = scalar_lea.vmem %s1, 384
      %v984 = vld [vmem:[%s983] sm:$0xf]
      %v985 = vld [vmem:[%s983 + $0x4] sm:$0xf]
      %v986 = vld [vmem:[%s983 + $0x8] sm:$0xf]
      %v987 = vld [vmem:[%s983 + $0xc] sm:$0xf]
      %v988 = vld [vmem:[%s983 + $0x10] sm:$0xf]
      %v989 = vld [vmem:[%s983 + $0x14] sm:$0xf]
      %v990 = vld [vmem:[%s983 + $0x18] sm:$0xf]
      %v991 = vld [vmem:[%s983 + $0x1c] sm:$0xf]
      %v992 = vld [vmem:[%s983 + $0x20] sm:$0xf]
      %v993 = vld [vmem:[%s983 + $0x24] sm:$0xf]
      %v994 = vld [vmem:[%s983 + $0x28] sm:$0xf]
      %v995 = vld [vmem:[%s983 + $0x2c] sm:$0xf]
      %v996 = vld [vmem:[%s983 + $0x30] sm:$0xf]
      %v997 = vld [vmem:[%s983 + $0x34] sm:$0xf]
      %v998 = vld [vmem:[%s983 + $0x38] sm:$0xf]
      %v999 = vld [vmem:[%s983 + $0x3c] sm:$0xf]
      %v1004 = vunpack.c.l.b16 %v979
      %v1005 = vunpack.c.l.b16 %v980
      %v1006 = vunpack.c.l.b16 %v981
      %v1007 = vunpack.c.l.b16 %v982
      %v1008 = vpack.c.b16 %v1005, %v1004
      %v1009 = vpack.c.b16 %v1007, %v1006
      %vm1010 = vcmask 1045504
      %v1011 = vrot.slane %v1008, 2
      %v1012 = vrot.slane %v1009, 2
      %v1013 = vsel %vm1010, %v1011, %v1012
      %v1032 = vunpack.c.l.b16 %v984
      %v1033 = vunpack.c.l.b16 %v985
      %v1034 = vunpack.c.l.b16 %v986
      %v1035 = vunpack.c.l.b16 %v987
      %v1036 = vunpack.c.l.b16 %v988
      %v1037 = vunpack.c.l.b16 %v989
      %v1038 = vunpack.c.l.b16 %v990
      %v1039 = vunpack.c.l.b16 %v991
      %v1040 = vunpack.c.l.b16 %v992
      %v1041 = vunpack.c.l.b16 %v993
      %v1042 = vunpack.c.l.b16 %v994
      %v1043 = vunpack.c.l.b16 %v995
      %v1044 = vunpack.c.l.b16 %v996
      %v1045 = vunpack.c.l.b16 %v997
      %v1046 = vunpack.c.l.b16 %v998
      %v1047 = vunpack.c.l.b16 %v999
      %v1048 = vpack.c.b16 %v1033, %v1032
      %v1049 = vpack.c.b16 %v1035, %v1034
      %v1050 = vpack.c.b16 %v1037, %v1036
      %v1051 = vpack.c.b16 %v1039, %v1038
      %v1052 = vpack.c.b16 %v1041, %v1040
      %v1053 = vpack.c.b16 %v1043, %v1042
      %v1054 = vpack.c.b16 %v1045, %v1044
      %v1055 = vpack.c.b16 %v1047, %v1046
      %1064 = vmatprep.subr.bf16.mxu0 0
      %1065 = vmatpush1.bf16.msra.mxu0 %v1055
      %1066 = vmatprep.subr.bf16.mxu0 0
      %1067 = vmatpush1.bf16.msra.mxu0 %v1054
      %1068 = vmatprep.subr.bf16.mxu0 0
      %1069 = vmatpush1.bf16.msra.mxu0 %v1053
      %1070 = vmatprep.subr.bf16.mxu0 0
      %1071 = vmatpush1.bf16.msra.mxu0 %v1052
      %1072 = vmatprep.subr.bf16.mxu0 0
      %1073 = vmatpush1.bf16.msra.mxu0 %v1051
      %1074 = vmatprep.subr.bf16.mxu0 0
      %1075 = vmatpush1.bf16.msra.mxu0 %v1050
      %1076 = vmatprep.subr.bf16.mxu0 0
      %1077 = vmatpush1.bf16.msra.mxu0 %v1049
      %1078 = vmatprep.subr.bf16.mxu0 0
      %1079 = vmatpush1.bf16.msra.mxu0 %v1048
      %1080 = vmatprep.subr.bf16.mxu0 0
      %1081 = vmatpush2.bf16.msra.mxu0 0
      %1082 = vmatprep.subr.bf16.mxu0 0
      %1083 = vmatpush2.bf16.msra.mxu0 0
      %1084 = vmatprep.subr.bf16.mxu0 0
      %1085 = vmatpush2.bf16.msra.mxu0 0
      %1086 = vmatprep.subr.bf16.mxu0 0
      %1087 = vmatpush2.bf16.msra.mxu0 0
      %1088 = vmatprep.subr.bf16.mxu0 0
      %1089 = vmatpush2.bf16.msra.mxu0 0
      %1090 = vmatprep.subr.bf16.mxu0 0
      %1091 = vmatpush2.bf16.msra.mxu0 0
      %1092 = vmatprep.subr.bf16.mxu0 0
      %1093 = vmatpush2.bf16.msra.mxu0 0
      %1094 = vmatprep.subr.bf16.mxu0 0
      %1095 = vmatpush2.bf16.msra.mxu0 0
      %1096 = vmatprep.mubr.bf16.mxu0 0
      %1097 = vmatmul.mubr.bf16.gmra.mxu0 %v1013
      %v1098 = vpop.f32.mrf.mxu0
      %v1099 = vadd.f32 0.0, %v1098
      %v1100 = vpop.f32.mrf.mxu0
      %v1101 = vpop.f32.mrf.mxu0
      %v1102 = vadd.f32 0.0, %v1101
      %v1103 = vpop.f32.mrf.mxu0
      %1104 = vmatprep.mubr.bf16.mxu0 0
      %1105 = vmatmul.mubr.bf16.gmra.mxu0 %v1012
      %v1106 = vpop.f32.mrf.mxu0
      %v1107 = vadd.f32 0.0, %v1106
      %v1108 = vpop.f32.mrf.mxu0
      %v1109 = vpop.f32.mrf.mxu0
      %v1110 = vpop.f32.mrf.mxu0
      %1111 = vdwg.mxu0
      %v1112 = vadd.f32 %v976, %v1099
      %v1113 = vadd.f32 %v977, %v1102
      %v1114 = vadd.f32 %v978, %v1107
      %v1115 = vld [vmem:[%s191 + $0x10] sm:$0x3]
      %s1116 = scalar_lea.vmem %s1, 448
      %v1117 = vld [vmem:[%s1116] sm:$0xf]
      %v1118 = vld [vmem:[%s1116 + $0x4] sm:$0xf]
      %v1119 = vld [vmem:[%s1116 + $0x8] sm:$0xf]
      %v1120 = vld [vmem:[%s1116 + $0xc] sm:$0xf]
      %v1121 = vld [vmem:[%s1116 + $0x10] sm:$0xf]
      %v1122 = vld [vmem:[%s1116 + $0x14] sm:$0xf]
      %v1123 = vld [vmem:[%s1116 + $0x18] sm:$0xf]
      %v1124 = vld [vmem:[%s1116 + $0x1c] sm:$0xf]
      %v1125 = vld [vmem:[%s1116 + $0x20] sm:$0xf]
      %v1126 = vld [vmem:[%s1116 + $0x24] sm:$0xf]
      %v1127 = vld [vmem:[%s1116 + $0x28] sm:$0xf]
      %v1128 = vld [vmem:[%s1116 + $0x2c] sm:$0xf]
      %v1129 = vld [vmem:[%s1116 + $0x30] sm:$0xf]
      %v1130 = vld [vmem:[%s1116 + $0x34] sm:$0xf]
      %v1131 = vld [vmem:[%s1116 + $0x38] sm:$0xf]
      %v1132 = vld [vmem:[%s1116 + $0x3c] sm:$0xf]
      %v1134 = vunpack.c.l.b16 %v1115
      %v1135 = vpack.c.b16 %v1134, %v1006
      %vm1136 = vsmask.f32 5376
      %v1138 = vshrl.u32 %v1008, 16
      %v1140 = vrot.slane %v1138, 2
      %v1141 = vshll.u32 %v1008, 16
      %v1143 = vrot.slane %v1141, 3
      %v1144 = vor.u32 %v1140, %v1143
      %v1146 = vshrl.u32 %v1135, 16
      %v1148 = vrot.slane %v1146, 2
      %v1149 = vshll.u32 %v1135, 16
      %v1151 = vrot.slane %v1149, 3
      %v1152 = vor.u32 %v1148, %v1151
      %v1153 = vsel %vm1136, %v1144, %v1152
      %v1172 = vunpack.c.l.b16 %v1117
      %v1173 = vunpack.c.l.b16 %v1118
      %v1174 = vunpack.c.l.b16 %v1119
      %v1175 = vunpack.c.l.b16 %v1120
      %v1176 = vunpack.c.l.b16 %v1121
      %v1177 = vunpack.c.l.b16 %v1122
      %v1178 = vunpack.c.l.b16 %v1123
      %v1179 = vunpack.c.l.b16 %v1124
      %v1180 = vunpack.c.l.b16 %v1125
      %v1181 = vunpack.c.l.b16 %v1126
      %v1182 = vunpack.c.l.b16 %v1127
      %v1183 = vunpack.c.l.b16 %v1128
      %v1184 = vunpack.c.l.b16 %v1129
      %v1185 = vunpack.c.l.b16 %v1130
      %v1186 = vunpack.c.l.b16 %v1131
      %v1187 = vunpack.c.l.b16 %v1132
      %v1188 = vpack.c.b16 %v1173, %v1172
      %v1189 = vpack.c.b16 %v1175, %v1174
      %v1190 = vpack.c.b16 %v1177, %v1176
      %v1191 = vpack.c.b16 %v1179, %v1178
      %v1192 = vpack.c.b16 %v1181, %v1180
      %v1193 = vpack.c.b16 %v1183, %v1182
      %v1194 = vpack.c.b16 %v1185, %v1184
      %v1195 = vpack.c.b16 %v1187, %v1186
      %1204 = vmatprep.subr.bf16.mxu0 0
      %1205 = vmatpush1.bf16.msra.mxu0 %v1195
      %1206 = vmatprep.subr.bf16.mxu0 0
      %1207 = vmatpush1.bf16.msra.mxu0 %v1194
      %1208 = vmatprep.subr.bf16.mxu0 0
      %1209 = vmatpush1.bf16.msra.mxu0 %v1193
      %1210 = vmatprep.subr.bf16.mxu0 0
      %1211 = vmatpush1.bf16.msra.mxu0 %v1192
      %1212 = vmatprep.subr.bf16.mxu0 0
      %1213 = vmatpush1.bf16.msra.mxu0 %v1191
      %1214 = vmatprep.subr.bf16.mxu0 0
      %1215 = vmatpush1.bf16.msra.mxu0 %v1190
      %1216 = vmatprep.subr.bf16.mxu0 0
      %1217 = vmatpush1.bf16.msra.mxu0 %v1189
      %1218 = vmatprep.subr.bf16.mxu0 0
      %1219 = vmatpush1.bf16.msra.mxu0 %v1188
      %1220 = vmatprep.subr.bf16.mxu0 0
      %1221 = vmatpush2.bf16.msra.mxu0 0
      %1222 = vmatprep.subr.bf16.mxu0 0
      %1223 = vmatpush2.bf16.msra.mxu0 0
      %1224 = vmatprep.subr.bf16.mxu0 0
      %1225 = vmatpush2.bf16.msra.mxu0 0
      %1226 = vmatprep.subr.bf16.mxu0 0
      %1227 = vmatpush2.bf16.msra.mxu0 0
      %1228 = vmatprep.subr.bf16.mxu0 0
      %1229 = vmatpush2.bf16.msra.mxu0 0
      %1230 = vmatprep.subr.bf16.mxu0 0
      %1231 = vmatpush2.bf16.msra.mxu0 0
      %1232 = vmatprep.subr.bf16.mxu0 0
      %1233 = vmatpush2.bf16.msra.mxu0 0
      %1234 = vmatprep.subr.bf16.mxu0 0
      %1235 = vmatpush2.bf16.msra.mxu0 0
      %1236 = vmatprep.mubr.bf16.mxu0 0
      %1237 = vmatmul.mubr.bf16.gmra.mxu0 %v1153
      %v1238 = vpop.f32.mrf.mxu0
      %v1239 = vadd.f32 0.0, %v1238
      %v1240 = vpop.f32.mrf.mxu0
      %v1241 = vpop.f32.mrf.mxu0
      %v1242 = vadd.f32 0.0, %v1241
      %v1243 = vpop.f32.mrf.mxu0
      %1244 = vmatprep.mubr.bf16.mxu0 0
      %1245 = vmatmul.mubr.bf16.gmra.mxu0 %v1152
      %v1246 = vpop.f32.mrf.mxu0
      %v1247 = vadd.f32 0.0, %v1246
      %v1248 = vpop.f32.mrf.mxu0
      %v1249 = vpop.f32.mrf.mxu0
      %v1250 = vpop.f32.mrf.mxu0
      %1251 = vdwg.mxu0
      %v1252 = vadd.f32 %v1112, %v1239
      %v1253 = vadd.f32 %v1113, %v1242
      %v1254 = vadd.f32 %v1114, %v1247
      %v1255 = vld [vmem:[%s191 + $0x4] sm:$0x8]
      %s1256 = scalar_lea.vmem %s1, 512
      %v1257 = vld [vmem:[%s1256] sm:$0xf]
      %v1258 = vld [vmem:[%s1256 + $0x4] sm:$0xf]
      %v1259 = vld [vmem:[%s1256 + $0x8] sm:$0xf]
      %v1260 = vld [vmem:[%s1256 + $0xc] sm:$0xf]
      %v1261 = vld [vmem:[%s1256 + $0x10] sm:$0xf]
      %v1262 = vld [vmem:[%s1256 + $0x14] sm:$0xf]
      %v1263 = vld [vmem:[%s1256 + $0x18] sm:$0xf]
      %v1264 = vld [vmem:[%s1256 + $0x1c] sm:$0xf]
      %v1265 = vld [vmem:[%s1256 + $0x20] sm:$0xf]
      %v1266 = vld [vmem:[%s1256 + $0x24] sm:$0xf]
      %v1267 = vld [vmem:[%s1256 + $0x28] sm:$0xf]
      %v1268 = vld [vmem:[%s1256 + $0x2c] sm:$0xf]
      %v1269 = vld [vmem:[%s1256 + $0x30] sm:$0xf]
      %v1270 = vld [vmem:[%s1256 + $0x34] sm:$0xf]
      %v1271 = vld [vmem:[%s1256 + $0x38] sm:$0xf]
      %v1272 = vld [vmem:[%s1256 + $0x3c] sm:$0xf]
      %v1274 = vunpack.c.l.b16 %v1255
      %v1275 = vpack.c.b16 %v1005, %v1274
      %v1276 = vrot.slane %v1275, 3
      %v1277 = vrot.slane %v1135, 3
      %v1278 = vsel %vm614, %v1276, %v1277
      %v1297 = vunpack.c.l.b16 %v1257
      %v1298 = vunpack.c.l.b16 %v1258
      %v1299 = vunpack.c.l.b16 %v1259
      %v1300 = vunpack.c.l.b16 %v1260
      %v1301 = vunpack.c.l.b16 %v1261
      %v1302 = vunpack.c.l.b16 %v1262
      %v1303 = vunpack.c.l.b16 %v1263
      %v1304 = vunpack.c.l.b16 %v1264
      %v1305 = vunpack.c.l.b16 %v1265
      %v1306 = vunpack.c.l.b16 %v1266
      %v1307 = vunpack.c.l.b16 %v1267
      %v1308 = vunpack.c.l.b16 %v1268
      %v1309 = vunpack.c.l.b16 %v1269
      %v1310 = vunpack.c.l.b16 %v1270
      %v1311 = vunpack.c.l.b16 %v1271
      %v1312 = vunpack.c.l.b16 %v1272
      %v1313 = vpack.c.b16 %v1298, %v1297
      %v1314 = vpack.c.b16 %v1300, %v1299
      %v1315 = vpack.c.b16 %v1302, %v1301
      %v1316 = vpack.c.b16 %v1304, %v1303
      %v1317 = vpack.c.b16 %v1306, %v1305
      %v1318 = vpack.c.b16 %v1308, %v1307
      %v1319 = vpack.c.b16 %v1310, %v1309
      %v1320 = vpack.c.b16 %v1312, %v1311
      %1329 = vmatprep.subr.bf16.mxu0 0
      %1330 = vmatpush1.bf16.msra.mxu0 %v1320
      %1331 = vmatprep.subr.bf16.mxu0 0
      %1332 = vmatpush1.bf16.msra.mxu0 %v1319
      %1333 = vmatprep.subr.bf16.mxu0 0
      %1334 = vmatpush1.bf16.msra.mxu0 %v1318
      %1335 = vmatprep.subr.bf16.mxu0 0
      %1336 = vmatpush1.bf16.msra.mxu0 %v1317
      %1337 = vmatprep.subr.bf16.mxu0 0
      %1338 = vmatpush1.bf16.msra.mxu0 %v1316
      %1339 = vmatprep.subr.bf16.mxu0 0
      %1340 = vmatpush1.bf16.msra.mxu0 %v1315
      %1341 = vmatprep.subr.bf16.mxu0 0
      %1342 = vmatpush1.bf16.msra.mxu0 %v1314
      %1343 = vmatprep.subr.bf16.mxu0 0
      %1344 = vmatpush1.bf16.msra.mxu0 %v1313
      %1345 = vmatprep.subr.bf16.mxu0 0
      %1346 = vmatpush2.bf16.msra.mxu0 0
      %1347 = vmatprep.subr.bf16.mxu0 0
      %1348 = vmatpush2.bf16.msra.mxu0 0
      %1349 = vmatprep.subr.bf16.mxu0 0
      %1350 = vmatpush2.bf16.msra.mxu0 0
      %1351 = vmatprep.subr.bf16.mxu0 0
      %1352 = vmatpush2.bf16.msra.mxu0 0
      %1353 = vmatprep.subr.bf16.mxu0 0
      %1354 = vmatpush2.bf16.msra.mxu0 0
      %1355 = vmatprep.subr.bf16.mxu0 0
      %1356 = vmatpush2.bf16.msra.mxu0 0
      %1357 = vmatprep.subr.bf16.mxu0 0
      %1358 = vmatpush2.bf16.msra.mxu0 0
      %1359 = vmatprep.subr.bf16.mxu0 0
      %1360 = vmatpush2.bf16.msra.mxu0 0
      %1361 = vmatprep.mubr.bf16.mxu0 0
      %1362 = vmatmul.mubr.bf16.gmra.mxu0 %v1278
      %v1363 = vpop.f32.mrf.mxu0
      %v1364 = vadd.f32 0.0, %v1363
      %v1365 = vpop.f32.mrf.mxu0
      %v1366 = vpop.f32.mrf.mxu0
      %v1367 = vadd.f32 0.0, %v1366
      %v1368 = vpop.f32.mrf.mxu0
      %1369 = vmatprep.mubr.bf16.mxu0 0
      %1370 = vmatmul.mubr.bf16.gmra.mxu0 %v1277
      %v1371 = vpop.f32.mrf.mxu0
      %v1372 = vadd.f32 0.0, %v1371
      %v1373 = vpop.f32.mrf.mxu0
      %v1374 = vpop.f32.mrf.mxu0
      %v1375 = vpop.f32.mrf.mxu0
      %1376 = vdwg.mxu0
      %v1377 = vadd.f32 %v1252, %v1364
      %v1378 = vadd.f32 %v1253, %v1367
      %v1379 = vadd.f32 %v1254, %v1372
      %v1380 = vld [vmem:[%s2] sm:$0x1]
      %v1382 = vlaneseq
      %v1383 = vshrl.u32 %v1382, 7
      %v1384 = vsub.s32 0, %v1383
      %v1385 = vrot.slane %v1380, %v1384
      %v1387 = vadd.f32 %v1377, %v1385
      %v1388 = vadd.f32 %v1378, %v1385
      %v1389 = vadd.f32 %v1379, %v1385
      %v1390 = vmax.f32 %v1387, 0.0
      %v1391 = vmax.f32 %v1388, 0.0
      %v1392 = vmax.f32 %v1389, 0.0
      %vm1396 = vcmask 1041408
      %v1397 = vrot.slane %v1390, 6
      %v1398 = vrot.slane %v1391, 6
      %v1399 = vsel %vm1396, %v1397, %v1398
      %v1400 = vrot.slane %v1392, 6
      %v1401 = vsel %vm1396, %v1398, %v1400
      %v1404 = vmax.f32 %v1390, %v1399
      %v1405 = vmax.f32 %v1391, %v1401
      %v1406 = vpack.c.bf16 %v1405, %v1404
      %v1407 = vld [vmem:[%s3] sm:$0x3]
      %vm1408 = vcmask 130048
      %v1410 = vsel %vm1408, %v1407, 0
      %1412 = vmatprep.subr.bf16.mxu0 0
      %1413 = vmatpush1.bf16.msra.mxu0 0
      %1414 = vmatprep.subr.bf16.mxu0 0
      %1415 = vmatpush1.bf16.msra.mxu0 0
      %1416 = vmatprep.subr.bf16.mxu0 0
      %1417 = vmatpush1.bf16.msra.mxu0 0
      %1418 = vmatprep.subr.bf16.mxu0 0
      %1419 = vmatpush1.bf16.msra.mxu0 0
      %1420 = vmatprep.subr.bf16.mxu0 0
      %1421 = vmatpush1.bf16.msra.mxu0 0
      %1422 = vmatprep.subr.bf16.mxu0 0
      %1423 = vmatpush1.bf16.msra.mxu0 0
      %1424 = vmatprep.subr.bf16.mxu0 0
      %1425 = vmatpush1.bf16.msra.mxu0 0
      %1426 = vmatprep.subr.bf16.mxu0 0
      %1427 = vmatpush1.bf16.msra.mxu0 %v1406
      %1428 = vmatprep.subr.bf16.mxu0 0
      %1429 = vmatpush2.bf16.msra.mxu0 0
      %1430 = vmatprep.subr.bf16.mxu0 0
      %1431 = vmatpush2.bf16.msra.mxu0 0
      %1432 = vmatprep.subr.bf16.mxu0 0
      %1433 = vmatpush2.bf16.msra.mxu0 0
      %1434 = vmatprep.subr.bf16.mxu0 0
      %1435 = vmatpush2.bf16.msra.mxu0 0
      %1436 = vmatprep.subr.bf16.mxu0 0
      %1437 = vmatpush2.bf16.msra.mxu0 0
      %1438 = vmatprep.subr.bf16.mxu0 0
      %1439 = vmatpush2.bf16.msra.mxu0 0
      %1440 = vmatprep.subr.bf16.mxu0 0
      %1441 = vmatpush2.bf16.msra.mxu0 0
      %1442 = vmatprep.subr.bf16.mxu0 0
      %1443 = vmatpush2.bf16.msra.mxu0 0
      %1444 = vmatprep.mubr.bf16.mxu0 0
      %1445 = vmatmul.mubr.bf16.gmra.mxu0 %v1410
      %v1446 = vpop.f32.mrf.mxu0
      %v1447 = vadd.f32 0.0, %v1446
      %v1448 = vpop.f32.mrf.mxu0
      %v1449 = vpop.f32.mrf.mxu0
      %v1450 = vpop.f32.mrf.mxu0
      %1451 = vdwg.mxu0
      %s1452 = scalar_lea.vmem %s3, 2
      %v1453 = vld [vmem:[%s1452] sm:$0x3]
      %v1455 = vsel %vm1408, %v1453, 0
      %1457 = vmatprep.subr.bf16.mxu0 0
      %1458 = vmatpush1.bf16.msra.mxu0 0
      %1459 = vmatprep.subr.bf16.mxu0 0
      %1460 = vmatpush1.bf16.msra.mxu0 0
      %1461 = vmatprep.subr.bf16.mxu0 0
      %1462 = vmatpush1.bf16.msra.mxu0 0
      %1463 = vmatprep.subr.bf16.mxu0 0
      %1464 = vmatpush1.bf16.msra.mxu0 0
      %1465 = vmatprep.subr.bf16.mxu0 0
      %1466 = vmatpush1.bf16.msra.mxu0 0
      %1467 = vmatprep.subr.bf16.mxu0 0
      %1468 = vmatpush1.bf16.msra.mxu0 0
      %1469 = vmatprep.subr.bf16.mxu0 0
      %1470 = vmatpush1.bf16.msra.mxu0 0
      %1471 = vmatprep.subr.bf16.mxu0 0
      %1472 = vmatpush1.bf16.msra.mxu0 %v1406
      %1473 = vmatprep.subr.bf16.mxu0 0
      %1474 = vmatpush2.bf16.msra.mxu0 0
      %1475 = vmatprep.subr.bf16.mxu0 0
      %1476 = vmatpush2.bf16.msra.mxu0 0
      %1477 = vmatprep.subr.bf16.mxu0 0
      %1478 = vmatpush2.bf16.msra.mxu0 0
      %1479 = vmatprep.subr.bf16.mxu0 0
      %1480 = vmatpush2.bf16.msra.mxu0 0
      %1481 = vmatprep.subr.bf16.mxu0 0
      %1482 = vmatpush2.bf16.msra.mxu0 0
      %1483 = vmatprep.subr.bf16.mxu0 0
      %1484 = vmatpush2.bf16.msra.mxu0 0
      %1485 = vmatprep.subr.bf16.mxu0 0
      %1486 = vmatpush2.bf16.msra.mxu0 0
      %1487 = vmatprep.subr.bf16.mxu0 0
      %1488 = vmatpush2.bf16.msra.mxu0 0
      %1489 = vmatprep.mubr.bf16.mxu0 0
      %1490 = vmatmul.mubr.bf16.gmra.mxu0 %v1455
      %v1491 = vpop.f32.mrf.mxu0
      %v1492 = vadd.f32 0.0, %v1491
      %v1493 = vpop.f32.mrf.mxu0
      %v1494 = vpop.f32.mrf.mxu0
      %v1495 = vpop.f32.mrf.mxu0
      %1496 = vdwg.mxu0
      %v1497 = vmax.f32 %v1447, %v1492
      %v1498 = vpack.c.bf16 %v1497, %v1497
      %1499 = vst [vmem:[%s195] sm:$0x3] %v1498
      %p1500 = scmp.lt.s32.totalorder %s15, 7
      %s1501 = scalar_select %p1500, %s15, 7
      %s1502 = smul.addr %s1501, 2
      %s1503 = scalar_lea.vmem %s4, %s1502
      // Predicated region
      $region37: #{vgg_forward_pallas.11} parent=35 // pred_check
        %p1504 = pneg %p122
      $region38: #{vgg_forward_pallas.11} parent=35 // pred_check_branch
        %1506 = sbr.rel (%p1504) target = $region40
      $region39: #{vgg_forward_pallas.11} parent=35 // pred_region
        _
      $region40: #{vgg_forward_pallas.11} parent=35 // pred_fallthru
        _
    $region36: #{vgg_forward_pallas.11} parent=5 // pred_fallthru
      _
    %p1507 = scmp.le.s32.totalorder 2, %s10
    // Predicated region
    $region41: #{vgg_forward_pallas.11} parent=5 // pred_check
      %p1508 = pneg %p1507
    $region42: #{vgg_forward_pallas.11} parent=5 // pred_check_branch
      %1510 = sbr.rel (%p1508) target = $region44
    $region43: #{vgg_forward_pallas.11} parent=5 // pred_region
      %s1511 = ssub.s32 %s10, 2
      // Predicated region
      $region45: #{vgg_forward_pallas.11} parent=43 // pred_check
        %p1512 = pneg %p128
      $region46: #{vgg_forward_pallas.11} parent=43 // pred_check_branch
        %1514 = sbr.rel (%p1512) target = $region48
      $region47: #{vgg_forward_pallas.11} parent=43 // pred_region
        %p1515 = scmp.lt.s32.totalorder %s16, 7
        %s1516 = scalar_select %p1515, %s16, 7
        %s1517 = smul.addr %s1516, 2
        %s1518 = scalar_lea.vmem %s4, %s1517
      $region48: #{vgg_forward_pallas.11} parent=43 // pred_fallthru
        _
    $region44: #{vgg_forward_pallas.11} parent=5 // pred_fallthru
      _
  $region6: #{vgg_forward_pallas.11} parent=0 // loop_footer
    %s14 = sadd.s32 1, %s10
  $region7: #{vgg_forward_pallas.11} parent=0 // loop_footer_branch
    %9 = sbr.rel target = $region3
  $region8: #{vgg_forward_pallas.11} parent=0 // loop_exit
    _

// kernel: vgg_forward_pallas.10
$region0: #{vgg_forward_pallas.10}
  #allocation0 [shape = 'u32[]', space=smem, size = 0x4, offset = 0x4, fixed_abs, tag = 'smem constant byte address 0x4 - core index']
  #allocation1 [shape = 'u32[144,128]{1,0:T(1,128)}', space=vmem, size = 0x12000, scoped, tag = 'internal scratch']
  %s0 = inlined_call_operand.vmem [shape: bf16[8,100,128], index: 0, kind: input, shape index: {}]
  %s1 = inlined_call_operand.vmem [shape: bf16[9,128,128], index: 1, kind: input, shape index: {}]
  %s2 = inlined_call_operand.vmem [shape: f32[1,128], index: 2, kind: input, shape index: {}]
  %s3 = inlined_call_operand.vmem [shape: bf16[2,36,68], index: 3, kind: input, shape index: {}]
  %s4 = inlined_call_operand.vmem [shape: bf16[8,36,128], index: 4, kind: output, shape index: {}]
  %s5 = sld [smem:[#allocation0]]
  $region49: #{vgg_forward_pallas.10} parent=0
    _
  %s7 = ssub.s32 1, %s5
  %s8 = scalar_select 0, %s7, %s5
  loop: start=0, step=1, limit=10
  $region2: #{vgg_forward_pallas.10} parent=0 // loop_pre_header
    _
  $region3: #{vgg_forward_pallas.10} parent=0 // loop_header
    %s10 = sphi 0, %s14
    %p11 = scmp.ge.s32.totalorder %s10, 10
    %s20 = sphi 0, %s22
    %s23 = sphi 0, %s20
    %s24 = sphi 0, %s23
    %s40 = sphi 0, %s24
    %s44 = sphi 0, %s44
    %s46 = sphi 0, %s44
    %s47 = sphi 0, %s46
    %s61 = sphi 0, %s47
    %s65 = sphi 0, %s65
    %s67 = sphi 0, %s65
    %s68 = sphi 0, %s67
    %s82 = sphi 0, %s68
    %s86 = sphi 0, %s86
    %s88 = sphi 0, %s86
    %s89 = sphi 0, %s88
    %s103 = sphi 0, %s89
    %s109 = sphi 0, %s111
    %s112 = sphi 0, %s109
    %s113 = sphi 0, %s112
    %s129 = sphi 0, %s113
  $region4: #{vgg_forward_pallas.10} parent=0 // loop_header_branch
    %13 = sbr.rel (%p11) target = $region8
  $region5: #{vgg_forward_pallas.10} parent=0 // loop_body
    %s15 = ssub.s32 %s10, 1
    %s16 = ssub.s32 %s10, 2
    %s17 = sadd.s32 %s10, 1
    %s18 = ssub.s32 %s10, %s17
    %p19 = scmp.eq.s32.totalorder %s18, 0
    %s21 = sadd.s32 %s20, 1
    %s22 = scalar_select %p19, %s20, %s21
    %p25 = pneg %p19
    %p26 = scmp.eq.s32.totalorder %s10, 7
    %p27 = por %p25, %p26
    %p28 = scmp.ne.s32.totalorder %s20, %s23
    %p29 = scmp.eq.s32.totalorder %s10, 0
    %p30 = por %p28, %p29
    %p31 = scmp.ne.s32.totalorder %s20, %s23
    %p32 = scmp.eq.s32.totalorder %s15, 7
    %p33 = por %p31, %p32
    %p34 = scmp.ne.s32.totalorder %s23, %s24
    %p35 = scmp.eq.s32.totalorder %s15, 0
    %p36 = por %p34, %p35
    %p37 = scmp.ne.s32.totalorder %s23, %s24
    %p38 = scmp.eq.s32.totalorder %s16, 7
    %p39 = por %p37, %p38
    %p41 = scmp.ne.s32.totalorder %s24, %s40
    %p42 = scmp.eq.s32.totalorder %s16, 0
    %p43 = por %p41, %p42
    %s45 = sadd.s32 %s44, 1
    %p48 = scmp.eq.s32.totalorder %s10, 7
    %p49 = scmp.ne.s32.totalorder %s44, %s46
    %p50 = scmp.eq.s32.totalorder %s10, 0
    %p51 = por %p49, %p50
    %p52 = scmp.ne.s32.totalorder %s44, %s46
    %p53 = scmp.eq.s32.totalorder %s15, 7
    %p54 = por %p52, %p53
    %p55 = scmp.ne.s32.totalorder %s46, %s47
    %p56 = scmp.eq.s32.totalorder %s15, 0
    %p57 = por %p55, %p56
    %p58 = scmp.ne.s32.totalorder %s46, %s47
    %p59 = scmp.eq.s32.totalorder %s16, 7
    %p60 = por %p58, %p59
    %p62 = scmp.ne.s32.totalorder %s47, %s61
    %p63 = scmp.eq.s32.totalorder %s16, 0
    %p64 = por %p62, %p63
    %s66 = sadd.s32 %s65, 1
    %p69 = scmp.eq.s32.totalorder %s10, 7
    %p70 = scmp.ne.s32.totalorder %s65, %s67
    %p71 = scmp.eq.s32.totalorder %s10, 0
    %p72 = por %p70, %p71
    %p73 = scmp.ne.s32.totalorder %s65, %s67
    %p74 = scmp.eq.s32.totalorder %s15, 7
    %p75 = por %p73, %p74
    %p76 = scmp.ne.s32.totalorder %s67, %s68
    %p77 = scmp.eq.s32.totalorder %s15, 0
    %p78 = por %p76, %p77
    %p79 = scmp.ne.s32.totalorder %s67, %s68
    %p80 = scmp.eq.s32.totalorder %s16, 7
    %p81 = por %p79, %p80
    %p83 = scmp.ne.s32.totalorder %s68, %s82
    %p84 = scmp.eq.s32.totalorder %s16, 0
    %p85 = por %p83, %p84
    %s87 = sadd.s32 %s86, 1
    %p90 = scmp.eq.s32.totalorder %s10, 7
    %p91 = scmp.ne.s32.totalorder %s86, %s88
    %p92 = scmp.eq.s32.totalorder %s10, 0
    %p93 = por %p91, %p92
    %p94 = scmp.ne.s32.totalorder %s86, %s88
    %p95 = scmp.eq.s32.totalorder %s15, 7
    %p96 = por %p94, %p95
    %p97 = scmp.ne.s32.totalorder %s88, %s89
    %p98 = scmp.eq.s32.totalorder %s15, 0
    %p99 = por %p97, %p98
    %p100 = scmp.ne.s32.totalorder %s88, %s89
    %p101 = scmp.eq.s32.totalorder %s16, 7
    %p102 = por %p100, %p101
    %p104 = scmp.ne.s32.totalorder %s89, %s103
    %p105 = scmp.eq.s32.totalorder %s16, 0
    %p106 = por %p104, %p105
    %s107 = ssub.s32 %s10, %s17
    %p108 = scmp.eq.s32.totalorder %s107, 0
    %s110 = sadd.s32 %s109, 1
    %s111 = scalar_select %p108, %s109, %s110
    %p114 = pneg %p108
    %p115 = scmp.eq.s32.totalorder %s10, 7
    %p116 = por %p114, %p115
    %p117 = scmp.ne.s32.totalorder %s109, %s112
    %p118 = scmp.eq.s32.totalorder %s10, 0
    %p119 = por %p117, %p118
    %p120 = scmp.ne.s32.totalorder %s109, %s112
    %p121 = scmp.eq.s32.totalorder %s15, 7
    %p122 = por %p120, %p121
    %p123 = scmp.ne.s32.totalorder %s112, %s113
    %p124 = scmp.eq.s32.totalorder %s15, 0
    %p125 = por %p123, %p124
    %p126 = scmp.ne.s32.totalorder %s112, %s113
    %p127 = scmp.eq.s32.totalorder %s16, 7
    %p128 = por %p126, %p127
    %p130 = scmp.ne.s32.totalorder %s113, %s129
    %p131 = scmp.eq.s32.totalorder %s16, 0
    %p132 = por %p130, %p131
    %p133 = scmp.le.s32.totalorder 1, %s10
    %p134 = scmp.lt.s32.totalorder %s10, 9
    %p135 = pnand %p133, %p134
    %p136 = pneg %p135
    // Predicated region
    $region9: #{vgg_forward_pallas.10} parent=5 // pred_check
      _
    $region10: #{vgg_forward_pallas.10} parent=5 // pred_check_branch
      %138 = sbr.rel (%p135) target = $region12
    $region11: #{vgg_forward_pallas.10} parent=5 // pred_region
      %s139 = ssub.s32 %s10, 1
      // Predicated region
      $region13: #{vgg_forward_pallas.10} parent=11 // pred_check
        %p140 = pneg %p57
      $region14: #{vgg_forward_pallas.10} parent=11 // pred_check_branch
        %142 = sbr.rel (%p140) target = $region16
      $region15: #{vgg_forward_pallas.10} parent=11 // pred_region
        _
      $region16: #{vgg_forward_pallas.10} parent=11 // pred_fallthru
        _
      // Predicated region
      $region17: #{vgg_forward_pallas.10} parent=11 // pred_check
        %p143 = pneg %p78
      $region18: #{vgg_forward_pallas.10} parent=11 // pred_check_branch
        %145 = sbr.rel (%p143) target = $region20
      $region19: #{vgg_forward_pallas.10} parent=11 // pred_region
        _
      $region20: #{vgg_forward_pallas.10} parent=11 // pred_fallthru
        _
      // Predicated region
      $region21: #{vgg_forward_pallas.10} parent=11 // pred_check
        %p146 = pneg %p99
      $region22: #{vgg_forward_pallas.10} parent=11 // pred_check_branch
        %148 = sbr.rel (%p146) target = $region24
      $region23: #{vgg_forward_pallas.10} parent=11 // pred_region
        _
      $region24: #{vgg_forward_pallas.10} parent=11 // pred_fallthru
        _
    $region12: #{vgg_forward_pallas.10} parent=5 // pred_fallthru
      _
    %p149 = scmp.lt.s32.totalorder %s10, 8
    // Predicated region
    $region25: #{vgg_forward_pallas.10} parent=5 // pred_check
      %p150 = pneg %p149
    $region26: #{vgg_forward_pallas.10} parent=5 // pred_check_branch
      %152 = sbr.rel (%p150) target = $region28
    $region27: #{vgg_forward_pallas.10} parent=5 // pred_region
      // Predicated region
      $region29: #{vgg_forward_pallas.10} parent=27 // pred_check
        %p153 = pneg %p30
      $region30: #{vgg_forward_pallas.10} parent=27 // pred_check_branch
        %155 = sbr.rel (%p153) target = $region32
      $region31: #{vgg_forward_pallas.10} parent=27 // pred_region
        %p156 = scmp.lt.s32.totalorder %s10, 7
        %s157 = scalar_select %p156, %s10, 7
        %s158 = smul.addr %s157, 13
        %s159 = smul.addr %s158, 4
        %s160 = scalar_lea.vmem %s0, %s159
      $region32: #{vgg_forward_pallas.10} parent=27 // pred_fallthru
        _
    $region28: #{vgg_forward_pallas.10} parent=5 // pred_fallthru
      _
    %p161 = scmp.le.s32.totalorder 1, %s10
    %p162 = scmp.lt.s32.totalorder %s10, 9
    %p163 = pnand %p161, %p162
    %p164 = pneg %p163
    // Predicated region
    $region33: #{vgg_forward_pallas.10} parent=5 // pred_check
      _
    $region34: #{vgg_forward_pallas.10} parent=5 // pred_check_branch
      %166 = sbr.rel (%p163) target = $region36
    $region35: #{vgg_forward_pallas.10} parent=5 // pred_region
      %s167 = ssub.s32 %s10, 1
      %p168 = scmp.lt.s32.totalorder %s15, 7
      %s169 = scalar_select %p168, %s15, 7
      %s170 = smul.addr %s169, 13
      %s171 = smul.addr %s170, 4
      %s172 = scalar_lea.vmem %s0, %s171
      %p173 = pneg %p36
      %p174 = pneg %p33
      %p175 = pneg %p57
      %p176 = pneg %p54
      %p177 = pneg %p78
      %p178 = pneg %p75
      %p179 = pneg %p99
      %p180 = pneg %p96
      %p181 = pneg %p125
      %p182 = pneg %p122
      %p183 = scmp.lt.s32.totalorder %s15, 7
      %s184 = scalar_select %p183, %s15, 7
      %s185 = smul.addr %s184, 5
      %s186 = smul.addr %s185, 4
      %s187 = scalar_lea.vmem %s4, %s186
      %p188 = scmp.lt.s32.totalorder %s15, 7
      %s189 = scalar_select %p188, %s15, 7
      %s190 = smul.addr %s189, 13
      %s191 = smul.addr %s190, 4
      %s192 = scalar_lea.vmem %s0, %s191
      %p193 = scmp.lt.s32.totalorder %s15, 7
      %s194 = scalar_select %p193, %s15, 7
      %s195 = smul.addr %s194, 5
      %s196 = smul.addr %s195, 4
      %s197 = scalar_lea.vmem %s4, %s196
      %v199 = vld [vmem:[%s192] sm:$0xf]
      %v200 = vld [vmem:[%s192 + $0x4] sm:$0xf]
      %v201 = vld [vmem:[%s192 + $0x8] sm:$0xf]
      %v202 = vld [vmem:[%s192 + $0xc] sm:$0xf]
      %v203 = vld [vmem:[%s192 + $0x10] sm:$0xf]
      %v204 = vld [vmem:[%s192 + $0x14] sm:$0xf]
      %v205 = vld [vmem:[%s192 + $0x18] sm:$0xf]
      %v206 = vld [vmem:[%s192 + $0x1c] sm:$0xf]
      %v207 = vld [vmem:[%s192 + $0x20] sm:$0xf]
      %v208 = vld [vmem:[%s192 + $0x24] sm:$0x7]
      %v209 = vld [vmem:[%s1] sm:$0xf]
      %v210 = vld [vmem:[%s1 + $0x4] sm:$0xf]
      %v211 = vld [vmem:[%s1 + $0x8] sm:$0xf]
      %v212 = vld [vmem:[%s1 + $0xc] sm:$0xf]
      %v213 = vld [vmem:[%s1 + $0x10] sm:$0xf]
      %v214 = vld [vmem:[%s1 + $0x14] sm:$0xf]
      %v215 = vld [vmem:[%s1 + $0x18] sm:$0xf]
      %v216 = vld [vmem:[%s1 + $0x1c] sm:$0xf]
      %v217 = vld [vmem:[%s1 + $0x20] sm:$0xf]
      %v218 = vld [vmem:[%s1 + $0x24] sm:$0xf]
      %v219 = vld [vmem:[%s1 + $0x28] sm:$0xf]
      %v220 = vld [vmem:[%s1 + $0x2c] sm:$0xf]
      %v221 = vld [vmem:[%s1 + $0x30] sm:$0xf]
      %v222 = vld [vmem:[%s1 + $0x34] sm:$0xf]
      %v223 = vld [vmem:[%s1 + $0x38] sm:$0xf]
      %v224 = vld [vmem:[%s1 + $0x3c] sm:$0xf]
      %v225 = vld [vmem:[%s192 + $0x24] sm:$0xf]
      %s226 = scalar_lea.vmem %s1, 64
      %v227 = vld [vmem:[%s226] sm:$0xf]
      %v228 = vld [vmem:[%s226 + $0x4] sm:$0xf]
      %v229 = vld [vmem:[%s226 + $0x8] sm:$0xf]
      %v230 = vld [vmem:[%s226 + $0xc] sm:$0xf]
      %v231 = vld [vmem:[%s226 + $0x10] sm:$0xf]
      %v232 = vld [vmem:[%s226 + $0x14] sm:$0xf]
      %v233 = vld [vmem:[%s226 + $0x18] sm:$0xf]
      %v234 = vld [vmem:[%s226 + $0x1c] sm:$0xf]
      %v235 = vld [vmem:[%s226 + $0x20] sm:$0xf]
      %v236 = vld [vmem:[%s226 + $0x24] sm:$0xf]
      %v237 = vld [vmem:[%s226 + $0x28] sm:$0xf]
      %v238 = vld [vmem:[%s226 + $0x2c] sm:$0xf]
      %v239 = vld [vmem:[%s226 + $0x30] sm:$0xf]
      %v240 = vld [vmem:[%s226 + $0x34] sm:$0xf]
      %v241 = vld [vmem:[%s226 + $0x38] sm:$0xf]
      %v242 = vld [vmem:[%s226 + $0x3c] sm:$0xf]
      %v253 = vunpack.c.l.b16 %v199
      %v254 = vunpack.c.l.b16 %v200
      %v255 = vunpack.c.l.b16 %v201
      %v256 = vunpack.c.l.b16 %v202
      %v257 = vunpack.c.l.b16 %v203
      %v258 = vunpack.c.l.b16 %v204
      %v259 = vunpack.c.l.b16 %v205
      %v260 = vunpack.c.l.b16 %v206
      %v261 = vunpack.c.l.b16 %v207
      %v262 = vunpack.c.l.b16 %v225
      %v263 = vpack.c.b16 %v254, %v253
      %v264 = vpack.c.b16 %v256, %v255
      %v265 = vpack.c.b16 %v258, %v257
      %v266 = vpack.c.b16 %v260, %v259
      %v267 = vpack.c.b16 %v262, %v261
      %vm268 = vsmask.f32 7424
      %v270 = vshrl.u32 %v263, 16
      %v272 = vshll.u32 %v263, 16
      %v274 = vrot.slane %v272, 1
      %v275 = vor.u32 %v270, %v274
      %v277 = vshll.u32 %v264, 16
      %v279 = vrot.slane %v277, 1
      %v280 = vsel %vm268, %v275, %v279
      %v281 = vshrl.u32 %v264, 16
      %v283 = vor.u32 %v281, %v279
      %v285 = vshll.u32 %v265, 16
      %v287 = vrot.slane %v285, 1
      %v288 = vsel %vm268, %v283, %v287
      %v289 = vshrl.u32 %v265, 16
      %v291 = vor.u32 %v289, %v287
      %v293 = vshll.u32 %v266, 16
      %v295 = vrot.slane %v293, 1
      %v296 = vsel %vm268, %v291, %v295
      %v297 = vshrl.u32 %v266, 16
      %v299 = vor.u32 %v297, %v295
      %v301 = vshll.u32 %v267, 16
      %v303 = vrot.slane %v301, 1
      %v304 = vsel %vm268, %v299, %v303
      %v305 = vshrl.u32 %v267, 16
      %v307 = vor.u32 %v305, %v303
      %v329 = vunpack.c.l.b16 %v227
      %v330 = vunpack.c.l.b16 %v228
      %v331 = vunpack.c.l.b16 %v229
      %v332 = vunpack.c.l.b16 %v230
      %v333 = vunpack.c.l.b16 %v231
      %v334 = vunpack.c.l.b16 %v232
      %v335 = vunpack.c.l.b16 %v233
      %v336 = vunpack.c.l.b16 %v234
      %v337 = vunpack.c.l.b16 %v235
      %v338 = vunpack.c.l.b16 %v236
      %v339 = vunpack.c.l.b16 %v237
      %v340 = vunpack.c.l.b16 %v238
      %v341 = vunpack.c.l.b16 %v239
      %v342 = vunpack.c.l.b16 %v240
      %v343 = vunpack.c.l.b16 %v241
      %v344 = vunpack.c.l.b16 %v242
      %v345 = vpack.c.b16 %v330, %v329
      %v346 = vpack.c.b16 %v332, %v331
      %v347 = vpack.c.b16 %v334, %v333
      %v348 = vpack.c.b16 %v336, %v335
      %v349 = vpack.c.b16 %v338, %v337
      %v350 = vpack.c.b16 %v340, %v339
      %v351 = vpack.c.b16 %v342, %v341
      %v352 = vpack.c.b16 %v344, %v343
      %361 = vmatprep.subr.bf16.mxu0 0
      %362 = vmatpush1.bf16.msra.mxu0 %v352
      %363 = vmatprep.subr.bf16.mxu0 0
      %364 = vmatpush1.bf16.msra.mxu0 %v351
      %365 = vmatprep.subr.bf16.mxu0 0
      %366 = vmatpush1.bf16.msra.mxu0 %v350
      %367 = vmatprep.subr.bf16.mxu0 0
      %368 = vmatpush1.bf16.msra.mxu0 %v349
      %369 = vmatprep.subr.bf16.mxu0 0
      %370 = vmatpush1.bf16.msra.mxu0 %v348
      %371 = vmatprep.subr.bf16.mxu0 0
      %372 = vmatpush1.bf16.msra.mxu0 %v347
      %373 = vmatprep.subr.bf16.mxu0 0
      %374 = vmatpush1.bf16.msra.mxu0 %v346
      %375 = vmatprep.subr.bf16.mxu0 0
      %376 = vmatpush1.bf16.msra.mxu0 %v345
      %377 = vmatprep.subr.bf16.mxu0 0
      %378 = vmatpush2.bf16.msra.mxu0 0
      %379 = vmatprep.subr.bf16.mxu0 0
      %380 = vmatpush2.bf16.msra.mxu0 0
      %381 = vmatprep.subr.bf16.mxu0 0
      %382 = vmatpush2.bf16.msra.mxu0 0
      %383 = vmatprep.subr.bf16.mxu0 0
      %384 = vmatpush2.bf16.msra.mxu0 0
      %385 = vmatprep.subr.bf16.mxu0 0
      %386 = vmatpush2.bf16.msra.mxu0 0
      %387 = vmatprep.subr.bf16.mxu0 0
      %388 = vmatpush2.bf16.msra.mxu0 0
      %389 = vmatprep.subr.bf16.mxu0 0
      %390 = vmatpush2.bf16.msra.mxu0 0
      %391 = vmatprep.subr.bf16.mxu0 0
      %392 = vmatpush2.bf16.msra.mxu0 0
      %393 = vmatprep.mubr.bf16.mxu0 0
      %394 = vmatmul.mubr.bf16.gmra.mxu0 %v280
      %v395 = vpop.f32.mrf.mxu0
      %v396 = vadd.f32 0.0, %v395
      %v397 = vpop.f32.mrf.mxu0
      %v398 = vpop.f32.mrf.mxu0
      %v399 = vadd.f32 0.0, %v398
      %v400 = vpop.f32.mrf.mxu0
      %401 = vmatprep.mubr.bf16.mxu0 0
      %402 = vmatmul.mubr.bf16.gmra.mxu0 %v288
      %v403 = vpop.f32.mrf.mxu0
      %v404 = vadd.f32 0.0, %v403
      %v405 = vpop.f32.mrf.mxu0
      %v406 = vpop.f32.mrf.mxu0
      %v407 = vadd.f32 0.0, %v406
      %v408 = vpop.f32.mrf.mxu0
      %409 = vmatprep.mubr.bf16.mxu0 0
      %410 = vmatmul.mubr.bf16.gmra.mxu0 %v296
      %v411 = vpop.f32.mrf.mxu0
      %v412 = vadd.f32 0.0, %v411
      %v413 = vpop.f32.mrf.mxu0
      %v414 = vpop.f32.mrf.mxu0
      %v415 = vadd.f32 0.0, %v414
      %v416 = vpop.f32.mrf.mxu0
      %417 = vmatprep.mubr.bf16.mxu0 0
      %418 = vmatmul.mubr.bf16.gmra.mxu0 %v304
      %v419 = vpop.f32.mrf.mxu0
      %v420 = vadd.f32 0.0, %v419
      %v421 = vpop.f32.mrf.mxu0
      %v422 = vpop.f32.mrf.mxu0
      %v423 = vadd.f32 0.0, %v422
      %v424 = vpop.f32.mrf.mxu0
      %425 = vmatprep.mubr.bf16.mxu0 0
      %426 = vmatmul.mubr.bf16.gmra.mxu0 %v307
      %v427 = vpop.f32.mrf.mxu0
      %v428 = vadd.f32 0.0, %v427
      %v429 = vpop.f32.mrf.mxu0
      %v430 = vpop.f32.mrf.mxu0
      %v431 = vadd.f32 0.0, %v430
      %v432 = vpop.f32.mrf.mxu0
      %433 = vdwg.mxu0
      %v435 = vunpack.c.l.b16 %v208
      %v436 = vpack.c.b16 %v435, %v261
      %v458 = vunpack.c.l.b16 %v209
      %v459 = vunpack.c.l.b16 %v210
      %v460 = vunpack.c.l.b16 %v211
      %v461 = vunpack.c.l.b16 %v212
      %v462 = vunpack.c.l.b16 %v213
      %v463 = vunpack.c.l.b16 %v214
      %v464 = vunpack.c.l.b16 %v215
      %v465 = vunpack.c.l.b16 %v216
      %v466 = vunpack.c.l.b16 %v217
      %v467 = vunpack.c.l.b16 %v218
      %v468 = vunpack.c.l.b16 %v219
      %v469 = vunpack.c.l.b16 %v220
      %v470 = vunpack.c.l.b16 %v221
      %v471 = vunpack.c.l.b16 %v222
      %v472 = vunpack.c.l.b16 %v223
      %v473 = vunpack.c.l.b16 %v224
      %v474 = vpack.c.b16 %v459, %v458
      %v475 = vpack.c.b16 %v461, %v460
      %v476 = vpack.c.b16 %v463, %v462
      %v477 = vpack.c.b16 %v465, %v464
      %v478 = vpack.c.b16 %v467, %v466
      %v479 = vpack.c.b16 %v469, %v468
      %v480 = vpack.c.b16 %v471, %v470
      %v481 = vpack.c.b16 %v473, %v472
      %490 = vmatprep.subr.bf16.mxu0 0
      %491 = vmatpush1.bf16.msra.mxu0 %v481
      %492 = vmatprep.subr.bf16.mxu0 0
      %493 = vmatpush1.bf16.msra.mxu0 %v480
      %494 = vmatprep.subr.bf16.mxu0 0
      %495 = vmatpush1.bf16.msra.mxu0 %v479
      %496 = vmatprep.subr.bf16.mxu0 0
      %497 = vmatpush1.bf16.msra.mxu0 %v478
      %498 = vmatprep.subr.bf16.mxu0 0
      %499 = vmatpush1.bf16.msra.mxu0 %v477
      %500 = vmatprep.subr.bf16.mxu0 0
      %501 = vmatpush1.bf16.msra.mxu0 %v476
      %502 = vmatprep.subr.bf16.mxu0 0
      %503 = vmatpush1.bf16.msra.mxu0 %v475
      %504 = vmatprep.subr.bf16.mxu0 0
      %505 = vmatpush1.bf16.msra.mxu0 %v474
      %506 = vmatprep.subr.bf16.mxu0 0
      %507 = vmatpush2.bf16.msra.mxu0 0
      %508 = vmatprep.subr.bf16.mxu0 0
      %509 = vmatpush2.bf16.msra.mxu0 0
      %510 = vmatprep.subr.bf16.mxu0 0
      %511 = vmatpush2.bf16.msra.mxu0 0
      %512 = vmatprep.subr.bf16.mxu0 0
      %513 = vmatpush2.bf16.msra.mxu0 0
      %514 = vmatprep.subr.bf16.mxu0 0
      %515 = vmatpush2.bf16.msra.mxu0 0
      %516 = vmatprep.subr.bf16.mxu0 0
      %517 = vmatpush2.bf16.msra.mxu0 0
      %518 = vmatprep.subr.bf16.mxu0 0
      %519 = vmatpush2.bf16.msra.mxu0 0
      %520 = vmatprep.subr.bf16.mxu0 0
      %521 = vmatpush2.bf16.msra.mxu0 0
      %522 = vmatprep.mubr.bf16.mxu0 0
      %523 = vmatmul.mubr.bf16.gmra.mxu0 %v263
      %v524 = vpop.f32.mrf.mxu0
      %v525 = vadd.f32 %v396, %v524
      %v526 = vpop.f32.mrf.mxu0
      %v527 = vpop.f32.mrf.mxu0
      %v528 = vadd.f32 %v399, %v527
      %v529 = vpop.f32.mrf.mxu0
      %530 = vmatprep.mubr.bf16.mxu0 0
      %531 = vmatmul.mubr.bf16.gmra.mxu0 %v264
      %v532 = vpop.f32.mrf.mxu0
      %v533 = vadd.f32 %v404, %v532
      %v534 = vpop.f32.mrf.mxu0
      %v535 = vpop.f32.mrf.mxu0
      %v536 = vadd.f32 %v407, %v535
      %v537 = vpop.f32.mrf.mxu0
      %538 = vmatprep.mubr.bf16.mxu0 0
      %539 = vmatmul.mubr.bf16.gmra.mxu0 %v265
      %v540 = vpop.f32.mrf.mxu0
      %v541 = vadd.f32 %v412, %v540
      %v542 = vpop.f32.mrf.mxu0
      %v543 = vpop.f32.mrf.mxu0
      %v544 = vadd.f32 %v415, %v543
      %v545 = vpop.f32.mrf.mxu0
      %546 = vmatprep.mubr.bf16.mxu0 0
      %547 = vmatmul.mubr.bf16.gmra.mxu0 %v266
      %v548 = vpop.f32.mrf.mxu0
      %v549 = vadd.f32 %v420, %v548
      %v550 = vpop.f32.mrf.mxu0
      %v551 = vpop.f32.mrf.mxu0
      %v552 = vadd.f32 %v423, %v551
      %v553 = vpop.f32.mrf.mxu0
      %554 = vmatprep.mubr.bf16.mxu0 0
      %555 = vmatmul.mubr.bf16.gmra.mxu0 %v436
      %v556 = vpop.f32.mrf.mxu0
      %v557 = vadd.f32 %v428, %v556
      %v558 = vpop.f32.mrf.mxu0
      %v559 = vpop.f32.mrf.mxu0
      %v560 = vadd.f32 %v431, %v559
      %v561 = vpop.f32.mrf.mxu0
      %562 = vdwg.mxu0
      %v563 = vld [vmem:[%s192] sm:$0xe]
      %s564 = scalar_lea.vmem %s1, 128
      %v565 = vld [vmem:[%s564] sm:$0xf]
      %v566 = vld [vmem:[%s564 + $0x4] sm:$0xf]
      %v567 = vld [vmem:[%s564 + $0x8] sm:$0xf]
      %v568 = vld [vmem:[%s564 + $0xc] sm:$0xf]
      %v569 = vld [vmem:[%s564 + $0x10] sm:$0xf]
      %v570 = vld [vmem:[%s564 + $0x14] sm:$0xf]
      %v571 = vld [vmem:[%s564 + $0x18] sm:$0xf]
      %v572 = vld [vmem:[%s564 + $0x1c] sm:$0xf]
      %v573 = vld [vmem:[%s564 + $0x20] sm:$0xf]
      %v574 = vld [vmem:[%s564 + $0x24] sm:$0xf]
      %v575 = vld [vmem:[%s564 + $0x28] sm:$0xf]
      %v576 = vld [vmem:[%s564 + $0x2c] sm:$0xf]
      %v577 = vld [vmem:[%s564 + $0x30] sm:$0xf]
      %v578 = vld [vmem:[%s564 + $0x34] sm:$0xf]
      %v579 = vld [vmem:[%s564 + $0x38] sm:$0xf]
      %v580 = vld [vmem:[%s564 + $0x3c] sm:$0xf]
      %v582 = vunpack.c.l.b16 %v563
      %v583 = vpack.c.b16 %v254, %v582
      %vm584 = vcmask 1046528
      %v585 = vrot.slane %v583, 1
      %v586 = vrot.slane %v264, 1
      %v587 = vsel %vm584, %v585, %v586
      %v588 = vrot.slane %v265, 1
      %v589 = vsel %vm584, %v586, %v588
      %v590 = vrot.slane %v266, 1
      %v591 = vsel %vm584, %v588, %v590
      %v592 = vrot.slane %v267, 1
      %v593 = vsel %vm584, %v590, %v592
      %v615 = vunpack.c.l.b16 %v565
      %v616 = vunpack.c.l.b16 %v566
      %v617 = vunpack.c.l.b16 %v567
      %v618 = vunpack.c.l.b16 %v568
      %v619 = vunpack.c.l.b16 %v569
      %v620 = vunpack.c.l.b16 %v570
      %v621 = vunpack.c.l.b16 %v571
      %v622 = vunpack.c.l.b16 %v572
      %v623 = vunpack.c.l.b16 %v573
      %v624 = vunpack.c.l.b16 %v574
      %v625 = vunpack.c.l.b16 %v575
      %v626 = vunpack.c.l.b16 %v576
      %v627 = vunpack.c.l.b16 %v577
      %v628 = vunpack.c.l.b16 %v578
      %v629 = vunpack.c.l.b16 %v579
      %v630 = vunpack.c.l.b16 %v580
      %v631 = vpack.c.b16 %v616, %v615
      %v632 = vpack.c.b16 %v618, %v617
      %v633 = vpack.c.b16 %v620, %v619
      %v634 = vpack.c.b16 %v622, %v621
      %v635 = vpack.c.b16 %v624, %v623
      %v636 = vpack.c.b16 %v626, %v625
      %v637 = vpack.c.b16 %v628, %v627
      %v638 = vpack.c.b16 %v630, %v629
      %647 = vmatprep.subr.bf16.mxu0 0
      %648 = vmatpush1.bf16.msra.mxu0 %v638
      %649 = vmatprep.subr.bf16.mxu0 0
      %650 = vmatpush1.bf16.msra.mxu0 %v637
      %651 = vmatprep.subr.bf16.mxu0 0
      %652 = vmatpush1.bf16.msra.mxu0 %v636
      %653 = vmatprep.subr.bf16.mxu0 0
      %654 = vmatpush1.bf16.msra.mxu0 %v635
      %655 = vmatprep.subr.bf16.mxu0 0
      %656 = vmatpush1.bf16.msra.mxu0 %v634
      %657 = vmatprep.subr.bf16.mxu0 0
      %658 = vmatpush1.bf16.msra.mxu0 %v633
      %659 = vmatprep.subr.bf16.mxu0 0
      %660 = vmatpush1.bf16.msra.mxu0 %v632
      %661 = vmatprep.subr.bf16.mxu0 0
      %662 = vmatpush1.bf16.msra.mxu0 %v631
      %663 = vmatprep.subr.bf16.mxu0 0
      %664 = vmatpush2.bf16.msra.mxu0 0
      %665 = vmatprep.subr.bf16.mxu0 0
      %666 = vmatpush2.bf16.msra.mxu0 0
      %667 = vmatprep.subr.bf16.mxu0 0
      %668 = vmatpush2.bf16.msra.mxu0 0
      %669 = vmatprep.subr.bf16.mxu0 0
      %670 = vmatpush2.bf16.msra.mxu0 0
      %671 = vmatprep.subr.bf16.mxu0 0
      %672 = vmatpush2.bf16.msra.mxu0 0
      %673 = vmatprep.subr.bf16.mxu0 0
      %674 = vmatpush2.bf16.msra.mxu0 0
      %675 = vmatprep.subr.bf16.mxu0 0
      %676 = vmatpush2.bf16.msra.mxu0 0
      %677 = vmatprep.subr.bf16.mxu0 0
      %678 = vmatpush2.bf16.msra.mxu0 0
      %679 = vmatprep.mubr.bf16.mxu0 0
      %680 = vmatmul.mubr.bf16.gmra.mxu0 %v587
      %v681 = vpop.f32.mrf.mxu0
      %v682 = vadd.f32 0.0, %v681
      %v683 = vpop.f32.mrf.mxu0
      %v684 = vpop.f32.mrf.mxu0
      %v685 = vadd.f32 0.0, %v684
      %v686 = vpop.f32.mrf.mxu0
      %687 = vmatprep.mubr.bf16.mxu0 0
      %688 = vmatmul.mubr.bf16.gmra.mxu0 %v589
      %v689 = vpop.f32.mrf.mxu0
      %v690 = vadd.f32 0.0, %v689
      %v691 = vpop.f32.mrf.mxu0
      %v692 = vpop.f32.mrf.mxu0
      %v693 = vadd.f32 0.0, %v692
      %v694 = vpop.f32.mrf.mxu0
      %695 = vmatprep.mubr.bf16.mxu0 0
      %696 = vmatmul.mubr.bf16.gmra.mxu0 %v591
      %v697 = vpop.f32.mrf.mxu0
      %v698 = vadd.f32 0.0, %v697
      %v699 = vpop.f32.mrf.mxu0
      %v700 = vpop.f32.mrf.mxu0
      %v701 = vadd.f32 0.0, %v700
      %v702 = vpop.f32.mrf.mxu0
      %703 = vmatprep.mubr.bf16.mxu0 0
      %704 = vmatmul.mubr.bf16.gmra.mxu0 %v593
      %v705 = vpop.f32.mrf.mxu0
      %v706 = vadd.f32 0.0, %v705
      %v707 = vpop.f32.mrf.mxu0
      %v708 = vpop.f32.mrf.mxu0
      %v709 = vadd.f32 0.0, %v708
      %v710 = vpop.f32.mrf.mxu0
      %711 = vmatprep.mubr.bf16.mxu0 0
      %712 = vmatmul.mubr.bf16.gmra.mxu0 %v592
      %v713 = vpop.f32.mrf.mxu0
      %v714 = vadd.f32 0.0, %v713
      %v715 = vpop.f32.mrf.mxu0
      %v716 = vpop.f32.mrf.mxu0
      %v717 = vadd.f32 0.0, %v716
      %v718 = vpop.f32.mrf.mxu0
      %719 = vdwg.mxu0
      %v720 = vadd.f32 %v525, %v682
      %v721 = vadd.f32 %v528, %v685
      %v722 = vadd.f32 %v533, %v690
      %v723 = vadd.f32 %v536, %v693
      %v724 = vadd.f32 %v541, %v698
      %v725 = vadd.f32 %v544, %v701
      %v726 = vadd.f32 %v549, %v706
      %v727 = vadd.f32 %v552, %v709
      %v728 = vadd.f32 %v557, %v714
      %v729 = vadd.f32 %v560, %v717
      %v730 = vld [vmem:[%s192 + $0x4] sm:$0xe]
      %v731 = vld [vmem:[%s192 + $0x8] sm:$0xf]
      %v732 = vld [vmem:[%s192 + $0xc] sm:$0xf]
      %v733 = vld [vmem:[%s192 + $0x10] sm:$0xf]
      %v734 = vld [vmem:[%s192 + $0x14] sm:$0xf]
      %v735 = vld [vmem:[%s192 + $0x18] sm:$0xf]
      %v736 = vld [vmem:[%s192 + $0x1c] sm:$0xf]
      %v737 = vld [vmem:[%s192 + $0x20] sm:$0xf]
      %v738 = vld [vmem:[%s192 + $0x24] sm:$0xf]
      %v739 = vld [vmem:[%s192 + $0x28] sm:$0xf]
      %s740 = scalar_lea.vmem %s1, 192
      %v741 = vld [vmem:[%s740] sm:$0xf]
      %v742 = vld [vmem:[%s740 + $0x4] sm:$0xf]
      %v743 = vld [vmem:[%s740 + $0x8] sm:$0xf]
      %v744 = vld [vmem:[%s740 + $0xc] sm:$0xf]
      %v745 = vld [vmem:[%s740 + $0x10] sm:$0xf]
      %v746 = vld [vmem:[%s740 + $0x14] sm:$0xf]
      %v747 = vld [vmem:[%s740 + $0x18] sm:$0xf]
      %v748 = vld [vmem:[%s740 + $0x1c] sm:$0xf]
      %v749 = vld [vmem:[%s740 + $0x20] sm:$0xf]
      %v750 = vld [vmem:[%s740 + $0x24] sm:$0xf]
      %v751 = vld [vmem:[%s740 + $0x28] sm:$0xf]
      %v752 = vld [vmem:[%s740 + $0x2c] sm:$0xf]
      %v753 = vld [vmem:[%s740 + $0x30] sm:$0xf]
      %v754 = vld [vmem:[%s740 + $0x34] sm:$0xf]
      %v755 = vld [vmem:[%s740 + $0x38] sm:$0xf]
      %v756 = vld [vmem:[%s740 + $0x3c] sm:$0xf]
      %v767 = vunpack.c.l.b16 %v730
      %v768 = vunpack.c.l.b16 %v731
      %v769 = vunpack.c.l.b16 %v732
      %v770 = vunpack.c.l.b16 %v733
      %v771 = vunpack.c.l.b16 %v734
      %v772 = vunpack.c.l.b16 %v735
      %v773 = vunpack.c.l.b16 %v736
      %v774 = vunpack.c.l.b16 %v737
      %v775 = vunpack.c.l.b16 %v738
      %v776 = vunpack.c.l.b16 %v739
      %v777 = vpack.c.b16 %v768, %v767
      %v778 = vpack.c.b16 %v770, %v769
      %v779 = vpack.c.b16 %v772, %v771
      %v780 = vpack.c.b16 %v774, %v773
      %v781 = vpack.c.b16 %v776, %v775
      %v782 = vrot.slane %v777, 1
      %v783 = vrot.slane %v778, 1
      %v784 = vsel %vm584, %v782, %v783
      %v785 = vrot.slane %v779, 1
      %v786 = vsel %vm584, %v783, %v785
      %v787 = vrot.slane %v780, 1
      %v788 = vsel %vm584, %v785, %v787
      %v789 = vrot.slane %v781, 1
      %v790 = vsel %vm584, %v787, %v789
      %v812 = vunpack.c.l.b16 %v741
      %v813 = vunpack.c.l.b16 %v742
      %v814 = vunpack.c.l.b16 %v743
      %v815 = vunpack.c.l.b16 %v744
      %v816 = vunpack.c.l.b16 %v745
      %v817 = vunpack.c.l.b16 %v746
      %v818 = vunpack.c.l.b16 %v747
      %v819 = vunpack.c.l.b16 %v748
      %v820 = vunpack.c.l.b16 %v749
      %v821 = vunpack.c.l.b16 %v750
      %v822 = vunpack.c.l.b16 %v751
      %v823 = vunpack.c.l.b16 %v752
      %v824 = vunpack.c.l.b16 %v753
      %v825 = vunpack.c.l.b16 %v754
      %v826 = vunpack.c.l.b16 %v755
      %v827 = vunpack.c.l.b16 %v756
      %v828 = vpack.c.b16 %v813, %v812
      %v829 = vpack.c.b16 %v815, %v814
      %v830 = vpack.c.b16 %v817, %v816
      %v831 = vpack.c.b16 %v819, %v818
      %v832 = vpack.c.b16 %v821, %v820
      %v833 = vpack.c.b16 %v823, %v822
      %v834 = vpack.c.b16 %v825, %v824
      %v835 = vpack.c.b16 %v827, %v826
      %844 = vmatprep.subr.bf16.mxu0 0
      %845 = vmatpush1.bf16.msra.mxu0 %v835
      %846 = vmatprep.subr.bf16.mxu0 0
      %847 = vmatpush1.bf16.msra.mxu0 %v834
      %848 = vmatprep.subr.bf16.mxu0 0
      %849 = vmatpush1.bf16.msra.mxu0 %v833
      %850 = vmatprep.subr.bf16.mxu0 0
      %851 = vmatpush1.bf16.msra.mxu0 %v832
      %852 = vmatprep.subr.bf16.mxu0 0
      %853 = vmatpush1.bf16.msra.mxu0 %v831
      %854 = vmatprep.subr.bf16.mxu0 0
      %855 = vmatpush1.bf16.msra.mxu0 %v830
      %856 = vmatprep.subr.bf16.mxu0 0
      %857 = vmatpush1.bf16.msra.mxu0 %v829
      %858 = vmatprep.subr.bf16.mxu0 0
      %859 = vmatpush1.bf16.msra.mxu0 %v828
      %860 = vmatprep.subr.bf16.mxu0 0
      %861 = vmatpush2.bf16.msra.mxu0 0
      %862 = vmatprep.subr.bf16.mxu0 0
      %863 = vmatpush2.bf16.msra.mxu0 0
      %864 = vmatprep.subr.bf16.mxu0 0
      %865 = vmatpush2.bf16.msra.mxu0 0
      %866 = vmatprep.subr.bf16.mxu0 0
      %867 = vmatpush2.bf16.msra.mxu0 0
      %868 = vmatprep.subr.bf16.mxu0 0
      %869 = vmatpush2.bf16.msra.mxu0 0
      %870 = vmatprep.subr.bf16.mxu0 0
      %871 = vmatpush2.bf16.msra.mxu0 0
      %872 = vmatprep.subr.bf16.mxu0 0
      %873 = vmatpush2.bf16.msra.mxu0 0
      %874 = vmatprep.subr.bf16.mxu0 0
      %875 = vmatpush2.bf16.msra.mxu0 0
      %876 = vmatprep.mubr.bf16.mxu0 0
      %877 = vmatmul.mubr.bf16.gmra.mxu0 %v784
      %v878 = vpop.f32.mrf.mxu0
      %v879 = vadd.f32 0.0, %v878
      %v880 = vpop.f32.mrf.mxu0
      %v881 = vpop.f32.mrf.mxu0
      %v882 = vadd.f32 0.0, %v881
      %v883 = vpop.f32.mrf.mxu0
      %884 = vmatprep.mubr.bf16.mxu0 0
      %885 = vmatmul.mubr.bf16.gmra.mxu0 %v786
      %v886 = vpop.f32.mrf.mxu0
      %v887 = vadd.f32 0.0, %v886
      %v888 = vpop.f32.mrf.mxu0
      %v889 = vpop.f32.mrf.mxu0
      %v890 = vadd.f32 0.0, %v889
      %v891 = vpop.f32.mrf.mxu0
      %892 = vmatprep.mubr.bf16.mxu0 0
      %893 = vmatmul.mubr.bf16.gmra.mxu0 %v788
      %v894 = vpop.f32.mrf.mxu0
      %v895 = vadd.f32 0.0, %v894
      %v896 = vpop.f32.mrf.mxu0
      %v897 = vpop.f32.mrf.mxu0
      %v898 = vadd.f32 0.0, %v897
      %v899 = vpop.f32.mrf.mxu0
      %900 = vmatprep.mubr.bf16.mxu0 0
      %901 = vmatmul.mubr.bf16.gmra.mxu0 %v790
      %v902 = vpop.f32.mrf.mxu0
      %v903 = vadd.f32 0.0, %v902
      %v904 = vpop.f32.mrf.mxu0
      %v905 = vpop.f32.mrf.mxu0
      %v906 = vadd.f32 0.0, %v905
      %v907 = vpop.f32.mrf.mxu0
      %908 = vmatprep.mubr.bf16.mxu0 0
      %909 = vmatmul.mubr.bf16.gmra.mxu0 %v789
      %v910 = vpop.f32.mrf.mxu0
      %v911 = vadd.f32 0.0, %v910
      %v912 = vpop.f32.mrf.mxu0
      %v913 = vpop.f32.mrf.mxu0
      %v914 = vadd.f32 0.0, %v913
      %v915 = vpop.f32.mrf.mxu0
      %916 = vdwg.mxu0
      %v917 = vadd.f32 %v720, %v879
      %v918 = vadd.f32 %v721, %v882
      %v919 = vadd.f32 %v722, %v887
      %v920 = vadd.f32 %v723, %v890
      %v921 = vadd.f32 %v724, %v895
      %v922 = vadd.f32 %v725, %v898
      %v923 = vadd.f32 %v726, %v903
      %v924 = vadd.f32 %v727, %v906
      %v925 = vadd.f32 %v728, %v911
      %v926 = vadd.f32 %v729, %v914
      %v927 = vld [vmem:[%s192 + $0x4] sm:$0xe]
      %v928 = vld [vmem:[%s192 + $0x8] sm:$0xf]
      %v929 = vld [vmem:[%s192 + $0xc] sm:$0xf]
      %v930 = vld [vmem:[%s192 + $0x10] sm:$0xf]
      %v931 = vld [vmem:[%s192 + $0x14] sm:$0xf]
      %v932 = vld [vmem:[%s192 + $0x18] sm:$0xf]
      %v933 = vld [vmem:[%s192 + $0x1c] sm:$0xf]
      %v934 = vld [vmem:[%s192 + $0x20] sm:$0xf]
      %v935 = vld [vmem:[%s192 + $0x24] sm:$0xf]
      %v936 = vld [vmem:[%s192 + $0x28] sm:$0xf]
      %v937 = vld [vmem:[%s192 + $0x2c] sm:$0x1]
      %s938 = scalar_lea.vmem %s1, 256
      %v939 = vld [vmem:[%s938] sm:$0xf]
      %v940 = vld [vmem:[%s938 + $0x4] sm:$0xf]
      %v941 = vld [vmem:[%s938 + $0x8] sm:$0xf]
      %v942 = vld [vmem:[%s938 + $0xc] sm:$0xf]
      %v943 = vld [vmem:[%s938 + $0x10] sm:$0xf]
      %v944 = vld [vmem:[%s938 + $0x14] sm:$0xf]
      %v945 = vld [vmem:[%s938 + $0x18] sm:$0xf]
      %v946 = vld [vmem:[%s938 + $0x1c] sm:$0xf]
      %v947 = vld [vmem:[%s938 + $0x20] sm:$0xf]
      %v948 = vld [vmem:[%s938 + $0x24] sm:$0xf]
      %v949 = vld [vmem:[%s938 + $0x28] sm:$0xf]
      %v950 = vld [vmem:[%s938 + $0x2c] sm:$0xf]
      %v951 = vld [vmem:[%s938 + $0x30] sm:$0xf]
      %v952 = vld [vmem:[%s938 + $0x34] sm:$0xf]
      %v953 = vld [vmem:[%s938 + $0x38] sm:$0xf]
      %v954 = vld [vmem:[%s938 + $0x3c] sm:$0xf]
      %v966 = vunpack.c.l.b16 %v927
      %v967 = vunpack.c.l.b16 %v928
      %v968 = vunpack.c.l.b16 %v929
      %v969 = vunpack.c.l.b16 %v930
      %v970 = vunpack.c.l.b16 %v931
      %v971 = vunpack.c.l.b16 %v932
      %v972 = vunpack.c.l.b16 %v933
      %v973 = vunpack.c.l.b16 %v934
      %v974 = vunpack.c.l.b16 %v935
      %v975 = vunpack.c.l.b16 %v936
      %v976 = vunpack.c.l.b16 %v937
      %v977 = vpack.c.b16 %v967, %v966
      %v978 = vpack.c.b16 %v969, %v968
      %v979 = vpack.c.b16 %v971, %v970
      %v980 = vpack.c.b16 %v973, %v972
      %v981 = vpack.c.b16 %v975, %v974
      %v982 = vpack.c.b16 %v976, %v976
      %vm983 = vsmask.f32 6400
      %v985 = vshrl.u32 %v977, 16
      %v987 = vrot.slane %v985, 1
      %v988 = vshll.u32 %v977, 16
      %v990 = vrot.slane %v988, 2
      %v991 = vor.u32 %v987, %v990
      %v993 = vshrl.u32 %v978, 16
      %v995 = vrot.slane %v993, 1
      %v996 = vshll.u32 %v978, 16
      %v998 = vrot.slane %v996, 2
      %v999 = vor.u32 %v995, %v998
      %v1000 = vsel %vm983, %v991, %v999
      %v1002 = vshrl.u32 %v979, 16
      %v1004 = vrot.slane %v1002, 1
      %v1005 = vshll.u32 %v979, 16
      %v1007 = vrot.slane %v1005, 2
      %v1008 = vor.u32 %v1004, %v1007
      %v1009 = vsel %vm983, %v999, %v1008
      %v1011 = vshrl.u32 %v980, 16
      %v1013 = vrot.slane %v1011, 1
      %v1014 = vshll.u32 %v980, 16
      %v1016 = vrot.slane %v1014, 2
      %v1017 = vor.u32 %v1013, %v1016
      %v1018 = vsel %vm983, %v1008, %v1017
      %v1020 = vshrl.u32 %v981, 16
      %v1022 = vrot.slane %v1020, 1
      %v1023 = vshll.u32 %v981, 16
      %v1025 = vrot.slane %v1023, 2
      %v1026 = vor.u32 %v1022, %v1025
      %v1027 = vsel %vm983, %v1017, %v1026
      %v1029 = vshll.u32 %v982, 16
      %v1031 = vrot.slane %v1029, 2
      %v1032 = vsel %vm983, %v1026, %v1031
      %v1054 = vunpack.c.l.b16 %v939
      %v1055 = vunpack.c.l.b16 %v940
      %v1056 = vunpack.c.l.b16 %v941
      %v1057 = vunpack.c.l.b16 %v942
      %v1058 = vunpack.c.l.b16 %v943
      %v1059 = vunpack.c.l.b16 %v944
      %v1060 = vunpack.c.l.b16 %v945
      %v1061 = vunpack.c.l.b16 %v946
      %v1062 = vunpack.c.l.b16 %v947
      %v1063 = vunpack.c.l.b16 %v948
      %v1064 = vunpack.c.l.b16 %v949
      %v1065 = vunpack.c.l.b16 %v950
      %v1066 = vunpack.c.l.b16 %v951
      %v1067 = vunpack.c.l.b16 %v952
      %v1068 = vunpack.c.l.b16 %v953
      %v1069 = vunpack.c.l.b16 %v954
      %v1070 = vpack.c.b16 %v1055, %v1054
      %v1071 = vpack.c.b16 %v1057, %v1056
      %v1072 = vpack.c.b16 %v1059, %v1058
      %v1073 = vpack.c.b16 %v1061, %v1060
      %v1074 = vpack.c.b16 %v1063, %v1062
      %v1075 = vpack.c.b16 %v1065, %v1064
      %v1076 = vpack.c.b16 %v1067, %v1066
      %v1077 = vpack.c.b16 %v1069, %v1068
      %1086 = vmatprep.subr.bf16.mxu0 0
      %1087 = vmatpush1.bf16.msra.mxu0 %v1077
      %1088 = vmatprep.subr.bf16.mxu0 0
      %1089 = vmatpush1.bf16.msra.mxu0 %v1076
      %1090 = vmatprep.subr.bf16.mxu0 0
      %1091 = vmatpush1.bf16.msra.mxu0 %v1075
      %1092 = vmatprep.subr.bf16.mxu0 0
      %1093 = vmatpush1.bf16.msra.mxu0 %v1074
      %1094 = vmatprep.subr.bf16.mxu0 0
      %1095 = vmatpush1.bf16.msra.mxu0 %v1073
      %1096 = vmatprep.subr.bf16.mxu0 0
      %1097 = vmatpush1.bf16.msra.mxu0 %v1072
      %1098 = vmatprep.subr.bf16.mxu0 0
      %1099 = vmatpush1.bf16.msra.mxu0 %v1071
      %1100 = vmatprep.subr.bf16.mxu0 0
      %1101 = vmatpush1.bf16.msra.mxu0 %v1070
      %1102 = vmatprep.subr.bf16.mxu0 0
      %1103 = vmatpush2.bf16.msra.mxu0 0
      %1104 = vmatprep.subr.bf16.mxu0 0
      %1105 = vmatpush2.bf16.msra.mxu0 0
      %1106 = vmatprep.subr.bf16.mxu0 0
      %1107 = vmatpush2.bf16.msra.mxu0 0
      %1108 = vmatprep.subr.bf16.mxu0 0
      %1109 = vmatpush2.bf16.msra.mxu0 0
      %1110 = vmatprep.subr.bf16.mxu0 0
      %1111 = vmatpush2.bf16.msra.mxu0 0
      %1112 = vmatprep.subr.bf16.mxu0 0
      %1113 = vmatpush2.bf16.msra.mxu0 0
      %1114 = vmatprep.subr.bf16.mxu0 0
      %1115 = vmatpush2.bf16.msra.mxu0 0
      %1116 = vmatprep.subr.bf16.mxu0 0
      %1117 = vmatpush2.bf16.msra.mxu0 0
      %1118 = vmatprep.mubr.bf16.mxu0 0
      %1119 = vmatmul.mubr.bf16.gmra.mxu0 %v1000
      %v1120 = vpop.f32.mrf.mxu0
      %v1121 = vadd.f32 0.0, %v1120
      %v1122 = vpop.f32.mrf.mxu0
      %v1123 = vpop.f32.mrf.mxu0
      %v1124 = vadd.f32 0.0, %v1123
      %v1125 = vpop.f32.mrf.mxu0
      %1126 = vmatprep.mubr.bf16.mxu0 0
      %1127 = vmatmul.mubr.bf16.gmra.mxu0 %v1009
      %v1128 = vpop.f32.mrf.mxu0
      %v1129 = vadd.f32 0.0, %v1128
      %v1130 = vpop.f32.mrf.mxu0
      %v1131 = vpop.f32.mrf.mxu0
      %v1132 = vadd.f32 0.0, %v1131
      %v1133 = vpop.f32.mrf.mxu0
      %1134 = vmatprep.mubr.bf16.mxu0 0
      %1135 = vmatmul.mubr.bf16.gmra.mxu0 %v1018
      %v1136 = vpop.f32.mrf.mxu0
      %v1137 = vadd.f32 0.0, %v1136
      %v1138 = vpop.f32.mrf.mxu0
      %v1139 = vpop.f32.mrf.mxu0
      %v1140 = vadd.f32 0.0, %v1139
      %v1141 = vpop.f32.mrf.mxu0
      %1142 = vmatprep.mubr.bf16.mxu0 0
      %1143 = vmatmul.mubr.bf16.gmra.mxu0 %v1027
      %v1144 = vpop.f32.mrf.mxu0
      %v1145 = vadd.f32 0.0, %v1144
      %v1146 = vpop.f32.mrf.mxu0
      %v1147 = vpop.f32.mrf.mxu0
      %v1148 = vadd.f32 0.0, %v1147
      %v1149 = vpop.f32.mrf.mxu0
      %1150 = vmatprep.mubr.bf16.mxu0 0
      %1151 = vmatmul.mubr.bf16.gmra.mxu0 %v1032
      %v1152 = vpop.f32.mrf.mxu0
      %v1153 = vadd.f32 0.0, %v1152
      %v1154 = vpop.f32.mrf.mxu0
      %v1155 = vpop.f32.mrf.mxu0
      %v1156 = vadd.f32 0.0, %v1155
      %v1157 = vpop.f32.mrf.mxu0
      %1158 = vdwg.mxu0
      %v1159 = vadd.f32 %v917, %v1121
      %v1160 = vadd.f32 %v918, %v1124
      %v1161 = vadd.f32 %v919, %v1129
      %v1162 = vadd.f32 %v920, %v1132
      %v1163 = vadd.f32 %v921, %v1137
      %v1164 = vadd.f32 %v922, %v1140
      %v1165 = vadd.f32 %v923, %v1145
      %v1166 = vadd.f32 %v924, %v1148
      %v1167 = vadd.f32 %v925, %v1153
      %v1168 = vadd.f32 %v926, %v1156
      %v1169 = vld [vmem:[%s192 + $0x4] sm:$0xc]
      %s1170 = scalar_lea.vmem %s1, 320
      %v1171 = vld [vmem:[%s1170] sm:$0xf]
      %v1172 = vld [vmem:[%s1170 + $0x4] sm:$0xf]
      %v1173 = vld [vmem:[%s1170 + $0x8] sm:$0xf]
      %v1174 = vld [vmem:[%s1170 + $0xc] sm:$0xf]
      %v1175 = vld [vmem:[%s1170 + $0x10] sm:$0xf]
      %v1176 = vld [vmem:[%s1170 + $0x14] sm:$0xf]
      %v1177 = vld [vmem:[%s1170 + $0x18] sm:$0xf]
      %v1178 = vld [vmem:[%s1170 + $0x1c] sm:$0xf]
      %v1179 = vld [vmem:[%s1170 + $0x20] sm:$0xf]
      %v1180 = vld [vmem:[%s1170 + $0x24] sm:$0xf]
      %v1181 = vld [vmem:[%s1170 + $0x28] sm:$0xf]
      %v1182 = vld [vmem:[%s1170 + $0x2c] sm:$0xf]
      %v1183 = vld [vmem:[%s1170 + $0x30] sm:$0xf]
      %v1184 = vld [vmem:[%s1170 + $0x34] sm:$0xf]
      %v1185 = vld [vmem:[%s1170 + $0x38] sm:$0xf]
      %v1186 = vld [vmem:[%s1170 + $0x3c] sm:$0xf]
      %v1188 = vunpack.c.l.b16 %v1169
      %v1189 = vpack.c.b16 %v967, %v1188
      %vm1190 = vcmask 1045504
      %v1191 = vrot.slane %v1189, 2
      %v1192 = vrot.slane %v978, 2
      %v1193 = vsel %vm1190, %v1191, %v1192
      %v1194 = vrot.slane %v979, 2
      %v1195 = vsel %vm1190, %v1192, %v1194
      %v1196 = vrot.slane %v980, 2
      %v1197 = vsel %vm1190, %v1194, %v1196
      %v1198 = vrot.slane %v981, 2
      %v1199 = vsel %vm1190, %v1196, %v1198
      %v1200 = vrot.slane %v982, 2
      %v1201 = vsel %vm1190, %v1198, %v1200
      %v1223 = vunpack.c.l.b16 %v1171
      %v1224 = vunpack.c.l.b16 %v1172
      %v1225 = vunpack.c.l.b16 %v1173
      %v1226 = vunpack.c.l.b16 %v1174
      %v1227 = vunpack.c.l.b16 %v1175
      %v1228 = vunpack.c.l.b16 %v1176
      %v1229 = vunpack.c.l.b16 %v1177
      %v1230 = vunpack.c.l.b16 %v1178
      %v1231 = vunpack.c.l.b16 %v1179
      %v1232 = vunpack.c.l.b16 %v1180
      %v1233 = vunpack.c.l.b16 %v1181
      %v1234 = vunpack.c.l.b16 %v1182
      %v1235 = vunpack.c.l.b16 %v1183
      %v1236 = vunpack.c.l.b16 %v1184
      %v1237 = vunpack.c.l.b16 %v1185
      %v1238 = vunpack.c.l.b16 %v1186
      %v1239 = vpack.c.b16 %v1224, %v1223
      %v1240 = vpack.c.b16 %v1226, %v1225
      %v1241 = vpack.c.b16 %v1228, %v1227
      %v1242 = vpack.c.b16 %v1230, %v1229
      %v1243 = vpack.c.b16 %v1232, %v1231
      %v1244 = vpack.c.b16 %v1234, %v1233
      %v1245 = vpack.c.b16 %v1236, %v1235
      %v1246 = vpack.c.b16 %v1238, %v1237
      %1255 = vmatprep.subr.bf16.mxu0 0
      %1256 = vmatpush1.bf16.msra.mxu0 %v1246
      %1257 = vmatprep.subr.bf16.mxu0 0
      %1258 = vmatpush1.bf16.msra.mxu0 %v1245
      %1259 = vmatprep.subr.bf16.mxu0 0
      %1260 = vmatpush1.bf16.msra.mxu0 %v1244
      %1261 = vmatprep.subr.bf16.mxu0 0
      %1262 = vmatpush1.bf16.msra.mxu0 %v1243
      %1263 = vmatprep.subr.bf16.mxu0 0
      %1264 = vmatpush1.bf16.msra.mxu0 %v1242
      %1265 = vmatprep.subr.bf16.mxu0 0
      %1266 = vmatpush1.bf16.msra.mxu0 %v1241
      %1267 = vmatprep.subr.bf16.mxu0 0
      %1268 = vmatpush1.bf16.msra.mxu0 %v1240
      %1269 = vmatprep.subr.bf16.mxu0 0
      %1270 = vmatpush1.bf16.msra.mxu0 %v1239
      %1271 = vmatprep.subr.bf16.mxu0 0
      %1272 = vmatpush2.bf16.msra.mxu0 0
      %1273 = vmatprep.subr.bf16.mxu0 0
      %1274 = vmatpush2.bf16.msra.mxu0 0
      %1275 = vmatprep.subr.bf16.mxu0 0
      %1276 = vmatpush2.bf16.msra.mxu0 0
      %1277 = vmatprep.subr.bf16.mxu0 0
      %1278 = vmatpush2.bf16.msra.mxu0 0
      %1279 = vmatprep.subr.bf16.mxu0 0
      %1280 = vmatpush2.bf16.msra.mxu0 0
      %1281 = vmatprep.subr.bf16.mxu0 0
      %1282 = vmatpush2.bf16.msra.mxu0 0
      %1283 = vmatprep.subr.bf16.mxu0 0
      %1284 = vmatpush2.bf16.msra.mxu0 0
      %1285 = vmatprep.subr.bf16.mxu0 0
      %1286 = vmatpush2.bf16.msra.mxu0 0
      %1287 = vmatprep.mubr.bf16.mxu0 0
      %1288 = vmatmul.mubr.bf16.gmra.mxu0 %v1193
      %v1289 = vpop.f32.mrf.mxu0
      %v1290 = vadd.f32 0.0, %v1289
      %v1291 = vpop.f32.mrf.mxu0
      %v1292 = vpop.f32.mrf.mxu0
      %v1293 = vadd.f32 0.0, %v1292
      %v1294 = vpop.f32.mrf.mxu0
      %1295 = vmatprep.mubr.bf16.mxu0 0
      %1296 = vmatmul.mubr.bf16.gmra.mxu0 %v1195
      %v1297 = vpop.f32.mrf.mxu0
      %v1298 = vadd.f32 0.0, %v1297
      %v1299 = vpop.f32.mrf.mxu0
      %v1300 = vpop.f32.mrf.mxu0
      %v1301 = vadd.f32 0.0, %v1300
      %v1302 = vpop.f32.mrf.mxu0
      %1303 = vmatprep.mubr.bf16.mxu0 0
      %1304 = vmatmul.mubr.bf16.gmra.mxu0 %v1197
      %v1305 = vpop.f32.mrf.mxu0
      %v1306 = vadd.f32 0.0, %v1305
      %v1307 = vpop.f32.mrf.mxu0
      %v1308 = vpop.f32.mrf.mxu0
      %v1309 = vadd.f32 0.0, %v1308
      %v1310 = vpop.f32.mrf.mxu0
      %1311 = vmatprep.mubr.bf16.mxu0 0
      %1312 = vmatmul.mubr.bf16.gmra.mxu0 %v1199
      %v1313 = vpop.f32.mrf.mxu0
      %v1314 = vadd.f32 0.0, %v1313
      %v1315 = vpop.f32.mrf.mxu0
      %v1316 = vpop.f32.mrf.mxu0
      %v1317 = vadd.f32 0.0, %v1316
      %v1318 = vpop.f32.mrf.mxu0
      %1319 = vmatprep.mubr.bf16.mxu0 0
      %1320 = vmatmul.mubr.bf16.gmra.mxu0 %v1201
      %v1321 = vpop.f32.mrf.mxu0
      %v1322 = vadd.f32 0.0, %v1321
      %v1323 = vpop.f32.mrf.mxu0
      %v1324 = vpop.f32.mrf.mxu0
      %v1325 = vadd.f32 0.0, %v1324
      %v1326 = vpop.f32.mrf.mxu0
      %1327 = vdwg.mxu0
      %v1328 = vadd.f32 %v1159, %v1290
      %v1329 = vadd.f32 %v1160, %v1293
      %v1330 = vadd.f32 %v1161, %v1298
      %v1331 = vadd.f32 %v1162, %v1301
      %v1332 = vadd.f32 %v1163, %v1306
      %v1333 = vadd.f32 %v1164, %v1309
      %v1334 = vadd.f32 %v1165, %v1314
      %v1335 = vadd.f32 %v1166, %v1317
      %v1336 = vadd.f32 %v1167, %v1322
      %v1337 = vadd.f32 %v1168, %v1325
      %v1338 = vld [vmem:[%s192 + $0x8] sm:$0xc]
      %v1339 = vld [vmem:[%s192 + $0xc] sm:$0xf]
      %v1340 = vld [vmem:[%s192 + $0x10] sm:$0xf]
      %v1341 = vld [vmem:[%s192 + $0x14] sm:$0xf]
      %v1342 = vld [vmem:[%s192 + $0x18] sm:$0xf]
      %v1343 = vld [vmem:[%s192 + $0x1c] sm:$0xf]
      %v1344 = vld [vmem:[%s192 + $0x20] sm:$0xf]
      %v1345 = vld [vmem:[%s192 + $0x24] sm:$0xf]
      %v1346 = vld [vmem:[%s192 + $0x28] sm:$0xf]
      %v1347 = vld [vmem:[%s192 + $0x2c] sm:$0xf]
      %v1348 = vld [vmem:[%s192 + $0x30] sm:$0x1]
      %s1349 = scalar_lea.vmem %s1, 384
      %v1350 = vld [vmem:[%s1349] sm:$0xf]
      %v1351 = vld [vmem:[%s1349 + $0x4] sm:$0xf]
      %v1352 = vld [vmem:[%s1349 + $0x8] sm:$0xf]
      %v1353 = vld [vmem:[%s1349 + $0xc] sm:$0xf]
      %v1354 = vld [vmem:[%s1349 + $0x10] sm:$0xf]
      %v1355 = vld [vmem:[%s1349 + $0x14] sm:$0xf]
      %v1356 = vld [vmem:[%s1349 + $0x18] sm:$0xf]
      %v1357 = vld [vmem:[%s1349 + $0x1c] sm:$0xf]
      %v1358 = vld [vmem:[%s1349 + $0x20] sm:$0xf]
      %v1359 = vld [vmem:[%s1349 + $0x24] sm:$0xf]
      %v1360 = vld [vmem:[%s1349 + $0x28] sm:$0xf]
      %v1361 = vld [vmem:[%s1349 + $0x2c] sm:$0xf]
      %v1362 = vld [vmem:[%s1349 + $0x30] sm:$0xf]
      %v1363 = vld [vmem:[%s1349 + $0x34] sm:$0xf]
      %v1364 = vld [vmem:[%s1349 + $0x38] sm:$0xf]
      %v1365 = vld [vmem:[%s1349 + $0x3c] sm:$0xf]
      %v1377 = vunpack.c.l.b16 %v1338
      %v1378 = vunpack.c.l.b16 %v1339
      %v1379 = vunpack.c.l.b16 %v1340
      %v1380 = vunpack.c.l.b16 %v1341
      %v1381 = vunpack.c.l.b16 %v1342
      %v1382 = vunpack.c.l.b16 %v1343
      %v1383 = vunpack.c.l.b16 %v1344
      %v1384 = vunpack.c.l.b16 %v1345
      %v1385 = vunpack.c.l.b16 %v1346
      %v1386 = vunpack.c.l.b16 %v1347
      %v1387 = vunpack.c.l.b16 %v1348
      %v1388 = vpack.c.b16 %v1378, %v1377
      %v1389 = vpack.c.b16 %v1380, %v1379
      %v1390 = vpack.c.b16 %v1382, %v1381
      %v1391 = vpack.c.b16 %v1384, %v1383
      %v1392 = vpack.c.b16 %v1386, %v1385
      %v1393 = vpack.c.b16 %v1387, %v1387
      %v1394 = vrot.slane %v1388, 2
      %v1395 = vrot.slane %v1389, 2
      %v1396 = vsel %vm1190, %v1394, %v1395
      %v1397 = vrot.slane %v1390, 2
      %v1398 = vsel %vm1190, %v1395, %v1397
      %v1399 = vrot.slane %v1391, 2
      %v1400 = vsel %vm1190, %v1397, %v1399
      %v1401 = vrot.slane %v1392, 2
      %v1402 = vsel %vm1190, %v1399, %v1401
      %v1403 = vrot.slane %v1393, 2
      %v1404 = vsel %vm1190, %v1401, %v1403
      %v1426 = vunpack.c.l.b16 %v1350
      %v1427 = vunpack.c.l.b16 %v1351
      %v1428 = vunpack.c.l.b16 %v1352
      %v1429 = vunpack.c.l.b16 %v1353
      %v1430 = vunpack.c.l.b16 %v1354
      %v1431 = vunpack.c.l.b16 %v1355
      %v1432 = vunpack.c.l.b16 %v1356
      %v1433 = vunpack.c.l.b16 %v1357
      %v1434 = vunpack.c.l.b16 %v1358
      %v1435 = vunpack.c.l.b16 %v1359
      %v1436 = vunpack.c.l.b16 %v1360
      %v1437 = vunpack.c.l.b16 %v1361
      %v1438 = vunpack.c.l.b16 %v1362
      %v1439 = vunpack.c.l.b16 %v1363
      %v1440 = vunpack.c.l.b16 %v1364
      %v1441 = vunpack.c.l.b16 %v1365
      %v1442 = vpack.c.b16 %v1427, %v1426
      %v1443 = vpack.c.b16 %v1429, %v1428
      %v1444 = vpack.c.b16 %v1431, %v1430
      %v1445 = vpack.c.b16 %v1433, %v1432
      %v1446 = vpack.c.b16 %v1435, %v1434
      %v1447 = vpack.c.b16 %v1437, %v1436
      %v1448 = vpack.c.b16 %v1439, %v1438
      %v1449 = vpack.c.b16 %v1441, %v1440
      %1458 = vmatprep.subr.bf16.mxu0 0
      %1459 = vmatpush1.bf16.msra.mxu0 %v1449
      %1460 = vmatprep.subr.bf16.mxu0 0
      %1461 = vmatpush1.bf16.msra.mxu0 %v1448
      %1462 = vmatprep.subr.bf16.mxu0 0
      %1463 = vmatpush1.bf16.msra.mxu0 %v1447
      %1464 = vmatprep.subr.bf16.mxu0 0
      %1465 = vmatpush1.bf16.msra.mxu0 %v1446
      %1466 = vmatprep.subr.bf16.mxu0 0
      %1467 = vmatpush1.bf16.msra.mxu0 %v1445
      %1468 = vmatprep.subr.bf16.mxu0 0
      %1469 = vmatpush1.bf16.msra.mxu0 %v1444
      %1470 = vmatprep.subr.bf16.mxu0 0
      %1471 = vmatpush1.bf16.msra.mxu0 %v1443
      %1472 = vmatprep.subr.bf16.mxu0 0
      %1473 = vmatpush1.bf16.msra.mxu0 %v1442
      %1474 = vmatprep.subr.bf16.mxu0 0
      %1475 = vmatpush2.bf16.msra.mxu0 0
      %1476 = vmatprep.subr.bf16.mxu0 0
      %1477 = vmatpush2.bf16.msra.mxu0 0
      %1478 = vmatprep.subr.bf16.mxu0 0
      %1479 = vmatpush2.bf16.msra.mxu0 0
      %1480 = vmatprep.subr.bf16.mxu0 0
      %1481 = vmatpush2.bf16.msra.mxu0 0
      %1482 = vmatprep.subr.bf16.mxu0 0
      %1483 = vmatpush2.bf16.msra.mxu0 0
      %1484 = vmatprep.subr.bf16.mxu0 0
      %1485 = vmatpush2.bf16.msra.mxu0 0
      %1486 = vmatprep.subr.bf16.mxu0 0
      %1487 = vmatpush2.bf16.msra.mxu0 0
      %1488 = vmatprep.subr.bf16.mxu0 0
      %1489 = vmatpush2.bf16.msra.mxu0 0
      %1490 = vmatprep.mubr.bf16.mxu0 0
      %1491 = vmatmul.mubr.bf16.gmra.mxu0 %v1396
      %v1492 = vpop.f32.mrf.mxu0
      %v1493 = vadd.f32 0.0, %v1492
      %v1494 = vpop.f32.mrf.mxu0
      %v1495 = vpop.f32.mrf.mxu0
      %v1496 = vadd.f32 0.0, %v1495
      %v1497 = vpop.f32.mrf.mxu0
      %1498 = vmatprep.mubr.bf16.mxu0 0
      %1499 = vmatmul.mubr.bf16.gmra.mxu0 %v1398
      %v1500 = vpop.f32.mrf.mxu0
      %v1501 = vadd.f32 0.0, %v1500
      %v1502 = vpop.f32.mrf.mxu0
      %v1503 = vpop.f32.mrf.mxu0
      %v1504 = vadd.f32 0.0, %v1503
      %v1505 = vpop.f32.mrf.mxu0
      %1506 = vmatprep.mubr.bf16.mxu0 0
      %1507 = vmatmul.mubr.bf16.gmra.mxu0 %v1400
      %v1508 = vpop.f32.mrf.mxu0
      %v1509 = vadd.f32 0.0, %v1508
      %v1510 = vpop.f32.mrf.mxu0
      %v1511 = vpop.f32.mrf.mxu0
      %v1512 = vadd.f32 0.0, %v1511
      %v1513 = vpop.f32.mrf.mxu0
      %1514 = vmatprep.mubr.bf16.mxu0 0
      %1515 = vmatmul.mubr.bf16.gmra.mxu0 %v1402
      %v1516 = vpop.f32.mrf.mxu0
      %v1517 = vadd.f32 0.0, %v1516
      %v1518 = vpop.f32.mrf.mxu0
      %v1519 = vpop.f32.mrf.mxu0
      %v1520 = vadd.f32 0.0, %v1519
      %v1521 = vpop.f32.mrf.mxu0
      %1522 = vmatprep.mubr.bf16.mxu0 0
      %1523 = vmatmul.mubr.bf16.gmra.mxu0 %v1404
      %v1524 = vpop.f32.mrf.mxu0
      %v1525 = vadd.f32 0.0, %v1524
      %v1526 = vpop.f32.mrf.mxu0
      %v1527 = vpop.f32.mrf.mxu0
      %v1528 = vadd.f32 0.0, %v1527
      %v1529 = vpop.f32.mrf.mxu0
      %1530 = vdwg.mxu0
      %v1531 = vadd.f32 %v1328, %v1493
      %v1532 = vadd.f32 %v1329, %v1496
      %v1533 = vadd.f32 %v1330, %v1501
      %v1534 = vadd.f32 %v1331, %v1504
      %v1535 = vadd.f32 %v1332, %v1509
      %v1536 = vadd.f32 %v1333, %v1512
      %v1537 = vadd.f32 %v1334, %v1517
      %v1538 = vadd.f32 %v1335, %v1520
      %v1539 = vadd.f32 %v1336, %v1525
      %v1540 = vadd.f32 %v1337, %v1528
      %v1541 = vld [vmem:[%s192 + $0x30] sm:$0x3]
      %s1542 = scalar_lea.vmem %s1, 448
      %v1543 = vld [vmem:[%s1542] sm:$0xf]
      %v1544 = vld [vmem:[%s1542 + $0x4] sm:$0xf]
      %v1545 = vld [vmem:[%s1542 + $0x8] sm:$0xf]
      %v1546 = vld [vmem:[%s1542 + $0xc] sm:$0xf]
      %v1547 = vld [vmem:[%s1542 + $0x10] sm:$0xf]
      %v1548 = vld [vmem:[%s1542 + $0x14] sm:$0xf]
      %v1549 = vld [vmem:[%s1542 + $0x18] sm:$0xf]
      %v1550 = vld [vmem:[%s1542 + $0x1c] sm:$0xf]
      %v1551 = vld [vmem:[%s1542 + $0x20] sm:$0xf]
      %v1552 = vld [vmem:[%s1542 + $0x24] sm:$0xf]
      %v1553 = vld [vmem:[%s1542 + $0x28] sm:$0xf]
      %v1554 = vld [vmem:[%s1542 + $0x2c] sm:$0xf]
      %v1555 = vld [vmem:[%s1542 + $0x30] sm:$0xf]
      %v1556 = vld [vmem:[%s1542 + $0x34] sm:$0xf]
      %v1557 = vld [vmem:[%s1542 + $0x38] sm:$0xf]
      %v1558 = vld [vmem:[%s1542 + $0x3c] sm:$0xf]
      %v1560 = vunpack.c.l.b16 %v1541
      %v1561 = vpack.c.b16 %v1560, %v1560
      %vm1562 = vsmask.f32 5376
      %v1564 = vshrl.u32 %v1388, 16
      %v1566 = vrot.slane %v1564, 2
      %v1567 = vshll.u32 %v1388, 16
      %v1569 = vrot.slane %v1567, 3
      %v1570 = vor.u32 %v1566, %v1569
      %v1572 = vshrl.u32 %v1389, 16
      %v1574 = vrot.slane %v1572, 2
      %v1575 = vshll.u32 %v1389, 16
      %v1577 = vrot.slane %v1575, 3
      %v1578 = vor.u32 %v1574, %v1577
      %v1579 = vsel %vm1562, %v1570, %v1578
      %v1581 = vshrl.u32 %v1390, 16
      %v1583 = vrot.slane %v1581, 2
      %v1584 = vshll.u32 %v1390, 16
      %v1586 = vrot.slane %v1584, 3
      %v1587 = vor.u32 %v1583, %v1586
      %v1588 = vsel %vm1562, %v1578, %v1587
      %v1590 = vshrl.u32 %v1391, 16
      %v1592 = vrot.slane %v1590, 2
      %v1593 = vshll.u32 %v1391, 16
      %v1595 = vrot.slane %v1593, 3
      %v1596 = vor.u32 %v1592, %v1595
      %v1597 = vsel %vm1562, %v1587, %v1596
      %v1599 = vshrl.u32 %v1392, 16
      %v1601 = vrot.slane %v1599, 2
      %v1602 = vshll.u32 %v1392, 16
      %v1604 = vrot.slane %v1602, 3
      %v1605 = vor.u32 %v1601, %v1604
      %v1606 = vsel %vm1562, %v1596, %v1605
      %v1608 = vshrl.u32 %v1561, 16
      %v1610 = vrot.slane %v1608, 2
      %v1611 = vshll.u32 %v1561, 16
      %v1613 = vrot.slane %v1611, 3
      %v1614 = vor.u32 %v1610, %v1613
      %v1615 = vsel %vm1562, %v1605, %v1614
      %v1637 = vunpack.c.l.b16 %v1543
      %v1638 = vunpack.c.l.b16 %v1544
      %v1639 = vunpack.c.l.b16 %v1545
      %v1640 = vunpack.c.l.b16 %v1546
      %v1641 = vunpack.c.l.b16 %v1547
      %v1642 = vunpack.c.l.b16 %v1548
      %v1643 = vunpack.c.l.b16 %v1549
      %v1644 = vunpack.c.l.b16 %v1550
      %v1645 = vunpack.c.l.b16 %v1551
      %v1646 = vunpack.c.l.b16 %v1552
      %v1647 = vunpack.c.l.b16 %v1553
      %v1648 = vunpack.c.l.b16 %v1554
      %v1649 = vunpack.c.l.b16 %v1555
      %v1650 = vunpack.c.l.b16 %v1556
      %v1651 = vunpack.c.l.b16 %v1557
      %v1652 = vunpack.c.l.b16 %v1558
      %v1653 = vpack.c.b16 %v1638, %v1637
      %v1654 = vpack.c.b16 %v1640, %v1639
      %v1655 = vpack.c.b16 %v1642, %v1641
      %v1656 = vpack.c.b16 %v1644, %v1643
      %v1657 = vpack.c.b16 %v1646, %v1645
      %v1658 = vpack.c.b16 %v1648, %v1647
      %v1659 = vpack.c.b16 %v1650, %v1649
      %v1660 = vpack.c.b16 %v1652, %v1651
      %1669 = vmatprep.subr.bf16.mxu0 0
      %1670 = vmatpush1.bf16.msra.mxu0 %v1660
      %1671 = vmatprep.subr.bf16.mxu0 0
      %1672 = vmatpush1.bf16.msra.mxu0 %v1659
      %1673 = vmatprep.subr.bf16.mxu0 0
      %1674 = vmatpush1.bf16.msra.mxu0 %v1658
      %1675 = vmatprep.subr.bf16.mxu0 0
      %1676 = vmatpush1.bf16.msra.mxu0 %v1657
      %1677 = vmatprep.subr.bf16.mxu0 0
      %1678 = vmatpush1.bf16.msra.mxu0 %v1656
      %1679 = vmatprep.subr.bf16.mxu0 0
      %1680 = vmatpush1.bf16.msra.mxu0 %v1655
      %1681 = vmatprep.subr.bf16.mxu0 0
      %1682 = vmatpush1.bf16.msra.mxu0 %v1654
      %1683 = vmatprep.subr.bf16.mxu0 0
      %1684 = vmatpush1.bf16.msra.mxu0 %v1653
      %1685 = vmatprep.subr.bf16.mxu0 0
      %1686 = vmatpush2.bf16.msra.mxu0 0
      %1687 = vmatprep.subr.bf16.mxu0 0
      %1688 = vmatpush2.bf16.msra.mxu0 0
      %1689 = vmatprep.subr.bf16.mxu0 0
      %1690 = vmatpush2.bf16.msra.mxu0 0
      %1691 = vmatprep.subr.bf16.mxu0 0
      %1692 = vmatpush2.bf16.msra.mxu0 0
      %1693 = vmatprep.subr.bf16.mxu0 0
      %1694 = vmatpush2.bf16.msra.mxu0 0
      %1695 = vmatprep.subr.bf16.mxu0 0
      %1696 = vmatpush2.bf16.msra.mxu0 0
      %1697 = vmatprep.subr.bf16.mxu0 0
      %1698 = vmatpush2.bf16.msra.mxu0 0
      %1699 = vmatprep.subr.bf16.mxu0 0
      %1700 = vmatpush2.bf16.msra.mxu0 0
      %1701 = vmatprep.mubr.bf16.mxu0 0
      %1702 = vmatmul.mubr.bf16.gmra.mxu0 %v1579
      %v1703 = vpop.f32.mrf.mxu0
      %v1704 = vadd.f32 0.0, %v1703
      %v1705 = vpop.f32.mrf.mxu0
      %v1706 = vpop.f32.mrf.mxu0
      %v1707 = vadd.f32 0.0, %v1706
      %v1708 = vpop.f32.mrf.mxu0
      %1709 = vmatprep.mubr.bf16.mxu0 0
      %1710 = vmatmul.mubr.bf16.gmra.mxu0 %v1588
      %v1711 = vpop.f32.mrf.mxu0
      %v1712 = vadd.f32 0.0, %v1711
      %v1713 = vpop.f32.mrf.mxu0
      %v1714 = vpop.f32.mrf.mxu0
      %v1715 = vadd.f32 0.0, %v1714
      %v1716 = vpop.f32.mrf.mxu0
      %1717 = vmatprep.mubr.bf16.mxu0 0
      %1718 = vmatmul.mubr.bf16.gmra.mxu0 %v1597
      %v1719 = vpop.f32.mrf.mxu0
      %v1720 = vadd.f32 0.0, %v1719
      %v1721 = vpop.f32.mrf.mxu0
      %v1722 = vpop.f32.mrf.mxu0
      %v1723 = vadd.f32 0.0, %v1722
      %v1724 = vpop.f32.mrf.mxu0
      %1725 = vmatprep.mubr.bf16.mxu0 0
      %1726 = vmatmul.mubr.bf16.gmra.mxu0 %v1606
      %v1727 = vpop.f32.mrf.mxu0
      %v1728 = vadd.f32 0.0, %v1727
      %v1729 = vpop.f32.mrf.mxu0
      %v1730 = vpop.f32.mrf.mxu0
      %v1731 = vadd.f32 0.0, %v1730
      %v1732 = vpop.f32.mrf.mxu0
      %1733 = vmatprep.mubr.bf16.mxu0 0
      %1734 = vmatmul.mubr.bf16.gmra.mxu0 %v1615
      %v1735 = vpop.f32.mrf.mxu0
      %v1736 = vadd.f32 0.0, %v1735
      %v1737 = vpop.f32.mrf.mxu0
      %v1738 = vpop.f32.mrf.mxu0
      %v1739 = vadd.f32 0.0, %v1738
      %v1740 = vpop.f32.mrf.mxu0
      %1741 = vdwg.mxu0
      %v1742 = vadd.f32 %v1531, %v1704
      %v1743 = vadd.f32 %v1532, %v1707
      %v1744 = vadd.f32 %v1533, %v1712
      %v1745 = vadd.f32 %v1534, %v1715
      %v1746 = vadd.f32 %v1535, %v1720
      %v1747 = vadd.f32 %v1536, %v1723
      %v1748 = vadd.f32 %v1537, %v1728
      %v1749 = vadd.f32 %v1538, %v1731
      %v1750 = vadd.f32 %v1539, %v1736
      %v1751 = vadd.f32 %v1540, %v1739
      %v1752 = vld [vmem:[%s192 + $0x8] sm:$0x8]
      %s1753 = scalar_lea.vmem %s1, 512
      %v1754 = vld [vmem:[%s1753] sm:$0xf]
      %v1755 = vld [vmem:[%s1753 + $0x4] sm:$0xf]
      %v1756 = vld [vmem:[%s1753 + $0x8] sm:$0xf]
      %v1757 = vld [vmem:[%s1753 + $0xc] sm:$0xf]
      %v1758 = vld [vmem:[%s1753 + $0x10] sm:$0xf]
      %v1759 = vld [vmem:[%s1753 + $0x14] sm:$0xf]
      %v1760 = vld [vmem:[%s1753 + $0x18] sm:$0xf]
      %v1761 = vld [vmem:[%s1753 + $0x1c] sm:$0xf]
      %v1762 = vld [vmem:[%s1753 + $0x20] sm:$0xf]
      %v1763 = vld [vmem:[%s1753 + $0x24] sm:$0xf]
      %v1764 = vld [vmem:[%s1753 + $0x28] sm:$0xf]
      %v1765 = vld [vmem:[%s1753 + $0x2c] sm:$0xf]
      %v1766 = vld [vmem:[%s1753 + $0x30] sm:$0xf]
      %v1767 = vld [vmem:[%s1753 + $0x34] sm:$0xf]
      %v1768 = vld [vmem:[%s1753 + $0x38] sm:$0xf]
      %v1769 = vld [vmem:[%s1753 + $0x3c] sm:$0xf]
      %v1771 = vunpack.c.l.b16 %v1752
      %v1772 = vpack.c.b16 %v1378, %v1771
      %vm1773 = vcmask 1044480
      %v1774 = vrot.slane %v1772, 3
      %v1775 = vrot.slane %v1389, 3
      %v1776 = vsel %vm1773, %v1774, %v1775
      %v1777 = vrot.slane %v1390, 3
      %v1778 = vsel %vm1773, %v1775, %v1777
      %v1779 = vrot.slane %v1391, 3
      %v1780 = vsel %vm1773, %v1777, %v1779
      %v1781 = vrot.slane %v1392, 3
      %v1782 = vsel %vm1773, %v1779, %v1781
      %v1783 = vrot.slane %v1561, 3
      %v1784 = vsel %vm1773, %v1781, %v1783
      %v1806 = vunpack.c.l.b16 %v1754
      %v1807 = vunpack.c.l.b16 %v1755
      %v1808 = vunpack.c.l.b16 %v1756
      %v1809 = vunpack.c.l.b16 %v1757
      %v1810 = vunpack.c.l.b16 %v1758
      %v1811 = vunpack.c.l.b16 %v1759
      %v1812 = vunpack.c.l.b16 %v1760
      %v1813 = vunpack.c.l.b16 %v1761
      %v1814 = vunpack.c.l.b16 %v1762
      %v1815 = vunpack.c.l.b16 %v1763
      %v1816 = vunpack.c.l.b16 %v1764
      %v1817 = vunpack.c.l.b16 %v1765
      %v1818 = vunpack.c.l.b16 %v1766
      %v1819 = vunpack.c.l.b16 %v1767
      %v1820 = vunpack.c.l.b16 %v1768
      %v1821 = vunpack.c.l.b16 %v1769
      %v1822 = vpack.c.b16 %v1807, %v1806
      %v1823 = vpack.c.b16 %v1809, %v1808
      %v1824 = vpack.c.b16 %v1811, %v1810
      %v1825 = vpack.c.b16 %v1813, %v1812
      %v1826 = vpack.c.b16 %v1815, %v1814
      %v1827 = vpack.c.b16 %v1817, %v1816
      %v1828 = vpack.c.b16 %v1819, %v1818
      %v1829 = vpack.c.b16 %v1821, %v1820
      %1838 = vmatprep.subr.bf16.mxu0 0
      %1839 = vmatpush1.bf16.msra.mxu0 %v1829
      %1840 = vmatprep.subr.bf16.mxu0 0
      %1841 = vmatpush1.bf16.msra.mxu0 %v1828
      %1842 = vmatprep.subr.bf16.mxu0 0
      %1843 = vmatpush1.bf16.msra.mxu0 %v1827
      %1844 = vmatprep.subr.bf16.mxu0 0
      %1845 = vmatpush1.bf16.msra.mxu0 %v1826
      %1846 = vmatprep.subr.bf16.mxu0 0
      %1847 = vmatpush1.bf16.msra.mxu0 %v1825
      %1848 = vmatprep.subr.bf16.mxu0 0
      %1849 = vmatpush1.bf16.msra.mxu0 %v1824
      %1850 = vmatprep.subr.bf16.mxu0 0
      %1851 = vmatpush1.bf16.msra.mxu0 %v1823
      %1852 = vmatprep.subr.bf16.mxu0 0
      %1853 = vmatpush1.bf16.msra.mxu0 %v1822
      %1854 = vmatprep.subr.bf16.mxu0 0
      %1855 = vmatpush2.bf16.msra.mxu0 0
      %1856 = vmatprep.subr.bf16.mxu0 0
      %1857 = vmatpush2.bf16.msra.mxu0 0
      %1858 = vmatprep.subr.bf16.mxu0 0
      %1859 = vmatpush2.bf16.msra.mxu0 0
      %1860 = vmatprep.subr.bf16.mxu0 0
      %1861 = vmatpush2.bf16.msra.mxu0 0
      %1862 = vmatprep.subr.bf16.mxu0 0
      %1863 = vmatpush2.bf16.msra.mxu0 0
      %1864 = vmatprep.subr.bf16.mxu0 0
      %1865 = vmatpush2.bf16.msra.mxu0 0
      %1866 = vmatprep.subr.bf16.mxu0 0
      %1867 = vmatpush2.bf16.msra.mxu0 0
      %1868 = vmatprep.subr.bf16.mxu0 0
      %1869 = vmatpush2.bf16.msra.mxu0 0
      %1870 = vmatprep.mubr.bf16.mxu0 0
      %1871 = vmatmul.mubr.bf16.gmra.mxu0 %v1776
      %v1872 = vpop.f32.mrf.mxu0
      %v1873 = vadd.f32 0.0, %v1872
      %v1874 = vpop.f32.mrf.mxu0
      %v1875 = vpop.f32.mrf.mxu0
      %v1876 = vadd.f32 0.0, %v1875
      %v1877 = vpop.f32.mrf.mxu0
      %1878 = vmatprep.mubr.bf16.mxu0 0
      %1879 = vmatmul.mubr.bf16.gmra.mxu0 %v1778
      %v1880 = vpop.f32.mrf.mxu0
      %v1881 = vadd.f32 0.0, %v1880
      %v1882 = vpop.f32.mrf.mxu0
      %v1883 = vpop.f32.mrf.mxu0
      %v1884 = vadd.f32 0.0, %v1883
      %v1885 = vpop.f32.mrf.mxu0
      %1886 = vmatprep.mubr.bf16.mxu0 0
      %1887 = vmatmul.mubr.bf16.gmra.mxu0 %v1780
      %v1888 = vpop.f32.mrf.mxu0
      %v1889 = vadd.f32 0.0, %v1888
      %v1890 = vpop.f32.mrf.mxu0
      %v1891 = vpop.f32.mrf.mxu0
      %v1892 = vadd.f32 0.0, %v1891
      %v1893 = vpop.f32.mrf.mxu0
      %1894 = vmatprep.mubr.bf16.mxu0 0
      %1895 = vmatmul.mubr.bf16.gmra.mxu0 %v1782
      %v1896 = vpop.f32.mrf.mxu0
      %v1897 = vadd.f32 0.0, %v1896
      %v1898 = vpop.f32.mrf.mxu0
      %v1899 = vpop.f32.mrf.mxu0
      %v1900 = vadd.f32 0.0, %v1899
      %v1901 = vpop.f32.mrf.mxu0
      %1902 = vmatprep.mubr.bf16.mxu0 0
      %1903 = vmatmul.mubr.bf16.gmra.mxu0 %v1784
      %v1904 = vpop.f32.mrf.mxu0
      %v1905 = vadd.f32 0.0, %v1904
      %v1906 = vpop.f32.mrf.mxu0
      %v1907 = vpop.f32.mrf.mxu0
      %v1908 = vadd.f32 0.0, %v1907
      %v1909 = vpop.f32.mrf.mxu0
      %1910 = vdwg.mxu0
      %v1911 = vadd.f32 %v1742, %v1873
      %v1912 = vadd.f32 %v1743, %v1876
      %v1913 = vadd.f32 %v1744, %v1881
      %v1914 = vadd.f32 %v1745, %v1884
      %v1915 = vadd.f32 %v1746, %v1889
      %v1916 = vadd.f32 %v1747, %v1892
      %v1917 = vadd.f32 %v1748, %v1897
      %v1918 = vadd.f32 %v1749, %v1900
      %v1919 = vadd.f32 %v1750, %v1905
      %v1920 = vadd.f32 %v1751, %v1908
      %v1921 = vld [vmem:[%s2] sm:$0x1]
      %v1923 = vlaneseq
      %v1924 = vshrl.u32 %v1923, 7
      %v1925 = vsub.s32 0, %v1924
      %v1926 = vrot.slane %v1921, %v1925
      %v1928 = vadd.f32 %v1911, %v1926
      %v1929 = vadd.f32 %v1912, %v1926
      %v1930 = vadd.f32 %v1913, %v1926
      %v1931 = vadd.f32 %v1914, %v1926
      %v1932 = vadd.f32 %v1915, %v1926
      %v1933 = vadd.f32 %v1916, %v1926
      %v1934 = vadd.f32 %v1917, %v1926
      %v1935 = vadd.f32 %v1918, %v1926
      %v1936 = vadd.f32 %v1919, %v1926
      %v1937 = vadd.f32 %v1920, %v1926
      %v1938 = vmax.f32 %v1928, 0.0
      %v1939 = vmax.f32 %v1929, 0.0
      %v1940 = vmax.f32 %v1930, 0.0
      %v1941 = vmax.f32 %v1931, 0.0
      %v1942 = vmax.f32 %v1932, 0.0
      %v1943 = vmax.f32 %v1933, 0.0
      %v1944 = vmax.f32 %v1934, 0.0
      %v1945 = vmax.f32 %v1935, 0.0
      %v1946 = vmax.f32 %v1936, 0.0
      %v1947 = vmax.f32 %v1937, 0.0
      %vm1957 = vcmask 1045504
      %v1958 = vrot.slane %v1939, 2
      %v1959 = vrot.slane %v1940, 2
      %v1960 = vsel %vm1957, %v1958, %v1959
      %v1961 = vrot.slane %v1941, 2
      %v1962 = vsel %vm1957, %v1959, %v1961
      %v1963 = vrot.slane %v1942, 2
      %v1964 = vsel %vm1957, %v1961, %v1963
      %v1965 = vrot.slane %v1943, 2
      %v1966 = vsel %vm1957, %v1963, %v1965
      %v1967 = vrot.slane %v1944, 2
      %v1968 = vsel %vm1957, %v1965, %v1967
      %v1969 = vrot.slane %v1945, 2
      %v1970 = vsel %vm1957, %v1967, %v1969
      %v1971 = vrot.slane %v1946, 2
      %v1972 = vsel %vm1957, %v1969, %v1971
      %v1973 = vrot.slane %v1947, 2
      %v1974 = vsel %vm1957, %v1971, %v1973
      %v1984 = vmax.f32 %v1938, %v1960
      %v1985 = vmax.f32 %v1939, %v1962
      %v1986 = vmax.f32 %v1940, %v1964
      %v1987 = vmax.f32 %v1941, %v1966
      %v1988 = vmax.f32 %v1942, %v1968
      %v1989 = vmax.f32 %v1943, %v1970
      %v1990 = vmax.f32 %v1944, %v1972
      %v1991 = vmax.f32 %v1945, %v1974
      %v1992 = vmax.f32 %v1946, %v1973
      %v1993 = vpack.c.bf16 %v1985, %v1984
      %v1994 = vpack.c.bf16 %v1987, %v1986
      %v1995 = vpack.c.bf16 %v1989, %v1988
      %v1996 = vpack.c.bf16 %v1991, %v1990
      %v1997 = vpack.c.bf16 %v1992, %v1992
      %v1998 = vld [vmem:[%s3] sm:$0xf]
      %v1999 = vld [vmem:[%s3 + $0x4] sm:$0xf]
      %v2000 = vld [vmem:[%s3 + $0x8] sm:$0xf]
      %v2001 = vld [vmem:[%s3 + $0xc] sm:$0xf]
      %v2002 = vld [vmem:[%s3 + $0x10] sm:$0x3]
      %v2008 = vunpack.c.l.b16 %v1998
      %v2009 = vunpack.c.l.b16 %v1999
      %v2010 = vunpack.c.l.b16 %v2000
      %v2011 = vunpack.c.l.b16 %v2001
      %v2012 = vunpack.c.l.b16 %v2002
      %v2013 = vpack.c.b16 %v2009, %v2008
      %v2014 = vpack.c.b16 %v2011, %v2010
      %v2015 = vpack.c.b16 %v2012, %v2012
      %vm2016 = vcmask 556032
      %v2018 = vsel %vm2016, %v2013, 0
      %v2021 = vsel %vm2016, %v2014, 0
      %v2024 = vsel %vm2016, %v2015, 0
      %vm2026 = vcmask 1041408
      %v2028 = vsel %vm2026, %v1997, 0
      %2030 = vmatprep.subr.bf16.mxu0 0
      %2031 = vmatpush1.bf16.msra.mxu0 0
      %2032 = vmatprep.subr.bf16.mxu0 0
      %2033 = vmatpush1.bf16.msra.mxu0 0
      %2034 = vmatprep.subr.bf16.mxu0 0
      %2035 = vmatpush1.bf16.msra.mxu0 0
      %2036 = vmatprep.subr.bf16.mxu0 0
      %2037 = vmatpush1.bf16.msra.mxu0 %v2028
      %2038 = vmatprep.subr.bf16.mxu0 0
      %2039 = vmatpush1.bf16.msra.mxu0 %v1996
      %2040 = vmatprep.subr.bf16.mxu0 0
      %2041 = vmatpush1.bf16.msra.mxu0 %v1995
      %2042 = vmatprep.subr.bf16.mxu0 0
      %2043 = vmatpush1.bf16.msra.mxu0 %v1994
      %2044 = vmatprep.subr.bf16.mxu0 0
      %2045 = vmatpush1.bf16.msra.mxu0 %v1993
      %2046 = vmatprep.subr.bf16.mxu0 0
      %2047 = vmatpush2.bf16.msra.mxu0 0
      %2048 = vmatprep.subr.bf16.mxu0 0
      %2049 = vmatpush2.bf16.msra.mxu0 0
      %2050 = vmatprep.subr.bf16.mxu0 0
      %2051 = vmatpush2.bf16.msra.mxu0 0
      %2052 = vmatprep.subr.bf16.mxu0 0
      %2053 = vmatpush2.bf16.msra.mxu0 0
      %2054 = vmatprep.subr.bf16.mxu0 0
      %2055 = vmatpush2.bf16.msra.mxu0 0
      %2056 = vmatprep.subr.bf16.mxu0 0
      %2057 = vmatpush2.bf16.msra.mxu0 0
      %2058 = vmatprep.subr.bf16.mxu0 0
      %2059 = vmatpush2.bf16.msra.mxu0 0
      %2060 = vmatprep.subr.bf16.mxu0 0
      %2061 = vmatpush2.bf16.msra.mxu0 0
      %2062 = vmatprep.mubr.bf16.mxu0 0
      %2063 = vmatmul.mubr.bf16.gmra.mxu0 %v2018
      %v2064 = vpop.f32.mrf.mxu0
      %v2065 = vadd.f32 0.0, %v2064
      %v2066 = vpop.f32.mrf.mxu0
      %v2067 = vpop.f32.mrf.mxu0
      %v2068 = vadd.f32 0.0, %v2067
      %v2069 = vpop.f32.mrf.mxu0
      %2070 = vmatprep.mubr.bf16.mxu0 0
      %2071 = vmatmul.mubr.bf16.gmra.mxu0 %v2021
      %v2072 = vpop.f32.mrf.mxu0
      %v2073 = vadd.f32 0.0, %v2072
      %v2074 = vpop.f32.mrf.mxu0
      %v2075 = vpop.f32.mrf.mxu0
      %v2076 = vadd.f32 0.0, %v2075
      %v2077 = vpop.f32.mrf.mxu0
      %2078 = vmatprep.mubr.bf16.mxu0 0
      %2079 = vmatmul.mubr.bf16.gmra.mxu0 %v2024
      %v2080 = vpop.f32.mrf.mxu0
      %v2081 = vadd.f32 0.0, %v2080
      %v2082 = vpop.f32.mrf.mxu0
      %v2083 = vpop.f32.mrf.mxu0
      %v2084 = vpop.f32.mrf.mxu0
      %2085 = vdwg.mxu0
      %s2086 = scalar_lea.vmem %s3, 20
      %v2087 = vld [vmem:[%s2086] sm:$0xf]
      %v2088 = vld [vmem:[%s2086 + $0x4] sm:$0xf]
      %v2089 = vld [vmem:[%s2086 + $0x8] sm:$0xf]
      %v2090 = vld [vmem:[%s2086 + $0xc] sm:$0xf]
      %v2091 = vld [vmem:[%s2086 + $0x10] sm:$0x3]
      %v2097 = vunpack.c.l.b16 %v2087
      %v2098 = vunpack.c.l.b16 %v2088
      %v2099 = vunpack.c.l.b16 %v2089
      %v2100 = vunpack.c.l.b16 %v2090
      %v2101 = vunpack.c.l.b16 %v2091
      %v2102 = vpack.c.b16 %v2098, %v2097
      %v2103 = vpack.c.b16 %v2100, %v2099
      %v2104 = vpack.c.b16 %v2101, %v2101
      %v2106 = vsel %vm2016, %v2102, 0
      %v2109 = vsel %vm2016, %v2103, 0
      %v2112 = vsel %vm2016, %v2104, 0
      %2114 = vmatprep.subr.bf16.mxu0 0
      %2115 = vmatpush1.bf16.msra.mxu0 0
      %2116 = vmatprep.subr.bf16.mxu0 0
      %2117 = vmatpush1.bf16.msra.mxu0 0
      %2118 = vmatprep.subr.bf16.mxu0 0
      %2119 = vmatpush1.bf16.msra.mxu0 0
      %2120 = vmatprep.subr.bf16.mxu0 0
      %2121 = vmatpush1.bf16.msra.mxu0 %v2028
      %2122 = vmatprep.subr.bf16.mxu0 0
      %2123 = vmatpush1.bf16.msra.mxu0 %v1996
      %2124 = vmatprep.subr.bf16.mxu0 0
      %2125 = vmatpush1.bf16.msra.mxu0 %v1995
      %2126 = vmatprep.subr.bf16.mxu0 0
      %2127 = vmatpush1.bf16.msra.mxu0 %v1994
      %2128 = vmatprep.subr.bf16.mxu0 0
      %2129 = vmatpush1.bf16.msra.mxu0 %v1993
      %2130 = vmatprep.subr.bf16.mxu0 0
      %2131 = vmatpush2.bf16.msra.mxu0 0
      %2132 = vmatprep.subr.bf16.mxu0 0
      %2133 = vmatpush2.bf16.msra.mxu0 0
      %2134 = vmatprep.subr.bf16.mxu0 0
      %2135 = vmatpush2.bf16.msra.mxu0 0
      %2136 = vmatprep.subr.bf16.mxu0 0
      %2137 = vmatpush2.bf16.msra.mxu0 0
      %2138 = vmatprep.subr.bf16.mxu0 0
      %2139 = vmatpush2.bf16.msra.mxu0 0
      %2140 = vmatprep.subr.bf16.mxu0 0
      %2141 = vmatpush2.bf16.msra.mxu0 0
      %2142 = vmatprep.subr.bf16.mxu0 0
      %2143 = vmatpush2.bf16.msra.mxu0 0
      %2144 = vmatprep.subr.bf16.mxu0 0
      %2145 = vmatpush2.bf16.msra.mxu0 0
      %2146 = vmatprep.mubr.bf16.mxu0 0
      %2147 = vmatmul.mubr.bf16.gmra.mxu0 %v2106
      %v2148 = vpop.f32.mrf.mxu0
      %v2149 = vadd.f32 0.0, %v2148
      %v2150 = vpop.f32.mrf.mxu0
      %v2151 = vpop.f32.mrf.mxu0
      %v2152 = vadd.f32 0.0, %v2151
      %v2153 = vpop.f32.mrf.mxu0
      %2154 = vmatprep.mubr.bf16.mxu0 0
      %2155 = vmatmul.mubr.bf16.gmra.mxu0 %v2109
      %v2156 = vpop.f32.mrf.mxu0
      %v2157 = vadd.f32 0.0, %v2156
      %v2158 = vpop.f32.mrf.mxu0
      %v2159 = vpop.f32.mrf.mxu0
      %v2160 = vadd.f32 0.0, %v2159
      %v2161 = vpop.f32.mrf.mxu0
      %2162 = vmatprep.mubr.bf16.mxu0 0
      %2163 = vmatmul.mubr.bf16.gmra.mxu0 %v2112
      %v2164 = vpop.f32.mrf.mxu0
      %v2165 = vadd.f32 0.0, %v2164
      %v2166 = vpop.f32.mrf.mxu0
      %v2167 = vpop.f32.mrf.mxu0
      %v2168 = vpop.f32.mrf.mxu0
      %2169 = vdwg.mxu0
      %v2170 = vmax.f32 %v2065, %v2149
      %v2171 = vmax.f32 %v2068, %v2152
      %v2172 = vmax.f32 %v2073, %v2157
      %v2173 = vmax.f32 %v2076, %v2160
      %v2174 = vmax.f32 %v2081, %v2165
      %v2175 = vpack.c.bf16 %v2171, %v2170
      %v2176 = vpack.c.bf16 %v2173, %v2172
      %v2177 = vpack.c.bf16 %v2174, %v2174
      %v2181 = vunpack.c.l.b16 %v2175
      %v2182 = vunpack.c.h.b16 %v2175
      %v2183 = vunpack.c.l.b16 %v2176
      %v2184 = vunpack.c.h.b16 %v2176
      %v2185 = vunpack.c.l.b16 %v2177
      %v2186 = vpack.c.b16 %v2181, %v2181
      %v2187 = vpack.c.b16 %v2182, %v2182
      %v2188 = vpack.c.b16 %v2183, %v2183
      %v2189 = vpack.c.b16 %v2184, %v2184
      %v2190 = vpack.c.b16 %v2185, %v2185
      %2196 = vst [vmem:[%s197] sm:$0xf] %v2186
      %2197 = vst [vmem:[%s197 + $0x4] sm:$0xf] %v2187
      %2198 = vst [vmem:[%s197 + $0x8] sm:$0xf] %v2188
      %2199 = vst [vmem:[%s197 + $0xc] sm:$0xf] %v2189
      %2200 = vst [vmem:[%s197 + $0x10] sm:$0x3] %v2190
      %p2201 = scmp.lt.s32.totalorder %s15, 7
      %s2202 = scalar_select %p2201, %s15, 7
      %s2203 = smul.addr %s2202, 5
      %s2204 = smul.addr %s2203, 4
      %s2205 = scalar_lea.vmem %s4, %s2204
      // Predicated region
      $region37: #{vgg_forward_pallas.10} parent=35 // pred_check
        %p2206 = pneg %p122
      $region38: #{vgg_forward_pallas.10} parent=35 // pred_check_branch
        %2208 = sbr.rel (%p2206) target = $region40
      $region39: #{vgg_forward_pallas.10} parent=35 // pred_region
        _
      $region40: #{vgg_forward_pallas.10} parent=35 // pred_fallthru
        _
    $region36: #{vgg_forward_pallas.10} parent=5 // pred_fallthru
      _
    %p2209 = scmp.le.s32.totalorder 2, %s10
    // Predicated region
    $region41: #{vgg_forward_pallas.10} parent=5 // pred_check
      %p2210 = pneg %p2209
    $region42: #{vgg_forward_pallas.10} parent=5 // pred_check_branch
      %2212 = sbr.rel (%p2210) target = $region44
    $region43: #{vgg_forward_pallas.10} parent=5 // pred_region
      %s2213 = ssub.s32 %s10, 2
      // Predicated region
      $region45: #{vgg_forward_pallas.10} parent=43 // pred_check
        %p2214 = pneg %p128
      $region46: #{vgg_forward_pallas.10} parent=43 // pred_check_branch
        %2216 = sbr.rel (%p2214) target = $region48
      $region47: #{vgg_forward_pallas.10} parent=43 // pred_region
        %p2217 = scmp.lt.s32.totalorder %s16, 7
        %s2218 = scalar_select %p2217, %s16, 7
        %s2219 = smul.addr %s2218, 5
        %s2220 = smul.addr %s2219, 4
        %s2221 = scalar_lea.vmem %s4, %s2220
      $region48: #{vgg_forward_pallas.10} parent=43 // pred_fallthru
        _
    $region44: #{vgg_forward_pallas.10} parent=5 // pred_fallthru
      _
  $region6: #{vgg_forward_pallas.10} parent=0 // loop_footer
    %s14 = sadd.s32 1, %s10
  $region7: #{vgg_forward_pallas.10} parent=0 // loop_footer_branch
    %9 = sbr.rel target = $region3
  $region8: #{vgg_forward_pallas.10} parent=0 // loop_exit
    _

// kernel: vgg_forward_pallas.13
$region0: #{vgg_forward_pallas.13}
  #allocation0 [shape = 'u32[]', space=smem, size = 0x4, offset = 0x4, fixed_abs, tag = 'smem constant byte address 0x4 - core index']
  #allocation1 [shape = 'u32[144,128]{1,0:T(1,128)}', space=vmem, size = 0x12000, scoped, tag = 'internal scratch']
  %s0 = inlined_call_operand.vmem [shape: f32[2,4,128], index: 0, kind: input, shape index: {}]
  %s1 = inlined_call_operand.vmem [shape: f32[2,4,128], index: 1, kind: output, shape index: {}]
  %s2 = sld [smem:[#allocation0]]
  $region37: #{vgg_forward_pallas.13} parent=0
    _
  %s4 = ssub.s32 1, %s2
  %s5 = scalar_select 0, %s4, %s2
  loop: start=0, step=1, limit=4
  $region2: #{vgg_forward_pallas.13} parent=0 // loop_pre_header
    _
  $region3: #{vgg_forward_pallas.13} parent=0 // loop_header
    %s7 = sphi 0, %s11
    %p8 = scmp.ge.s32.totalorder %s7, 4
    %s17 = sphi 0, %s19
    %s20 = sphi 0, %s17
    %s21 = sphi 0, %s20
    %s37 = sphi 0, %s21
    %s43 = sphi 0, %s45
    %s46 = sphi 0, %s43
    %s47 = sphi 0, %s46
    %s63 = sphi 0, %s47
  $region4: #{vgg_forward_pallas.13} parent=0 // loop_header_branch
    %10 = sbr.rel (%p8) target = $region8
  $region5: #{vgg_forward_pallas.13} parent=0 // loop_body
    %s12 = ssub.s32 %s7, 1
    %s13 = ssub.s32 %s7, 2
    %s14 = sadd.s32 %s7, 1
    %s15 = ssub.s32 %s7, %s14
    %p16 = scmp.eq.s32.totalorder %s15, 0
    %s18 = sadd.s32 %s17, 1
    %s19 = scalar_select %p16, %s17, %s18
    %p22 = pneg %p16
    %p23 = scmp.eq.s32.totalorder %s7, 1
    %p24 = por %p22, %p23
    %p25 = scmp.ne.s32.totalorder %s17, %s20
    %p26 = scmp.eq.s32.totalorder %s7, 0
    %p27 = por %p25, %p26
    %p28 = scmp.ne.s32.totalorder %s17, %s20
    %p29 = scmp.eq.s32.totalorder %s12, 1
    %p30 = por %p28, %p29
    %p31 = scmp.ne.s32.totalorder %s20, %s21
    %p32 = scmp.eq.s32.totalorder %s12, 0
    %p33 = por %p31, %p32
    %p34 = scmp.ne.s32.totalorder %s20, %s21
    %p35 = scmp.eq.s32.totalorder %s13, 1
    %p36 = por %p34, %p35
    %p38 = scmp.ne.s32.totalorder %s21, %s37
    %p39 = scmp.eq.s32.totalorder %s13, 0
    %p40 = por %p38, %p39
    %s41 = ssub.s32 %s7, %s14
    %p42 = scmp.eq.s32.totalorder %s41, 0
    %s44 = sadd.s32 %s43, 1
    %s45 = scalar_select %p42, %s43, %s44
    %p48 = pneg %p42
    %p49 = scmp.eq.s32.totalorder %s7, 1
    %p50 = por %p48, %p49
    %p51 = scmp.ne.s32.totalorder %s43, %s46
    %p52 = scmp.eq.s32.totalorder %s7, 0
    %p53 = por %p51, %p52
    %p54 = scmp.ne.s32.totalorder %s43, %s46
    %p55 = scmp.eq.s32.totalorder %s12, 1
    %p56 = por %p54, %p55
    %p57 = scmp.ne.s32.totalorder %s46, %s47
    %p58 = scmp.eq.s32.totalorder %s12, 0
    %p59 = por %p57, %p58
    %p60 = scmp.ne.s32.totalorder %s46, %s47
    %p61 = scmp.eq.s32.totalorder %s13, 1
    %p62 = por %p60, %p61
    %p64 = scmp.ne.s32.totalorder %s47, %s63
    %p65 = scmp.eq.s32.totalorder %s13, 0
    %p66 = por %p64, %p65
    %p67 = scmp.le.s32.totalorder 1, %s7
    %p68 = scmp.lt.s32.totalorder %s7, 3
    %p69 = pnand %p67, %p68
    %p70 = pneg %p69
    // Predicated region
    $region9: #{vgg_forward_pallas.13} parent=5 // pred_check
      _
    $region10: #{vgg_forward_pallas.13} parent=5 // pred_check_branch
      %72 = sbr.rel (%p69) target = $region12
    $region11: #{vgg_forward_pallas.13} parent=5 // pred_region
      %s73 = ssub.s32 %s7, 1
    $region12: #{vgg_forward_pallas.13} parent=5 // pred_fallthru
      _
    %p74 = scmp.lt.s32.totalorder %s7, 2
    // Predicated region
    $region13: #{vgg_forward_pallas.13} parent=5 // pred_check
      %p75 = pneg %p74
    $region14: #{vgg_forward_pallas.13} parent=5 // pred_check_branch
      %77 = sbr.rel (%p75) target = $region16
    $region15: #{vgg_forward_pallas.13} parent=5 // pred_region
      // Predicated region
      $region17: #{vgg_forward_pallas.13} parent=15 // pred_check
        %p78 = pneg %p27
      $region18: #{vgg_forward_pallas.13} parent=15 // pred_check_branch
        %80 = sbr.rel (%p78) target = $region20
      $region19: #{vgg_forward_pallas.13} parent=15 // pred_region
        %p81 = scmp.lt.s32.totalorder %s7, 1
        %s82 = scalar_select %p81, %s7, 1
        %s83 = smul.addr %s82, 4
        %s84 = scalar_lea.vmem %s0, %s83
      $region20: #{vgg_forward_pallas.13} parent=15 // pred_fallthru
        _
    $region16: #{vgg_forward_pallas.13} parent=5 // pred_fallthru
      _
    %p85 = scmp.le.s32.totalorder 1, %s7
    %p86 = scmp.lt.s32.totalorder %s7, 3
    %p87 = pnand %p85, %p86
    %p88 = pneg %p87
    // Predicated region
    $region21: #{vgg_forward_pallas.13} parent=5 // pred_check
      _
    $region22: #{vgg_forward_pallas.13} parent=5 // pred_check_branch
      %90 = sbr.rel (%p87) target = $region24
    $region23: #{vgg_forward_pallas.13} parent=5 // pred_region
      %s91 = ssub.s32 %s7, 1
      %p92 = scmp.lt.s32.totalorder %s12, 1
      %s93 = scalar_select %p92, %s12, 1
      %s94 = smul.addr %s93, 4
      %s95 = scalar_lea.vmem %s0, %s94
      %p96 = pneg %p33
      %p97 = pneg %p30
      %p98 = pneg %p59
      %p99 = pneg %p56
      %p100 = scmp.lt.s32.totalorder %s12, 1
      %s101 = scalar_select %p100, %s12, 1
      %s102 = smul.addr %s101, 4
      %s103 = scalar_lea.vmem %s1, %s102
      %p104 = scmp.lt.s32.totalorder %s12, 1
      %s105 = scalar_select %p104, %s12, 1
      %s106 = smul.addr %s105, 4
      %s107 = scalar_lea.vmem %s0, %s106
      %p108 = scmp.lt.s32.totalorder %s12, 1
      %s109 = scalar_select %p108, %s12, 1
      %s110 = smul.addr %s109, 4
      %s111 = scalar_lea.vmem %s1, %s110
      %v112 = vld [vmem:[%s107 + $0x1] sm:$0x7]
      %v113 = vld [vmem:[%s107] sm:$0x7]
      %v114 = vsub.f32 %v112, %v113
      %115 = vst [vmem:[%s111] sm:$0x7] %v114
      %v116 = vld [vmem:[%s107 + $0x3] sm:$0x1]
      %v117 = vsub.f32 0.0, %v116
      %118 = vst [vmem:[%s111 + $0x3] sm:$0x1] %v117
      %p119 = scmp.lt.s32.totalorder %s12, 1
      %s120 = scalar_select %p119, %s12, 1
      %s121 = smul.addr %s120, 4
      %s122 = scalar_lea.vmem %s1, %s121
      // Predicated region
      $region25: #{vgg_forward_pallas.13} parent=23 // pred_check
        %p123 = pneg %p56
      $region26: #{vgg_forward_pallas.13} parent=23 // pred_check_branch
        %125 = sbr.rel (%p123) target = $region28
      $region27: #{vgg_forward_pallas.13} parent=23 // pred_region
        _
      $region28: #{vgg_forward_pallas.13} parent=23 // pred_fallthru
        _
    $region24: #{vgg_forward_pallas.13} parent=5 // pred_fallthru
      _
    %p126 = scmp.le.s32.totalorder 2, %s7
    // Predicated region
    $region29: #{vgg_forward_pallas.13} parent=5 // pred_check
      %p127 = pneg %p126
    $region30: #{vgg_forward_pallas.13} parent=5 // pred_check_branch
      %129 = sbr.rel (%p127) target = $region32
    $region31: #{vgg_forward_pallas.13} parent=5 // pred_region
      %s130 = ssub.s32 %s7, 2
      // Predicated region
      $region33: #{vgg_forward_pallas.13} parent=31 // pred_check
        %p131 = pneg %p62
      $region34: #{vgg_forward_pallas.13} parent=31 // pred_check_branch
        %133 = sbr.rel (%p131) target = $region36
      $region35: #{vgg_forward_pallas.13} parent=31 // pred_region
        %p134 = scmp.lt.s32.totalorder %s13, 1
        %s135 = scalar_select %p134, %s13, 1
        %s136 = smul.addr %s135, 4
        %s137 = scalar_lea.vmem %s1, %s136
      $region36: #{vgg_forward_pallas.13} parent=31 // pred_fallthru
        _
    $region32: #{vgg_forward_pallas.13} parent=5 // pred_fallthru
      _
  $region6: #{vgg_forward_pallas.13} parent=0 // loop_footer
    %s11 = sadd.s32 1, %s7
  $region7: #{vgg_forward_pallas.13} parent=0 // loop_footer_branch
    %6 = sbr.rel target = $region3
  $region8: #{vgg_forward_pallas.13} parent=0 // loop_exit
    _

// kernel: vgg_forward_pallas.12
$region0: #{vgg_forward_pallas.12}
  #allocation0 [shape = 'u32[]', space=smem, size = 0x4, offset = 0x4, fixed_abs, tag = 'smem constant byte address 0x4 - core index']
  #allocation1 [shape = 'u32[144,128]{1,0:T(1,128)}', space=vmem, size = 0x12000, scoped, tag = 'internal scratch']
  #allocation2 [shape = 'f32[8,128]{1,0:T(8,128)}', space=vmem, size = 0x1000, scoped, tag = 'scratch operand']
  %s0 = inlined_call_operand.vmem [shape: bf16[8,512], index: 0, kind: input, shape index: {}]
  %s1 = inlined_call_operand.vmem [shape: bf16[512,128], index: 1, kind: input, shape index: {}]
  %s2 = inlined_call_operand.vmem [shape: f32[1,128], index: 2, kind: input, shape index: {}]
  %s3 = inlined_call_operand.vmem [shape: f32[8,128], index: 3, kind: output, shape index: {}]
  %s4 = sld [smem:[#allocation0]]
  $region30: #{vgg_forward_pallas.12} parent=0
    _
  %s6 = ssub.s32 1, %s4
  %s7 = scalar_select 0, %s6, %s4
  // Predicated region
  $region2: #{vgg_forward_pallas.12} parent=0 // pred_check
    _
  $region3: #{vgg_forward_pallas.12} parent=0 // pred_check_branch
    %9 = sbr.rel (0) target = $region5
  $region4: #{vgg_forward_pallas.12} parent=0 // pred_region
    _
  $region5: #{vgg_forward_pallas.12} parent=0 // pred_fallthru
    _
  // Predicated region
  $region6: #{vgg_forward_pallas.12} parent=0 // pred_check
    _
  $region7: #{vgg_forward_pallas.12} parent=0 // pred_check_branch
    %11 = sbr.rel (0) target = $region9
  $region8: #{vgg_forward_pallas.12} parent=0 // pred_region
    _
  $region9: #{vgg_forward_pallas.12} parent=0 // pred_fallthru
    _
  // Predicated region
  $region10: #{vgg_forward_pallas.12} parent=0 // pred_check
    _
  $region11: #{vgg_forward_pallas.12} parent=0 // pred_check_branch
    %13 = sbr.rel (0) target = $region13
  $region12: #{vgg_forward_pallas.12} parent=0 // pred_region
    _
  $region13: #{vgg_forward_pallas.12} parent=0 // pred_fallthru
    _
  %p15 = scmp.eq.s32.totalorder 0, 0
  // Predicated region
  $region14: #{vgg_forward_pallas.12} parent=0 // pred_check
    %p16 = pneg %p15
  $region15: #{vgg_forward_pallas.12} parent=0 // pred_check_branch
    %18 = sbr.rel (%p16) target = $region17
  $region16: #{vgg_forward_pallas.12} parent=0 // pred_region
    %v19 = vld [vmem:[%s2] sm:$0x1]
    %v21 = vlaneseq
    %v22 = vshrl.u32 %v21, 7
    %v23 = vsub.s32 0, %v22
    %v24 = vrot.slane %v19, %v23
    %v26 = vadd.f32 %v24, 0.0
    %27 = vst [vmem:[#allocation2] sm:$0xff] %v26
  $region17: #{vgg_forward_pallas.12} parent=0 // pred_fallthru
    _
  %v28 = vld [vmem:[#allocation2] sm:$0xff]
  %v29 = vld [vmem:[%s0] sm:$0xff]
  %v30 = vld [vmem:[%s0 + $0x8] sm:$0xff]
  %v31 = vld [vmem:[%s1] sm:$0xf]
  %v32 = vld [vmem:[%s1 + $0x4] sm:$0xf]
  %v33 = vld [vmem:[%s1 + $0x8] sm:$0xf]
  %v34 = vld [vmem:[%s1 + $0xc] sm:$0xf]
  %v35 = vld [vmem:[%s1 + $0x10] sm:$0xf]
  %v36 = vld [vmem:[%s1 + $0x14] sm:$0xf]
  %v37 = vld [vmem:[%s1 + $0x18] sm:$0xf]
  %v38 = vld [vmem:[%s1 + $0x1c] sm:$0xf]
  %v39 = vld [vmem:[%s1 + $0x20] sm:$0xf]
  %v40 = vld [vmem:[%s1 + $0x24] sm:$0xf]
  %v41 = vld [vmem:[%s1 + $0x28] sm:$0xf]
  %v42 = vld [vmem:[%s1 + $0x2c] sm:$0xf]
  %v43 = vld [vmem:[%s1 + $0x30] sm:$0xf]
  %v44 = vld [vmem:[%s1 + $0x34] sm:$0xf]
  %v45 = vld [vmem:[%s1 + $0x38] sm:$0xf]
  %v46 = vld [vmem:[%s1 + $0x3c] sm:$0xf]
  %v47 = vld [vmem:[%s1 + $0x40] sm:$0xf]
  %v48 = vld [vmem:[%s1 + $0x44] sm:$0xf]
  %v49 = vld [vmem:[%s1 + $0x48] sm:$0xf]
  %v50 = vld [vmem:[%s1 + $0x4c] sm:$0xf]
  %v51 = vld [vmem:[%s1 + $0x50] sm:$0xf]
  %v52 = vld [vmem:[%s1 + $0x54] sm:$0xf]
  %v53 = vld [vmem:[%s1 + $0x58] sm:$0xf]
  %v54 = vld [vmem:[%s1 + $0x5c] sm:$0xf]
  %v55 = vld [vmem:[%s1 + $0x60] sm:$0xf]
  %v56 = vld [vmem:[%s1 + $0x64] sm:$0xf]
  %v57 = vld [vmem:[%s1 + $0x68] sm:$0xf]
  %v58 = vld [vmem:[%s1 + $0x6c] sm:$0xf]
  %v59 = vld [vmem:[%s1 + $0x70] sm:$0xf]
  %v60 = vld [vmem:[%s1 + $0x74] sm:$0xf]
  %v61 = vld [vmem:[%s1 + $0x78] sm:$0xf]
  %v62 = vld [vmem:[%s1 + $0x7c] sm:$0xf]
  %v63 = vld [vmem:[%s1 + $0x80] sm:$0xf]
  %v64 = vld [vmem:[%s1 + $0x84] sm:$0xf]
  %v65 = vld [vmem:[%s1 + $0x88] sm:$0xf]
  %v66 = vld [vmem:[%s1 + $0x8c] sm:$0xf]
  %v67 = vld [vmem:[%s1 + $0x90] sm:$0xf]
  %v68 = vld [vmem:[%s1 + $0x94] sm:$0xf]
  %v69 = vld [vmem:[%s1 + $0x98] sm:$0xf]
  %v70 = vld [vmem:[%s1 + $0x9c] sm:$0xf]
  %v71 = vld [vmem:[%s1 + $0xa0] sm:$0xf]
  %v72 = vld [vmem:[%s1 + $0xa4] sm:$0xf]
  %v73 = vld [vmem:[%s1 + $0xa8] sm:$0xf]
  %v74 = vld [vmem:[%s1 + $0xac] sm:$0xf]
  %v75 = vld [vmem:[%s1 + $0xb0] sm:$0xf]
  %v76 = vld [vmem:[%s1 + $0xb4] sm:$0xf]
  %v77 = vld [vmem:[%s1 + $0xb8] sm:$0xf]
  %v78 = vld [vmem:[%s1 + $0xbc] sm:$0xf]
  %v79 = vld [vmem:[%s1 + $0xc0] sm:$0xf]
  %v80 = vld [vmem:[%s1 + $0xc4] sm:$0xf]
  %v81 = vld [vmem:[%s1 + $0xc8] sm:$0xf]
  %v82 = vld [vmem:[%s1 + $0xcc] sm:$0xf]
  %v83 = vld [vmem:[%s1 + $0xd0] sm:$0xf]
  %v84 = vld [vmem:[%s1 + $0xd4] sm:$0xf]
  %v85 = vld [vmem:[%s1 + $0xd8] sm:$0xf]
  %v86 = vld [vmem:[%s1 + $0xdc] sm:$0xf]
  %v87 = vld [vmem:[%s1 + $0xe0] sm:$0xf]
  %v88 = vld [vmem:[%s1 + $0xe4] sm:$0xf]
  %v89 = vld [vmem:[%s1 + $0xe8] sm:$0xf]
  %v90 = vld [vmem:[%s1 + $0xec] sm:$0xf]
  %v91 = vld [vmem:[%s1 + $0xf0] sm:$0xf]
  %v92 = vld [vmem:[%s1 + $0xf4] sm:$0xf]
  %v93 = vld [vmem:[%s1 + $0xf8] sm:$0xf]
  %v94 = vld [vmem:[%s1 + $0xfc] sm:$0xf]
  %v97 = vunpack.c.l.b16 %v29
  %v98 = vunpack.c.h.b16 %v29
  %v99 = vunpack.c.l.b16 %v30
  %v100 = vunpack.c.h.b16 %v30
  %v101 = vpack.c.b16 %v97, %v97
  %v102 = vpack.c.b16 %v98, %v98
  %v103 = vpack.c.b16 %v99, %v99
  %v104 = vpack.c.b16 %v100, %v100
  %v173 = vunpack.c.l.b16 %v31
  %v174 = vunpack.c.l.b16 %v32
  %v175 = vunpack.c.l.b16 %v33
  %v176 = vunpack.c.l.b16 %v34
  %v177 = vunpack.c.l.b16 %v35
  %v178 = vunpack.c.l.b16 %v36
  %v179 = vunpack.c.l.b16 %v37
  %v180 = vunpack.c.l.b16 %v38
  %v181 = vunpack.c.l.b16 %v39
  %v182 = vunpack.c.l.b16 %v40
  %v183 = vunpack.c.l.b16 %v41
  %v184 = vunpack.c.l.b16 %v42
  %v185 = vunpack.c.l.b16 %v43
  %v186 = vunpack.c.l.b16 %v44
  %v187 = vunpack.c.l.b16 %v45
  %v188 = vunpack.c.l.b16 %v46
  %v189 = vunpack.c.l.b16 %v47
  %v190 = vunpack.c.l.b16 %v48
  %v191 = vunpack.c.l.b16 %v49
  %v192 = vunpack.c.l.b16 %v50
  %v193 = vunpack.c.l.b16 %v51
  %v194 = vunpack.c.l.b16 %v52
  %v195 = vunpack.c.l.b16 %v53
  %v196 = vunpack.c.l.b16 %v54
  %v197 = vunpack.c.l.b16 %v55
  %v198 = vunpack.c.l.b16 %v56
  %v199 = vunpack.c.l.b16 %v57
  %v200 = vunpack.c.l.b16 %v58
  %v201 = vunpack.c.l.b16 %v59
  %v202 = vunpack.c.l.b16 %v60
  %v203 = vunpack.c.l.b16 %v61
  %v204 = vunpack.c.l.b16 %v62
  %v205 = vunpack.c.l.b16 %v63
  %v206 = vunpack.c.l.b16 %v64
  %v207 = vunpack.c.l.b16 %v65
  %v208 = vunpack.c.l.b16 %v66
  %v209 = vunpack.c.l.b16 %v67
  %v210 = vunpack.c.l.b16 %v68
  %v211 = vunpack.c.l.b16 %v69
  %v212 = vunpack.c.l.b16 %v70
  %v213 = vunpack.c.l.b16 %v71
  %v214 = vunpack.c.l.b16 %v72
  %v215 = vunpack.c.l.b16 %v73
  %v216 = vunpack.c.l.b16 %v74
  %v217 = vunpack.c.l.b16 %v75
  %v218 = vunpack.c.l.b16 %v76
  %v219 = vunpack.c.l.b16 %v77
  %v220 = vunpack.c.l.b16 %v78
  %v221 = vunpack.c.l.b16 %v79
  %v222 = vunpack.c.l.b16 %v80
  %v223 = vunpack.c.l.b16 %v81
  %v224 = vunpack.c.l.b16 %v82
  %v225 = vunpack.c.l.b16 %v83
  %v226 = vunpack.c.l.b16 %v84
  %v227 = vunpack.c.l.b16 %v85
  %v228 = vunpack.c.l.b16 %v86
  %v229 = vunpack.c.l.b16 %v87
  %v230 = vunpack.c.l.b16 %v88
  %v231 = vunpack.c.l.b16 %v89
  %v232 = vunpack.c.l.b16 %v90
  %v233 = vunpack.c.l.b16 %v91
  %v234 = vunpack.c.l.b16 %v92
  %v235 = vunpack.c.l.b16 %v93
  %v236 = vunpack.c.l.b16 %v94
  %v237 = vpack.c.b16 %v174, %v173
  %v238 = vpack.c.b16 %v176, %v175
  %v239 = vpack.c.b16 %v178, %v177
  %v240 = vpack.c.b16 %v180, %v179
  %v241 = vpack.c.b16 %v182, %v181
  %v242 = vpack.c.b16 %v184, %v183
  %v243 = vpack.c.b16 %v186, %v185
  %v244 = vpack.c.b16 %v188, %v187
  %v245 = vpack.c.b16 %v190, %v189
  %v246 = vpack.c.b16 %v192, %v191
  %v247 = vpack.c.b16 %v194, %v193
  %v248 = vpack.c.b16 %v196, %v195
  %v249 = vpack.c.b16 %v198, %v197
  %v250 = vpack.c.b16 %v200, %v199
  %v251 = vpack.c.b16 %v202, %v201
  %v252 = vpack.c.b16 %v204, %v203
  %v253 = vpack.c.b16 %v206, %v205
  %v254 = vpack.c.b16 %v208, %v207
  %v255 = vpack.c.b16 %v210, %v209
  %v256 = vpack.c.b16 %v212, %v211
  %v257 = vpack.c.b16 %v214, %v213
  %v258 = vpack.c.b16 %v216, %v215
  %v259 = vpack.c.b16 %v218, %v217
  %v260 = vpack.c.b16 %v220, %v219
  %v261 = vpack.c.b16 %v222, %v221
  %v262 = vpack.c.b16 %v224, %v223
  %v263 = vpack.c.b16 %v226, %v225
  %v264 = vpack.c.b16 %v228, %v227
  %v265 = vpack.c.b16 %v230, %v229
  %v266 = vpack.c.b16 %v232, %v231
  %v267 = vpack.c.b16 %v234, %v233
  %v268 = vpack.c.b16 %v236, %v235
  %301 = vmatprep.subr.bf16.mxu0 0
  %302 = vmatpush1.bf16.msra.mxu0 %v244
  %303 = vmatprep.subr.bf16.mxu0 0
  %304 = vmatpush1.bf16.msra.mxu0 %v243
  %305 = vmatprep.subr.bf16.mxu0 0
  %306 = vmatpush1.bf16.msra.mxu0 %v242
  %307 = vmatprep.subr.bf16.mxu0 0
  %308 = vmatpush1.bf16.msra.mxu0 %v241
  %309 = vmatprep.subr.bf16.mxu0 0
  %310 = vmatpush1.bf16.msra.mxu0 %v240
  %311 = vmatprep.subr.bf16.mxu0 0
  %312 = vmatpush1.bf16.msra.mxu0 %v239
  %313 = vmatprep.subr.bf16.mxu0 0
  %314 = vmatpush1.bf16.msra.mxu0 %v238
  %315 = vmatprep.subr.bf16.mxu0 0
  %316 = vmatpush1.bf16.msra.mxu0 %v237
  %317 = vmatprep.subr.bf16.mxu0 0
  %318 = vmatpush2.bf16.msra.mxu0 %v252
  %319 = vmatprep.subr.bf16.mxu0 0
  %320 = vmatpush2.bf16.msra.mxu0 %v251
  %321 = vmatprep.subr.bf16.mxu0 0
  %322 = vmatpush2.bf16.msra.mxu0 %v250
  %323 = vmatprep.subr.bf16.mxu0 0
  %324 = vmatpush2.bf16.msra.mxu0 %v249
  %325 = vmatprep.subr.bf16.mxu0 0
  %326 = vmatpush2.bf16.msra.mxu0 %v248
  %327 = vmatprep.subr.bf16.mxu0 0
  %328 = vmatpush2.bf16.msra.mxu0 %v247
  %329 = vmatprep.subr.bf16.mxu0 0
  %330 = vmatpush2.bf16.msra.mxu0 %v246
  %331 = vmatprep.subr.bf16.mxu0 0
  %332 = vmatpush2.bf16.msra.mxu0 %v245
  %333 = vmatprep.mubr.bf16.mxu0 %v102
  %334 = vmatmul.mubr.bf16.gmra.mxu0 %v101
  %v335 = vpop.f32.mrf.mxu0
  %v336 = vadd.f32 0.0, %v335
  %v337 = vpop.f32.mrf.mxu0
  %v338 = vpop.f32.mrf.mxu0
  %v339 = vpop.f32.mrf.mxu0
  %340 = vdwg.mxu0
  %341 = vmatprep.subr.bf16.mxu0 0
  %342 = vmatpush1.bf16.msra.mxu0 %v260
  %343 = vmatprep.subr.bf16.mxu0 0
  %344 = vmatpush1.bf16.msra.mxu0 %v259
  %345 = vmatprep.subr.bf16.mxu0 0
  %346 = vmatpush1.bf16.msra.mxu0 %v258
  %347 = vmatprep.subr.bf16.mxu0 0
  %348 = vmatpush1.bf16.msra.mxu0 %v257
  %349 = vmatprep.subr.bf16.mxu0 0
  %350 = vmatpush1.bf16.msra.mxu0 %v256
  %351 = vmatprep.subr.bf16.mxu0 0
  %352 = vmatpush1.bf16.msra.mxu0 %v255
  %353 = vmatprep.subr.bf16.mxu0 0
  %354 = vmatpush1.bf16.msra.mxu0 %v254
  %355 = vmatprep.subr.bf16.mxu0 0
  %356 = vmatpush1.bf16.msra.mxu0 %v253
  %357 = vmatprep.subr.bf16.mxu0 0
  %358 = vmatpush2.bf16.msra.mxu0 %v268
  %359 = vmatprep.subr.bf16.mxu0 0
  %360 = vmatpush2.bf16.msra.mxu0 %v267
  %361 = vmatprep.subr.bf16.mxu0 0
  %362 = vmatpush2.bf16.msra.mxu0 %v266
  %363 = vmatprep.subr.bf16.mxu0 0
  %364 = vmatpush2.bf16.msra.mxu0 %v265
  %365 = vmatprep.subr.bf16.mxu0 0
  %366 = vmatpush2.bf16.msra.mxu0 %v264
  %367 = vmatprep.subr.bf16.mxu0 0
  %368 = vmatpush2.bf16.msra.mxu0 %v263
  %369 = vmatprep.subr.bf16.mxu0 0
  %370 = vmatpush2.bf16.msra.mxu0 %v262
  %371 = vmatprep.subr.bf16.mxu0 0
  %372 = vmatpush2.bf16.msra.mxu0 %v261
  %373 = vmatprep.mubr.bf16.mxu0 %v104
  %374 = vmatmul.mubr.bf16.gmra.mxu0 %v103
  %v375 = vpop.f32.mrf.mxu0
  %v376 = vadd.f32 %v336, %v375
  %v377 = vpop.f32.mrf.mxu0
  %v378 = vpop.f32.mrf.mxu0
  %v379 = vpop.f32.mrf.mxu0
  %380 = vdwg.mxu0
  %v381 = vadd.f32 %v28, %v376
  %382 = vst [vmem:[#allocation2] sm:$0xff] %v381
  // Predicated region
  $region18: #{vgg_forward_pallas.12} parent=0 // pred_check
    %p383 = pneg %p15
  $region19: #{vgg_forward_pallas.12} parent=0 // pred_check_branch
    %385 = sbr.rel (%p383) target = $region21
  $region20: #{vgg_forward_pallas.12} parent=0 // pred_region
    %v386 = vld [vmem:[#allocation2] sm:$0xff]
    %v387 = vmax.f32 %v386, 0.0
    %388 = vst [vmem:[%s3] sm:$0xff] %v387
  $region21: #{vgg_forward_pallas.12} parent=0 // pred_fallthru
    _
  // Predicated region
  $region22: #{vgg_forward_pallas.12} parent=0 // pred_check
    _
  $region23: #{vgg_forward_pallas.12} parent=0 // pred_check_branch
    %390 = sbr.rel (0) target = $region25
  $region24: #{vgg_forward_pallas.12} parent=0 // pred_region
    _
  $region25: #{vgg_forward_pallas.12} parent=0 // pred_fallthru
    _
  // Predicated region
  $region26: #{vgg_forward_pallas.12} parent=0 // pred_check
    _
  $region27: #{vgg_forward_pallas.12} parent=0 // pred_check_branch
    %392 = sbr.rel (0) target = $region29
  $region28: #{vgg_forward_pallas.12} parent=0 // pred_region
    _
  $region29: #{vgg_forward_pallas.12} parent=0 // pred_fallthru
    _

// kernel: vgg_forward_pallas.15
$region0: #{vgg_forward_pallas.15}
  #allocation0 [shape = 'u32[]', space=smem, size = 0x4, offset = 0x4, fixed_abs, tag = 'smem constant byte address 0x4 - core index']
  #allocation1 [shape = 'u32[144,128]{1,0:T(1,128)}', space=vmem, size = 0x12000, scoped, tag = 'internal scratch']
  #allocation2 [shape = 'f32[1,1]{1,0:T(1,128)S(1)}', space=vmem, size = 0x200, scoped, tag = 'scoped memory for vgg_forward_pallas.15']
  %s0 = inlined_call_operand.vmem [shape: f32[2,4,128], index: 0, kind: input, shape index: {}]
  %s1 = inlined_call_operand.vmem [shape: f32[2,4,128], index: 1, kind: input, shape index: {}]
  %s2 = inlined_call_operand.vmem [shape: f32[1,128], index: 2, kind: input, shape index: {}]
  %s3 = inlined_call_operand.<no memory space> [shape: f32[1,1], index: 3, kind: input, shape index: {}]
  %s4 = inlined_call_operand.vmem [shape: f32[2,1,128], index: 4, kind: output, shape index: {0}]
  %s5 = inlined_call_operand.vmem [shape: f32[2,4,128], index: 5, kind: output, shape index: {1}]
  %6 = xla_tuple %s4, %s5
  %s7 = sld [smem:[#allocation0]]
  $region57: #{vgg_forward_pallas.15} parent=0
    _
  %s9 = ssub.s32 1, %s7
  %s10 = scalar_select 0, %s9, %s7
  %v11 = vstv %s3
  %12 = vst [vmem:[#allocation2] sm:$0x1] %v11
  loop: start=0, step=1, limit=4
  $region2: #{vgg_forward_pallas.15} parent=0 // loop_pre_header
    _
  $region3: #{vgg_forward_pallas.15} parent=0 // loop_header
    %s14 = sphi 0, %s18
    %p15 = scmp.ge.s32.totalorder %s14, 4
    %s24 = sphi 0, %s26
    %s27 = sphi 0, %s24
    %s28 = sphi 0, %s27
    %s44 = sphi 0, %s28
    %s50 = sphi 0, %s52
    %s53 = sphi 0, %s50
    %s54 = sphi 0, %s53
    %s70 = sphi 0, %s54
    %s74 = sphi 0, %s74
    %s76 = sphi 0, %s74
    %s77 = sphi 0, %s76
    %s91 = sphi 0, %s77
    %s95 = sphi 0, %s95
    %s97 = sphi 0, %s95
    %s98 = sphi 0, %s97
    %s112 = sphi 0, %s98
    %s118 = sphi 0, %s120
    %s121 = sphi 0, %s118
    %s122 = sphi 0, %s121
    %s138 = sphi 0, %s122
    %s144 = sphi 0, %s146
    %s147 = sphi 0, %s144
    %s148 = sphi 0, %s147
    %s164 = sphi 0, %s148
  $region4: #{vgg_forward_pallas.15} parent=0 // loop_header_branch
    %17 = sbr.rel (%p15) target = $region8
  $region5: #{vgg_forward_pallas.15} parent=0 // loop_body
    %s19 = ssub.s32 %s14, 1
    %s20 = ssub.s32 %s14, 2
    %s21 = sadd.s32 %s14, 1
    %s22 = ssub.s32 %s14, %s21
    %p23 = scmp.eq.s32.totalorder %s22, 0
    %s25 = sadd.s32 %s24, 1
    %s26 = scalar_select %p23, %s24, %s25
    %p29 = pneg %p23
    %p30 = scmp.eq.s32.totalorder %s14, 1
    %p31 = por %p29, %p30
    %p32 = scmp.ne.s32.totalorder %s24, %s27
    %p33 = scmp.eq.s32.totalorder %s14, 0
    %p34 = por %p32, %p33
    %p35 = scmp.ne.s32.totalorder %s24, %s27
    %p36 = scmp.eq.s32.totalorder %s19, 1
    %p37 = por %p35, %p36
    %p38 = scmp.ne.s32.totalorder %s27, %s28
    %p39 = scmp.eq.s32.totalorder %s19, 0
    %p40 = por %p38, %p39
    %p41 = scmp.ne.s32.totalorder %s27, %s28
    %p42 = scmp.eq.s32.totalorder %s20, 1
    %p43 = por %p41, %p42
    %p45 = scmp.ne.s32.totalorder %s28, %s44
    %p46 = scmp.eq.s32.totalorder %s20, 0
    %p47 = por %p45, %p46
    %s48 = ssub.s32 %s14, %s21
    %p49 = scmp.eq.s32.totalorder %s48, 0
    %s51 = sadd.s32 %s50, 1
    %s52 = scalar_select %p49, %s50, %s51
    %p55 = pneg %p49
    %p56 = scmp.eq.s32.totalorder %s14, 1
    %p57 = por %p55, %p56
    %p58 = scmp.ne.s32.totalorder %s50, %s53
    %p59 = scmp.eq.s32.totalorder %s14, 0
    %p60 = por %p58, %p59
    %p61 = scmp.ne.s32.totalorder %s50, %s53
    %p62 = scmp.eq.s32.totalorder %s19, 1
    %p63 = por %p61, %p62
    %p64 = scmp.ne.s32.totalorder %s53, %s54
    %p65 = scmp.eq.s32.totalorder %s19, 0
    %p66 = por %p64, %p65
    %p67 = scmp.ne.s32.totalorder %s53, %s54
    %p68 = scmp.eq.s32.totalorder %s20, 1
    %p69 = por %p67, %p68
    %p71 = scmp.ne.s32.totalorder %s54, %s70
    %p72 = scmp.eq.s32.totalorder %s20, 0
    %p73 = por %p71, %p72
    %s75 = sadd.s32 %s74, 1
    %p78 = scmp.eq.s32.totalorder %s14, 1
    %p79 = scmp.ne.s32.totalorder %s74, %s76
    %p80 = scmp.eq.s32.totalorder %s14, 0
    %p81 = por %p79, %p80
    %p82 = scmp.ne.s32.totalorder %s74, %s76
    %p83 = scmp.eq.s32.totalorder %s19, 1
    %p84 = por %p82, %p83
    %p85 = scmp.ne.s32.totalorder %s76, %s77
    %p86 = scmp.eq.s32.totalorder %s19, 0
    %p87 = por %p85, %p86
    %p88 = scmp.ne.s32.totalorder %s76, %s77
    %p89 = scmp.eq.s32.totalorder %s20, 1
    %p90 = por %p88, %p89
    %p92 = scmp.ne.s32.totalorder %s77, %s91
    %p93 = scmp.eq.s32.totalorder %s20, 0
    %p94 = por %p92, %p93
    %s96 = sadd.s32 %s95, 1
    %p99 = scmp.eq.s32.totalorder %s14, 1
    %p100 = scmp.ne.s32.totalorder %s95, %s97
    %p101 = scmp.eq.s32.totalorder %s14, 0
    %p102 = por %p100, %p101
    %p103 = scmp.ne.s32.totalorder %s95, %s97
    %p104 = scmp.eq.s32.totalorder %s19, 1
    %p105 = por %p103, %p104
    %p106 = scmp.ne.s32.totalorder %s97, %s98
    %p107 = scmp.eq.s32.totalorder %s19, 0
    %p108 = por %p106, %p107
    %p109 = scmp.ne.s32.totalorder %s97, %s98
    %p110 = scmp.eq.s32.totalorder %s20, 1
    %p111 = por %p109, %p110
    %p113 = scmp.ne.s32.totalorder %s98, %s112
    %p114 = scmp.eq.s32.totalorder %s20, 0
    %p115 = por %p113, %p114
    %s116 = ssub.s32 %s14, %s21
    %p117 = scmp.eq.s32.totalorder %s116, 0
    %s119 = sadd.s32 %s118, 1
    %s120 = scalar_select %p117, %s118, %s119
    %p123 = pneg %p117
    %p124 = scmp.eq.s32.totalorder %s14, 1
    %p125 = por %p123, %p124
    %p126 = scmp.ne.s32.totalorder %s118, %s121
    %p127 = scmp.eq.s32.totalorder %s14, 0
    %p128 = por %p126, %p127
    %p129 = scmp.ne.s32.totalorder %s118, %s121
    %p130 = scmp.eq.s32.totalorder %s19, 1
    %p131 = por %p129, %p130
    %p132 = scmp.ne.s32.totalorder %s121, %s122
    %p133 = scmp.eq.s32.totalorder %s19, 0
    %p134 = por %p132, %p133
    %p135 = scmp.ne.s32.totalorder %s121, %s122
    %p136 = scmp.eq.s32.totalorder %s20, 1
    %p137 = por %p135, %p136
    %p139 = scmp.ne.s32.totalorder %s122, %s138
    %p140 = scmp.eq.s32.totalorder %s20, 0
    %p141 = por %p139, %p140
    %s142 = ssub.s32 %s14, %s21
    %p143 = scmp.eq.s32.totalorder %s142, 0
    %s145 = sadd.s32 %s144, 1
    %s146 = scalar_select %p143, %s144, %s145
    %p149 = pneg %p143
    %p150 = scmp.eq.s32.totalorder %s14, 1
    %p151 = por %p149, %p150
    %p152 = scmp.ne.s32.totalorder %s144, %s147
    %p153 = scmp.eq.s32.totalorder %s14, 0
    %p154 = por %p152, %p153
    %p155 = scmp.ne.s32.totalorder %s144, %s147
    %p156 = scmp.eq.s32.totalorder %s19, 1
    %p157 = por %p155, %p156
    %p158 = scmp.ne.s32.totalorder %s147, %s148
    %p159 = scmp.eq.s32.totalorder %s19, 0
    %p160 = por %p158, %p159
    %p161 = scmp.ne.s32.totalorder %s147, %s148
    %p162 = scmp.eq.s32.totalorder %s20, 1
    %p163 = por %p161, %p162
    %p165 = scmp.ne.s32.totalorder %s148, %s164
    %p166 = scmp.eq.s32.totalorder %s20, 0
    %p167 = por %p165, %p166
    %p168 = scmp.le.s32.totalorder 1, %s14
    %p169 = scmp.lt.s32.totalorder %s14, 3
    %p170 = pnand %p168, %p169
    %p171 = pneg %p170
    // Predicated region
    $region9: #{vgg_forward_pallas.15} parent=5 // pred_check
      _
    $region10: #{vgg_forward_pallas.15} parent=5 // pred_check_branch
      %173 = sbr.rel (%p170) target = $region12
    $region11: #{vgg_forward_pallas.15} parent=5 // pred_region
      %s174 = ssub.s32 %s14, 1
      // Predicated region
      $region13: #{vgg_forward_pallas.15} parent=11 // pred_check
        %p175 = pneg %p87
      $region14: #{vgg_forward_pallas.15} parent=11 // pred_check_branch
        %177 = sbr.rel (%p175) target = $region16
      $region15: #{vgg_forward_pallas.15} parent=11 // pred_region
        _
      $region16: #{vgg_forward_pallas.15} parent=11 // pred_fallthru
        _
      // Predicated region
      $region17: #{vgg_forward_pallas.15} parent=11 // pred_check
        %p178 = pneg %p108
      $region18: #{vgg_forward_pallas.15} parent=11 // pred_check_branch
        %180 = sbr.rel (%p178) target = $region20
      $region19: #{vgg_forward_pallas.15} parent=11 // pred_region
        _
      $region20: #{vgg_forward_pallas.15} parent=11 // pred_fallthru
        _
    $region12: #{vgg_forward_pallas.15} parent=5 // pred_fallthru
      _
    %p181 = scmp.lt.s32.totalorder %s14, 2
    // Predicated region
    $region21: #{vgg_forward_pallas.15} parent=5 // pred_check
      %p182 = pneg %p181
    $region22: #{vgg_forward_pallas.15} parent=5 // pred_check_branch
      %184 = sbr.rel (%p182) target = $region24
    $region23: #{vgg_forward_pallas.15} parent=5 // pred_region
      // Predicated region
      $region25: #{vgg_forward_pallas.15} parent=23 // pred_check
        %p185 = pneg %p34
      $region26: #{vgg_forward_pallas.15} parent=23 // pred_check_branch
        %187 = sbr.rel (%p185) target = $region28
      $region27: #{vgg_forward_pallas.15} parent=23 // pred_region
        %p188 = scmp.lt.s32.totalorder %s14, 1
        %s189 = scalar_select %p188, %s14, 1
        %s190 = smul.addr %s189, 4
        %s191 = scalar_lea.vmem %s0, %s190
      $region28: #{vgg_forward_pallas.15} parent=23 // pred_fallthru
        _
      // Predicated region
      $region29: #{vgg_forward_pallas.15} parent=23 // pred_check
        %p192 = pneg %p60
      $region30: #{vgg_forward_pallas.15} parent=23 // pred_check_branch
        %194 = sbr.rel (%p192) target = $region32
      $region31: #{vgg_forward_pallas.15} parent=23 // pred_region
        %p195 = scmp.lt.s32.totalorder %s14, 1
        %s196 = scalar_select %p195, %s14, 1
        %s197 = smul.addr %s196, 4
        %s198 = scalar_lea.vmem %s1, %s197
      $region32: #{vgg_forward_pallas.15} parent=23 // pred_fallthru
        _
    $region24: #{vgg_forward_pallas.15} parent=5 // pred_fallthru
      _
    %p199 = scmp.le.s32.totalorder 1, %s14
    %p200 = scmp.lt.s32.totalorder %s14, 3
    %p201 = pnand %p199, %p200
    %p202 = pneg %p201
    // Predicated region
    $region33: #{vgg_forward_pallas.15} parent=5 // pred_check
      _
    $region34: #{vgg_forward_pallas.15} parent=5 // pred_check_branch
      %204 = sbr.rel (%p201) target = $region36
    $region35: #{vgg_forward_pallas.15} parent=5 // pred_region
      %s205 = ssub.s32 %s14, 1
      %p206 = scmp.lt.s32.totalorder %s19, 1
      %s207 = scalar_select %p206, %s19, 1
      %s208 = smul.addr %s207, 4
      %s209 = scalar_lea.vmem %s0, %s208
      %p210 = pneg %p40
      %p211 = pneg %p37
      %p212 = scmp.lt.s32.totalorder %s19, 1
      %s213 = scalar_select %p212, %s19, 1
      %s214 = smul.addr %s213, 4
      %s215 = scalar_lea.vmem %s1, %s214
      %p216 = pneg %p66
      %p217 = pneg %p63
      %p218 = pneg %p87
      %p219 = pneg %p84
      %p220 = pneg %p108
      %p221 = pneg %p105
      %p222 = pneg %p134
      %p223 = pneg %p131
      %p224 = scmp.lt.s32.totalorder %s19, 1
      %s225 = scalar_select %p224, %s19, 1
      %s226 = scalar_lea.vmem %s4, %s225
      %p227 = pneg %p160
      %p228 = pneg %p157
      %p229 = scmp.lt.s32.totalorder %s19, 1
      %s230 = scalar_select %p229, %s19, 1
      %s231 = smul.addr %s230, 4
      %s232 = scalar_lea.vmem %s5, %s231
      %p233 = scmp.lt.s32.totalorder %s19, 1
      %s234 = scalar_select %p233, %s19, 1
      %s235 = smul.addr %s234, 4
      %s236 = scalar_lea.vmem %s0, %s235
      %p237 = scmp.lt.s32.totalorder %s19, 1
      %s238 = scalar_select %p237, %s19, 1
      %s239 = smul.addr %s238, 4
      %s240 = scalar_lea.vmem %s1, %s239
      %p241 = scmp.lt.s32.totalorder %s19, 1
      %s242 = scalar_select %p241, %s19, 1
      %s243 = scalar_lea.vmem %s4, %s242
      %p244 = scmp.lt.s32.totalorder %s19, 1
      %s245 = scalar_select %p244, %s19, 1
      %s246 = smul.addr %s245, 4
      %s247 = scalar_lea.vmem %s5, %s246
      %v248 = vld [vmem:[%s236] sm:$0xf]
      %v249 = vld [vmem:[%s240] sm:$0xf]
      %v250 = vld [vmem:[%s2] sm:$0x1]
      %v252 = vlaneseq
      %v253 = vshrl.u32 %v252, 7
      %v254 = vsub.s32 0, %v253
      %v255 = vrot.slane %v250, %v254
      %v257 = vmul.f32 %v249, %v255
      %vm258 = vcmask 1043456
      %v259 = vsel %vm258, %v257, 0.0
      %260 = vadd.xlane.f32.xlu0 %v259
      %v261 = vpop.xlane.xlu0 %260
      %v262 = vld [vmem:[#allocation2] sm:$0x1]
      %v264 = vlaneseq
      %v265 = vshrl.u32 %v264, 7
      %v266 = vsub.s32 0, %v265
      %v267 = vrot.slane %v262, %v266
      %v269 = vadd.f32 %v261, %v267
      %v270 = vmax.f32 %v269, 0.0
      %272 = vset.pattern.permute.xlu0 0
      %273 = vperm.xlu0 %272, %v270
      %v274 = vpop.permute.xlu0 %273
      %v276 = vmul.f32 %v248, %v274
      %v277 = vsel %vm258, %v276, 0.0
      %v278 = vrot.slane %v277, 4
      %v279 = vadd.f32 %v277, %v278
      %v280 = vrot.slane %v279, 2
      %v281 = vadd.f32 %v279, %v280
      %v282 = vrot.slane %v281, 1
      %v283 = vadd.f32 %v281, %v282
      %284 = vst [vmem:[%s243] sm:$0x1] %v283
      %285 = vst [vmem:[%s247] sm:$0xf] %v274
      %p286 = scmp.lt.s32.totalorder %s19, 1
      %s287 = scalar_select %p286, %s19, 1
      %s288 = scalar_lea.vmem %s4, %s287
      %p289 = scmp.lt.s32.totalorder %s19, 1
      %s290 = scalar_select %p289, %s19, 1
      %s291 = smul.addr %s290, 4
      %s292 = scalar_lea.vmem %s5, %s291
      // Predicated region
      $region37: #{vgg_forward_pallas.15} parent=35 // pred_check
        %p293 = pneg %p131
      $region38: #{vgg_forward_pallas.15} parent=35 // pred_check_branch
        %295 = sbr.rel (%p293) target = $region40
      $region39: #{vgg_forward_pallas.15} parent=35 // pred_region
        _
      $region40: #{vgg_forward_pallas.15} parent=35 // pred_fallthru
        _
      // Predicated region
      $region41: #{vgg_forward_pallas.15} parent=35 // pred_check
        %p296 = pneg %p157
      $region42: #{vgg_forward_pallas.15} parent=35 // pred_check_branch
        %298 = sbr.rel (%p296) target = $region44
      $region43: #{vgg_forward_pallas.15} parent=35 // pred_region
        _
      $region44: #{vgg_forward_pallas.15} parent=35 // pred_fallthru
        _
    $region36: #{vgg_forward_pallas.15} parent=5 // pred_fallthru
      _
    %p299 = scmp.le.s32.totalorder 2, %s14
    // Predicated region
    $region45: #{vgg_forward_pallas.15} parent=5 // pred_check
      %p300 = pneg %p299
    $region46: #{vgg_forward_pallas.15} parent=5 // pred_check_branch
      %302 = sbr.rel (%p300) target = $region48
    $region47: #{vgg_forward_pallas.15} parent=5 // pred_region
      %s303 = ssub.s32 %s14, 2
      // Predicated region
      $region49: #{vgg_forward_pallas.15} parent=47 // pred_check
        %p304 = pneg %p137
      $region50: #{vgg_forward_pallas.15} parent=47 // pred_check_branch
        %306 = sbr.rel (%p304) target = $region52
      $region51: #{vgg_forward_pallas.15} parent=47 // pred_region
        %p307 = scmp.lt.s32.totalorder %s20, 1
        %s308 = scalar_select %p307, %s20, 1
        %s309 = scalar_lea.vmem %s4, %s308
      $region52: #{vgg_forward_pallas.15} parent=47 // pred_fallthru
        _
      // Predicated region
      $region53: #{vgg_forward_pallas.15} parent=47 // pred_check
        %p310 = pneg %p163
      $region54: #{vgg_forward_pallas.15} parent=47 // pred_check_branch
        %312 = sbr.rel (%p310) target = $region56
      $region55: #{vgg_forward_pallas.15} parent=47 // pred_region
        %p313 = scmp.lt.s32.totalorder %s20, 1
        %s314 = scalar_select %p313, %s20, 1
        %s315 = smul.addr %s314, 4
        %s316 = scalar_lea.vmem %s5, %s315
      $region56: #{vgg_forward_pallas.15} parent=47 // pred_fallthru
        _
    $region48: #{vgg_forward_pallas.15} parent=5 // pred_fallthru
      _
  $region6: #{vgg_forward_pallas.15} parent=0 // loop_footer
    %s18 = sadd.s32 1, %s14
  $region7: #{vgg_forward_pallas.15} parent=0 // loop_footer_branch
    %13 = sbr.rel target = $region3
  $region8: #{vgg_forward_pallas.15} parent=0 // loop_exit
    _

// kernel: vgg_forward_pallas.14
$region0: #{vgg_forward_pallas.14}
  #allocation0 [shape = 'u32[]', space=smem, size = 0x4, offset = 0x4, fixed_abs, tag = 'smem constant byte address 0x4 - core index']
  #allocation1 [shape = 'u32[144,128]{1,0:T(1,128)}', space=vmem, size = 0x12000, scoped, tag = 'internal scratch']
  #allocation2 [shape = 'f32[8,128]{1,0:T(8,128)}', space=vmem, size = 0x1000, scoped, tag = 'scratch operand']
  %s0 = inlined_call_operand.vmem [shape: bf16[8,128], index: 0, kind: input, shape index: {}]
  %s1 = inlined_call_operand.vmem [shape: bf16[128,128], index: 1, kind: input, shape index: {}]
  %s2 = inlined_call_operand.vmem [shape: f32[1,128], index: 2, kind: input, shape index: {}]
  %s3 = inlined_call_operand.vmem [shape: f32[8,128], index: 3, kind: output, shape index: {}]
  %s4 = sld [smem:[#allocation0]]
  $region30: #{vgg_forward_pallas.14} parent=0
    _
  %s6 = ssub.s32 1, %s4
  %s7 = scalar_select 0, %s6, %s4
  // Predicated region
  $region2: #{vgg_forward_pallas.14} parent=0 // pred_check
    _
  $region3: #{vgg_forward_pallas.14} parent=0 // pred_check_branch
    %9 = sbr.rel (0) target = $region5
  $region4: #{vgg_forward_pallas.14} parent=0 // pred_region
    _
  $region5: #{vgg_forward_pallas.14} parent=0 // pred_fallthru
    _
  // Predicated region
  $region6: #{vgg_forward_pallas.14} parent=0 // pred_check
    _
  $region7: #{vgg_forward_pallas.14} parent=0 // pred_check_branch
    %11 = sbr.rel (0) target = $region9
  $region8: #{vgg_forward_pallas.14} parent=0 // pred_region
    _
  $region9: #{vgg_forward_pallas.14} parent=0 // pred_fallthru
    _
  // Predicated region
  $region10: #{vgg_forward_pallas.14} parent=0 // pred_check
    _
  $region11: #{vgg_forward_pallas.14} parent=0 // pred_check_branch
    %13 = sbr.rel (0) target = $region13
  $region12: #{vgg_forward_pallas.14} parent=0 // pred_region
    _
  $region13: #{vgg_forward_pallas.14} parent=0 // pred_fallthru
    _
  %p15 = scmp.eq.s32.totalorder 0, 0
  // Predicated region
  $region14: #{vgg_forward_pallas.14} parent=0 // pred_check
    %p16 = pneg %p15
  $region15: #{vgg_forward_pallas.14} parent=0 // pred_check_branch
    %18 = sbr.rel (%p16) target = $region17
  $region16: #{vgg_forward_pallas.14} parent=0 // pred_region
    %v19 = vld [vmem:[%s2] sm:$0x1]
    %v21 = vlaneseq
    %v22 = vshrl.u32 %v21, 7
    %v23 = vsub.s32 0, %v22
    %v24 = vrot.slane %v19, %v23
    %v26 = vadd.f32 %v24, 0.0
    %27 = vst [vmem:[#allocation2] sm:$0xff] %v26
  $region17: #{vgg_forward_pallas.14} parent=0 // pred_fallthru
    _
  %v28 = vld [vmem:[#allocation2] sm:$0xff]
  %v29 = vld [vmem:[%s0] sm:$0xf]
  %v30 = vld [vmem:[%s1] sm:$0xf]
  %v31 = vld [vmem:[%s1 + $0x4] sm:$0xf]
  %v32 = vld [vmem:[%s1 + $0x8] sm:$0xf]
  %v33 = vld [vmem:[%s1 + $0xc] sm:$0xf]
  %v34 = vld [vmem:[%s1 + $0x10] sm:$0xf]
  %v35 = vld [vmem:[%s1 + $0x14] sm:$0xf]
  %v36 = vld [vmem:[%s1 + $0x18] sm:$0xf]
  %v37 = vld [vmem:[%s1 + $0x1c] sm:$0xf]
  %v38 = vld [vmem:[%s1 + $0x20] sm:$0xf]
  %v39 = vld [vmem:[%s1 + $0x24] sm:$0xf]
  %v40 = vld [vmem:[%s1 + $0x28] sm:$0xf]
  %v41 = vld [vmem:[%s1 + $0x2c] sm:$0xf]
  %v42 = vld [vmem:[%s1 + $0x30] sm:$0xf]
  %v43 = vld [vmem:[%s1 + $0x34] sm:$0xf]
  %v44 = vld [vmem:[%s1 + $0x38] sm:$0xf]
  %v45 = vld [vmem:[%s1 + $0x3c] sm:$0xf]
  %v62 = vunpack.c.l.b16 %v30
  %v63 = vunpack.c.l.b16 %v31
  %v64 = vunpack.c.l.b16 %v32
  %v65 = vunpack.c.l.b16 %v33
  %v66 = vunpack.c.l.b16 %v34
  %v67 = vunpack.c.l.b16 %v35
  %v68 = vunpack.c.l.b16 %v36
  %v69 = vunpack.c.l.b16 %v37
  %v70 = vunpack.c.l.b16 %v38
  %v71 = vunpack.c.l.b16 %v39
  %v72 = vunpack.c.l.b16 %v40
  %v73 = vunpack.c.l.b16 %v41
  %v74 = vunpack.c.l.b16 %v42
  %v75 = vunpack.c.l.b16 %v43
  %v76 = vunpack.c.l.b16 %v44
  %v77 = vunpack.c.l.b16 %v45
  %v78 = vpack.c.b16 %v63, %v62
  %v79 = vpack.c.b16 %v65, %v64
  %v80 = vpack.c.b16 %v67, %v66
  %v81 = vpack.c.b16 %v69, %v68
  %v82 = vpack.c.b16 %v71, %v70
  %v83 = vpack.c.b16 %v73, %v72
  %v84 = vpack.c.b16 %v75, %v74
  %v85 = vpack.c.b16 %v77, %v76
  %94 = vmatprep.subr.bf16.mxu0 0
  %95 = vmatpush1.bf16.msra.mxu0 %v85
  %96 = vmatprep.subr.bf16.mxu0 0
  %97 = vmatpush1.bf16.msra.mxu0 %v84
  %98 = vmatprep.subr.bf16.mxu0 0
  %99 = vmatpush1.bf16.msra.mxu0 %v83
  %100 = vmatprep.subr.bf16.mxu0 0
  %101 = vmatpush1.bf16.msra.mxu0 %v82
  %102 = vmatprep.subr.bf16.mxu0 0
  %103 = vmatpush1.bf16.msra.mxu0 %v81
  %104 = vmatprep.subr.bf16.mxu0 0
  %105 = vmatpush1.bf16.msra.mxu0 %v80
  %106 = vmatprep.subr.bf16.mxu0 0
  %107 = vmatpush1.bf16.msra.mxu0 %v79
  %108 = vmatprep.subr.bf16.mxu0 0
  %109 = vmatpush1.bf16.msra.mxu0 %v78
  %110 = vmatprep.subr.bf16.mxu0 0
  %111 = vmatpush2.bf16.msra.mxu0 0
  %112 = vmatprep.subr.bf16.mxu0 0
  %113 = vmatpush2.bf16.msra.mxu0 0
  %114 = vmatprep.subr.bf16.mxu0 0
  %115 = vmatpush2.bf16.msra.mxu0 0
  %116 = vmatprep.subr.bf16.mxu0 0
  %117 = vmatpush2.bf16.msra.mxu0 0
  %118 = vmatprep.subr.bf16.mxu0 0
  %119 = vmatpush2.bf16.msra.mxu0 0
  %120 = vmatprep.subr.bf16.mxu0 0
  %121 = vmatpush2.bf16.msra.mxu0 0
  %122 = vmatprep.subr.bf16.mxu0 0
  %123 = vmatpush2.bf16.msra.mxu0 0
  %124 = vmatprep.subr.bf16.mxu0 0
  %125 = vmatpush2.bf16.msra.mxu0 0
  %126 = vmatprep.mubr.bf16.mxu0 0
  %127 = vmatmul.mubr.bf16.gmra.mxu0 %v29
  %v128 = vpop.f32.mrf.mxu0
  %v129 = vadd.f32 0.0, %v128
  %v130 = vpop.f32.mrf.mxu0
  %v131 = vpop.f32.mrf.mxu0
  %v132 = vpop.f32.mrf.mxu0
  %133 = vdwg.mxu0
  %v134 = vadd.f32 %v28, %v129
  %135 = vst [vmem:[#allocation2] sm:$0xff] %v134
  // Predicated region
  $region18: #{vgg_forward_pallas.14} parent=0 // pred_check
    %p136 = pneg %p15
  $region19: #{vgg_forward_pallas.14} parent=0 // pred_check_branch
    %138 = sbr.rel (%p136) target = $region21
  $region20: #{vgg_forward_pallas.14} parent=0 // pred_region
    %v139 = vld [vmem:[#allocation2] sm:$0xff]
    %v140 = vmax.f32 %v139, 0.0
    %141 = vst [vmem:[%s3] sm:$0xff] %v140
  $region21: #{vgg_forward_pallas.14} parent=0 // pred_fallthru
    _
  // Predicated region
  $region22: #{vgg_forward_pallas.14} parent=0 // pred_check
    _
  $region23: #{vgg_forward_pallas.14} parent=0 // pred_check_branch
    %143 = sbr.rel (0) target = $region25
  $region24: #{vgg_forward_pallas.14} parent=0 // pred_region
    _
  $region25: #{vgg_forward_pallas.14} parent=0 // pred_fallthru
    _
  // Predicated region
  $region26: #{vgg_forward_pallas.14} parent=0 // pred_check
    _
  $region27: #{vgg_forward_pallas.14} parent=0 // pred_check_branch
    %145 = sbr.rel (0) target = $region29
  $region28: #{vgg_forward_pallas.14} parent=0 // pred_region
    _
  $region29: #{vgg_forward_pallas.14} parent=0 // pred_fallthru
    _

// kernel: vgg_forward_pallas.9
$region0: #{vgg_forward_pallas.9}
  #allocation0 [shape = 'u32[]', space=smem, size = 0x4, offset = 0x4, fixed_abs, tag = 'smem constant byte address 0x4 - core index']
  #allocation1 [shape = 'u32[144,128]{1,0:T(1,128)}', space=vmem, size = 0x12000, scoped, tag = 'internal scratch']
  %s0 = inlined_call_operand.vmem [shape: bf16[8,324,128], index: 0, kind: input, shape index: {}]
  %s1 = inlined_call_operand.vmem [shape: bf16[9,128,128], index: 1, kind: input, shape index: {}]
  %s2 = inlined_call_operand.vmem [shape: f32[1,128], index: 2, kind: input, shape index: {}]
  %s3 = inlined_call_operand.vmem [shape: bf16[2,100,268], index: 3, kind: input, shape index: {}]
  %s4 = inlined_call_operand.vmem [shape: bf16[8,100,128], index: 4, kind: output, shape index: {}]
  %s5 = sld [smem:[#allocation0]]
  $region49: #{vgg_forward_pallas.9} parent=0
    _
  %s7 = ssub.s32 1, %s5
  %s8 = scalar_select 0, %s7, %s5
  loop: start=0, step=1, limit=10
  $region2: #{vgg_forward_pallas.9} parent=0 // loop_pre_header
    _
  $region3: #{vgg_forward_pallas.9} parent=0 // loop_header
    %s10 = sphi 0, %s14
    %p11 = scmp.ge.s32.totalorder %s10, 10
    %s20 = sphi 0, %s22
    %s23 = sphi 0, %s20
    %s24 = sphi 0, %s23
    %s40 = sphi 0, %s24
    %s44 = sphi 0, %s44
    %s46 = sphi 0, %s44
    %s47 = sphi 0, %s46
    %s61 = sphi 0, %s47
    %s65 = sphi 0, %s65
    %s67 = sphi 0, %s65
    %s68 = sphi 0, %s67
    %s82 = sphi 0, %s68
    %s86 = sphi 0, %s86
    %s88 = sphi 0, %s86
    %s89 = sphi 0, %s88
    %s103 = sphi 0, %s89
    %s109 = sphi 0, %s111
    %s112 = sphi 0, %s109
    %s113 = sphi 0, %s112
    %s129 = sphi 0, %s113
  $region4: #{vgg_forward_pallas.9} parent=0 // loop_header_branch
    %13 = sbr.rel (%p11) target = $region8
  $region5: #{vgg_forward_pallas.9} parent=0 // loop_body
    %s15 = ssub.s32 %s10, 1
    %s16 = ssub.s32 %s10, 2
    %s17 = sadd.s32 %s10, 1
    %s18 = ssub.s32 %s10, %s17
    %p19 = scmp.eq.s32.totalorder %s18, 0
    %s21 = sadd.s32 %s20, 1
    %s22 = scalar_select %p19, %s20, %s21
    %p25 = pneg %p19
    %p26 = scmp.eq.s32.totalorder %s10, 7
    %p27 = por %p25, %p26
    %p28 = scmp.ne.s32.totalorder %s20, %s23
    %p29 = scmp.eq.s32.totalorder %s10, 0
    %p30 = por %p28, %p29
    %p31 = scmp.ne.s32.totalorder %s20, %s23
    %p32 = scmp.eq.s32.totalorder %s15, 7
    %p33 = por %p31, %p32
    %p34 = scmp.ne.s32.totalorder %s23, %s24
    %p35 = scmp.eq.s32.totalorder %s15, 0
    %p36 = por %p34, %p35
    %p37 = scmp.ne.s32.totalorder %s23, %s24
    %p38 = scmp.eq.s32.totalorder %s16, 7
    %p39 = por %p37, %p38
    %p41 = scmp.ne.s32.totalorder %s24, %s40
    %p42 = scmp.eq.s32.totalorder %s16, 0
    %p43 = por %p41, %p42
    %s45 = sadd.s32 %s44, 1
    %p48 = scmp.eq.s32.totalorder %s10, 7
    %p49 = scmp.ne.s32.totalorder %s44, %s46
    %p50 = scmp.eq.s32.totalorder %s10, 0
    %p51 = por %p49, %p50
    %p52 = scmp.ne.s32.totalorder %s44, %s46
    %p53 = scmp.eq.s32.totalorder %s15, 7
    %p54 = por %p52, %p53
    %p55 = scmp.ne.s32.totalorder %s46, %s47
    %p56 = scmp.eq.s32.totalorder %s15, 0
    %p57 = por %p55, %p56
    %p58 = scmp.ne.s32.totalorder %s46, %s47
    %p59 = scmp.eq.s32.totalorder %s16, 7
    %p60 = por %p58, %p59
    %p62 = scmp.ne.s32.totalorder %s47, %s61
    %p63 = scmp.eq.s32.totalorder %s16, 0
    %p64 = por %p62, %p63
    %s66 = sadd.s32 %s65, 1
    %p69 = scmp.eq.s32.totalorder %s10, 7
    %p70 = scmp.ne.s32.totalorder %s65, %s67
    %p71 = scmp.eq.s32.totalorder %s10, 0
    %p72 = por %p70, %p71
    %p73 = scmp.ne.s32.totalorder %s65, %s67
    %p74 = scmp.eq.s32.totalorder %s15, 7
    %p75 = por %p73, %p74
    %p76 = scmp.ne.s32.totalorder %s67, %s68
    %p77 = scmp.eq.s32.totalorder %s15, 0
    %p78 = por %p76, %p77
    %p79 = scmp.ne.s32.totalorder %s67, %s68
    %p80 = scmp.eq.s32.totalorder %s16, 7
    %p81 = por %p79, %p80
    %p83 = scmp.ne.s32.totalorder %s68, %s82
    %p84 = scmp.eq.s32.totalorder %s16, 0
    %p85 = por %p83, %p84
    %s87 = sadd.s32 %s86, 1
    %p90 = scmp.eq.s32.totalorder %s10, 7
    %p91 = scmp.ne.s32.totalorder %s86, %s88
    %p92 = scmp.eq.s32.totalorder %s10, 0
    %p93 = por %p91, %p92
    %p94 = scmp.ne.s32.totalorder %s86, %s88
    %p95 = scmp.eq.s32.totalorder %s15, 7
    %p96 = por %p94, %p95
    %p97 = scmp.ne.s32.totalorder %s88, %s89
    %p98 = scmp.eq.s32.totalorder %s15, 0
    %p99 = por %p97, %p98
    %p100 = scmp.ne.s32.totalorder %s88, %s89
    %p101 = scmp.eq.s32.totalorder %s16, 7
    %p102 = por %p100, %p101
    %p104 = scmp.ne.s32.totalorder %s89, %s103
    %p105 = scmp.eq.s32.totalorder %s16, 0
    %p106 = por %p104, %p105
    %s107 = ssub.s32 %s10, %s17
    %p108 = scmp.eq.s32.totalorder %s107, 0
    %s110 = sadd.s32 %s109, 1
    %s111 = scalar_select %p108, %s109, %s110
    %p114 = pneg %p108
    %p115 = scmp.eq.s32.totalorder %s10, 7
    %p116 = por %p114, %p115
    %p117 = scmp.ne.s32.totalorder %s109, %s112
    %p118 = scmp.eq.s32.totalorder %s10, 0
    %p119 = por %p117, %p118
    %p120 = scmp.ne.s32.totalorder %s109, %s112
    %p121 = scmp.eq.s32.totalorder %s15, 7
    %p122 = por %p120, %p121
    %p123 = scmp.ne.s32.totalorder %s112, %s113
    %p124 = scmp.eq.s32.totalorder %s15, 0
    %p125 = por %p123, %p124
    %p126 = scmp.ne.s32.totalorder %s112, %s113
    %p127 = scmp.eq.s32.totalorder %s16, 7
    %p128 = por %p126, %p127
    %p130 = scmp.ne.s32.totalorder %s113, %s129
    %p131 = scmp.eq.s32.totalorder %s16, 0
    %p132 = por %p130, %p131
    %p133 = scmp.le.s32.totalorder 1, %s10
    %p134 = scmp.lt.s32.totalorder %s10, 9
    %p135 = pnand %p133, %p134
    %p136 = pneg %p135
    // Predicated region
    $region9: #{vgg_forward_pallas.9} parent=5 // pred_check
      _
    $region10: #{vgg_forward_pallas.9} parent=5 // pred_check_branch
      %138 = sbr.rel (%p135) target = $region12
    $region11: #{vgg_forward_pallas.9} parent=5 // pred_region
      %s139 = ssub.s32 %s10, 1
      // Predicated region
      $region13: #{vgg_forward_pallas.9} parent=11 // pred_check
        %p140 = pneg %p57
      $region14: #{vgg_forward_pallas.9} parent=11 // pred_check_branch
        %142 = sbr.rel (%p140) target = $region16
      $region15: #{vgg_forward_pallas.9} parent=11 // pred_region
        _
      $region16: #{vgg_forward_pallas.9} parent=11 // pred_fallthru
        _
      // Predicated region
      $region17: #{vgg_forward_pallas.9} parent=11 // pred_check
        %p143 = pneg %p78
      $region18: #{vgg_forward_pallas.9} parent=11 // pred_check_branch
        %145 = sbr.rel (%p143) target = $region20
      $region19: #{vgg_forward_pallas.9} parent=11 // pred_region
        _
      $region20: #{vgg_forward_pallas.9} parent=11 // pred_fallthru
        _
      // Predicated region
      $region21: #{vgg_forward_pallas.9} parent=11 // pred_check
        %p146 = pneg %p99
      $region22: #{vgg_forward_pallas.9} parent=11 // pred_check_branch
        %148 = sbr.rel (%p146) target = $region24
      $region23: #{vgg_forward_pallas.9} parent=11 // pred_region
        _
      $region24: #{vgg_forward_pallas.9} parent=11 // pred_fallthru
        _
    $region12: #{vgg_forward_pallas.9} parent=5 // pred_fallthru
      _
    %p149 = scmp.lt.s32.totalorder %s10, 8
    // Predicated region
    $region25: #{vgg_forward_pallas.9} parent=5 // pred_check
      %p150 = pneg %p149
    $region26: #{vgg_forward_pallas.9} parent=5 // pred_check_branch
      %152 = sbr.rel (%p150) target = $region28
    $region27: #{vgg_forward_pallas.9} parent=5 // pred_region
      // Predicated region
      $region29: #{vgg_forward_pallas.9} parent=27 // pred_check
        %p153 = pneg %p30
      $region30: #{vgg_forward_pallas.9} parent=27 // pred_check_branch
        %155 = sbr.rel (%p153) target = $region32
      $region31: #{vgg_forward_pallas.9} parent=27 // pred_region
        %p156 = scmp.lt.s32.totalorder %s10, 7
        %s157 = scalar_select %p156, %s10, 7
        %s158 = smul.addr %s157, 41
        %s159 = smul.addr %s158, 4
        %s160 = scalar_lea.vmem %s0, %s159
      $region32: #{vgg_forward_pallas.9} parent=27 // pred_fallthru
        _
    $region28: #{vgg_forward_pallas.9} parent=5 // pred_fallthru
      _
    %p161 = scmp.le.s32.totalorder 1, %s10
    %p162 = scmp.lt.s32.totalorder %s10, 9
    %p163 = pnand %p161, %p162
    %p164 = pneg %p163
    // Predicated region
    $region33: #{vgg_forward_pallas.9} parent=5 // pred_check
      _
    $region34: #{vgg_forward_pallas.9} parent=5 // pred_check_branch
      %166 = sbr.rel (%p163) target = $region36
    $region35: #{vgg_forward_pallas.9} parent=5 // pred_region
      %s167 = ssub.s32 %s10, 1
      %p168 = scmp.lt.s32.totalorder %s15, 7
      %s169 = scalar_select %p168, %s15, 7
      %s170 = smul.addr %s169, 41
      %s171 = smul.addr %s170, 4
      %s172 = scalar_lea.vmem %s0, %s171
      %p173 = pneg %p36
      %p174 = pneg %p33
      %p175 = pneg %p57
      %p176 = pneg %p54
      %p177 = pneg %p78
      %p178 = pneg %p75
      %p179 = pneg %p99
      %p180 = pneg %p96
      %p181 = pneg %p125
      %p182 = pneg %p122
      %p183 = scmp.lt.s32.totalorder %s15, 7
      %s184 = scalar_select %p183, %s15, 7
      %s185 = smul.addr %s184, 13
      %s186 = smul.addr %s185, 4
      %s187 = scalar_lea.vmem %s4, %s186
      %p188 = scmp.lt.s32.totalorder %s15, 7
      %s189 = scalar_select %p188, %s15, 7
      %s190 = smul.addr %s189, 41
      %s191 = smul.addr %s190, 4
      %s192 = scalar_lea.vmem %s0, %s191
      %p193 = scmp.lt.s32.totalorder %s15, 7
      %s194 = scalar_select %p193, %s15, 7
      %s195 = smul.addr %s194, 13
      %s196 = smul.addr %s195, 4
      %s197 = scalar_lea.vmem %s4, %s196
      %v199 = vld [vmem:[%s192] sm:$0xf]
      %v200 = vld [vmem:[%s192 + $0x4] sm:$0xf]
      %v201 = vld [vmem:[%s192 + $0x8] sm:$0xf]
      %v202 = vld [vmem:[%s192 + $0xc] sm:$0xf]
      %v203 = vld [vmem:[%s192 + $0x10] sm:$0xf]
      %v204 = vld [vmem:[%s192 + $0x14] sm:$0xf]
      %v205 = vld [vmem:[%s192 + $0x18] sm:$0xf]
      %v206 = vld [vmem:[%s192 + $0x1c] sm:$0xf]
      %v207 = vld [vmem:[%s192 + $0x20] sm:$0xf]
      %v208 = vld [vmem:[%s192 + $0x24] sm:$0xf]
      %v209 = vld [vmem:[%s192 + $0x28] sm:$0xf]
      %v210 = vld [vmem:[%s192 + $0x2c] sm:$0xf]
      %v211 = vld [vmem:[%s192 + $0x30] sm:$0xf]
      %v212 = vld [vmem:[%s192 + $0x34] sm:$0xf]
      %v213 = vld [vmem:[%s192 + $0x38] sm:$0xf]
      %v214 = vld [vmem:[%s192 + $0x3c] sm:$0xf]
      %v215 = vld [vmem:[%s192 + $0x40] sm:$0xf]
      %v216 = vld [vmem:[%s192 + $0x44] sm:$0xf]
      %v217 = vld [vmem:[%s192 + $0x48] sm:$0xf]
      %v218 = vld [vmem:[%s192 + $0x4c] sm:$0xf]
      %v219 = vld [vmem:[%s192 + $0x50] sm:$0xf]
      %v220 = vld [vmem:[%s192 + $0x54] sm:$0xf]
      %v221 = vld [vmem:[%s192 + $0x58] sm:$0xf]
      %v222 = vld [vmem:[%s192 + $0x5c] sm:$0xf]
      %v223 = vld [vmem:[%s192 + $0x60] sm:$0xf]
      %v224 = vld [vmem:[%s192 + $0x64] sm:$0xf]
      %v225 = vld [vmem:[%s192 + $0x68] sm:$0xf]
      %v226 = vld [vmem:[%s192 + $0x6c] sm:$0xf]
      %v227 = vld [vmem:[%s192 + $0x70] sm:$0xf]
      %v228 = vld [vmem:[%s192 + $0x74] sm:$0xf]
      %v229 = vld [vmem:[%s192 + $0x78] sm:$0xf]
      %v230 = vld [vmem:[%s192 + $0x7c] sm:$0xf]
      %v231 = vld [vmem:[%s192 + $0x80] sm:$0xf]
      %v232 = vld [vmem:[%s192 + $0x84] sm:$0xf]
      %v233 = vld [vmem:[%s192 + $0x88] sm:$0xf]
      %v234 = vld [vmem:[%s192 + $0x8c] sm:$0x7]
      %v235 = vld [vmem:[%s1] sm:$0xf]
      %v236 = vld [vmem:[%s1 + $0x4] sm:$0xf]
      %v237 = vld [vmem:[%s1 + $0x8] sm:$0xf]
      %v238 = vld [vmem:[%s1 + $0xc] sm:$0xf]
      %v239 = vld [vmem:[%s1 + $0x10] sm:$0xf]
      %v240 = vld [vmem:[%s1 + $0x14] sm:$0xf]
      %v241 = vld [vmem:[%s1 + $0x18] sm:$0xf]
      %v242 = vld [vmem:[%s1 + $0x1c] sm:$0xf]
      %v243 = vld [vmem:[%s1 + $0x20] sm:$0xf]
      %v244 = vld [vmem:[%s1 + $0x24] sm:$0xf]
      %v245 = vld [vmem:[%s1 + $0x28] sm:$0xf]
      %v246 = vld [vmem:[%s1 + $0x2c] sm:$0xf]
      %v247 = vld [vmem:[%s1 + $0x30] sm:$0xf]
      %v248 = vld [vmem:[%s1 + $0x34] sm:$0xf]
      %v249 = vld [vmem:[%s1 + $0x38] sm:$0xf]
      %v250 = vld [vmem:[%s1 + $0x3c] sm:$0xf]
      %v251 = vld [vmem:[%s192 + $0x8c] sm:$0xf]
      %s252 = scalar_lea.vmem %s1, 64
      %v253 = vld [vmem:[%s252] sm:$0xf]
      %v254 = vld [vmem:[%s252 + $0x4] sm:$0xf]
      %v255 = vld [vmem:[%s252 + $0x8] sm:$0xf]
      %v256 = vld [vmem:[%s252 + $0xc] sm:$0xf]
      %v257 = vld [vmem:[%s252 + $0x10] sm:$0xf]
      %v258 = vld [vmem:[%s252 + $0x14] sm:$0xf]
      %v259 = vld [vmem:[%s252 + $0x18] sm:$0xf]
      %v260 = vld [vmem:[%s252 + $0x1c] sm:$0xf]
      %v261 = vld [vmem:[%s252 + $0x20] sm:$0xf]
      %v262 = vld [vmem:[%s252 + $0x24] sm:$0xf]
      %v263 = vld [vmem:[%s252 + $0x28] sm:$0xf]
      %v264 = vld [vmem:[%s252 + $0x2c] sm:$0xf]
      %v265 = vld [vmem:[%s252 + $0x30] sm:$0xf]
      %v266 = vld [vmem:[%s252 + $0x34] sm:$0xf]
      %v267 = vld [vmem:[%s252 + $0x38] sm:$0xf]
      %v268 = vld [vmem:[%s252 + $0x3c] sm:$0xf]
      %v305 = vunpack.c.l.b16 %v199
      %v306 = vunpack.c.l.b16 %v200
      %v307 = vunpack.c.l.b16 %v201
      %v308 = vunpack.c.l.b16 %v202
      %v309 = vunpack.c.l.b16 %v203
      %v310 = vunpack.c.l.b16 %v204
      %v311 = vunpack.c.l.b16 %v205
      %v312 = vunpack.c.l.b16 %v206
      %v313 = vunpack.c.l.b16 %v207
      %v314 = vunpack.c.l.b16 %v208
      %v315 = vunpack.c.l.b16 %v209
      %v316 = vunpack.c.l.b16 %v210
      %v317 = vunpack.c.l.b16 %v211
      %v318 = vunpack.c.l.b16 %v212
      %v319 = vunpack.c.l.b16 %v213
      %v320 = vunpack.c.l.b16 %v214
      %v321 = vunpack.c.l.b16 %v215
      %v322 = vunpack.c.l.b16 %v216
      %v323 = vunpack.c.l.b16 %v217
      %v324 = vunpack.c.l.b16 %v218
      %v325 = vunpack.c.l.b16 %v219
      %v326 = vunpack.c.l.b16 %v220
      %v327 = vunpack.c.l.b16 %v221
      %v328 = vunpack.c.l.b16 %v222
      %v329 = vunpack.c.l.b16 %v223
      %v330 = vunpack.c.l.b16 %v224
      %v331 = vunpack.c.l.b16 %v225
      %v332 = vunpack.c.l.b16 %v226
      %v333 = vunpack.c.l.b16 %v227
      %v334 = vunpack.c.l.b16 %v228
      %v335 = vunpack.c.l.b16 %v229
      %v336 = vunpack.c.l.b16 %v230
      %v337 = vunpack.c.l.b16 %v231
      %v338 = vunpack.c.l.b16 %v232
      %v339 = vunpack.c.l.b16 %v233
      %v340 = vunpack.c.l.b16 %v251
      %v341 = vpack.c.b16 %v306, %v305
      %v342 = vpack.c.b16 %v308, %v307
      %v343 = vpack.c.b16 %v310, %v309
      %v344 = vpack.c.b16 %v312, %v311
      %v345 = vpack.c.b16 %v314, %v313
      %v346 = vpack.c.b16 %v316, %v315
      %v347 = vpack.c.b16 %v318, %v317
      %v348 = vpack.c.b16 %v320, %v319
      %v349 = vpack.c.b16 %v322, %v321
      %v350 = vpack.c.b16 %v324, %v323
      %v351 = vpack.c.b16 %v326, %v325
      %v352 = vpack.c.b16 %v328, %v327
      %v353 = vpack.c.b16 %v330, %v329
      %v354 = vpack.c.b16 %v332, %v331
      %v355 = vpack.c.b16 %v334, %v333
      %v356 = vpack.c.b16 %v336, %v335
      %v357 = vpack.c.b16 %v338, %v337
      %v358 = vpack.c.b16 %v340, %v339
      %vm359 = vsmask.f32 7424
      %v361 = vshrl.u32 %v341, 16
      %v363 = vshll.u32 %v341, 16
      %v365 = vrot.slane %v363, 1
      %v366 = vor.u32 %v361, %v365
      %v368 = vshll.u32 %v342, 16
      %v370 = vrot.slane %v368, 1
      %v371 = vsel %vm359, %v366, %v370
      %v372 = vshrl.u32 %v342, 16
      %v374 = vor.u32 %v372, %v370
      %v376 = vshll.u32 %v343, 16
      %v378 = vrot.slane %v376, 1
      %v379 = vsel %vm359, %v374, %v378
      %v380 = vshrl.u32 %v343, 16
      %v382 = vor.u32 %v380, %v378
      %v384 = vshll.u32 %v344, 16
      %v386 = vrot.slane %v384, 1
      %v387 = vsel %vm359, %v382, %v386
      %v388 = vshrl.u32 %v344, 16
      %v390 = vor.u32 %v388, %v386
      %v392 = vshll.u32 %v345, 16
      %v394 = vrot.slane %v392, 1
      %v395 = vsel %vm359, %v390, %v394
      %v396 = vshrl.u32 %v345, 16
      %v398 = vor.u32 %v396, %v394
      %v400 = vshll.u32 %v346, 16
      %v402 = vrot.slane %v400, 1
      %v403 = vsel %vm359, %v398, %v402
      %v404 = vshrl.u32 %v346, 16
      %v406 = vor.u32 %v404, %v402
      %v408 = vshll.u32 %v347, 16
      %v410 = vrot.slane %v408, 1
      %v411 = vsel %vm359, %v406, %v410
      %v412 = vshrl.u32 %v347, 16
      %v414 = vor.u32 %v412, %v410
      %v416 = vshll.u32 %v348, 16
      %v418 = vrot.slane %v416, 1
      %v419 = vsel %vm359, %v414, %v418
      %v420 = vshrl.u32 %v348, 16
      %v422 = vor.u32 %v420, %v418
      %v424 = vshll.u32 %v349, 16
      %v426 = vrot.slane %v424, 1
      %v427 = vsel %vm359, %v422, %v426
      %v428 = vshrl.u32 %v349, 16
      %v430 = vor.u32 %v428, %v426
      %v432 = vshll.u32 %v350, 16
      %v434 = vrot.slane %v432, 1
      %v435 = vsel %vm359, %v430, %v434
      %v436 = vshrl.u32 %v350, 16
      %v438 = vor.u32 %v436, %v434
      %v440 = vshll.u32 %v351, 16
      %v442 = vrot.slane %v440, 1
      %v443 = vsel %vm359, %v438, %v442
      %v444 = vshrl.u32 %v351, 16
      %v446 = vor.u32 %v444, %v442
      %v448 = vshll.u32 %v352, 16
      %v450 = vrot.slane %v448, 1
      %v451 = vsel %vm359, %v446, %v450
      %v452 = vshrl.u32 %v352, 16
      %v454 = vor.u32 %v452, %v450
      %v456 = vshll.u32 %v353, 16
      %v458 = vrot.slane %v456, 1
      %v459 = vsel %vm359, %v454, %v458
      %v460 = vshrl.u32 %v353, 16
      %v462 = vor.u32 %v460, %v458
      %v464 = vshll.u32 %v354, 16
      %v466 = vrot.slane %v464, 1
      %v467 = vsel %vm359, %v462, %v466
      %v468 = vshrl.u32 %v354, 16
      %v470 = vor.u32 %v468, %v466
      %v472 = vshll.u32 %v355, 16
      %v474 = vrot.slane %v472, 1
      %v475 = vsel %vm359, %v470, %v474
      %v476 = vshrl.u32 %v355, 16
      %v478 = vor.u32 %v476, %v474
      %v480 = vshll.u32 %v356, 16
      %v482 = vrot.slane %v480, 1
      %v483 = vsel %vm359, %v478, %v482
      %v484 = vshrl.u32 %v356, 16
      %v486 = vor.u32 %v484, %v482
      %v488 = vshll.u32 %v357, 16
      %v490 = vrot.slane %v488, 1
      %v491 = vsel %vm359, %v486, %v490
      %v492 = vshrl.u32 %v357, 16
      %v494 = vor.u32 %v492, %v490
      %v496 = vshll.u32 %v358, 16
      %v498 = vrot.slane %v496, 1
      %v499 = vsel %vm359, %v494, %v498
      %v500 = vshrl.u32 %v358, 16
      %v502 = vor.u32 %v500, %v498
      %v537 = vunpack.c.l.b16 %v253
      %v538 = vunpack.c.l.b16 %v254
      %v539 = vunpack.c.l.b16 %v255
      %v540 = vunpack.c.l.b16 %v256
      %v541 = vunpack.c.l.b16 %v257
      %v542 = vunpack.c.l.b16 %v258
      %v543 = vunpack.c.l.b16 %v259
      %v544 = vunpack.c.l.b16 %v260
      %v545 = vunpack.c.l.b16 %v261
      %v546 = vunpack.c.l.b16 %v262
      %v547 = vunpack.c.l.b16 %v263
      %v548 = vunpack.c.l.b16 %v264
      %v549 = vunpack.c.l.b16 %v265
      %v550 = vunpack.c.l.b16 %v266
      %v551 = vunpack.c.l.b16 %v267
      %v552 = vunpack.c.l.b16 %v268
      %v553 = vpack.c.b16 %v538, %v537
      %v554 = vpack.c.b16 %v540, %v539
      %v555 = vpack.c.b16 %v542, %v541
      %v556 = vpack.c.b16 %v544, %v543
      %v557 = vpack.c.b16 %v546, %v545
      %v558 = vpack.c.b16 %v548, %v547
      %v559 = vpack.c.b16 %v550, %v549
      %v560 = vpack.c.b16 %v552, %v551
      %569 = vmatprep.subr.bf16.mxu0 0
      %570 = vmatpush1.bf16.msra.mxu0 %v560
      %571 = vmatprep.subr.bf16.mxu0 0
      %572 = vmatpush1.bf16.msra.mxu0 %v559
      %573 = vmatprep.subr.bf16.mxu0 0
      %574 = vmatpush1.bf16.msra.mxu0 %v558
      %575 = vmatprep.subr.bf16.mxu0 0
      %576 = vmatpush1.bf16.msra.mxu0 %v557
      %577 = vmatprep.subr.bf16.mxu0 0
      %578 = vmatpush1.bf16.msra.mxu0 %v556
      %579 = vmatprep.subr.bf16.mxu0 0
      %580 = vmatpush1.bf16.msra.mxu0 %v555
      %581 = vmatprep.subr.bf16.mxu0 0
      %582 = vmatpush1.bf16.msra.mxu0 %v554
      %583 = vmatprep.subr.bf16.mxu0 0
      %584 = vmatpush1.bf16.msra.mxu0 %v553
      %585 = vmatprep.subr.bf16.mxu0 0
      %586 = vmatpush2.bf16.msra.mxu0 0
      %587 = vmatprep.subr.bf16.mxu0 0
      %588 = vmatpush2.bf16.msra.mxu0 0
      %589 = vmatprep.subr.bf16.mxu0 0
      %590 = vmatpush2.bf16.msra.mxu0 0
      %591 = vmatprep.subr.bf16.mxu0 0
      %592 = vmatpush2.bf16.msra.mxu0 0
      %593 = vmatprep.subr.bf16.mxu0 0
      %594 = vmatpush2.bf16.msra.mxu0 0
      %595 = vmatprep.subr.bf16.mxu0 0
      %596 = vmatpush2.bf16.msra.mxu0 0
      %597 = vmatprep.subr.bf16.mxu0 0
      %598 = vmatpush2.bf16.msra.mxu0 0
      %599 = vmatprep.subr.bf16.mxu0 0
      %600 = vmatpush2.bf16.msra.mxu0 0
      %601 = vmatprep.mubr.bf16.mxu0 0
      %602 = vmatmul.mubr.bf16.gmra.mxu0 %v371
      %v603 = vpop.f32.mrf.mxu0
      %v604 = vadd.f32 0.0, %v603
      %v605 = vpop.f32.mrf.mxu0
      %v606 = vpop.f32.mrf.mxu0
      %v607 = vadd.f32 0.0, %v606
      %v608 = vpop.f32.mrf.mxu0
      %609 = vmatprep.mubr.bf16.mxu0 0
      %610 = vmatmul.mubr.bf16.gmra.mxu0 %v379
      %v611 = vpop.f32.mrf.mxu0
      %v612 = vadd.f32 0.0, %v611
      %v613 = vpop.f32.mrf.mxu0
      %v614 = vpop.f32.mrf.mxu0
      %v615 = vadd.f32 0.0, %v614
      %v616 = vpop.f32.mrf.mxu0
      %617 = vmatprep.mubr.bf16.mxu0 0
      %618 = vmatmul.mubr.bf16.gmra.mxu0 %v387
      %v619 = vpop.f32.mrf.mxu0
      %v620 = vadd.f32 0.0, %v619
      %v621 = vpop.f32.mrf.mxu0
      %v622 = vpop.f32.mrf.mxu0
      %v623 = vadd.f32 0.0, %v622
      %v624 = vpop.f32.mrf.mxu0
      %625 = vmatprep.mubr.bf16.mxu0 0
      %626 = vmatmul.mubr.bf16.gmra.mxu0 %v395
      %v627 = vpop.f32.mrf.mxu0
      %v628 = vadd.f32 0.0, %v627
      %v629 = vpop.f32.mrf.mxu0
      %v630 = vpop.f32.mrf.mxu0
      %v631 = vadd.f32 0.0, %v630
      %v632 = vpop.f32.mrf.mxu0
      %633 = vmatprep.mubr.bf16.mxu0 0
      %634 = vmatmul.mubr.bf16.gmra.mxu0 %v403
      %v635 = vpop.f32.mrf.mxu0
      %v636 = vadd.f32 0.0, %v635
      %v637 = vpop.f32.mrf.mxu0
      %v638 = vpop.f32.mrf.mxu0
      %v639 = vadd.f32 0.0, %v638
      %v640 = vpop.f32.mrf.mxu0
      %641 = vmatprep.mubr.bf16.mxu0 0
      %642 = vmatmul.mubr.bf16.gmra.mxu0 %v411
      %v643 = vpop.f32.mrf.mxu0
      %v644 = vadd.f32 0.0, %v643
      %v645 = vpop.f32.mrf.mxu0
      %v646 = vpop.f32.mrf.mxu0
      %v647 = vadd.f32 0.0, %v646
      %v648 = vpop.f32.mrf.mxu0
      %649 = vmatprep.mubr.bf16.mxu0 0
      %650 = vmatmul.mubr.bf16.gmra.mxu0 %v419
      %v651 = vpop.f32.mrf.mxu0
      %v652 = vadd.f32 0.0, %v651
      %v653 = vpop.f32.mrf.mxu0
      %v654 = vpop.f32.mrf.mxu0
      %v655 = vadd.f32 0.0, %v654
      %v656 = vpop.f32.mrf.mxu0
      %657 = vmatprep.mubr.bf16.mxu0 0
      %658 = vmatmul.mubr.bf16.gmra.mxu0 %v427
      %v659 = vpop.f32.mrf.mxu0
      %v660 = vadd.f32 0.0, %v659
      %v661 = vpop.f32.mrf.mxu0
      %v662 = vpop.f32.mrf.mxu0
      %v663 = vadd.f32 0.0, %v662
      %v664 = vpop.f32.mrf.mxu0
      %665 = vmatprep.mubr.bf16.mxu0 0
      %666 = vmatmul.mubr.bf16.gmra.mxu0 %v435
      %v667 = vpop.f32.mrf.mxu0
      %v668 = vadd.f32 0.0, %v667
      %v669 = vpop.f32.mrf.mxu0
      %v670 = vpop.f32.mrf.mxu0
      %v671 = vadd.f32 0.0, %v670
      %v672 = vpop.f32.mrf.mxu0
      %673 = vmatprep.mubr.bf16.mxu0 0
      %674 = vmatmul.mubr.bf16.gmra.mxu0 %v443
      %v675 = vpop.f32.mrf.mxu0
      %v676 = vadd.f32 0.0, %v675
      %v677 = vpop.f32.mrf.mxu0
      %v678 = vpop.f32.mrf.mxu0
      %v679 = vadd.f32 0.0, %v678
      %v680 = vpop.f32.mrf.mxu0
      %681 = vmatprep.mubr.bf16.mxu0 0
      %682 = vmatmul.mubr.bf16.gmra.mxu0 %v451
      %v683 = vpop.f32.mrf.mxu0
      %v684 = vadd.f32 0.0, %v683
      %v685 = vpop.f32.mrf.mxu0
      %v686 = vpop.f32.mrf.mxu0
      %v687 = vadd.f32 0.0, %v686
      %v688 = vpop.f32.mrf.mxu0
      %689 = vmatprep.mubr.bf16.mxu0 0
      %690 = vmatmul.mubr.bf16.gmra.mxu0 %v459
      %v691 = vpop.f32.mrf.mxu0
      %v692 = vadd.f32 0.0, %v691
      %v693 = vpop.f32.mrf.mxu0
      %v694 = vpop.f32.mrf.mxu0
      %v695 = vadd.f32 0.0, %v694
      %v696 = vpop.f32.mrf.mxu0
      %697 = vmatprep.mubr.bf16.mxu0 0
      %698 = vmatmul.mubr.bf16.gmra.mxu0 %v467
      %v699 = vpop.f32.mrf.mxu0
      %v700 = vadd.f32 0.0, %v699
      %v701 = vpop.f32.mrf.mxu0
      %v702 = vpop.f32.mrf.mxu0
      %v703 = vadd.f32 0.0, %v702
      %v704 = vpop.f32.mrf.mxu0
      %705 = vmatprep.mubr.bf16.mxu0 0
      %706 = vmatmul.mubr.bf16.gmra.mxu0 %v475
      %v707 = vpop.f32.mrf.mxu0
      %v708 = vadd.f32 0.0, %v707
      %v709 = vpop.f32.mrf.mxu0
      %v710 = vpop.f32.mrf.mxu0
      %v711 = vadd.f32 0.0, %v710
      %v712 = vpop.f32.mrf.mxu0
      %713 = vmatprep.mubr.bf16.mxu0 0
      %714 = vmatmul.mubr.bf16.gmra.mxu0 %v483
      %v715 = vpop.f32.mrf.mxu0
      %v716 = vadd.f32 0.0, %v715
      %v717 = vpop.f32.mrf.mxu0
      %v718 = vpop.f32.mrf.mxu0
      %v719 = vadd.f32 0.0, %v718
      %v720 = vpop.f32.mrf.mxu0
      %721 = vmatprep.mubr.bf16.mxu0 0
      %722 = vmatmul.mubr.bf16.gmra.mxu0 %v491
      %v723 = vpop.f32.mrf.mxu0
      %v724 = vadd.f32 0.0, %v723
      %v725 = vpop.f32.mrf.mxu0
      %v726 = vpop.f32.mrf.mxu0
      %v727 = vadd.f32 0.0, %v726
      %v728 = vpop.f32.mrf.mxu0
      %729 = vmatprep.mubr.bf16.mxu0 0
      %730 = vmatmul.mubr.bf16.gmra.mxu0 %v499
      %v731 = vpop.f32.mrf.mxu0
      %v732 = vadd.f32 0.0, %v731
      %v733 = vpop.f32.mrf.mxu0
      %v734 = vpop.f32.mrf.mxu0
      %v735 = vadd.f32 0.0, %v734
      %v736 = vpop.f32.mrf.mxu0
      %737 = vmatprep.mubr.bf16.mxu0 0
      %738 = vmatmul.mubr.bf16.gmra.mxu0 %v502
      %v739 = vpop.f32.mrf.mxu0
      %v740 = vadd.f32 0.0, %v739
      %v741 = vpop.f32.mrf.mxu0
      %v742 = vpop.f32.mrf.mxu0
      %v743 = vadd.f32 0.0, %v742
      %v744 = vpop.f32.mrf.mxu0
      %745 = vdwg.mxu0
      %v747 = vunpack.c.l.b16 %v234
      %v748 = vpack.c.b16 %v747, %v339
      %v783 = vunpack.c.l.b16 %v235
      %v784 = vunpack.c.l.b16 %v236
      %v785 = vunpack.c.l.b16 %v237
      %v786 = vunpack.c.l.b16 %v238
      %v787 = vunpack.c.l.b16 %v239
      %v788 = vunpack.c.l.b16 %v240
      %v789 = vunpack.c.l.b16 %v241
      %v790 = vunpack.c.l.b16 %v242
      %v791 = vunpack.c.l.b16 %v243
      %v792 = vunpack.c.l.b16 %v244
      %v793 = vunpack.c.l.b16 %v245
      %v794 = vunpack.c.l.b16 %v246
      %v795 = vunpack.c.l.b16 %v247
      %v796 = vunpack.c.l.b16 %v248
      %v797 = vunpack.c.l.b16 %v249
      %v798 = vunpack.c.l.b16 %v250
      %v799 = vpack.c.b16 %v784, %v783
      %v800 = vpack.c.b16 %v786, %v785
      %v801 = vpack.c.b16 %v788, %v787
      %v802 = vpack.c.b16 %v790, %v789
      %v803 = vpack.c.b16 %v792, %v791
      %v804 = vpack.c.b16 %v794, %v793
      %v805 = vpack.c.b16 %v796, %v795
      %v806 = vpack.c.b16 %v798, %v797
      %815 = vmatprep.subr.bf16.mxu0 0
      %816 = vmatpush1.bf16.msra.mxu0 %v806
      %817 = vmatprep.subr.bf16.mxu0 0
      %818 = vmatpush1.bf16.msra.mxu0 %v805
      %819 = vmatprep.subr.bf16.mxu0 0
      %820 = vmatpush1.bf16.msra.mxu0 %v804
      %821 = vmatprep.subr.bf16.mxu0 0
      %822 = vmatpush1.bf16.msra.mxu0 %v803
      %823 = vmatprep.subr.bf16.mxu0 0
      %824 = vmatpush1.bf16.msra.mxu0 %v802
      %825 = vmatprep.subr.bf16.mxu0 0
      %826 = vmatpush1.bf16.msra.mxu0 %v801
      %827 = vmatprep.subr.bf16.mxu0 0
      %828 = vmatpush1.bf16.msra.mxu0 %v800
      %829 = vmatprep.subr.bf16.mxu0 0
      %830 = vmatpush1.bf16.msra.mxu0 %v799
      %831 = vmatprep.subr.bf16.mxu0 0
      %832 = vmatpush2.bf16.msra.mxu0 0
      %833 = vmatprep.subr.bf16.mxu0 0
      %834 = vmatpush2.bf16.msra.mxu0 0
      %835 = vmatprep.subr.bf16.mxu0 0
      %836 = vmatpush2.bf16.msra.mxu0 0
      %837 = vmatprep.subr.bf16.mxu0 0
      %838 = vmatpush2.bf16.msra.mxu0 0
      %839 = vmatprep.subr.bf16.mxu0 0
      %840 = vmatpush2.bf16.msra.mxu0 0
      %841 = vmatprep.subr.bf16.mxu0 0
      %842 = vmatpush2.bf16.msra.mxu0 0
      %843 = vmatprep.subr.bf16.mxu0 0
      %844 = vmatpush2.bf16.msra.mxu0 0
      %845 = vmatprep.subr.bf16.mxu0 0
      %846 = vmatpush2.bf16.msra.mxu0 0
      %847 = vmatprep.mubr.bf16.mxu0 0
      %848 = vmatmul.mubr.bf16.gmra.mxu0 %v341
      %v849 = vpop.f32.mrf.mxu0
      %v850 = vadd.f32 %v604, %v849
      %v851 = vpop.f32.mrf.mxu0
      %v852 = vpop.f32.mrf.mxu0
      %v853 = vadd.f32 %v607, %v852
      %v854 = vpop.f32.mrf.mxu0
      %855 = vmatprep.mubr.bf16.mxu0 0
      %856 = vmatmul.mubr.bf16.gmra.mxu0 %v342
      %v857 = vpop.f32.mrf.mxu0
      %v858 = vadd.f32 %v612, %v857
      %v859 = vpop.f32.mrf.mxu0
      %v860 = vpop.f32.mrf.mxu0
      %v861 = vadd.f32 %v615, %v860
      %v862 = vpop.f32.mrf.mxu0
      %863 = vmatprep.mubr.bf16.mxu0 0
      %864 = vmatmul.mubr.bf16.gmra.mxu0 %v343
      %v865 = vpop.f32.mrf.mxu0
      %v866 = vadd.f32 %v620, %v865
      %v867 = vpop.f32.mrf.mxu0
      %v868 = vpop.f32.mrf.mxu0
      %v869 = vadd.f32 %v623, %v868
      %v870 = vpop.f32.mrf.mxu0
      %871 = vmatprep.mubr.bf16.mxu0 0
      %872 = vmatmul.mubr.bf16.gmra.mxu0 %v344
      %v873 = vpop.f32.mrf.mxu0
      %v874 = vadd.f32 %v628, %v873
      %v875 = vpop.f32.mrf.mxu0
      %v876 = vpop.f32.mrf.mxu0
      %v877 = vadd.f32 %v631, %v876
      %v878 = vpop.f32.mrf.mxu0
      %879 = vmatprep.mubr.bf16.mxu0 0
      %880 = vmatmul.mubr.bf16.gmra.mxu0 %v345
      %v881 = vpop.f32.mrf.mxu0
      %v882 = vadd.f32 %v636, %v881
      %v883 = vpop.f32.mrf.mxu0
      %v884 = vpop.f32.mrf.mxu0
      %v885 = vadd.f32 %v639, %v884
      %v886 = vpop.f32.mrf.mxu0
      %887 = vmatprep.mubr.bf16.mxu0 0
      %888 = vmatmul.mubr.bf16.gmra.mxu0 %v346
      %v889 = vpop.f32.mrf.mxu0
      %v890 = vadd.f32 %v644, %v889
      %v891 = vpop.f32.mrf.mxu0
      %v892 = vpop.f32.mrf.mxu0
      %v893 = vadd.f32 %v647, %v892
      %v894 = vpop.f32.mrf.mxu0
      %895 = vmatprep.mubr.bf16.mxu0 0
      %896 = vmatmul.mubr.bf16.gmra.mxu0 %v347
      %v897 = vpop.f32.mrf.mxu0
      %v898 = vadd.f32 %v652, %v897
      %v899 = vpop.f32.mrf.mxu0
      %v900 = vpop.f32.mrf.mxu0
      %v901 = vadd.f32 %v655, %v900
      %v902 = vpop.f32.mrf.mxu0
      %903 = vmatprep.mubr.bf16.mxu0 0
      %904 = vmatmul.mubr.bf16.gmra.mxu0 %v348
      %v905 = vpop.f32.mrf.mxu0
      %v906 = vadd.f32 %v660, %v905
      %v907 = vpop.f32.mrf.mxu0
      %v908 = vpop.f32.mrf.mxu0
      %v909 = vadd.f32 %v663, %v908
      %v910 = vpop.f32.mrf.mxu0
      %911 = vmatprep.mubr.bf16.mxu0 0
      %912 = vmatmul.mubr.bf16.gmra.mxu0 %v349
      %v913 = vpop.f32.mrf.mxu0
      %v914 = vadd.f32 %v668, %v913
      %v915 = vpop.f32.mrf.mxu0
      %v916 = vpop.f32.mrf.mxu0
      %v917 = vadd.f32 %v671, %v916
      %v918 = vpop.f32.mrf.mxu0
      %919 = vmatprep.mubr.bf16.mxu0 0
      %920 = vmatmul.mubr.bf16.gmra.mxu0 %v350
      %v921 = vpop.f32.mrf.mxu0
      %v922 = vadd.f32 %v676, %v921
      %v923 = vpop.f32.mrf.mxu0
      %v924 = vpop.f32.mrf.mxu0
      %v925 = vadd.f32 %v679, %v924
      %v926 = vpop.f32.mrf.mxu0
      %927 = vmatprep.mubr.bf16.mxu0 0
      %928 = vmatmul.mubr.bf16.gmra.mxu0 %v351
      %v929 = vpop.f32.mrf.mxu0
      %v930 = vadd.f32 %v684, %v929
      %v931 = vpop.f32.mrf.mxu0
      %v932 = vpop.f32.mrf.mxu0
      %v933 = vadd.f32 %v687, %v932
      %v934 = vpop.f32.mrf.mxu0
      %935 = vmatprep.mubr.bf16.mxu0 0
      %936 = vmatmul.mubr.bf16.gmra.mxu0 %v352
      %v937 = vpop.f32.mrf.mxu0
      %v938 = vadd.f32 %v692, %v937
      %v939 = vpop.f32.mrf.mxu0
      %v940 = vpop.f32.mrf.mxu0
      %v941 = vadd.f32 %v695, %v940
      %v942 = vpop.f32.mrf.mxu0
      %943 = vmatprep.mubr.bf16.mxu0 0
      %944 = vmatmul.mubr.bf16.gmra.mxu0 %v353
      %v945 = vpop.f32.mrf.mxu0
      %v946 = vadd.f32 %v700, %v945
      %v947 = vpop.f32.mrf.mxu0
      %v948 = vpop.f32.mrf.mxu0
      %v949 = vadd.f32 %v703, %v948
      %v950 = vpop.f32.mrf.mxu0
      %951 = vmatprep.mubr.bf16.mxu0 0
      %952 = vmatmul.mubr.bf16.gmra.mxu0 %v354
      %v953 = vpop.f32.mrf.mxu0
      %v954 = vadd.f32 %v708, %v953
      %v955 = vpop.f32.mrf.mxu0
      %v956 = vpop.f32.mrf.mxu0
      %v957 = vadd.f32 %v711, %v956
      %v958 = vpop.f32.mrf.mxu0
      %959 = vmatprep.mubr.bf16.mxu0 0
      %960 = vmatmul.mubr.bf16.gmra.mxu0 %v355
      %v961 = vpop.f32.mrf.mxu0
      %v962 = vadd.f32 %v716, %v961
      %v963 = vpop.f32.mrf.mxu0
      %v964 = vpop.f32.mrf.mxu0
      %v965 = vadd.f32 %v719, %v964
      %v966 = vpop.f32.mrf.mxu0
      %967 = vmatprep.mubr.bf16.mxu0 0
      %968 = vmatmul.mubr.bf16.gmra.mxu0 %v356
      %v969 = vpop.f32.mrf.mxu0
      %v970 = vadd.f32 %v724, %v969
      %v971 = vpop.f32.mrf.mxu0
      %v972 = vpop.f32.mrf.mxu0
      %v973 = vadd.f32 %v727, %v972
      %v974 = vpop.f32.mrf.mxu0
      %975 = vmatprep.mubr.bf16.mxu0 0
      %976 = vmatmul.mubr.bf16.gmra.mxu0 %v357
      %v977 = vpop.f32.mrf.mxu0
      %v978 = vadd.f32 %v732, %v977
      %v979 = vpop.f32.mrf.mxu0
      %v980 = vpop.f32.mrf.mxu0
      %v981 = vadd.f32 %v735, %v980
      %v982 = vpop.f32.mrf.mxu0
      %983 = vmatprep.mubr.bf16.mxu0 0
      %984 = vmatmul.mubr.bf16.gmra.mxu0 %v748
      %v985 = vpop.f32.mrf.mxu0
      %v986 = vadd.f32 %v740, %v985
      %v987 = vpop.f32.mrf.mxu0
      %v988 = vpop.f32.mrf.mxu0
      %v989 = vadd.f32 %v743, %v988
      %v990 = vpop.f32.mrf.mxu0
      %991 = vdwg.mxu0
      %v992 = vld [vmem:[%s192] sm:$0xe]
      %s993 = scalar_lea.vmem %s1, 128
      %v994 = vld [vmem:[%s993] sm:$0xf]
      %v995 = vld [vmem:[%s993 + $0x4] sm:$0xf]
      %v996 = vld [vmem:[%s993 + $0x8] sm:$0xf]
      %v997 = vld [vmem:[%s993 + $0xc] sm:$0xf]
      %v998 = vld [vmem:[%s993 + $0x10] sm:$0xf]
      %v999 = vld [vmem:[%s993 + $0x14] sm:$0xf]
      %v1000 = vld [vmem:[%s993 + $0x18] sm:$0xf]
      %v1001 = vld [vmem:[%s993 + $0x1c] sm:$0xf]
      %v1002 = vld [vmem:[%s993 + $0x20] sm:$0xf]
      %v1003 = vld [vmem:[%s993 + $0x24] sm:$0xf]
      %v1004 = vld [vmem:[%s993 + $0x28] sm:$0xf]
      %v1005 = vld [vmem:[%s993 + $0x2c] sm:$0xf]
      %v1006 = vld [vmem:[%s993 + $0x30] sm:$0xf]
      %v1007 = vld [vmem:[%s993 + $0x34] sm:$0xf]
      %v1008 = vld [vmem:[%s993 + $0x38] sm:$0xf]
      %v1009 = vld [vmem:[%s993 + $0x3c] sm:$0xf]
      %v1011 = vunpack.c.l.b16 %v992
      %v1012 = vpack.c.b16 %v306, %v1011
      %vm1013 = vcmask 1046528
      %v1014 = vrot.slane %v1012, 1
      %v1015 = vrot.slane %v342, 1
      %v1016 = vsel %vm1013, %v1014, %v1015
      %v1017 = vrot.slane %v343, 1
      %v1018 = vsel %vm1013, %v1015, %v1017
      %v1019 = vrot.slane %v344, 1
      %v1020 = vsel %vm1013, %v1017, %v1019
      %v1021 = vrot.slane %v345, 1
      %v1022 = vsel %vm1013, %v1019, %v1021
      %v1023 = vrot.slane %v346, 1
      %v1024 = vsel %vm1013, %v1021, %v1023
      %v1025 = vrot.slane %v347, 1
      %v1026 = vsel %vm1013, %v1023, %v1025
      %v1027 = vrot.slane %v348, 1
      %v1028 = vsel %vm1013, %v1025, %v1027
      %v1029 = vrot.slane %v349, 1
      %v1030 = vsel %vm1013, %v1027, %v1029
      %v1031 = vrot.slane %v350, 1
      %v1032 = vsel %vm1013, %v1029, %v1031
      %v1033 = vrot.slane %v351, 1
      %v1034 = vsel %vm1013, %v1031, %v1033
      %v1035 = vrot.slane %v352, 1
      %v1036 = vsel %vm1013, %v1033, %v1035
      %v1037 = vrot.slane %v353, 1
      %v1038 = vsel %vm1013, %v1035, %v1037
      %v1039 = vrot.slane %v354, 1
      %v1040 = vsel %vm1013, %v1037, %v1039
      %v1041 = vrot.slane %v355, 1
      %v1042 = vsel %vm1013, %v1039, %v1041
      %v1043 = vrot.slane %v356, 1
      %v1044 = vsel %vm1013, %v1041, %v1043
      %v1045 = vrot.slane %v357, 1
      %v1046 = vsel %vm1013, %v1043, %v1045
      %v1047 = vrot.slane %v358, 1
      %v1048 = vsel %vm1013, %v1045, %v1047
      %v1083 = vunpack.c.l.b16 %v994
      %v1084 = vunpack.c.l.b16 %v995
      %v1085 = vunpack.c.l.b16 %v996
      %v1086 = vunpack.c.l.b16 %v997
      %v1087 = vunpack.c.l.b16 %v998
      %v1088 = vunpack.c.l.b16 %v999
      %v1089 = vunpack.c.l.b16 %v1000
      %v1090 = vunpack.c.l.b16 %v1001
      %v1091 = vunpack.c.l.b16 %v1002
      %v1092 = vunpack.c.l.b16 %v1003
      %v1093 = vunpack.c.l.b16 %v1004
      %v1094 = vunpack.c.l.b16 %v1005
      %v1095 = vunpack.c.l.b16 %v1006
      %v1096 = vunpack.c.l.b16 %v1007
      %v1097 = vunpack.c.l.b16 %v1008
      %v1098 = vunpack.c.l.b16 %v1009
      %v1099 = vpack.c.b16 %v1084, %v1083
      %v1100 = vpack.c.b16 %v1086, %v1085
      %v1101 = vpack.c.b16 %v1088, %v1087
      %v1102 = vpack.c.b16 %v1090, %v1089
      %v1103 = vpack.c.b16 %v1092, %v1091
      %v1104 = vpack.c.b16 %v1094, %v1093
      %v1105 = vpack.c.b16 %v1096, %v1095
      %v1106 = vpack.c.b16 %v1098, %v1097
      %1115 = vmatprep.subr.bf16.mxu0 0
      %1116 = vmatpush1.bf16.msra.mxu0 %v1106
      %1117 = vmatprep.subr.bf16.mxu0 0
      %1118 = vmatpush1.bf16.msra.mxu0 %v1105
      %1119 = vmatprep.subr.bf16.mxu0 0
      %1120 = vmatpush1.bf16.msra.mxu0 %v1104
      %1121 = vmatprep.subr.bf16.mxu0 0
      %1122 = vmatpush1.bf16.msra.mxu0 %v1103
      %1123 = vmatprep.subr.bf16.mxu0 0
      %1124 = vmatpush1.bf16.msra.mxu0 %v1102
      %1125 = vmatprep.subr.bf16.mxu0 0
      %1126 = vmatpush1.bf16.msra.mxu0 %v1101
      %1127 = vmatprep.subr.bf16.mxu0 0
      %1128 = vmatpush1.bf16.msra.mxu0 %v1100
      %1129 = vmatprep.subr.bf16.mxu0 0
      %1130 = vmatpush1.bf16.msra.mxu0 %v1099
      %1131 = vmatprep.subr.bf16.mxu0 0
      %1132 = vmatpush2.bf16.msra.mxu0 0
      %1133 = vmatprep.subr.bf16.mxu0 0
      %1134 = vmatpush2.bf16.msra.mxu0 0
      %1135 = vmatprep.subr.bf16.mxu0 0
      %1136 = vmatpush2.bf16.msra.mxu0 0
      %1137 = vmatprep.subr.bf16.mxu0 0
      %1138 = vmatpush2.bf16.msra.mxu0 0
      %1139 = vmatprep.subr.bf16.mxu0 0
      %1140 = vmatpush2.bf16.msra.mxu0 0
      %1141 = vmatprep.subr.bf16.mxu0 0
      %1142 = vmatpush2.bf16.msra.mxu0 0
      %1143 = vmatprep.subr.bf16.mxu0 0
      %1144 = vmatpush2.bf16.msra.mxu0 0
      %1145 = vmatprep.subr.bf16.mxu0 0
      %1146 = vmatpush2.bf16.msra.mxu0 0
      %1147 = vmatprep.mubr.bf16.mxu0 0
      %1148 = vmatmul.mubr.bf16.gmra.mxu0 %v1016
      %v1149 = vpop.f32.mrf.mxu0
      %v1150 = vadd.f32 0.0, %v1149
      %v1151 = vpop.f32.mrf.mxu0
      %v1152 = vpop.f32.mrf.mxu0
      %v1153 = vadd.f32 0.0, %v1152
      %v1154 = vpop.f32.mrf.mxu0
      %1155 = vmatprep.mubr.bf16.mxu0 0
      %1156 = vmatmul.mubr.bf16.gmra.mxu0 %v1018
      %v1157 = vpop.f32.mrf.mxu0
      %v1158 = vadd.f32 0.0, %v1157
      %v1159 = vpop.f32.mrf.mxu0
      %v1160 = vpop.f32.mrf.mxu0
      %v1161 = vadd.f32 0.0, %v1160
      %v1162 = vpop.f32.mrf.mxu0
      %1163 = vmatprep.mubr.bf16.mxu0 0
      %1164 = vmatmul.mubr.bf16.gmra.mxu0 %v1020
      %v1165 = vpop.f32.mrf.mxu0
      %v1166 = vadd.f32 0.0, %v1165
      %v1167 = vpop.f32.mrf.mxu0
      %v1168 = vpop.f32.mrf.mxu0
      %v1169 = vadd.f32 0.0, %v1168
      %v1170 = vpop.f32.mrf.mxu0
      %1171 = vmatprep.mubr.bf16.mxu0 0
      %1172 = vmatmul.mubr.bf16.gmra.mxu0 %v1022
      %v1173 = vpop.f32.mrf.mxu0
      %v1174 = vadd.f32 0.0, %v1173
      %v1175 = vpop.f32.mrf.mxu0
      %v1176 = vpop.f32.mrf.mxu0
      %v1177 = vadd.f32 0.0, %v1176
      %v1178 = vpop.f32.mrf.mxu0
      %1179 = vmatprep.mubr.bf16.mxu0 0
      %1180 = vmatmul.mubr.bf16.gmra.mxu0 %v1024
      %v1181 = vpop.f32.mrf.mxu0
      %v1182 = vadd.f32 0.0, %v1181
      %v1183 = vpop.f32.mrf.mxu0
      %v1184 = vpop.f32.mrf.mxu0
      %v1185 = vadd.f32 0.0, %v1184
      %v1186 = vpop.f32.mrf.mxu0
      %1187 = vmatprep.mubr.bf16.mxu0 0
      %1188 = vmatmul.mubr.bf16.gmra.mxu0 %v1026
      %v1189 = vpop.f32.mrf.mxu0
      %v1190 = vadd.f32 0.0, %v1189
      %v1191 = vpop.f32.mrf.mxu0
      %v1192 = vpop.f32.mrf.mxu0
      %v1193 = vadd.f32 0.0, %v1192
      %v1194 = vpop.f32.mrf.mxu0
      %1195 = vmatprep.mubr.bf16.mxu0 0
      %1196 = vmatmul.mubr.bf16.gmra.mxu0 %v1028
      %v1197 = vpop.f32.mrf.mxu0
      %v1198 = vadd.f32 0.0, %v1197
      %v1199 = vpop.f32.mrf.mxu0
      %v1200 = vpop.f32.mrf.mxu0
      %v1201 = vadd.f32 0.0, %v1200
      %v1202 = vpop.f32.mrf.mxu0
      %1203 = vmatprep.mubr.bf16.mxu0 0
      %1204 = vmatmul.mubr.bf16.gmra.mxu0 %v1030
      %v1205 = vpop.f32.mrf.mxu0
      %v1206 = vadd.f32 0.0, %v1205
      %v1207 = vpop.f32.mrf.mxu0
      %v1208 = vpop.f32.mrf.mxu0
      %v1209 = vadd.f32 0.0, %v1208
      %v1210 = vpop.f32.mrf.mxu0
      %1211 = vmatprep.mubr.bf16.mxu0 0
      %1212 = vmatmul.mubr.bf16.gmra.mxu0 %v1032
      %v1213 = vpop.f32.mrf.mxu0
      %v1214 = vadd.f32 0.0, %v1213
      %v1215 = vpop.f32.mrf.mxu0
      %v1216 = vpop.f32.mrf.mxu0
      %v1217 = vadd.f32 0.0, %v1216
      %v1218 = vpop.f32.mrf.mxu0
      %1219 = vmatprep.mubr.bf16.mxu0 0
      %1220 = vmatmul.mubr.bf16.gmra.mxu0 %v1034
      %v1221 = vpop.f32.mrf.mxu0
      %v1222 = vadd.f32 0.0, %v1221
      %v1223 = vpop.f32.mrf.mxu0
      %v1224 = vpop.f32.mrf.mxu0
      %v1225 = vadd.f32 0.0, %v1224
      %v1226 = vpop.f32.mrf.mxu0
      %1227 = vmatprep.mubr.bf16.mxu0 0
      %1228 = vmatmul.mubr.bf16.gmra.mxu0 %v1036
      %v1229 = vpop.f32.mrf.mxu0
      %v1230 = vadd.f32 0.0, %v1229
      %v1231 = vpop.f32.mrf.mxu0
      %v1232 = vpop.f32.mrf.mxu0
      %v1233 = vadd.f32 0.0, %v1232
      %v1234 = vpop.f32.mrf.mxu0
      %1235 = vmatprep.mubr.bf16.mxu0 0
      %1236 = vmatmul.mubr.bf16.gmra.mxu0 %v1038
      %v1237 = vpop.f32.mrf.mxu0
      %v1238 = vadd.f32 0.0, %v1237
      %v1239 = vpop.f32.mrf.mxu0
      %v1240 = vpop.f32.mrf.mxu0
      %v1241 = vadd.f32 0.0, %v1240
      %v1242 = vpop.f32.mrf.mxu0
      %1243 = vmatprep.mubr.bf16.mxu0 0
      %1244 = vmatmul.mubr.bf16.gmra.mxu0 %v1040
      %v1245 = vpop.f32.mrf.mxu0
      %v1246 = vadd.f32 0.0, %v1245
      %v1247 = vpop.f32.mrf.mxu0
      %v1248 = vpop.f32.mrf.mxu0
      %v1249 = vadd.f32 0.0, %v1248
      %v1250 = vpop.f32.mrf.mxu0
      %1251 = vmatprep.mubr.bf16.mxu0 0
      %1252 = vmatmul.mubr.bf16.gmra.mxu0 %v1042
      %v1253 = vpop.f32.mrf.mxu0
      %v1254 = vadd.f32 0.0, %v1253
      %v1255 = vpop.f32.mrf.mxu0
      %v1256 = vpop.f32.mrf.mxu0
      %v1257 = vadd.f32 0.0, %v1256
      %v1258 = vpop.f32.mrf.mxu0
      %1259 = vmatprep.mubr.bf16.mxu0 0
      %1260 = vmatmul.mubr.bf16.gmra.mxu0 %v1044
      %v1261 = vpop.f32.mrf.mxu0
      %v1262 = vadd.f32 0.0, %v1261
      %v1263 = vpop.f32.mrf.mxu0
      %v1264 = vpop.f32.mrf.mxu0
      %v1265 = vadd.f32 0.0, %v1264
      %v1266 = vpop.f32.mrf.mxu0
      %1267 = vmatprep.mubr.bf16.mxu0 0
      %1268 = vmatmul.mubr.bf16.gmra.mxu0 %v1046
      %v1269 = vpop.f32.mrf.mxu0
      %v1270 = vadd.f32 0.0, %v1269
      %v1271 = vpop.f32.mrf.mxu0
      %v1272 = vpop.f32.mrf.mxu0
      %v1273 = vadd.f32 0.0, %v1272
      %v1274 = vpop.f32.mrf.mxu0
      %1275 = vmatprep.mubr.bf16.mxu0 0
      %1276 = vmatmul.mubr.bf16.gmra.mxu0 %v1048
      %v1277 = vpop.f32.mrf.mxu0
      %v1278 = vadd.f32 0.0, %v1277
      %v1279 = vpop.f32.mrf.mxu0
      %v1280 = vpop.f32.mrf.mxu0
      %v1281 = vadd.f32 0.0, %v1280
      %v1282 = vpop.f32.mrf.mxu0
      %1283 = vmatprep.mubr.bf16.mxu0 0
      %1284 = vmatmul.mubr.bf16.gmra.mxu0 %v1047
      %v1285 = vpop.f32.mrf.mxu0
      %v1286 = vadd.f32 0.0, %v1285
      %v1287 = vpop.f32.mrf.mxu0
      %v1288 = vpop.f32.mrf.mxu0
      %v1289 = vadd.f32 0.0, %v1288
      %v1290 = vpop.f32.mrf.mxu0
      %1291 = vdwg.mxu0
      %v1292 = vadd.f32 %v850, %v1150
      %v1293 = vadd.f32 %v853, %v1153
      %v1294 = vadd.f32 %v858, %v1158
      %v1295 = vadd.f32 %v861, %v1161
      %v1296 = vadd.f32 %v866, %v1166
      %v1297 = vadd.f32 %v869, %v1169
      %v1298 = vadd.f32 %v874, %v1174
      %v1299 = vadd.f32 %v877, %v1177
      %v1300 = vadd.f32 %v882, %v1182
      %v1301 = vadd.f32 %v885, %v1185
      %v1302 = vadd.f32 %v890, %v1190
      %v1303 = vadd.f32 %v893, %v1193
      %v1304 = vadd.f32 %v898, %v1198
      %v1305 = vadd.f32 %v901, %v1201
      %v1306 = vadd.f32 %v906, %v1206
      %v1307 = vadd.f32 %v909, %v1209
      %v1308 = vadd.f32 %v914, %v1214
      %v1309 = vadd.f32 %v917, %v1217
      %v1310 = vadd.f32 %v922, %v1222
      %v1311 = vadd.f32 %v925, %v1225
      %v1312 = vadd.f32 %v930, %v1230
      %v1313 = vadd.f32 %v933, %v1233
      %v1314 = vadd.f32 %v938, %v1238
      %v1315 = vadd.f32 %v941, %v1241
      %v1316 = vadd.f32 %v946, %v1246
      %v1317 = vadd.f32 %v949, %v1249
      %v1318 = vadd.f32 %v954, %v1254
      %v1319 = vadd.f32 %v957, %v1257
      %v1320 = vadd.f32 %v962, %v1262
      %v1321 = vadd.f32 %v965, %v1265
      %v1322 = vadd.f32 %v970, %v1270
      %v1323 = vadd.f32 %v973, %v1273
      %v1324 = vadd.f32 %v978, %v1278
      %v1325 = vadd.f32 %v981, %v1281
      %v1326 = vadd.f32 %v986, %v1286
      %v1327 = vadd.f32 %v989, %v1289
      %v1328 = vld [vmem:[%s192 + $0x8] sm:$0xe]
      %v1329 = vld [vmem:[%s192 + $0xc] sm:$0xf]
      %v1330 = vld [vmem:[%s192 + $0x10] sm:$0xf]
      %v1331 = vld [vmem:[%s192 + $0x14] sm:$0xf]
      %v1332 = vld [vmem:[%s192 + $0x18] sm:$0xf]
      %v1333 = vld [vmem:[%s192 + $0x1c] sm:$0xf]
      %v1334 = vld [vmem:[%s192 + $0x20] sm:$0xf]
      %v1335 = vld [vmem:[%s192 + $0x24] sm:$0xf]
      %v1336 = vld [vmem:[%s192 + $0x28] sm:$0xf]
      %v1337 = vld [vmem:[%s192 + $0x2c] sm:$0xf]
      %v1338 = vld [vmem:[%s192 + $0x30] sm:$0xf]
      %v1339 = vld [vmem:[%s192 + $0x34] sm:$0xf]
      %v1340 = vld [vmem:[%s192 + $0x38] sm:$0xf]
      %v1341 = vld [vmem:[%s192 + $0x3c] sm:$0xf]
      %v1342 = vld [vmem:[%s192 + $0x40] sm:$0xf]
      %v1343 = vld [vmem:[%s192 + $0x44] sm:$0xf]
      %v1344 = vld [vmem:[%s192 + $0x48] sm:$0xf]
      %v1345 = vld [vmem:[%s192 + $0x4c] sm:$0xf]
      %v1346 = vld [vmem:[%s192 + $0x50] sm:$0xf]
      %v1347 = vld [vmem:[%s192 + $0x54] sm:$0xf]
      %v1348 = vld [vmem:[%s192 + $0x58] sm:$0xf]
      %v1349 = vld [vmem:[%s192 + $0x5c] sm:$0xf]
      %v1350 = vld [vmem:[%s192 + $0x60] sm:$0xf]
      %v1351 = vld [vmem:[%s192 + $0x64] sm:$0xf]
      %v1352 = vld [vmem:[%s192 + $0x68] sm:$0xf]
      %v1353 = vld [vmem:[%s192 + $0x6c] sm:$0xf]
      %v1354 = vld [vmem:[%s192 + $0x70] sm:$0xf]
      %v1355 = vld [vmem:[%s192 + $0x74] sm:$0xf]
      %v1356 = vld [vmem:[%s192 + $0x78] sm:$0xf]
      %v1357 = vld [vmem:[%s192 + $0x7c] sm:$0xf]
      %v1358 = vld [vmem:[%s192 + $0x80] sm:$0xf]
      %v1359 = vld [vmem:[%s192 + $0x84] sm:$0xf]
      %v1360 = vld [vmem:[%s192 + $0x88] sm:$0xf]
      %v1361 = vld [vmem:[%s192 + $0x8c] sm:$0xf]
      %v1362 = vld [vmem:[%s192 + $0x90] sm:$0xf]
      %v1363 = vld [vmem:[%s192 + $0x94] sm:$0xf]
      %s1364 = scalar_lea.vmem %s1, 192
      %v1365 = vld [vmem:[%s1364] sm:$0xf]
      %v1366 = vld [vmem:[%s1364 + $0x4] sm:$0xf]
      %v1367 = vld [vmem:[%s1364 + $0x8] sm:$0xf]
      %v1368 = vld [vmem:[%s1364 + $0xc] sm:$0xf]
      %v1369 = vld [vmem:[%s1364 + $0x10] sm:$0xf]
      %v1370 = vld [vmem:[%s1364 + $0x14] sm:$0xf]
      %v1371 = vld [vmem:[%s1364 + $0x18] sm:$0xf]
      %v1372 = vld [vmem:[%s1364 + $0x1c] sm:$0xf]
      %v1373 = vld [vmem:[%s1364 + $0x20] sm:$0xf]
      %v1374 = vld [vmem:[%s1364 + $0x24] sm:$0xf]
      %v1375 = vld [vmem:[%s1364 + $0x28] sm:$0xf]
      %v1376 = vld [vmem:[%s1364 + $0x2c] sm:$0xf]
      %v1377 = vld [vmem:[%s1364 + $0x30] sm:$0xf]
      %v1378 = vld [vmem:[%s1364 + $0x34] sm:$0xf]
      %v1379 = vld [vmem:[%s1364 + $0x38] sm:$0xf]
      %v1380 = vld [vmem:[%s1364 + $0x3c] sm:$0xf]
      %v1417 = vunpack.c.l.b16 %v1328
      %v1418 = vunpack.c.l.b16 %v1329
      %v1419 = vunpack.c.l.b16 %v1330
      %v1420 = vunpack.c.l.b16 %v1331
      %v1421 = vunpack.c.l.b16 %v1332
      %v1422 = vunpack.c.l.b16 %v1333
      %v1423 = vunpack.c.l.b16 %v1334
      %v1424 = vunpack.c.l.b16 %v1335
      %v1425 = vunpack.c.l.b16 %v1336
      %v1426 = vunpack.c.l.b16 %v1337
      %v1427 = vunpack.c.l.b16 %v1338
      %v1428 = vunpack.c.l.b16 %v1339
      %v1429 = vunpack.c.l.b16 %v1340
      %v1430 = vunpack.c.l.b16 %v1341
      %v1431 = vunpack.c.l.b16 %v1342
      %v1432 = vunpack.c.l.b16 %v1343
      %v1433 = vunpack.c.l.b16 %v1344
      %v1434 = vunpack.c.l.b16 %v1345
      %v1435 = vunpack.c.l.b16 %v1346
      %v1436 = vunpack.c.l.b16 %v1347
      %v1437 = vunpack.c.l.b16 %v1348
      %v1438 = vunpack.c.l.b16 %v1349
      %v1439 = vunpack.c.l.b16 %v1350
      %v1440 = vunpack.c.l.b16 %v1351
      %v1441 = vunpack.c.l.b16 %v1352
      %v1442 = vunpack.c.l.b16 %v1353
      %v1443 = vunpack.c.l.b16 %v1354
      %v1444 = vunpack.c.l.b16 %v1355
      %v1445 = vunpack.c.l.b16 %v1356
      %v1446 = vunpack.c.l.b16 %v1357
      %v1447 = vunpack.c.l.b16 %v1358
      %v1448 = vunpack.c.l.b16 %v1359
      %v1449 = vunpack.c.l.b16 %v1360
      %v1450 = vunpack.c.l.b16 %v1361
      %v1451 = vunpack.c.l.b16 %v1362
      %v1452 = vunpack.c.l.b16 %v1363
      %v1453 = vpack.c.b16 %v1418, %v1417
      %v1454 = vpack.c.b16 %v1420, %v1419
      %v1455 = vpack.c.b16 %v1422, %v1421
      %v1456 = vpack.c.b16 %v1424, %v1423
      %v1457 = vpack.c.b16 %v1426, %v1425
      %v1458 = vpack.c.b16 %v1428, %v1427
      %v1459 = vpack.c.b16 %v1430, %v1429
      %v1460 = vpack.c.b16 %v1432, %v1431
      %v1461 = vpack.c.b16 %v1434, %v1433
      %v1462 = vpack.c.b16 %v1436, %v1435
      %v1463 = vpack.c.b16 %v1438, %v1437
      %v1464 = vpack.c.b16 %v1440, %v1439
      %v1465 = vpack.c.b16 %v1442, %v1441
      %v1466 = vpack.c.b16 %v1444, %v1443
      %v1467 = vpack.c.b16 %v1446, %v1445
      %v1468 = vpack.c.b16 %v1448, %v1447
      %v1469 = vpack.c.b16 %v1450, %v1449
      %v1470 = vpack.c.b16 %v1452, %v1451
      %v1471 = vrot.slane %v1453, 1
      %v1472 = vrot.slane %v1454, 1
      %v1473 = vsel %vm1013, %v1471, %v1472
      %v1474 = vrot.slane %v1455, 1
      %v1475 = vsel %vm1013, %v1472, %v1474
      %v1476 = vrot.slane %v1456, 1
      %v1477 = vsel %vm1013, %v1474, %v1476
      %v1478 = vrot.slane %v1457, 1
      %v1479 = vsel %vm1013, %v1476, %v1478
      %v1480 = vrot.slane %v1458, 1
      %v1481 = vsel %vm1013, %v1478, %v1480
      %v1482 = vrot.slane %v1459, 1
      %v1483 = vsel %vm1013, %v1480, %v1482
      %v1484 = vrot.slane %v1460, 1
      %v1485 = vsel %vm1013, %v1482, %v1484
      %v1486 = vrot.slane %v1461, 1
      %v1487 = vsel %vm1013, %v1484, %v1486
      %v1488 = vrot.slane %v1462, 1
      %v1489 = vsel %vm1013, %v1486, %v1488
      %v1490 = vrot.slane %v1463, 1
      %v1491 = vsel %vm1013, %v1488, %v1490
      %v1492 = vrot.slane %v1464, 1
      %v1493 = vsel %vm1013, %v1490, %v1492
      %v1494 = vrot.slane %v1465, 1
      %v1495 = vsel %vm1013, %v1492, %v1494
      %v1496 = vrot.slane %v1466, 1
      %v1497 = vsel %vm1013, %v1494, %v1496
      %v1498 = vrot.slane %v1467, 1
      %v1499 = vsel %vm1013, %v1496, %v1498
      %v1500 = vrot.slane %v1468, 1
      %v1501 = vsel %vm1013, %v1498, %v1500
      %v1502 = vrot.slane %v1469, 1
      %v1503 = vsel %vm1013, %v1500, %v1502
      %v1504 = vrot.slane %v1470, 1
      %v1505 = vsel %vm1013, %v1502, %v1504
      %v1540 = vunpack.c.l.b16 %v1365
      %v1541 = vunpack.c.l.b16 %v1366
      %v1542 = vunpack.c.l.b16 %v1367
      %v1543 = vunpack.c.l.b16 %v1368
      %v1544 = vunpack.c.l.b16 %v1369
      %v1545 = vunpack.c.l.b16 %v1370
      %v1546 = vunpack.c.l.b16 %v1371
      %v1547 = vunpack.c.l.b16 %v1372
      %v1548 = vunpack.c.l.b16 %v1373
      %v1549 = vunpack.c.l.b16 %v1374
      %v1550 = vunpack.c.l.b16 %v1375
      %v1551 = vunpack.c.l.b16 %v1376
      %v1552 = vunpack.c.l.b16 %v1377
      %v1553 = vunpack.c.l.b16 %v1378
      %v1554 = vunpack.c.l.b16 %v1379
      %v1555 = vunpack.c.l.b16 %v1380
      %v1556 = vpack.c.b16 %v1541, %v1540
      %v1557 = vpack.c.b16 %v1543, %v1542
      %v1558 = vpack.c.b16 %v1545, %v1544
      %v1559 = vpack.c.b16 %v1547, %v1546
      %v1560 = vpack.c.b16 %v1549, %v1548
      %v1561 = vpack.c.b16 %v1551, %v1550
      %v1562 = vpack.c.b16 %v1553, %v1552
      %v1563 = vpack.c.b16 %v1555, %v1554
      %1572 = vmatprep.subr.bf16.mxu0 0
      %1573 = vmatpush1.bf16.msra.mxu0 %v1563
      %1574 = vmatprep.subr.bf16.mxu0 0
      %1575 = vmatpush1.bf16.msra.mxu0 %v1562
      %1576 = vmatprep.subr.bf16.mxu0 0
      %1577 = vmatpush1.bf16.msra.mxu0 %v1561
      %1578 = vmatprep.subr.bf16.mxu0 0
      %1579 = vmatpush1.bf16.msra.mxu0 %v1560
      %1580 = vmatprep.subr.bf16.mxu0 0
      %1581 = vmatpush1.bf16.msra.mxu0 %v1559
      %1582 = vmatprep.subr.bf16.mxu0 0
      %1583 = vmatpush1.bf16.msra.mxu0 %v1558
      %1584 = vmatprep.subr.bf16.mxu0 0
      %1585 = vmatpush1.bf16.msra.mxu0 %v1557
      %1586 = vmatprep.subr.bf16.mxu0 0
      %1587 = vmatpush1.bf16.msra.mxu0 %v1556
      %1588 = vmatprep.subr.bf16.mxu0 0
      %1589 = vmatpush2.bf16.msra.mxu0 0
      %1590 = vmatprep.subr.bf16.mxu0 0
      %1591 = vmatpush2.bf16.msra.mxu0 0
      %1592 = vmatprep.subr.bf16.mxu0 0
      %1593 = vmatpush2.bf16.msra.mxu0 0
      %1594 = vmatprep.subr.bf16.mxu0 0
      %1595 = vmatpush2.bf16.msra.mxu0 0
      %1596 = vmatprep.subr.bf16.mxu0 0
      %1597 = vmatpush2.bf16.msra.mxu0 0
      %1598 = vmatprep.subr.bf16.mxu0 0
      %1599 = vmatpush2.bf16.msra.mxu0 0
      %1600 = vmatprep.subr.bf16.mxu0 0
      %1601 = vmatpush2.bf16.msra.mxu0 0
      %1602 = vmatprep.subr.bf16.mxu0 0
      %1603 = vmatpush2.bf16.msra.mxu0 0
      %1604 = vmatprep.mubr.bf16.mxu0 0
      %1605 = vmatmul.mubr.bf16.gmra.mxu0 %v1473
      %v1606 = vpop.f32.mrf.mxu0
      %v1607 = vadd.f32 0.0, %v1606
      %v1608 = vpop.f32.mrf.mxu0
      %v1609 = vpop.f32.mrf.mxu0
      %v1610 = vadd.f32 0.0, %v1609
      %v1611 = vpop.f32.mrf.mxu0
      %1612 = vmatprep.mubr.bf16.mxu0 0
      %1613 = vmatmul.mubr.bf16.gmra.mxu0 %v1475
      %v1614 = vpop.f32.mrf.mxu0
      %v1615 = vadd.f32 0.0, %v1614
      %v1616 = vpop.f32.mrf.mxu0
      %v1617 = vpop.f32.mrf.mxu0
      %v1618 = vadd.f32 0.0, %v1617
      %v1619 = vpop.f32.mrf.mxu0
      %1620 = vmatprep.mubr.bf16.mxu0 0
      %1621 = vmatmul.mubr.bf16.gmra.mxu0 %v1477
      %v1622 = vpop.f32.mrf.mxu0
      %v1623 = vadd.f32 0.0, %v1622
      %v1624 = vpop.f32.mrf.mxu0
      %v1625 = vpop.f32.mrf.mxu0
      %v1626 = vadd.f32 0.0, %v1625
      %v1627 = vpop.f32.mrf.mxu0
      %1628 = vmatprep.mubr.bf16.mxu0 0
      %1629 = vmatmul.mubr.bf16.gmra.mxu0 %v1479
      %v1630 = vpop.f32.mrf.mxu0
      %v1631 = vadd.f32 0.0, %v1630
      %v1632 = vpop.f32.mrf.mxu0
      %v1633 = vpop.f32.mrf.mxu0
      %v1634 = vadd.f32 0.0, %v1633
      %v1635 = vpop.f32.mrf.mxu0
      %1636 = vmatprep.mubr.bf16.mxu0 0
      %1637 = vmatmul.mubr.bf16.gmra.mxu0 %v1481
      %v1638 = vpop.f32.mrf.mxu0
      %v1639 = vadd.f32 0.0, %v1638
      %v1640 = vpop.f32.mrf.mxu0
      %v1641 = vpop.f32.mrf.mxu0
      %v1642 = vadd.f32 0.0, %v1641
      %v1643 = vpop.f32.mrf.mxu0
      %1644 = vmatprep.mubr.bf16.mxu0 0
      %1645 = vmatmul.mubr.bf16.gmra.mxu0 %v1483
      %v1646 = vpop.f32.mrf.mxu0
      %v1647 = vadd.f32 0.0, %v1646
      %v1648 = vpop.f32.mrf.mxu0
      %v1649 = vpop.f32.mrf.mxu0
      %v1650 = vadd.f32 0.0, %v1649
      %v1651 = vpop.f32.mrf.mxu0
      %1652 = vmatprep.mubr.bf16.mxu0 0
      %1653 = vmatmul.mubr.bf16.gmra.mxu0 %v1485
      %v1654 = vpop.f32.mrf.mxu0
      %v1655 = vadd.f32 0.0, %v1654
      %v1656 = vpop.f32.mrf.mxu0
      %v1657 = vpop.f32.mrf.mxu0
      %v1658 = vadd.f32 0.0, %v1657
      %v1659 = vpop.f32.mrf.mxu0
      %1660 = vmatprep.mubr.bf16.mxu0 0
      %1661 = vmatmul.mubr.bf16.gmra.mxu0 %v1487
      %v1662 = vpop.f32.mrf.mxu0
      %v1663 = vadd.f32 0.0, %v1662
      %v1664 = vpop.f32.mrf.mxu0
      %v1665 = vpop.f32.mrf.mxu0
      %v1666 = vadd.f32 0.0, %v1665
      %v1667 = vpop.f32.mrf.mxu0
      %1668 = vmatprep.mubr.bf16.mxu0 0
      %1669 = vmatmul.mubr.bf16.gmra.mxu0 %v1489
      %v1670 = vpop.f32.mrf.mxu0
      %v1671 = vadd.f32 0.0, %v1670
      %v1672 = vpop.f32.mrf.mxu0
      %v1673 = vpop.f32.mrf.mxu0
      %v1674 = vadd.f32 0.0, %v1673
      %v1675 = vpop.f32.mrf.mxu0
      %1676 = vmatprep.mubr.bf16.mxu0 0
      %1677 = vmatmul.mubr.bf16.gmra.mxu0 %v1491
      %v1678 = vpop.f32.mrf.mxu0
      %v1679 = vadd.f32 0.0, %v1678
      %v1680 = vpop.f32.mrf.mxu0
      %v1681 = vpop.f32.mrf.mxu0
      %v1682 = vadd.f32 0.0, %v1681
      %v1683 = vpop.f32.mrf.mxu0
      %1684 = vmatprep.mubr.bf16.mxu0 0
      %1685 = vmatmul.mubr.bf16.gmra.mxu0 %v1493
      %v1686 = vpop.f32.mrf.mxu0
      %v1687 = vadd.f32 0.0, %v1686
      %v1688 = vpop.f32.mrf.mxu0
      %v1689 = vpop.f32.mrf.mxu0
      %v1690 = vadd.f32 0.0, %v1689
      %v1691 = vpop.f32.mrf.mxu0
      %1692 = vmatprep.mubr.bf16.mxu0 0
      %1693 = vmatmul.mubr.bf16.gmra.mxu0 %v1495
      %v1694 = vpop.f32.mrf.mxu0
      %v1695 = vadd.f32 0.0, %v1694
      %v1696 = vpop.f32.mrf.mxu0
      %v1697 = vpop.f32.mrf.mxu0
      %v1698 = vadd.f32 0.0, %v1697
      %v1699 = vpop.f32.mrf.mxu0
      %1700 = vmatprep.mubr.bf16.mxu0 0
      %1701 = vmatmul.mubr.bf16.gmra.mxu0 %v1497
      %v1702 = vpop.f32.mrf.mxu0
      %v1703 = vadd.f32 0.0, %v1702
      %v1704 = vpop.f32.mrf.mxu0
      %v1705 = vpop.f32.mrf.mxu0
      %v1706 = vadd.f32 0.0, %v1705
      %v1707 = vpop.f32.mrf.mxu0
      %1708 = vmatprep.mubr.bf16.mxu0 0
      %1709 = vmatmul.mubr.bf16.gmra.mxu0 %v1499
      %v1710 = vpop.f32.mrf.mxu0
      %v1711 = vadd.f32 0.0, %v1710
      %v1712 = vpop.f32.mrf.mxu0
      %v1713 = vpop.f32.mrf.mxu0
      %v1714 = vadd.f32 0.0, %v1713
      %v1715 = vpop.f32.mrf.mxu0
      %1716 = vmatprep.mubr.bf16.mxu0 0
      %1717 = vmatmul.mubr.bf16.gmra.mxu0 %v1501
      %v1718 = vpop.f32.mrf.mxu0
      %v1719 = vadd.f32 0.0, %v1718
      %v1720 = vpop.f32.mrf.mxu0
      %v1721 = vpop.f32.mrf.mxu0
      %v1722 = vadd.f32 0.0, %v1721
      %v1723 = vpop.f32.mrf.mxu0
      %1724 = vmatprep.mubr.bf16.mxu0 0
      %1725 = vmatmul.mubr.bf16.gmra.mxu0 %v1503
      %v1726 = vpop.f32.mrf.mxu0
      %v1727 = vadd.f32 0.0, %v1726
      %v1728 = vpop.f32.mrf.mxu0
      %v1729 = vpop.f32.mrf.mxu0
      %v1730 = vadd.f32 0.0, %v1729
      %v1731 = vpop.f32.mrf.mxu0
      %1732 = vmatprep.mubr.bf16.mxu0 0
      %1733 = vmatmul.mubr.bf16.gmra.mxu0 %v1505
      %v1734 = vpop.f32.mrf.mxu0
      %v1735 = vadd.f32 0.0, %v1734
      %v1736 = vpop.f32.mrf.mxu0
      %v1737 = vpop.f32.mrf.mxu0
      %v1738 = vadd.f32 0.0, %v1737
      %v1739 = vpop.f32.mrf.mxu0
      %1740 = vmatprep.mubr.bf16.mxu0 0
      %1741 = vmatmul.mubr.bf16.gmra.mxu0 %v1504
      %v1742 = vpop.f32.mrf.mxu0
      %v1743 = vadd.f32 0.0, %v1742
      %v1744 = vpop.f32.mrf.mxu0
      %v1745 = vpop.f32.mrf.mxu0
      %v1746 = vadd.f32 0.0, %v1745
      %v1747 = vpop.f32.mrf.mxu0
      %1748 = vdwg.mxu0
      %v1749 = vadd.f32 %v1292, %v1607
      %v1750 = vadd.f32 %v1293, %v1610
      %v1751 = vadd.f32 %v1294, %v1615
      %v1752 = vadd.f32 %v1295, %v1618
      %v1753 = vadd.f32 %v1296, %v1623
      %v1754 = vadd.f32 %v1297, %v1626
      %v1755 = vadd.f32 %v1298, %v1631
      %v1756 = vadd.f32 %v1299, %v1634
      %v1757 = vadd.f32 %v1300, %v1639
      %v1758 = vadd.f32 %v1301, %v1642
      %v1759 = vadd.f32 %v1302, %v1647
      %v1760 = vadd.f32 %v1303, %v1650
      %v1761 = vadd.f32 %v1304, %v1655
      %v1762 = vadd.f32 %v1305, %v1658
      %v1763 = vadd.f32 %v1306, %v1663
      %v1764 = vadd.f32 %v1307, %v1666
      %v1765 = vadd.f32 %v1308, %v1671
      %v1766 = vadd.f32 %v1309, %v1674
      %v1767 = vadd.f32 %v1310, %v1679
      %v1768 = vadd.f32 %v1311, %v1682
      %v1769 = vadd.f32 %v1312, %v1687
      %v1770 = vadd.f32 %v1313, %v1690
      %v1771 = vadd.f32 %v1314, %v1695
      %v1772 = vadd.f32 %v1315, %v1698
      %v1773 = vadd.f32 %v1316, %v1703
      %v1774 = vadd.f32 %v1317, %v1706
      %v1775 = vadd.f32 %v1318, %v1711
      %v1776 = vadd.f32 %v1319, %v1714
      %v1777 = vadd.f32 %v1320, %v1719
      %v1778 = vadd.f32 %v1321, %v1722
      %v1779 = vadd.f32 %v1322, %v1727
      %v1780 = vadd.f32 %v1323, %v1730
      %v1781 = vadd.f32 %v1324, %v1735
      %v1782 = vadd.f32 %v1325, %v1738
      %v1783 = vadd.f32 %v1326, %v1743
      %v1784 = vadd.f32 %v1327, %v1746
      %v1785 = vld [vmem:[%s192 + $0x8] sm:$0xe]
      %v1786 = vld [vmem:[%s192 + $0xc] sm:$0xf]
      %v1787 = vld [vmem:[%s192 + $0x10] sm:$0xf]
      %v1788 = vld [vmem:[%s192 + $0x14] sm:$0xf]
      %v1789 = vld [vmem:[%s192 + $0x18] sm:$0xf]
      %v1790 = vld [vmem:[%s192 + $0x1c] sm:$0xf]
      %v1791 = vld [vmem:[%s192 + $0x20] sm:$0xf]
      %v1792 = vld [vmem:[%s192 + $0x24] sm:$0xf]
      %v1793 = vld [vmem:[%s192 + $0x28] sm:$0xf]
      %v1794 = vld [vmem:[%s192 + $0x2c] sm:$0xf]
      %v1795 = vld [vmem:[%s192 + $0x30] sm:$0xf]
      %v1796 = vld [vmem:[%s192 + $0x34] sm:$0xf]
      %v1797 = vld [vmem:[%s192 + $0x38] sm:$0xf]
      %v1798 = vld [vmem:[%s192 + $0x3c] sm:$0xf]
      %v1799 = vld [vmem:[%s192 + $0x40] sm:$0xf]
      %v1800 = vld [vmem:[%s192 + $0x44] sm:$0xf]
      %v1801 = vld [vmem:[%s192 + $0x48] sm:$0xf]
      %v1802 = vld [vmem:[%s192 + $0x4c] sm:$0xf]
      %v1803 = vld [vmem:[%s192 + $0x50] sm:$0xf]
      %v1804 = vld [vmem:[%s192 + $0x54] sm:$0xf]
      %v1805 = vld [vmem:[%s192 + $0x58] sm:$0xf]
      %v1806 = vld [vmem:[%s192 + $0x5c] sm:$0xf]
      %v1807 = vld [vmem:[%s192 + $0x60] sm:$0xf]
      %v1808 = vld [vmem:[%s192 + $0x64] sm:$0xf]
      %v1809 = vld [vmem:[%s192 + $0x68] sm:$0xf]
      %v1810 = vld [vmem:[%s192 + $0x6c] sm:$0xf]
      %v1811 = vld [vmem:[%s192 + $0x70] sm:$0xf]
      %v1812 = vld [vmem:[%s192 + $0x74] sm:$0xf]
      %v1813 = vld [vmem:[%s192 + $0x78] sm:$0xf]
      %v1814 = vld [vmem:[%s192 + $0x7c] sm:$0xf]
      %v1815 = vld [vmem:[%s192 + $0x80] sm:$0xf]
      %v1816 = vld [vmem:[%s192 + $0x84] sm:$0xf]
      %v1817 = vld [vmem:[%s192 + $0x88] sm:$0xf]
      %v1818 = vld [vmem:[%s192 + $0x8c] sm:$0xf]
      %v1819 = vld [vmem:[%s192 + $0x90] sm:$0xf]
      %v1820 = vld [vmem:[%s192 + $0x94] sm:$0xf]
      %v1821 = vld [vmem:[%s192 + $0x98] sm:$0x1]
      %s1822 = scalar_lea.vmem %s1, 256
      %v1823 = vld [vmem:[%s1822] sm:$0xf]
      %v1824 = vld [vmem:[%s1822 + $0x4] sm:$0xf]
      %v1825 = vld [vmem:[%s1822 + $0x8] sm:$0xf]
      %v1826 = vld [vmem:[%s1822 + $0xc] sm:$0xf]
      %v1827 = vld [vmem:[%s1822 + $0x10] sm:$0xf]
      %v1828 = vld [vmem:[%s1822 + $0x14] sm:$0xf]
      %v1829 = vld [vmem:[%s1822 + $0x18] sm:$0xf]
      %v1830 = vld [vmem:[%s1822 + $0x1c] sm:$0xf]
      %v1831 = vld [vmem:[%s1822 + $0x20] sm:$0xf]
      %v1832 = vld [vmem:[%s1822 + $0x24] sm:$0xf]
      %v1833 = vld [vmem:[%s1822 + $0x28] sm:$0xf]
      %v1834 = vld [vmem:[%s1822 + $0x2c] sm:$0xf]
      %v1835 = vld [vmem:[%s1822 + $0x30] sm:$0xf]
      %v1836 = vld [vmem:[%s1822 + $0x34] sm:$0xf]
      %v1837 = vld [vmem:[%s1822 + $0x38] sm:$0xf]
      %v1838 = vld [vmem:[%s1822 + $0x3c] sm:$0xf]
      %v1876 = vunpack.c.l.b16 %v1785
      %v1877 = vunpack.c.l.b16 %v1786
      %v1878 = vunpack.c.l.b16 %v1787
      %v1879 = vunpack.c.l.b16 %v1788
      %v1880 = vunpack.c.l.b16 %v1789
      %v1881 = vunpack.c.l.b16 %v1790
      %v1882 = vunpack.c.l.b16 %v1791
      %v1883 = vunpack.c.l.b16 %v1792
      %v1884 = vunpack.c.l.b16 %v1793
      %v1885 = vunpack.c.l.b16 %v1794
      %v1886 = vunpack.c.l.b16 %v1795
      %v1887 = vunpack.c.l.b16 %v1796
      %v1888 = vunpack.c.l.b16 %v1797
      %v1889 = vunpack.c.l.b16 %v1798
      %v1890 = vunpack.c.l.b16 %v1799
      %v1891 = vunpack.c.l.b16 %v1800
      %v1892 = vunpack.c.l.b16 %v1801
      %v1893 = vunpack.c.l.b16 %v1802
      %v1894 = vunpack.c.l.b16 %v1803
      %v1895 = vunpack.c.l.b16 %v1804
      %v1896 = vunpack.c.l.b16 %v1805
      %v1897 = vunpack.c.l.b16 %v1806
      %v1898 = vunpack.c.l.b16 %v1807
      %v1899 = vunpack.c.l.b16 %v1808
      %v1900 = vunpack.c.l.b16 %v1809
      %v1901 = vunpack.c.l.b16 %v1810
      %v1902 = vunpack.c.l.b16 %v1811
      %v1903 = vunpack.c.l.b16 %v1812
      %v1904 = vunpack.c.l.b16 %v1813
      %v1905 = vunpack.c.l.b16 %v1814
      %v1906 = vunpack.c.l.b16 %v1815
      %v1907 = vunpack.c.l.b16 %v1816
      %v1908 = vunpack.c.l.b16 %v1817
      %v1909 = vunpack.c.l.b16 %v1818
      %v1910 = vunpack.c.l.b16 %v1819
      %v1911 = vunpack.c.l.b16 %v1820
      %v1912 = vunpack.c.l.b16 %v1821
      %v1913 = vpack.c.b16 %v1877, %v1876
      %v1914 = vpack.c.b16 %v1879, %v1878
      %v1915 = vpack.c.b16 %v1881, %v1880
      %v1916 = vpack.c.b16 %v1883, %v1882
      %v1917 = vpack.c.b16 %v1885, %v1884
      %v1918 = vpack.c.b16 %v1887, %v1886
      %v1919 = vpack.c.b16 %v1889, %v1888
      %v1920 = vpack.c.b16 %v1891, %v1890
      %v1921 = vpack.c.b16 %v1893, %v1892
      %v1922 = vpack.c.b16 %v1895, %v1894
      %v1923 = vpack.c.b16 %v1897, %v1896
      %v1924 = vpack.c.b16 %v1899, %v1898
      %v1925 = vpack.c.b16 %v1901, %v1900
      %v1926 = vpack.c.b16 %v1903, %v1902
      %v1927 = vpack.c.b16 %v1905, %v1904
      %v1928 = vpack.c.b16 %v1907, %v1906
      %v1929 = vpack.c.b16 %v1909, %v1908
      %v1930 = vpack.c.b16 %v1911, %v1910
      %v1931 = vpack.c.b16 %v1912, %v1912
      %vm1932 = vsmask.f32 6400
      %v1934 = vshrl.u32 %v1913, 16
      %v1936 = vrot.slane %v1934, 1
      %v1937 = vshll.u32 %v1913, 16
      %v1939 = vrot.slane %v1937, 2
      %v1940 = vor.u32 %v1936, %v1939
      %v1942 = vshrl.u32 %v1914, 16
      %v1944 = vrot.slane %v1942, 1
      %v1945 = vshll.u32 %v1914, 16
      %v1947 = vrot.slane %v1945, 2
      %v1948 = vor.u32 %v1944, %v1947
      %v1949 = vsel %vm1932, %v1940, %v1948
      %v1951 = vshrl.u32 %v1915, 16
      %v1953 = vrot.slane %v1951, 1
      %v1954 = vshll.u32 %v1915, 16
      %v1956 = vrot.slane %v1954, 2
      %v1957 = vor.u32 %v1953, %v1956
      %v1958 = vsel %vm1932, %v1948, %v1957
      %v1960 = vshrl.u32 %v1916, 16
      %v1962 = vrot.slane %v1960, 1
      %v1963 = vshll.u32 %v1916, 16
      %v1965 = vrot.slane %v1963, 2
      %v1966 = vor.u32 %v1962, %v1965
      %v1967 = vsel %vm1932, %v1957, %v1966
      %v1969 = vshrl.u32 %v1917, 16
      %v1971 = vrot.slane %v1969, 1
      %v1972 = vshll.u32 %v1917, 16
      %v1974 = vrot.slane %v1972, 2
      %v1975 = vor.u32 %v1971, %v1974
      %v1976 = vsel %vm1932, %v1966, %v1975
      %v1978 = vshrl.u32 %v1918, 16
      %v1980 = vrot.slane %v1978, 1
      %v1981 = vshll.u32 %v1918, 16
      %v1983 = vrot.slane %v1981, 2
      %v1984 = vor.u32 %v1980, %v1983
      %v1985 = vsel %vm1932, %v1975, %v1984
      %v1987 = vshrl.u32 %v1919, 16
      %v1989 = vrot.slane %v1987, 1
      %v1990 = vshll.u32 %v1919, 16
      %v1992 = vrot.slane %v1990, 2
      %v1993 = vor.u32 %v1989, %v1992
      %v1994 = vsel %vm1932, %v1984, %v1993
      %v1996 = vshrl.u32 %v1920, 16
      %v1998 = vrot.slane %v1996, 1
      %v1999 = vshll.u32 %v1920, 16
      %v2001 = vrot.slane %v1999, 2
      %v2002 = vor.u32 %v1998, %v2001
      %v2003 = vsel %vm1932, %v1993, %v2002
      %v2005 = vshrl.u32 %v1921, 16
      %v2007 = vrot.slane %v2005, 1
      %v2008 = vshll.u32 %v1921, 16
      %v2010 = vrot.slane %v2008, 2
      %v2011 = vor.u32 %v2007, %v2010
      %v2012 = vsel %vm1932, %v2002, %v2011
      %v2014 = vshrl.u32 %v1922, 16
      %v2016 = vrot.slane %v2014, 1
      %v2017 = vshll.u32 %v1922, 16
      %v2019 = vrot.slane %v2017, 2
      %v2020 = vor.u32 %v2016, %v2019
      %v2021 = vsel %vm1932, %v2011, %v2020
      %v2023 = vshrl.u32 %v1923, 16
      %v2025 = vrot.slane %v2023, 1
      %v2026 = vshll.u32 %v1923, 16
      %v2028 = vrot.slane %v2026, 2
      %v2029 = vor.u32 %v2025, %v2028
      %v2030 = vsel %vm1932, %v2020, %v2029
      %v2032 = vshrl.u32 %v1924, 16
      %v2034 = vrot.slane %v2032, 1
      %v2035 = vshll.u32 %v1924, 16
      %v2037 = vrot.slane %v2035, 2
      %v2038 = vor.u32 %v2034, %v2037
      %v2039 = vsel %vm1932, %v2029, %v2038
      %v2041 = vshrl.u32 %v1925, 16
      %v2043 = vrot.slane %v2041, 1
      %v2044 = vshll.u32 %v1925, 16
      %v2046 = vrot.slane %v2044, 2
      %v2047 = vor.u32 %v2043, %v2046
      %v2048 = vsel %vm1932, %v2038, %v2047
      %v2050 = vshrl.u32 %v1926, 16
      %v2052 = vrot.slane %v2050, 1
      %v2053 = vshll.u32 %v1926, 16
      %v2055 = vrot.slane %v2053, 2
      %v2056 = vor.u32 %v2052, %v2055
      %v2057 = vsel %vm1932, %v2047, %v2056
      %v2059 = vshrl.u32 %v1927, 16
      %v2061 = vrot.slane %v2059, 1
      %v2062 = vshll.u32 %v1927, 16
      %v2064 = vrot.slane %v2062, 2
      %v2065 = vor.u32 %v2061, %v2064
      %v2066 = vsel %vm1932, %v2056, %v2065
      %v2068 = vshrl.u32 %v1928, 16
      %v2070 = vrot.slane %v2068, 1
      %v2071 = vshll.u32 %v1928, 16
      %v2073 = vrot.slane %v2071, 2
      %v2074 = vor.u32 %v2070, %v2073
      %v2075 = vsel %vm1932, %v2065, %v2074
      %v2077 = vshrl.u32 %v1929, 16
      %v2079 = vrot.slane %v2077, 1
      %v2080 = vshll.u32 %v1929, 16
      %v2082 = vrot.slane %v2080, 2
      %v2083 = vor.u32 %v2079, %v2082
      %v2084 = vsel %vm1932, %v2074, %v2083
      %v2086 = vshrl.u32 %v1930, 16
      %v2088 = vrot.slane %v2086, 1
      %v2089 = vshll.u32 %v1930, 16
      %v2091 = vrot.slane %v2089, 2
      %v2092 = vor.u32 %v2088, %v2091
      %v2093 = vsel %vm1932, %v2083, %v2092
      %v2095 = vshll.u32 %v1931, 16
      %v2097 = vrot.slane %v2095, 2
      %v2098 = vsel %vm1932, %v2092, %v2097
      %v2133 = vunpack.c.l.b16 %v1823
      %v2134 = vunpack.c.l.b16 %v1824
      %v2135 = vunpack.c.l.b16 %v1825
      %v2136 = vunpack.c.l.b16 %v1826
      %v2137 = vunpack.c.l.b16 %v1827
      %v2138 = vunpack.c.l.b16 %v1828
      %v2139 = vunpack.c.l.b16 %v1829
      %v2140 = vunpack.c.l.b16 %v1830
      %v2141 = vunpack.c.l.b16 %v1831
      %v2142 = vunpack.c.l.b16 %v1832
      %v2143 = vunpack.c.l.b16 %v1833
      %v2144 = vunpack.c.l.b16 %v1834
      %v2145 = vunpack.c.l.b16 %v1835
      %v2146 = vunpack.c.l.b16 %v1836
      %v2147 = vunpack.c.l.b16 %v1837
      %v2148 = vunpack.c.l.b16 %v1838
      %v2149 = vpack.c.b16 %v2134, %v2133
      %v2150 = vpack.c.b16 %v2136, %v2135
      %v2151 = vpack.c.b16 %v2138, %v2137
      %v2152 = vpack.c.b16 %v2140, %v2139
      %v2153 = vpack.c.b16 %v2142, %v2141
      %v2154 = vpack.c.b16 %v2144, %v2143
      %v2155 = vpack.c.b16 %v2146, %v2145
      %v2156 = vpack.c.b16 %v2148, %v2147
      %2165 = vmatprep.subr.bf16.mxu0 0
      %2166 = vmatpush1.bf16.msra.mxu0 %v2156
      %2167 = vmatprep.subr.bf16.mxu0 0
      %2168 = vmatpush1.bf16.msra.mxu0 %v2155
      %2169 = vmatprep.subr.bf16.mxu0 0
      %2170 = vmatpush1.bf16.msra.mxu0 %v2154
      %2171 = vmatprep.subr.bf16.mxu0 0
      %2172 = vmatpush1.bf16.msra.mxu0 %v2153
      %2173 = vmatprep.subr.bf16.mxu0 0
      %2174 = vmatpush1.bf16.msra.mxu0 %v2152
      %2175 = vmatprep.subr.bf16.mxu0 0
      %2176 = vmatpush1.bf16.msra.mxu0 %v2151
      %2177 = vmatprep.subr.bf16.mxu0 0
      %2178 = vmatpush1.bf16.msra.mxu0 %v2150
      %2179 = vmatprep.subr.bf16.mxu0 0
      %2180 = vmatpush1.bf16.msra.mxu0 %v2149
      %2181 = vmatprep.subr.bf16.mxu0 0
      %2182 = vmatpush2.bf16.msra.mxu0 0
      %2183 = vmatprep.subr.bf16.mxu0 0
      %2184 = vmatpush2.bf16.msra.mxu0 0
      %2185 = vmatprep.subr.bf16.mxu0 0
      %2186 = vmatpush2.bf16.msra.mxu0 0
      %2187 = vmatprep.subr.bf16.mxu0 0
      %2188 = vmatpush2.bf16.msra.mxu0 0
      %2189 = vmatprep.subr.bf16.mxu0 0
      %2190 = vmatpush2.bf16.msra.mxu0 0
      %2191 = vmatprep.subr.bf16.mxu0 0
      %2192 = vmatpush2.bf16.msra.mxu0 0
      %2193 = vmatprep.subr.bf16.mxu0 0
      %2194 = vmatpush2.bf16.msra.mxu0 0
      %2195 = vmatprep.subr.bf16.mxu0 0
      %2196 = vmatpush2.bf16.msra.mxu0 0
      %2197 = vmatprep.mubr.bf16.mxu0 0
      %2198 = vmatmul.mubr.bf16.gmra.mxu0 %v1949
      %v2199 = vpop.f32.mrf.mxu0
      %v2200 = vadd.f32 0.0, %v2199
      %v2201 = vpop.f32.mrf.mxu0
      %v2202 = vpop.f32.mrf.mxu0
      %v2203 = vadd.f32 0.0, %v2202
      %v2204 = vpop.f32.mrf.mxu0
      %2205 = vmatprep.mubr.bf16.mxu0 0
      %2206 = vmatmul.mubr.bf16.gmra.mxu0 %v1958
      %v2207 = vpop.f32.mrf.mxu0
      %v2208 = vadd.f32 0.0, %v2207
      %v2209 = vpop.f32.mrf.mxu0
      %v2210 = vpop.f32.mrf.mxu0
      %v2211 = vadd.f32 0.0, %v2210
      %v2212 = vpop.f32.mrf.mxu0
      %2213 = vmatprep.mubr.bf16.mxu0 0
      %2214 = vmatmul.mubr.bf16.gmra.mxu0 %v1967
      %v2215 = vpop.f32.mrf.mxu0
      %v2216 = vadd.f32 0.0, %v2215
      %v2217 = vpop.f32.mrf.mxu0
      %v2218 = vpop.f32.mrf.mxu0
      %v2219 = vadd.f32 0.0, %v2218
      %v2220 = vpop.f32.mrf.mxu0
      %2221 = vmatprep.mubr.bf16.mxu0 0
      %2222 = vmatmul.mubr.bf16.gmra.mxu0 %v1976
      %v2223 = vpop.f32.mrf.mxu0
      %v2224 = vadd.f32 0.0, %v2223
      %v2225 = vpop.f32.mrf.mxu0
      %v2226 = vpop.f32.mrf.mxu0
      %v2227 = vadd.f32 0.0, %v2226
      %v2228 = vpop.f32.mrf.mxu0
      %2229 = vmatprep.mubr.bf16.mxu0 0
      %2230 = vmatmul.mubr.bf16.gmra.mxu0 %v1985
      %v2231 = vpop.f32.mrf.mxu0
      %v2232 = vadd.f32 0.0, %v2231
      %v2233 = vpop.f32.mrf.mxu0
      %v2234 = vpop.f32.mrf.mxu0
      %v2235 = vadd.f32 0.0, %v2234
      %v2236 = vpop.f32.mrf.mxu0
      %2237 = vmatprep.mubr.bf16.mxu0 0
      %2238 = vmatmul.mubr.bf16.gmra.mxu0 %v1994
      %v2239 = vpop.f32.mrf.mxu0
      %v2240 = vadd.f32 0.0, %v2239
      %v2241 = vpop.f32.mrf.mxu0
      %v2242 = vpop.f32.mrf.mxu0
      %v2243 = vadd.f32 0.0, %v2242
      %v2244 = vpop.f32.mrf.mxu0
      %2245 = vmatprep.mubr.bf16.mxu0 0
      %2246 = vmatmul.mubr.bf16.gmra.mxu0 %v2003
      %v2247 = vpop.f32.mrf.mxu0
      %v2248 = vadd.f32 0.0, %v2247
      %v2249 = vpop.f32.mrf.mxu0
      %v2250 = vpop.f32.mrf.mxu0
      %v2251 = vadd.f32 0.0, %v2250
      %v2252 = vpop.f32.mrf.mxu0
      %2253 = vmatprep.mubr.bf16.mxu0 0
      %2254 = vmatmul.mubr.bf16.gmra.mxu0 %v2012
      %v2255 = vpop.f32.mrf.mxu0
      %v2256 = vadd.f32 0.0, %v2255
      %v2257 = vpop.f32.mrf.mxu0
      %v2258 = vpop.f32.mrf.mxu0
      %v2259 = vadd.f32 0.0, %v2258
      %v2260 = vpop.f32.mrf.mxu0
      %2261 = vmatprep.mubr.bf16.mxu0 0
      %2262 = vmatmul.mubr.bf16.gmra.mxu0 %v2021
      %v2263 = vpop.f32.mrf.mxu0
      %v2264 = vadd.f32 0.0, %v2263
      %v2265 = vpop.f32.mrf.mxu0
      %v2266 = vpop.f32.mrf.mxu0
      %v2267 = vadd.f32 0.0, %v2266
      %v2268 = vpop.f32.mrf.mxu0
      %2269 = vmatprep.mubr.bf16.mxu0 0
      %2270 = vmatmul.mubr.bf16.gmra.mxu0 %v2030
      %v2271 = vpop.f32.mrf.mxu0
      %v2272 = vadd.f32 0.0, %v2271
      %v2273 = vpop.f32.mrf.mxu0
      %v2274 = vpop.f32.mrf.mxu0
      %v2275 = vadd.f32 0.0, %v2274
      %v2276 = vpop.f32.mrf.mxu0
      %2277 = vmatprep.mubr.bf16.mxu0 0
      %2278 = vmatmul.mubr.bf16.gmra.mxu0 %v2039
      %v2279 = vpop.f32.mrf.mxu0
      %v2280 = vadd.f32 0.0, %v2279
      %v2281 = vpop.f32.mrf.mxu0
      %v2282 = vpop.f32.mrf.mxu0
      %v2283 = vadd.f32 0.0, %v2282
      %v2284 = vpop.f32.mrf.mxu0
      %2285 = vmatprep.mubr.bf16.mxu0 0
      %2286 = vmatmul.mubr.bf16.gmra.mxu0 %v2048
      %v2287 = vpop.f32.mrf.mxu0
      %v2288 = vadd.f32 0.0, %v2287
      %v2289 = vpop.f32.mrf.mxu0
      %v2290 = vpop.f32.mrf.mxu0
      %v2291 = vadd.f32 0.0, %v2290
      %v2292 = vpop.f32.mrf.mxu0
      %2293 = vmatprep.mubr.bf16.mxu0 0
      %2294 = vmatmul.mubr.bf16.gmra.mxu0 %v2057
      %v2295 = vpop.f32.mrf.mxu0
      %v2296 = vadd.f32 0.0, %v2295
      %v2297 = vpop.f32.mrf.mxu0
      %v2298 = vpop.f32.mrf.mxu0
      %v2299 = vadd.f32 0.0, %v2298
      %v2300 = vpop.f32.mrf.mxu0
      %2301 = vmatprep.mubr.bf16.mxu0 0
      %2302 = vmatmul.mubr.bf16.gmra.mxu0 %v2066
      %v2303 = vpop.f32.mrf.mxu0
      %v2304 = vadd.f32 0.0, %v2303
      %v2305 = vpop.f32.mrf.mxu0
      %v2306 = vpop.f32.mrf.mxu0
      %v2307 = vadd.f32 0.0, %v2306
      %v2308 = vpop.f32.mrf.mxu0
      %2309 = vmatprep.mubr.bf16.mxu0 0
      %2310 = vmatmul.mubr.bf16.gmra.mxu0 %v2075
      %v2311 = vpop.f32.mrf.mxu0
      %v2312 = vadd.f32 0.0, %v2311
      %v2313 = vpop.f32.mrf.mxu0
      %v2314 = vpop.f32.mrf.mxu0
      %v2315 = vadd.f32 0.0, %v2314
      %v2316 = vpop.f32.mrf.mxu0
      %2317 = vmatprep.mubr.bf16.mxu0 0
      %2318 = vmatmul.mubr.bf16.gmra.mxu0 %v2084
      %v2319 = vpop.f32.mrf.mxu0
      %v2320 = vadd.f32 0.0, %v2319
      %v2321 = vpop.f32.mrf.mxu0
      %v2322 = vpop.f32.mrf.mxu0
      %v2323 = vadd.f32 0.0, %v2322
      %v2324 = vpop.f32.mrf.mxu0
      %2325 = vmatprep.mubr.bf16.mxu0 0
      %2326 = vmatmul.mubr.bf16.gmra.mxu0 %v2093
      %v2327 = vpop.f32.mrf.mxu0
      %v2328 = vadd.f32 0.0, %v2327
      %v2329 = vpop.f32.mrf.mxu0
      %v2330 = vpop.f32.mrf.mxu0
      %v2331 = vadd.f32 0.0, %v2330
      %v2332 = vpop.f32.mrf.mxu0
      %2333 = vmatprep.mubr.bf16.mxu0 0
      %2334 = vmatmul.mubr.bf16.gmra.mxu0 %v2098
      %v2335 = vpop.f32.mrf.mxu0
      %v2336 = vadd.f32 0.0, %v2335
      %v2337 = vpop.f32.mrf.mxu0
      %v2338 = vpop.f32.mrf.mxu0
      %v2339 = vadd.f32 0.0, %v2338
      %v2340 = vpop.f32.mrf.mxu0
      %2341 = vdwg.mxu0
      %v2342 = vadd.f32 %v1749, %v2200
      %v2343 = vadd.f32 %v1750, %v2203
      %v2344 = vadd.f32 %v1751, %v2208
      %v2345 = vadd.f32 %v1752, %v2211
      %v2346 = vadd.f32 %v1753, %v2216
      %v2347 = vadd.f32 %v1754, %v2219
      %v2348 = vadd.f32 %v1755, %v2224
      %v2349 = vadd.f32 %v1756, %v2227
      %v2350 = vadd.f32 %v1757, %v2232
      %v2351 = vadd.f32 %v1758, %v2235
      %v2352 = vadd.f32 %v1759, %v2240
      %v2353 = vadd.f32 %v1760, %v2243
      %v2354 = vadd.f32 %v1761, %v2248
      %v2355 = vadd.f32 %v1762, %v2251
      %v2356 = vadd.f32 %v1763, %v2256
      %v2357 = vadd.f32 %v1764, %v2259
      %v2358 = vadd.f32 %v1765, %v2264
      %v2359 = vadd.f32 %v1766, %v2267
      %v2360 = vadd.f32 %v1767, %v2272
      %v2361 = vadd.f32 %v1768, %v2275
      %v2362 = vadd.f32 %v1769, %v2280
      %v2363 = vadd.f32 %v1770, %v2283
      %v2364 = vadd.f32 %v1771, %v2288
      %v2365 = vadd.f32 %v1772, %v2291
      %v2366 = vadd.f32 %v1773, %v2296
      %v2367 = vadd.f32 %v1774, %v2299
      %v2368 = vadd.f32 %v1775, %v2304
      %v2369 = vadd.f32 %v1776, %v2307
      %v2370 = vadd.f32 %v1777, %v2312
      %v2371 = vadd.f32 %v1778, %v2315
      %v2372 = vadd.f32 %v1779, %v2320
      %v2373 = vadd.f32 %v1780, %v2323
      %v2374 = vadd.f32 %v1781, %v2328
      %v2375 = vadd.f32 %v1782, %v2331
      %v2376 = vadd.f32 %v1783, %v2336
      %v2377 = vadd.f32 %v1784, %v2339
      %v2378 = vld [vmem:[%s192 + $0x8] sm:$0xc]
      %s2379 = scalar_lea.vmem %s1, 320
      %v2380 = vld [vmem:[%s2379] sm:$0xf]
      %v2381 = vld [vmem:[%s2379 + $0x4] sm:$0xf]
      %v2382 = vld [vmem:[%s2379 + $0x8] sm:$0xf]
      %v2383 = vld [vmem:[%s2379 + $0xc] sm:$0xf]
      %v2384 = vld [vmem:[%s2379 + $0x10] sm:$0xf]
      %v2385 = vld [vmem:[%s2379 + $0x14] sm:$0xf]
      %v2386 = vld [vmem:[%s2379 + $0x18] sm:$0xf]
      %v2387 = vld [vmem:[%s2379 + $0x1c] sm:$0xf]
      %v2388 = vld [vmem:[%s2379 + $0x20] sm:$0xf]
      %v2389 = vld [vmem:[%s2379 + $0x24] sm:$0xf]
      %v2390 = vld [vmem:[%s2379 + $0x28] sm:$0xf]
      %v2391 = vld [vmem:[%s2379 + $0x2c] sm:$0xf]
      %v2392 = vld [vmem:[%s2379 + $0x30] sm:$0xf]
      %v2393 = vld [vmem:[%s2379 + $0x34] sm:$0xf]
      %v2394 = vld [vmem:[%s2379 + $0x38] sm:$0xf]
      %v2395 = vld [vmem:[%s2379 + $0x3c] sm:$0xf]
      %v2397 = vunpack.c.l.b16 %v2378
      %v2398 = vpack.c.b16 %v1877, %v2397
      %vm2399 = vcmask 1045504
      %v2400 = vrot.slane %v2398, 2
      %v2401 = vrot.slane %v1914, 2
      %v2402 = vsel %vm2399, %v2400, %v2401
      %v2403 = vrot.slane %v1915, 2
      %v2404 = vsel %vm2399, %v2401, %v2403
      %v2405 = vrot.slane %v1916, 2
      %v2406 = vsel %vm2399, %v2403, %v2405
      %v2407 = vrot.slane %v1917, 2
      %v2408 = vsel %vm2399, %v2405, %v2407
      %v2409 = vrot.slane %v1918, 2
      %v2410 = vsel %vm2399, %v2407, %v2409
      %v2411 = vrot.slane %v1919, 2
      %v2412 = vsel %vm2399, %v2409, %v2411
      %v2413 = vrot.slane %v1920, 2
      %v2414 = vsel %vm2399, %v2411, %v2413
      %v2415 = vrot.slane %v1921, 2
      %v2416 = vsel %vm2399, %v2413, %v2415
      %v2417 = vrot.slane %v1922, 2
      %v2418 = vsel %vm2399, %v2415, %v2417
      %v2419 = vrot.slane %v1923, 2
      %v2420 = vsel %vm2399, %v2417, %v2419
      %v2421 = vrot.slane %v1924, 2
      %v2422 = vsel %vm2399, %v2419, %v2421
      %v2423 = vrot.slane %v1925, 2
      %v2424 = vsel %vm2399, %v2421, %v2423
      %v2425 = vrot.slane %v1926, 2
      %v2426 = vsel %vm2399, %v2423, %v2425
      %v2427 = vrot.slane %v1927, 2
      %v2428 = vsel %vm2399, %v2425, %v2427
      %v2429 = vrot.slane %v1928, 2
      %v2430 = vsel %vm2399, %v2427, %v2429
      %v2431 = vrot.slane %v1929, 2
      %v2432 = vsel %vm2399, %v2429, %v2431
      %v2433 = vrot.slane %v1930, 2
      %v2434 = vsel %vm2399, %v2431, %v2433
      %v2435 = vrot.slane %v1931, 2
      %v2436 = vsel %vm2399, %v2433, %v2435
      %v2471 = vunpack.c.l.b16 %v2380
      %v2472 = vunpack.c.l.b16 %v2381
      %v2473 = vunpack.c.l.b16 %v2382
      %v2474 = vunpack.c.l.b16 %v2383
      %v2475 = vunpack.c.l.b16 %v2384
      %v2476 = vunpack.c.l.b16 %v2385
      %v2477 = vunpack.c.l.b16 %v2386
      %v2478 = vunpack.c.l.b16 %v2387
      %v2479 = vunpack.c.l.b16 %v2388
      %v2480 = vunpack.c.l.b16 %v2389
      %v2481 = vunpack.c.l.b16 %v2390
      %v2482 = vunpack.c.l.b16 %v2391
      %v2483 = vunpack.c.l.b16 %v2392
      %v2484 = vunpack.c.l.b16 %v2393
      %v2485 = vunpack.c.l.b16 %v2394
      %v2486 = vunpack.c.l.b16 %v2395
      %v2487 = vpack.c.b16 %v2472, %v2471
      %v2488 = vpack.c.b16 %v2474, %v2473
      %v2489 = vpack.c.b16 %v2476, %v2475
      %v2490 = vpack.c.b16 %v2478, %v2477
      %v2491 = vpack.c.b16 %v2480, %v2479
      %v2492 = vpack.c.b16 %v2482, %v2481
      %v2493 = vpack.c.b16 %v2484, %v2483
      %v2494 = vpack.c.b16 %v2486, %v2485
      %2503 = vmatprep.subr.bf16.mxu0 0
      %2504 = vmatpush1.bf16.msra.mxu0 %v2494
      %2505 = vmatprep.subr.bf16.mxu0 0
      %2506 = vmatpush1.bf16.msra.mxu0 %v2493
      %2507 = vmatprep.subr.bf16.mxu0 0
      %2508 = vmatpush1.bf16.msra.mxu0 %v2492
      %2509 = vmatprep.subr.bf16.mxu0 0
      %2510 = vmatpush1.bf16.msra.mxu0 %v2491
      %2511 = vmatprep.subr.bf16.mxu0 0
      %2512 = vmatpush1.bf16.msra.mxu0 %v2490
      %2513 = vmatprep.subr.bf16.mxu0 0
      %2514 = vmatpush1.bf16.msra.mxu0 %v2489
      %2515 = vmatprep.subr.bf16.mxu0 0
      %2516 = vmatpush1.bf16.msra.mxu0 %v2488
      %2517 = vmatprep.subr.bf16.mxu0 0
      %2518 = vmatpush1.bf16.msra.mxu0 %v2487
      %2519 = vmatprep.subr.bf16.mxu0 0
      %2520 = vmatpush2.bf16.msra.mxu0 0
      %2521 = vmatprep.subr.bf16.mxu0 0
      %2522 = vmatpush2.bf16.msra.mxu0 0
      %2523 = vmatprep.subr.bf16.mxu0 0
      %2524 = vmatpush2.bf16.msra.mxu0 0
      %2525 = vmatprep.subr.bf16.mxu0 0
      %2526 = vmatpush2.bf16.msra.mxu0 0
      %2527 = vmatprep.subr.bf16.mxu0 0
      %2528 = vmatpush2.bf16.msra.mxu0 0
      %2529 = vmatprep.subr.bf16.mxu0 0
      %2530 = vmatpush2.bf16.msra.mxu0 0
      %2531 = vmatprep.subr.bf16.mxu0 0
      %2532 = vmatpush2.bf16.msra.mxu0 0
      %2533 = vmatprep.subr.bf16.mxu0 0
      %2534 = vmatpush2.bf16.msra.mxu0 0
      %2535 = vmatprep.mubr.bf16.mxu0 0
      %2536 = vmatmul.mubr.bf16.gmra.mxu0 %v2402
      %v2537 = vpop.f32.mrf.mxu0
      %v2538 = vadd.f32 0.0, %v2537
      %v2539 = vpop.f32.mrf.mxu0
      %v2540 = vpop.f32.mrf.mxu0
      %v2541 = vadd.f32 0.0, %v2540
      %v2542 = vpop.f32.mrf.mxu0
      %2543 = vmatprep.mubr.bf16.mxu0 0
      %2544 = vmatmul.mubr.bf16.gmra.mxu0 %v2404
      %v2545 = vpop.f32.mrf.mxu0
      %v2546 = vadd.f32 0.0, %v2545
      %v2547 = vpop.f32.mrf.mxu0
      %v2548 = vpop.f32.mrf.mxu0
      %v2549 = vadd.f32 0.0, %v2548
      %v2550 = vpop.f32.mrf.mxu0
      %2551 = vmatprep.mubr.bf16.mxu0 0
      %2552 = vmatmul.mubr.bf16.gmra.mxu0 %v2406
      %v2553 = vpop.f32.mrf.mxu0
      %v2554 = vadd.f32 0.0, %v2553
      %v2555 = vpop.f32.mrf.mxu0
      %v2556 = vpop.f32.mrf.mxu0
      %v2557 = vadd.f32 0.0, %v2556
      %v2558 = vpop.f32.mrf.mxu0
      %2559 = vmatprep.mubr.bf16.mxu0 0
      %2560 = vmatmul.mubr.bf16.gmra.mxu0 %v2408
      %v2561 = vpop.f32.mrf.mxu0
      %v2562 = vadd.f32 0.0, %v2561
      %v2563 = vpop.f32.mrf.mxu0
      %v2564 = vpop.f32.mrf.mxu0
      %v2565 = vadd.f32 0.0, %v2564
      %v2566 = vpop.f32.mrf.mxu0
      %2567 = vmatprep.mubr.bf16.mxu0 0
      %2568 = vmatmul.mubr.bf16.gmra.mxu0 %v2410
      %v2569 = vpop.f32.mrf.mxu0
      %v2570 = vadd.f32 0.0, %v2569
      %v2571 = vpop.f32.mrf.mxu0
      %v2572 = vpop.f32.mrf.mxu0
      %v2573 = vadd.f32 0.0, %v2572
      %v2574 = vpop.f32.mrf.mxu0
      %2575 = vmatprep.mubr.bf16.mxu0 0
      %2576 = vmatmul.mubr.bf16.gmra.mxu0 %v2412
      %v2577 = vpop.f32.mrf.mxu0
      %v2578 = vadd.f32 0.0, %v2577
      %v2579 = vpop.f32.mrf.mxu0
      %v2580 = vpop.f32.mrf.mxu0
      %v2581 = vadd.f32 0.0, %v2580
      %v2582 = vpop.f32.mrf.mxu0
      %2583 = vmatprep.mubr.bf16.mxu0 0
      %2584 = vmatmul.mubr.bf16.gmra.mxu0 %v2414
      %v2585 = vpop.f32.mrf.mxu0
      %v2586 = vadd.f32 0.0, %v2585
      %v2587 = vpop.f32.mrf.mxu0
      %v2588 = vpop.f32.mrf.mxu0
      %v2589 = vadd.f32 0.0, %v2588
      %v2590 = vpop.f32.mrf.mxu0
      %2591 = vmatprep.mubr.bf16.mxu0 0
      %2592 = vmatmul.mubr.bf16.gmra.mxu0 %v2416
      %v2593 = vpop.f32.mrf.mxu0
      %v2594 = vadd.f32 0.0, %v2593
      %v2595 = vpop.f32.mrf.mxu0
      %v2596 = vpop.f32.mrf.mxu0
      %v2597 = vadd.f32 0.0, %v2596
      %v2598 = vpop.f32.mrf.mxu0
      %2599 = vmatprep.mubr.bf16.mxu0 0
      %2600 = vmatmul.mubr.bf16.gmra.mxu0 %v2418
      %v2601 = vpop.f32.mrf.mxu0
      %v2602 = vadd.f32 0.0, %v2601
      %v2603 = vpop.f32.mrf.mxu0
      %v2604 = vpop.f32.mrf.mxu0
      %v2605 = vadd.f32 0.0, %v2604
      %v2606 = vpop.f32.mrf.mxu0
      %2607 = vmatprep.mubr.bf16.mxu0 0
      %2608 = vmatmul.mubr.bf16.gmra.mxu0 %v2420
      %v2609 = vpop.f32.mrf.mxu0
      %v2610 = vadd.f32 0.0, %v2609
      %v2611 = vpop.f32.mrf.mxu0
      %v2612 = vpop.f32.mrf.mxu0
      %v2613 = vadd.f32 0.0, %v2612
      %v2614 = vpop.f32.mrf.mxu0
      %2615 = vmatprep.mubr.bf16.mxu0 0
      %2616 = vmatmul.mubr.bf16.gmra.mxu0 %v2422
      %v2617 = vpop.f32.mrf.mxu0
      %v2618 = vadd.f32 0.0, %v2617
      %v2619 = vpop.f32.mrf.mxu0
      %v2620 = vpop.f32.mrf.mxu0
      %v2621 = vadd.f32 0.0, %v2620
      %v2622 = vpop.f32.mrf.mxu0
      %2623 = vmatprep.mubr.bf16.mxu0 0
      %2624 = vmatmul.mubr.bf16.gmra.mxu0 %v2424
      %v2625 = vpop.f32.mrf.mxu0
      %v2626 = vadd.f32 0.0, %v2625
      %v2627 = vpop.f32.mrf.mxu0
      %v2628 = vpop.f32.mrf.mxu0
      %v2629 = vadd.f32 0.0, %v2628
      %v2630 = vpop.f32.mrf.mxu0
      %2631 = vmatprep.mubr.bf16.mxu0 0
      %2632 = vmatmul.mubr.bf16.gmra.mxu0 %v2426
      %v2633 = vpop.f32.mrf.mxu0
      %v2634 = vadd.f32 0.0, %v2633
      %v2635 = vpop.f32.mrf.mxu0
      %v2636 = vpop.f32.mrf.mxu0
      %v2637 = vadd.f32 0.0, %v2636
      %v2638 = vpop.f32.mrf.mxu0
      %2639 = vmatprep.mubr.bf16.mxu0 0
      %2640 = vmatmul.mubr.bf16.gmra.mxu0 %v2428
      %v2641 = vpop.f32.mrf.mxu0
      %v2642 = vadd.f32 0.0, %v2641
      %v2643 = vpop.f32.mrf.mxu0
      %v2644 = vpop.f32.mrf.mxu0
      %v2645 = vadd.f32 0.0, %v2644
      %v2646 = vpop.f32.mrf.mxu0
      %2647 = vmatprep.mubr.bf16.mxu0 0
      %2648 = vmatmul.mubr.bf16.gmra.mxu0 %v2430
      %v2649 = vpop.f32.mrf.mxu0
      %v2650 = vadd.f32 0.0, %v2649
      %v2651 = vpop.f32.mrf.mxu0
      %v2652 = vpop.f32.mrf.mxu0
      %v2653 = vadd.f32 0.0, %v2652
      %v2654 = vpop.f32.mrf.mxu0
      %2655 = vmatprep.mubr.bf16.mxu0 0
      %2656 = vmatmul.mubr.bf16.gmra.mxu0 %v2432
      %v2657 = vpop.f32.mrf.mxu0
      %v2658 = vadd.f32 0.0, %v2657
      %v2659 = vpop.f32.mrf.mxu0
      %v2660 = vpop.f32.mrf.mxu0
      %v2661 = vadd.f32 0.0, %v2660
      %v2662 = vpop.f32.mrf.mxu0
      %2663 = vmatprep.mubr.bf16.mxu0 0
      %2664 = vmatmul.mubr.bf16.gmra.mxu0 %v2434
      %v2665 = vpop.f32.mrf.mxu0
      %v2666 = vadd.f32 0.0, %v2665
      %v2667 = vpop.f32.mrf.mxu0
      %v2668 = vpop.f32.mrf.mxu0
      %v2669 = vadd.f32 0.0, %v2668
      %v2670 = vpop.f32.mrf.mxu0
      %2671 = vmatprep.mubr.bf16.mxu0 0
      %2672 = vmatmul.mubr.bf16.gmra.mxu0 %v2436
      %v2673 = vpop.f32.mrf.mxu0
      %v2674 = vadd.f32 0.0, %v2673
      %v2675 = vpop.f32.mrf.mxu0
      %v2676 = vpop.f32.mrf.mxu0
      %v2677 = vadd.f32 0.0, %v2676
      %v2678 = vpop.f32.mrf.mxu0
      %2679 = vdwg.mxu0
      %v2680 = vadd.f32 %v2342, %v2538
      %v2681 = vadd.f32 %v2343, %v2541
      %v2682 = vadd.f32 %v2344, %v2546
      %v2683 = vadd.f32 %v2345, %v2549
      %v2684 = vadd.f32 %v2346, %v2554
      %v2685 = vadd.f32 %v2347, %v2557
      %v2686 = vadd.f32 %v2348, %v2562
      %v2687 = vadd.f32 %v2349, %v2565
      %v2688 = vadd.f32 %v2350, %v2570
      %v2689 = vadd.f32 %v2351, %v2573
      %v2690 = vadd.f32 %v2352, %v2578
      %v2691 = vadd.f32 %v2353, %v2581
      %v2692 = vadd.f32 %v2354, %v2586
      %v2693 = vadd.f32 %v2355, %v2589
      %v2694 = vadd.f32 %v2356, %v2594
      %v2695 = vadd.f32 %v2357, %v2597
      %v2696 = vadd.f32 %v2358, %v2602
      %v2697 = vadd.f32 %v2359, %v2605
      %v2698 = vadd.f32 %v2360, %v2610
      %v2699 = vadd.f32 %v2361, %v2613
      %v2700 = vadd.f32 %v2362, %v2618
      %v2701 = vadd.f32 %v2363, %v2621
      %v2702 = vadd.f32 %v2364, %v2626
      %v2703 = vadd.f32 %v2365, %v2629
      %v2704 = vadd.f32 %v2366, %v2634
      %v2705 = vadd.f32 %v2367, %v2637
      %v2706 = vadd.f32 %v2368, %v2642
      %v2707 = vadd.f32 %v2369, %v2645
      %v2708 = vadd.f32 %v2370, %v2650
      %v2709 = vadd.f32 %v2371, %v2653
      %v2710 = vadd.f32 %v2372, %v2658
      %v2711 = vadd.f32 %v2373, %v2661
      %v2712 = vadd.f32 %v2374, %v2666
      %v2713 = vadd.f32 %v2375, %v2669
      %v2714 = vadd.f32 %v2376, %v2674
      %v2715 = vadd.f32 %v2377, %v2677
      %v2716 = vld [vmem:[%s192 + $0x10] sm:$0xc]
      %v2717 = vld [vmem:[%s192 + $0x14] sm:$0xf]
      %v2718 = vld [vmem:[%s192 + $0x18] sm:$0xf]
      %v2719 = vld [vmem:[%s192 + $0x1c] sm:$0xf]
      %v2720 = vld [vmem:[%s192 + $0x20] sm:$0xf]
      %v2721 = vld [vmem:[%s192 + $0x24] sm:$0xf]
      %v2722 = vld [vmem:[%s192 + $0x28] sm:$0xf]
      %v2723 = vld [vmem:[%s192 + $0x2c] sm:$0xf]
      %v2724 = vld [vmem:[%s192 + $0x30] sm:$0xf]
      %v2725 = vld [vmem:[%s192 + $0x34] sm:$0xf]
      %v2726 = vld [vmem:[%s192 + $0x38] sm:$0xf]
      %v2727 = vld [vmem:[%s192 + $0x3c] sm:$0xf]
      %v2728 = vld [vmem:[%s192 + $0x40] sm:$0xf]
      %v2729 = vld [vmem:[%s192 + $0x44] sm:$0xf]
      %v2730 = vld [vmem:[%s192 + $0x48] sm:$0xf]
      %v2731 = vld [vmem:[%s192 + $0x4c] sm:$0xf]
      %v2732 = vld [vmem:[%s192 + $0x50] sm:$0xf]
      %v2733 = vld [vmem:[%s192 + $0x54] sm:$0xf]
      %v2734 = vld [vmem:[%s192 + $0x58] sm:$0xf]
      %v2735 = vld [vmem:[%s192 + $0x5c] sm:$0xf]
      %v2736 = vld [vmem:[%s192 + $0x60] sm:$0xf]
      %v2737 = vld [vmem:[%s192 + $0x64] sm:$0xf]
      %v2738 = vld [vmem:[%s192 + $0x68] sm:$0xf]
      %v2739 = vld [vmem:[%s192 + $0x6c] sm:$0xf]
      %v2740 = vld [vmem:[%s192 + $0x70] sm:$0xf]
      %v2741 = vld [vmem:[%s192 + $0x74] sm:$0xf]
      %v2742 = vld [vmem:[%s192 + $0x78] sm:$0xf]
      %v2743 = vld [vmem:[%s192 + $0x7c] sm:$0xf]
      %v2744 = vld [vmem:[%s192 + $0x80] sm:$0xf]
      %v2745 = vld [vmem:[%s192 + $0x84] sm:$0xf]
      %v2746 = vld [vmem:[%s192 + $0x88] sm:$0xf]
      %v2747 = vld [vmem:[%s192 + $0x8c] sm:$0xf]
      %v2748 = vld [vmem:[%s192 + $0x90] sm:$0xf]
      %v2749 = vld [vmem:[%s192 + $0x94] sm:$0xf]
      %v2750 = vld [vmem:[%s192 + $0x98] sm:$0xf]
      %v2751 = vld [vmem:[%s192 + $0x9c] sm:$0xf]
      %v2752 = vld [vmem:[%s192 + $0xa0] sm:$0x1]
      %s2753 = scalar_lea.vmem %s1, 384
      %v2754 = vld [vmem:[%s2753] sm:$0xf]
      %v2755 = vld [vmem:[%s2753 + $0x4] sm:$0xf]
      %v2756 = vld [vmem:[%s2753 + $0x8] sm:$0xf]
      %v2757 = vld [vmem:[%s2753 + $0xc] sm:$0xf]
      %v2758 = vld [vmem:[%s2753 + $0x10] sm:$0xf]
      %v2759 = vld [vmem:[%s2753 + $0x14] sm:$0xf]
      %v2760 = vld [vmem:[%s2753 + $0x18] sm:$0xf]
      %v2761 = vld [vmem:[%s2753 + $0x1c] sm:$0xf]
      %v2762 = vld [vmem:[%s2753 + $0x20] sm:$0xf]
      %v2763 = vld [vmem:[%s2753 + $0x24] sm:$0xf]
      %v2764 = vld [vmem:[%s2753 + $0x28] sm:$0xf]
      %v2765 = vld [vmem:[%s2753 + $0x2c] sm:$0xf]
      %v2766 = vld [vmem:[%s2753 + $0x30] sm:$0xf]
      %v2767 = vld [vmem:[%s2753 + $0x34] sm:$0xf]
      %v2768 = vld [vmem:[%s2753 + $0x38] sm:$0xf]
      %v2769 = vld [vmem:[%s2753 + $0x3c] sm:$0xf]
      %v2807 = vunpack.c.l.b16 %v2716
      %v2808 = vunpack.c.l.b16 %v2717
      %v2809 = vunpack.c.l.b16 %v2718
      %v2810 = vunpack.c.l.b16 %v2719
      %v2811 = vunpack.c.l.b16 %v2720
      %v2812 = vunpack.c.l.b16 %v2721
      %v2813 = vunpack.c.l.b16 %v2722
      %v2814 = vunpack.c.l.b16 %v2723
      %v2815 = vunpack.c.l.b16 %v2724
      %v2816 = vunpack.c.l.b16 %v2725
      %v2817 = vunpack.c.l.b16 %v2726
      %v2818 = vunpack.c.l.b16 %v2727
      %v2819 = vunpack.c.l.b16 %v2728
      %v2820 = vunpack.c.l.b16 %v2729
      %v2821 = vunpack.c.l.b16 %v2730
      %v2822 = vunpack.c.l.b16 %v2731
      %v2823 = vunpack.c.l.b16 %v2732
      %v2824 = vunpack.c.l.b16 %v2733
      %v2825 = vunpack.c.l.b16 %v2734
      %v2826 = vunpack.c.l.b16 %v2735
      %v2827 = vunpack.c.l.b16 %v2736
      %v2828 = vunpack.c.l.b16 %v2737
      %v2829 = vunpack.c.l.b16 %v2738
      %v2830 = vunpack.c.l.b16 %v2739
      %v2831 = vunpack.c.l.b16 %v2740
      %v2832 = vunpack.c.l.b16 %v2741
      %v2833 = vunpack.c.l.b16 %v2742
      %v2834 = vunpack.c.l.b16 %v2743
      %v2835 = vunpack.c.l.b16 %v2744
      %v2836 = vunpack.c.l.b16 %v2745
      %v2837 = vunpack.c.l.b16 %v2746
      %v2838 = vunpack.c.l.b16 %v2747
      %v2839 = vunpack.c.l.b16 %v2748
      %v2840 = vunpack.c.l.b16 %v2749
      %v2841 = vunpack.c.l.b16 %v2750
      %v2842 = vunpack.c.l.b16 %v2751
      %v2843 = vunpack.c.l.b16 %v2752
      %v2844 = vpack.c.b16 %v2808, %v2807
      %v2845 = vpack.c.b16 %v2810, %v2809
      %v2846 = vpack.c.b16 %v2812, %v2811
      %v2847 = vpack.c.b16 %v2814, %v2813
      %v2848 = vpack.c.b16 %v2816, %v2815
      %v2849 = vpack.c.b16 %v2818, %v2817
      %v2850 = vpack.c.b16 %v2820, %v2819
      %v2851 = vpack.c.b16 %v2822, %v2821
      %v2852 = vpack.c.b16 %v2824, %v2823
      %v2853 = vpack.c.b16 %v2826, %v2825
      %v2854 = vpack.c.b16 %v2828, %v2827
      %v2855 = vpack.c.b16 %v2830, %v2829
      %v2856 = vpack.c.b16 %v2832, %v2831
      %v2857 = vpack.c.b16 %v2834, %v2833
      %v2858 = vpack.c.b16 %v2836, %v2835
      %v2859 = vpack.c.b16 %v2838, %v2837
      %v2860 = vpack.c.b16 %v2840, %v2839
      %v2861 = vpack.c.b16 %v2842, %v2841
      %v2862 = vpack.c.b16 %v2843, %v2843
      %v2863 = vrot.slane %v2844, 2
      %v2864 = vrot.slane %v2845, 2
      %v2865 = vsel %vm2399, %v2863, %v2864
      %v2866 = vrot.slane %v2846, 2
      %v2867 = vsel %vm2399, %v2864, %v2866
      %v2868 = vrot.slane %v2847, 2
      %v2869 = vsel %vm2399, %v2866, %v2868
      %v2870 = vrot.slane %v2848, 2
      %v2871 = vsel %vm2399, %v2868, %v2870
      %v2872 = vrot.slane %v2849, 2
      %v2873 = vsel %vm2399, %v2870, %v2872
      %v2874 = vrot.slane %v2850, 2
      %v2875 = vsel %vm2399, %v2872, %v2874
      %v2876 = vrot.slane %v2851, 2
      %v2877 = vsel %vm2399, %v2874, %v2876
      %v2878 = vrot.slane %v2852, 2
      %v2879 = vsel %vm2399, %v2876, %v2878
      %v2880 = vrot.slane %v2853, 2
      %v2881 = vsel %vm2399, %v2878, %v2880
      %v2882 = vrot.slane %v2854, 2
      %v2883 = vsel %vm2399, %v2880, %v2882
      %v2884 = vrot.slane %v2855, 2
      %v2885 = vsel %vm2399, %v2882, %v2884
      %v2886 = vrot.slane %v2856, 2
      %v2887 = vsel %vm2399, %v2884, %v2886
      %v2888 = vrot.slane %v2857, 2
      %v2889 = vsel %vm2399, %v2886, %v2888
      %v2890 = vrot.slane %v2858, 2
      %v2891 = vsel %vm2399, %v2888, %v2890
      %v2892 = vrot.slane %v2859, 2
      %v2893 = vsel %vm2399, %v2890, %v2892
      %v2894 = vrot.slane %v2860, 2
      %v2895 = vsel %vm2399, %v2892, %v2894
      %v2896 = vrot.slane %v2861, 2
      %v2897 = vsel %vm2399, %v2894, %v2896
      %v2898 = vrot.slane %v2862, 2
      %v2899 = vsel %vm2399, %v2896, %v2898
      %v2934 = vunpack.c.l.b16 %v2754
      %v2935 = vunpack.c.l.b16 %v2755
      %v2936 = vunpack.c.l.b16 %v2756
      %v2937 = vunpack.c.l.b16 %v2757
      %v2938 = vunpack.c.l.b16 %v2758
      %v2939 = vunpack.c.l.b16 %v2759
      %v2940 = vunpack.c.l.b16 %v2760
      %v2941 = vunpack.c.l.b16 %v2761
      %v2942 = vunpack.c.l.b16 %v2762
      %v2943 = vunpack.c.l.b16 %v2763
      %v2944 = vunpack.c.l.b16 %v2764
      %v2945 = vunpack.c.l.b16 %v2765
      %v2946 = vunpack.c.l.b16 %v2766
      %v2947 = vunpack.c.l.b16 %v2767
      %v2948 = vunpack.c.l.b16 %v2768
      %v2949 = vunpack.c.l.b16 %v2769
      %v2950 = vpack.c.b16 %v2935, %v2934
      %v2951 = vpack.c.b16 %v2937, %v2936
      %v2952 = vpack.c.b16 %v2939, %v2938
      %v2953 = vpack.c.b16 %v2941, %v2940
      %v2954 = vpack.c.b16 %v2943, %v2942
      %v2955 = vpack.c.b16 %v2945, %v2944
      %v2956 = vpack.c.b16 %v2947, %v2946
      %v2957 = vpack.c.b16 %v2949, %v2948
      %2966 = vmatprep.subr.bf16.mxu0 0
      %2967 = vmatpush1.bf16.msra.mxu0 %v2957
      %2968 = vmatprep.subr.bf16.mxu0 0
      %2969 = vmatpush1.bf16.msra.mxu0 %v2956
      %2970 = vmatprep.subr.bf16.mxu0 0
      %2971 = vmatpush1.bf16.msra.mxu0 %v2955
      %2972 = vmatprep.subr.bf16.mxu0 0
      %2973 = vmatpush1.bf16.msra.mxu0 %v2954
      %2974 = vmatprep.subr.bf16.mxu0 0
      %2975 = vmatpush1.bf16.msra.mxu0 %v2953
      %2976 = vmatprep.subr.bf16.mxu0 0
      %2977 = vmatpush1.bf16.msra.mxu0 %v2952
      %2978 = vmatprep.subr.bf16.mxu0 0
      %2979 = vmatpush1.bf16.msra.mxu0 %v2951
      %2980 = vmatprep.subr.bf16.mxu0 0
      %2981 = vmatpush1.bf16.msra.mxu0 %v2950
      %2982 = vmatprep.subr.bf16.mxu0 0
      %2983 = vmatpush2.bf16.msra.mxu0 0
      %2984 = vmatprep.subr.bf16.mxu0 0
      %2985 = vmatpush2.bf16.msra.mxu0 0
      %2986 = vmatprep.subr.bf16.mxu0 0
      %2987 = vmatpush2.bf16.msra.mxu0 0
      %2988 = vmatprep.subr.bf16.mxu0 0
      %2989 = vmatpush2.bf16.msra.mxu0 0
      %2990 = vmatprep.subr.bf16.mxu0 0
      %2991 = vmatpush2.bf16.msra.mxu0 0
      %2992 = vmatprep.subr.bf16.mxu0 0
      %2993 = vmatpush2.bf16.msra.mxu0 0
      %2994 = vmatprep.subr.bf16.mxu0 0
      %2995 = vmatpush2.bf16.msra.mxu0 0
      %2996 = vmatprep.subr.bf16.mxu0 0
      %2997 = vmatpush2.bf16.msra.mxu0 0
      %2998 = vmatprep.mubr.bf16.mxu0 0
      %2999 = vmatmul.mubr.bf16.gmra.mxu0 %v2865
      %v3000 = vpop.f32.mrf.mxu0
      %v3001 = vadd.f32 0.0, %v3000
      %v3002 = vpop.f32.mrf.mxu0
      %v3003 = vpop.f32.mrf.mxu0
      %v3004 = vadd.f32 0.0, %v3003
      %v3005 = vpop.f32.mrf.mxu0
      %3006 = vmatprep.mubr.bf16.mxu0 0
      %3007 = vmatmul.mubr.bf16.gmra.mxu0 %v2867
      %v3008 = vpop.f32.mrf.mxu0
      %v3009 = vadd.f32 0.0, %v3008
      %v3010 = vpop.f32.mrf.mxu0
      %v3011 = vpop.f32.mrf.mxu0
      %v3012 = vadd.f32 0.0, %v3011
      %v3013 = vpop.f32.mrf.mxu0
      %3014 = vmatprep.mubr.bf16.mxu0 0
      %3015 = vmatmul.mubr.bf16.gmra.mxu0 %v2869
      %v3016 = vpop.f32.mrf.mxu0
      %v3017 = vadd.f32 0.0, %v3016
      %v3018 = vpop.f32.mrf.mxu0
      %v3019 = vpop.f32.mrf.mxu0
      %v3020 = vadd.f32 0.0, %v3019
      %v3021 = vpop.f32.mrf.mxu0
      %3022 = vmatprep.mubr.bf16.mxu0 0
      %3023 = vmatmul.mubr.bf16.gmra.mxu0 %v2871
      %v3024 = vpop.f32.mrf.mxu0
      %v3025 = vadd.f32 0.0, %v3024
      %v3026 = vpop.f32.mrf.mxu0
      %v3027 = vpop.f32.mrf.mxu0
      %v3028 = vadd.f32 0.0, %v3027
      %v3029 = vpop.f32.mrf.mxu0
      %3030 = vmatprep.mubr.bf16.mxu0 0
      %3031 = vmatmul.mubr.bf16.gmra.mxu0 %v2873
      %v3032 = vpop.f32.mrf.mxu0
      %v3033 = vadd.f32 0.0, %v3032
      %v3034 = vpop.f32.mrf.mxu0
      %v3035 = vpop.f32.mrf.mxu0
      %v3036 = vadd.f32 0.0, %v3035
      %v3037 = vpop.f32.mrf.mxu0
      %3038 = vmatprep.mubr.bf16.mxu0 0
      %3039 = vmatmul.mubr.bf16.gmra.mxu0 %v2875
      %v3040 = vpop.f32.mrf.mxu0
      %v3041 = vadd.f32 0.0, %v3040
      %v3042 = vpop.f32.mrf.mxu0
      %v3043 = vpop.f32.mrf.mxu0
      %v3044 = vadd.f32 0.0, %v3043
      %v3045 = vpop.f32.mrf.mxu0
      %3046 = vmatprep.mubr.bf16.mxu0 0
      %3047 = vmatmul.mubr.bf16.gmra.mxu0 %v2877
      %v3048 = vpop.f32.mrf.mxu0
      %v3049 = vadd.f32 0.0, %v3048
      %v3050 = vpop.f32.mrf.mxu0
      %v3051 = vpop.f32.mrf.mxu0
      %v3052 = vadd.f32 0.0, %v3051
      %v3053 = vpop.f32.mrf.mxu0
      %3054 = vmatprep.mubr.bf16.mxu0 0
      %3055 = vmatmul.mubr.bf16.gmra.mxu0 %v2879
      %v3056 = vpop.f32.mrf.mxu0
      %v3057 = vadd.f32 0.0, %v3056
      %v3058 = vpop.f32.mrf.mxu0
      %v3059 = vpop.f32.mrf.mxu0
      %v3060 = vadd.f32 0.0, %v3059
      %v3061 = vpop.f32.mrf.mxu0
      %3062 = vmatprep.mubr.bf16.mxu0 0
      %3063 = vmatmul.mubr.bf16.gmra.mxu0 %v2881
      %v3064 = vpop.f32.mrf.mxu0
      %v3065 = vadd.f32 0.0, %v3064
      %v3066 = vpop.f32.mrf.mxu0
      %v3067 = vpop.f32.mrf.mxu0
      %v3068 = vadd.f32 0.0, %v3067
      %v3069 = vpop.f32.mrf.mxu0
      %3070 = vmatprep.mubr.bf16.mxu0 0
      %3071 = vmatmul.mubr.bf16.gmra.mxu0 %v2883
      %v3072 = vpop.f32.mrf.mxu0
      %v3073 = vadd.f32 0.0, %v3072
      %v3074 = vpop.f32.mrf.mxu0
      %v3075 = vpop.f32.mrf.mxu0
      %v3076 = vadd.f32 0.0, %v3075
      %v3077 = vpop.f32.mrf.mxu0
      %3078 = vmatprep.mubr.bf16.mxu0 0
      %3079 = vmatmul.mubr.bf16.gmra.mxu0 %v2885
      %v3080 = vpop.f32.mrf.mxu0
      %v3081 = vadd.f32 0.0, %v3080
      %v3082 = vpop.f32.mrf.mxu0
      %v3083 = vpop.f32.mrf.mxu0
      %v3084 = vadd.f32 0.0, %v3083
      %v3085 = vpop.f32.mrf.mxu0
      %3086 = vmatprep.mubr.bf16.mxu0 0
      %3087 = vmatmul.mubr.bf16.gmra.mxu0 %v2887
      %v3088 = vpop.f32.mrf.mxu0
      %v3089 = vadd.f32 0.0, %v3088
      %v3090 = vpop.f32.mrf.mxu0
      %v3091 = vpop.f32.mrf.mxu0
      %v3092 = vadd.f32 0.0, %v3091
      %v3093 = vpop.f32.mrf.mxu0
      %3094 = vmatprep.mubr.bf16.mxu0 0
      %3095 = vmatmul.mubr.bf16.gmra.mxu0 %v2889
      %v3096 = vpop.f32.mrf.mxu0
      %v3097 = vadd.f32 0.0, %v3096
      %v3098 = vpop.f32.mrf.mxu0
      %v3099 = vpop.f32.mrf.mxu0
      %v3100 = vadd.f32 0.0, %v3099
      %v3101 = vpop.f32.mrf.mxu0
      %3102 = vmatprep.mubr.bf16.mxu0 0
      %3103 = vmatmul.mubr.bf16.gmra.mxu0 %v2891
      %v3104 = vpop.f32.mrf.mxu0
      %v3105 = vadd.f32 0.0, %v3104
      %v3106 = vpop.f32.mrf.mxu0
      %v3107 = vpop.f32.mrf.mxu0
      %v3108 = vadd.f32 0.0, %v3107
      %v3109 = vpop.f32.mrf.mxu0
      %3110 = vmatprep.mubr.bf16.mxu0 0
      %3111 = vmatmul.mubr.bf16.gmra.mxu0 %v2893
      %v3112 = vpop.f32.mrf.mxu0
      %v3113 = vadd.f32 0.0, %v3112
      %v3114 = vpop.f32.mrf.mxu0
      %v3115 = vpop.f32.mrf.mxu0
      %v3116 = vadd.f32 0.0, %v3115
      %v3117 = vpop.f32.mrf.mxu0
      %3118 = vmatprep.mubr.bf16.mxu0 0
      %3119 = vmatmul.mubr.bf16.gmra.mxu0 %v2895
      %v3120 = vpop.f32.mrf.mxu0
      %v3121 = vadd.f32 0.0, %v3120
      %v3122 = vpop.f32.mrf.mxu0
      %v3123 = vpop.f32.mrf.mxu0
      %v3124 = vadd.f32 0.0, %v3123
      %v3125 = vpop.f32.mrf.mxu0
      %3126 = vmatprep.mubr.bf16.mxu0 0
      %3127 = vmatmul.mubr.bf16.gmra.mxu0 %v2897
      %v3128 = vpop.f32.mrf.mxu0
      %v3129 = vadd.f32 0.0, %v3128
      %v3130 = vpop.f32.mrf.mxu0
      %v3131 = vpop.f32.mrf.mxu0
      %v3132 = vadd.f32 0.0, %v3131
      %v3133 = vpop.f32.mrf.mxu0
      %3134 = vmatprep.mubr.bf16.mxu0 0
      %3135 = vmatmul.mubr.bf16.gmra.mxu0 %v2899
      %v3136 = vpop.f32.mrf.mxu0
      %v3137 = vadd.f32 0.0, %v3136
      %v3138 = vpop.f32.mrf.mxu0
      %v3139 = vpop.f32.mrf.mxu0
      %v3140 = vadd.f32 0.0, %v3139
      %v3141 = vpop.f32.mrf.mxu0
      %3142 = vdwg.mxu0
      %v3143 = vadd.f32 %v2680, %v3001
      %v3144 = vadd.f32 %v2681, %v3004
      %v3145 = vadd.f32 %v2682, %v3009
      %v3146 = vadd.f32 %v2683, %v3012
      %v3147 = vadd.f32 %v2684, %v3017
      %v3148 = vadd.f32 %v2685, %v3020
      %v3149 = vadd.f32 %v2686, %v3025
      %v3150 = vadd.f32 %v2687, %v3028
      %v3151 = vadd.f32 %v2688, %v3033
      %v3152 = vadd.f32 %v2689, %v3036
      %v3153 = vadd.f32 %v2690, %v3041
      %v3154 = vadd.f32 %v2691, %v3044
      %v3155 = vadd.f32 %v2692, %v3049
      %v3156 = vadd.f32 %v2693, %v3052
      %v3157 = vadd.f32 %v2694, %v3057
      %v3158 = vadd.f32 %v2695, %v3060
      %v3159 = vadd.f32 %v2696, %v3065
      %v3160 = vadd.f32 %v2697, %v3068
      %v3161 = vadd.f32 %v2698, %v3073
      %v3162 = vadd.f32 %v2699, %v3076
      %v3163 = vadd.f32 %v2700, %v3081
      %v3164 = vadd.f32 %v2701, %v3084
      %v3165 = vadd.f32 %v2702, %v3089
      %v3166 = vadd.f32 %v2703, %v3092
      %v3167 = vadd.f32 %v2704, %v3097
      %v3168 = vadd.f32 %v2705, %v3100
      %v3169 = vadd.f32 %v2706, %v3105
      %v3170 = vadd.f32 %v2707, %v3108
      %v3171 = vadd.f32 %v2708, %v3113
      %v3172 = vadd.f32 %v2709, %v3116
      %v3173 = vadd.f32 %v2710, %v3121
      %v3174 = vadd.f32 %v2711, %v3124
      %v3175 = vadd.f32 %v2712, %v3129
      %v3176 = vadd.f32 %v2713, %v3132
      %v3177 = vadd.f32 %v2714, %v3137
      %v3178 = vadd.f32 %v2715, %v3140
      %v3179 = vld [vmem:[%s192 + $0xa0] sm:$0x3]
      %s3180 = scalar_lea.vmem %s1, 448
      %v3181 = vld [vmem:[%s3180] sm:$0xf]
      %v3182 = vld [vmem:[%s3180 + $0x4] sm:$0xf]
      %v3183 = vld [vmem:[%s3180 + $0x8] sm:$0xf]
      %v3184 = vld [vmem:[%s3180 + $0xc] sm:$0xf]
      %v3185 = vld [vmem:[%s3180 + $0x10] sm:$0xf]
      %v3186 = vld [vmem:[%s3180 + $0x14] sm:$0xf]
      %v3187 = vld [vmem:[%s3180 + $0x18] sm:$0xf]
      %v3188 = vld [vmem:[%s3180 + $0x1c] sm:$0xf]
      %v3189 = vld [vmem:[%s3180 + $0x20] sm:$0xf]
      %v3190 = vld [vmem:[%s3180 + $0x24] sm:$0xf]
      %v3191 = vld [vmem:[%s3180 + $0x28] sm:$0xf]
      %v3192 = vld [vmem:[%s3180 + $0x2c] sm:$0xf]
      %v3193 = vld [vmem:[%s3180 + $0x30] sm:$0xf]
      %v3194 = vld [vmem:[%s3180 + $0x34] sm:$0xf]
      %v3195 = vld [vmem:[%s3180 + $0x38] sm:$0xf]
      %v3196 = vld [vmem:[%s3180 + $0x3c] sm:$0xf]
      %v3198 = vunpack.c.l.b16 %v3179
      %v3199 = vpack.c.b16 %v3198, %v3198
      %vm3200 = vsmask.f32 5376
      %v3202 = vshrl.u32 %v2844, 16
      %v3204 = vrot.slane %v3202, 2
      %v3205 = vshll.u32 %v2844, 16
      %v3207 = vrot.slane %v3205, 3
      %v3208 = vor.u32 %v3204, %v3207
      %v3210 = vshrl.u32 %v2845, 16
      %v3212 = vrot.slane %v3210, 2
      %v3213 = vshll.u32 %v2845, 16
      %v3215 = vrot.slane %v3213, 3
      %v3216 = vor.u32 %v3212, %v3215
      %v3217 = vsel %vm3200, %v3208, %v3216
      %v3219 = vshrl.u32 %v2846, 16
      %v3221 = vrot.slane %v3219, 2
      %v3222 = vshll.u32 %v2846, 16
      %v3224 = vrot.slane %v3222, 3
      %v3225 = vor.u32 %v3221, %v3224
      %v3226 = vsel %vm3200, %v3216, %v3225
      %v3228 = vshrl.u32 %v2847, 16
      %v3230 = vrot.slane %v3228, 2
      %v3231 = vshll.u32 %v2847, 16
      %v3233 = vrot.slane %v3231, 3
      %v3234 = vor.u32 %v3230, %v3233
      %v3235 = vsel %vm3200, %v3225, %v3234
      %v3237 = vshrl.u32 %v2848, 16
      %v3239 = vrot.slane %v3237, 2
      %v3240 = vshll.u32 %v2848, 16
      %v3242 = vrot.slane %v3240, 3
      %v3243 = vor.u32 %v3239, %v3242
      %v3244 = vsel %vm3200, %v3234, %v3243
      %v3246 = vshrl.u32 %v2849, 16
      %v3248 = vrot.slane %v3246, 2
      %v3249 = vshll.u32 %v2849, 16
      %v3251 = vrot.slane %v3249, 3
      %v3252 = vor.u32 %v3248, %v3251
      %v3253 = vsel %vm3200, %v3243, %v3252
      %v3255 = vshrl.u32 %v2850, 16
      %v3257 = vrot.slane %v3255, 2
      %v3258 = vshll.u32 %v2850, 16
      %v3260 = vrot.slane %v3258, 3
      %v3261 = vor.u32 %v3257, %v3260
      %v3262 = vsel %vm3200, %v3252, %v3261
      %v3264 = vshrl.u32 %v2851, 16
      %v3266 = vrot.slane %v3264, 2
      %v3267 = vshll.u32 %v2851, 16
      %v3269 = vrot.slane %v3267, 3
      %v3270 = vor.u32 %v3266, %v3269
      %v3271 = vsel %vm3200, %v3261, %v3270
      %v3273 = vshrl.u32 %v2852, 16
      %v3275 = vrot.slane %v3273, 2
      %v3276 = vshll.u32 %v2852, 16
      %v3278 = vrot.slane %v3276, 3
      %v3279 = vor.u32 %v3275, %v3278
      %v3280 = vsel %vm3200, %v3270, %v3279
      %v3282 = vshrl.u32 %v2853, 16
      %v3284 = vrot.slane %v3282, 2
      %v3285 = vshll.u32 %v2853, 16
      %v3287 = vrot.slane %v3285, 3
      %v3288 = vor.u32 %v3284, %v3287
      %v3289 = vsel %vm3200, %v3279, %v3288
      %v3291 = vshrl.u32 %v2854, 16
      %v3293 = vrot.slane %v3291, 2
      %v3294 = vshll.u32 %v2854, 16
      %v3296 = vrot.slane %v3294, 3
      %v3297 = vor.u32 %v3293, %v3296
      %v3298 = vsel %vm3200, %v3288, %v3297
      %v3300 = vshrl.u32 %v2855, 16
      %v3302 = vrot.slane %v3300, 2
      %v3303 = vshll.u32 %v2855, 16
      %v3305 = vrot.slane %v3303, 3
      %v3306 = vor.u32 %v3302, %v3305
      %v3307 = vsel %vm3200, %v3297, %v3306
      %v3309 = vshrl.u32 %v2856, 16
      %v3311 = vrot.slane %v3309, 2
      %v3312 = vshll.u32 %v2856, 16
      %v3314 = vrot.slane %v3312, 3
      %v3315 = vor.u32 %v3311, %v3314
      %v3316 = vsel %vm3200, %v3306, %v3315
      %v3318 = vshrl.u32 %v2857, 16
      %v3320 = vrot.slane %v3318, 2
      %v3321 = vshll.u32 %v2857, 16
      %v3323 = vrot.slane %v3321, 3
      %v3324 = vor.u32 %v3320, %v3323
      %v3325 = vsel %vm3200, %v3315, %v3324
      %v3327 = vshrl.u32 %v2858, 16
      %v3329 = vrot.slane %v3327, 2
      %v3330 = vshll.u32 %v2858, 16
      %v3332 = vrot.slane %v3330, 3
      %v3333 = vor.u32 %v3329, %v3332
      %v3334 = vsel %vm3200, %v3324, %v3333
      %v3336 = vshrl.u32 %v2859, 16
      %v3338 = vrot.slane %v3336, 2
      %v3339 = vshll.u32 %v2859, 16
      %v3341 = vrot.slane %v3339, 3
      %v3342 = vor.u32 %v3338, %v3341
      %v3343 = vsel %vm3200, %v3333, %v3342
      %v3345 = vshrl.u32 %v2860, 16
      %v3347 = vrot.slane %v3345, 2
      %v3348 = vshll.u32 %v2860, 16
      %v3350 = vrot.slane %v3348, 3
      %v3351 = vor.u32 %v3347, %v3350
      %v3352 = vsel %vm3200, %v3342, %v3351
      %v3354 = vshrl.u32 %v2861, 16
      %v3356 = vrot.slane %v3354, 2
      %v3357 = vshll.u32 %v2861, 16
      %v3359 = vrot.slane %v3357, 3
      %v3360 = vor.u32 %v3356, %v3359
      %v3361 = vsel %vm3200, %v3351, %v3360
      %v3363 = vshrl.u32 %v3199, 16
      %v3365 = vrot.slane %v3363, 2
      %v3366 = vshll.u32 %v3199, 16
      %v3368 = vrot.slane %v3366, 3
      %v3369 = vor.u32 %v3365, %v3368
      %v3370 = vsel %vm3200, %v3360, %v3369
      %v3405 = vunpack.c.l.b16 %v3181
      %v3406 = vunpack.c.l.b16 %v3182
      %v3407 = vunpack.c.l.b16 %v3183
      %v3408 = vunpack.c.l.b16 %v3184
      %v3409 = vunpack.c.l.b16 %v3185
      %v3410 = vunpack.c.l.b16 %v3186
      %v3411 = vunpack.c.l.b16 %v3187
      %v3412 = vunpack.c.l.b16 %v3188
      %v3413 = vunpack.c.l.b16 %v3189
      %v3414 = vunpack.c.l.b16 %v3190
      %v3415 = vunpack.c.l.b16 %v3191
      %v3416 = vunpack.c.l.b16 %v3192
      %v3417 = vunpack.c.l.b16 %v3193
      %v3418 = vunpack.c.l.b16 %v3194
      %v3419 = vunpack.c.l.b16 %v3195
      %v3420 = vunpack.c.l.b16 %v3196
      %v3421 = vpack.c.b16 %v3406, %v3405
      %v3422 = vpack.c.b16 %v3408, %v3407
      %v3423 = vpack.c.b16 %v3410, %v3409
      %v3424 = vpack.c.b16 %v3412, %v3411
      %v3425 = vpack.c.b16 %v3414, %v3413
      %v3426 = vpack.c.b16 %v3416, %v3415
      %v3427 = vpack.c.b16 %v3418, %v3417
      %v3428 = vpack.c.b16 %v3420, %v3419
      %3437 = vmatprep.subr.bf16.mxu0 0
      %3438 = vmatpush1.bf16.msra.mxu0 %v3428
      %3439 = vmatprep.subr.bf16.mxu0 0
      %3440 = vmatpush1.bf16.msra.mxu0 %v3427
      %3441 = vmatprep.subr.bf16.mxu0 0
      %3442 = vmatpush1.bf16.msra.mxu0 %v3426
      %3443 = vmatprep.subr.bf16.mxu0 0
      %3444 = vmatpush1.bf16.msra.mxu0 %v3425
      %3445 = vmatprep.subr.bf16.mxu0 0
      %3446 = vmatpush1.bf16.msra.mxu0 %v3424
      %3447 = vmatprep.subr.bf16.mxu0 0
      %3448 = vmatpush1.bf16.msra.mxu0 %v3423
      %3449 = vmatprep.subr.bf16.mxu0 0
      %3450 = vmatpush1.bf16.msra.mxu0 %v3422
      %3451 = vmatprep.subr.bf16.mxu0 0
      %3452 = vmatpush1.bf16.msra.mxu0 %v3421
      %3453 = vmatprep.subr.bf16.mxu0 0
      %3454 = vmatpush2.bf16.msra.mxu0 0
      %3455 = vmatprep.subr.bf16.mxu0 0
      %3456 = vmatpush2.bf16.msra.mxu0 0
      %3457 = vmatprep.subr.bf16.mxu0 0
      %3458 = vmatpush2.bf16.msra.mxu0 0
      %3459 = vmatprep.subr.bf16.mxu0 0
      %3460 = vmatpush2.bf16.msra.mxu0 0
      %3461 = vmatprep.subr.bf16.mxu0 0
      %3462 = vmatpush2.bf16.msra.mxu0 0
      %3463 = vmatprep.subr.bf16.mxu0 0
      %3464 = vmatpush2.bf16.msra.mxu0 0
      %3465 = vmatprep.subr.bf16.mxu0 0
      %3466 = vmatpush2.bf16.msra.mxu0 0
      %3467 = vmatprep.subr.bf16.mxu0 0
      %3468 = vmatpush2.bf16.msra.mxu0 0
      %3469 = vmatprep.mubr.bf16.mxu0 0
      %3470 = vmatmul.mubr.bf16.gmra.mxu0 %v3217
      %v3471 = vpop.f32.mrf.mxu0
      %v3472 = vadd.f32 0.0, %v3471
      %v3473 = vpop.f32.mrf.mxu0
      %v3474 = vpop.f32.mrf.mxu0
      %v3475 = vadd.f32 0.0, %v3474
      %v3476 = vpop.f32.mrf.mxu0
      %3477 = vmatprep.mubr.bf16.mxu0 0
      %3478 = vmatmul.mubr.bf16.gmra.mxu0 %v3226
      %v3479 = vpop.f32.mrf.mxu0
      %v3480 = vadd.f32 0.0, %v3479
      %v3481 = vpop.f32.mrf.mxu0
      %v3482 = vpop.f32.mrf.mxu0
      %v3483 = vadd.f32 0.0, %v3482
      %v3484 = vpop.f32.mrf.mxu0
      %3485 = vmatprep.mubr.bf16.mxu0 0
      %3486 = vmatmul.mubr.bf16.gmra.mxu0 %v3235
      %v3487 = vpop.f32.mrf.mxu0
      %v3488 = vadd.f32 0.0, %v3487
      %v3489 = vpop.f32.mrf.mxu0
      %v3490 = vpop.f32.mrf.mxu0
      %v3491 = vadd.f32 0.0, %v3490
      %v3492 = vpop.f32.mrf.mxu0
      %3493 = vmatprep.mubr.bf16.mxu0 0
      %3494 = vmatmul.mubr.bf16.gmra.mxu0 %v3244
      %v3495 = vpop.f32.mrf.mxu0
      %v3496 = vadd.f32 0.0, %v3495
      %v3497 = vpop.f32.mrf.mxu0
      %v3498 = vpop.f32.mrf.mxu0
      %v3499 = vadd.f32 0.0, %v3498
      %v3500 = vpop.f32.mrf.mxu0
      %3501 = vmatprep.mubr.bf16.mxu0 0
      %3502 = vmatmul.mubr.bf16.gmra.mxu0 %v3253
      %v3503 = vpop.f32.mrf.mxu0
      %v3504 = vadd.f32 0.0, %v3503
      %v3505 = vpop.f32.mrf.mxu0
      %v3506 = vpop.f32.mrf.mxu0
      %v3507 = vadd.f32 0.0, %v3506
      %v3508 = vpop.f32.mrf.mxu0
      %3509 = vmatprep.mubr.bf16.mxu0 0
      %3510 = vmatmul.mubr.bf16.gmra.mxu0 %v3262
      %v3511 = vpop.f32.mrf.mxu0
      %v3512 = vadd.f32 0.0, %v3511
      %v3513 = vpop.f32.mrf.mxu0
      %v3514 = vpop.f32.mrf.mxu0
      %v3515 = vadd.f32 0.0, %v3514
      %v3516 = vpop.f32.mrf.mxu0
      %3517 = vmatprep.mubr.bf16.mxu0 0
      %3518 = vmatmul.mubr.bf16.gmra.mxu0 %v3271
      %v3519 = vpop.f32.mrf.mxu0
      %v3520 = vadd.f32 0.0, %v3519
      %v3521 = vpop.f32.mrf.mxu0
      %v3522 = vpop.f32.mrf.mxu0
      %v3523 = vadd.f32 0.0, %v3522
      %v3524 = vpop.f32.mrf.mxu0
      %3525 = vmatprep.mubr.bf16.mxu0 0
      %3526 = vmatmul.mubr.bf16.gmra.mxu0 %v3280
      %v3527 = vpop.f32.mrf.mxu0
      %v3528 = vadd.f32 0.0, %v3527
      %v3529 = vpop.f32.mrf.mxu0
      %v3530 = vpop.f32.mrf.mxu0
      %v3531 = vadd.f32 0.0, %v3530
      %v3532 = vpop.f32.mrf.mxu0
      %3533 = vmatprep.mubr.bf16.mxu0 0
      %3534 = vmatmul.mubr.bf16.gmra.mxu0 %v3289
      %v3535 = vpop.f32.mrf.mxu0
      %v3536 = vadd.f32 0.0, %v3535
      %v3537 = vpop.f32.mrf.mxu0
      %v3538 = vpop.f32.mrf.mxu0
      %v3539 = vadd.f32 0.0, %v3538
      %v3540 = vpop.f32.mrf.mxu0
      %3541 = vmatprep.mubr.bf16.mxu0 0
      %3542 = vmatmul.mubr.bf16.gmra.mxu0 %v3298
      %v3543 = vpop.f32.mrf.mxu0
      %v3544 = vadd.f32 0.0, %v3543
      %v3545 = vpop.f32.mrf.mxu0
      %v3546 = vpop.f32.mrf.mxu0
      %v3547 = vadd.f32 0.0, %v3546
      %v3548 = vpop.f32.mrf.mxu0
      %3549 = vmatprep.mubr.bf16.mxu0 0
      %3550 = vmatmul.mubr.bf16.gmra.mxu0 %v3307
      %v3551 = vpop.f32.mrf.mxu0
      %v3552 = vadd.f32 0.0, %v3551
      %v3553 = vpop.f32.mrf.mxu0
      %v3554 = vpop.f32.mrf.mxu0
      %v3555 = vadd.f32 0.0, %v3554
      %v3556 = vpop.f32.mrf.mxu0
      %3557 = vmatprep.mubr.bf16.mxu0 0
      %3558 = vmatmul.mubr.bf16.gmra.mxu0 %v3316
      %v3559 = vpop.f32.mrf.mxu0
      %v3560 = vadd.f32 0.0, %v3559
      %v3561 = vpop.f32.mrf.mxu0
      %v3562 = vpop.f32.mrf.mxu0
      %v3563 = vadd.f32 0.0, %v3562
      %v3564 = vpop.f32.mrf.mxu0
      %3565 = vmatprep.mubr.bf16.mxu0 0
      %3566 = vmatmul.mubr.bf16.gmra.mxu0 %v3325
      %v3567 = vpop.f32.mrf.mxu0
      %v3568 = vadd.f32 0.0, %v3567
      %v3569 = vpop.f32.mrf.mxu0
      %v3570 = vpop.f32.mrf.mxu0
      %v3571 = vadd.f32 0.0, %v3570
      %v3572 = vpop.f32.mrf.mxu0
      %3573 = vmatprep.mubr.bf16.mxu0 0
      %3574 = vmatmul.mubr.bf16.gmra.mxu0 %v3334
      %v3575 = vpop.f32.mrf.mxu0
      %v3576 = vadd.f32 0.0, %v3575
      %v3577 = vpop.f32.mrf.mxu0
      %v3578 = vpop.f32.mrf.mxu0
      %v3579 = vadd.f32 0.0, %v3578
      %v3580 = vpop.f32.mrf.mxu0
      %3581 = vmatprep.mubr.bf16.mxu0 0
      %3582 = vmatmul.mubr.bf16.gmra.mxu0 %v3343
      %v3583 = vpop.f32.mrf.mxu0
      %v3584 = vadd.f32 0.0, %v3583
      %v3585 = vpop.f32.mrf.mxu0
      %v3586 = vpop.f32.mrf.mxu0
      %v3587 = vadd.f32 0.0, %v3586
      %v3588 = vpop.f32.mrf.mxu0
      %3589 = vmatprep.mubr.bf16.mxu0 0
      %3590 = vmatmul.mubr.bf16.gmra.mxu0 %v3352
      %v3591 = vpop.f32.mrf.mxu0
      %v3592 = vadd.f32 0.0, %v3591
      %v3593 = vpop.f32.mrf.mxu0
      %v3594 = vpop.f32.mrf.mxu0
      %v3595 = vadd.f32 0.0, %v3594
      %v3596 = vpop.f32.mrf.mxu0
      %3597 = vmatprep.mubr.bf16.mxu0 0
      %3598 = vmatmul.mubr.bf16.gmra.mxu0 %v3361
      %v3599 = vpop.f32.mrf.mxu0
      %v3600 = vadd.f32 0.0, %v3599
      %v3601 = vpop.f32.mrf.mxu0
      %v3602 = vpop.f32.mrf.mxu0
      %v3603 = vadd.f32 0.0, %v3602
      %v3604 = vpop.f32.mrf.mxu0
      %3605 = vmatprep.mubr.bf16.mxu0 0
      %3606 = vmatmul.mubr.bf16.gmra.mxu0 %v3370
      %v3607 = vpop.f32.mrf.mxu0
      %v3608 = vadd.f32 0.0, %v3607
      %v3609 = vpop.f32.mrf.mxu0
      %v3610 = vpop.f32.mrf.mxu0
      %v3611 = vadd.f32 0.0, %v3610
      %v3612 = vpop.f32.mrf.mxu0
      %3613 = vdwg.mxu0
      %v3614 = vadd.f32 %v3143, %v3472
      %v3615 = vadd.f32 %v3144, %v3475
      %v3616 = vadd.f32 %v3145, %v3480
      %v3617 = vadd.f32 %v3146, %v3483
      %v3618 = vadd.f32 %v3147, %v3488
      %v3619 = vadd.f32 %v3148, %v3491
      %v3620 = vadd.f32 %v3149, %v3496
      %v3621 = vadd.f32 %v3150, %v3499
      %v3622 = vadd.f32 %v3151, %v3504
      %v3623 = vadd.f32 %v3152, %v3507
      %v3624 = vadd.f32 %v3153, %v3512
      %v3625 = vadd.f32 %v3154, %v3515
      %v3626 = vadd.f32 %v3155, %v3520
      %v3627 = vadd.f32 %v3156, %v3523
      %v3628 = vadd.f32 %v3157, %v3528
      %v3629 = vadd.f32 %v3158, %v3531
      %v3630 = vadd.f32 %v3159, %v3536
      %v3631 = vadd.f32 %v3160, %v3539
      %v3632 = vadd.f32 %v3161, %v3544
      %v3633 = vadd.f32 %v3162, %v3547
      %v3634 = vadd.f32 %v3163, %v3552
      %v3635 = vadd.f32 %v3164, %v3555
      %v3636 = vadd.f32 %v3165, %v3560
      %v3637 = vadd.f32 %v3166, %v3563
      %v3638 = vadd.f32 %v3167, %v3568
      %v3639 = vadd.f32 %v3168, %v3571
      %v3640 = vadd.f32 %v3169, %v3576
      %v3641 = vadd.f32 %v3170, %v3579
      %v3642 = vadd.f32 %v3171, %v3584
      %v3643 = vadd.f32 %v3172, %v3587
      %v3644 = vadd.f32 %v3173, %v3592
      %v3645 = vadd.f32 %v3174, %v3595
      %v3646 = vadd.f32 %v3175, %v3600
      %v3647 = vadd.f32 %v3176, %v3603
      %v3648 = vadd.f32 %v3177, %v3608
      %v3649 = vadd.f32 %v3178, %v3611
      %v3650 = vld [vmem:[%s192 + $0x10] sm:$0x8]
      %s3651 = scalar_lea.vmem %s1, 512
      %v3652 = vld [vmem:[%s3651] sm:$0xf]
      %v3653 = vld [vmem:[%s3651 + $0x4] sm:$0xf]
      %v3654 = vld [vmem:[%s3651 + $0x8] sm:$0xf]
      %v3655 = vld [vmem:[%s3651 + $0xc] sm:$0xf]
      %v3656 = vld [vmem:[%s3651 + $0x10] sm:$0xf]
      %v3657 = vld [vmem:[%s3651 + $0x14] sm:$0xf]
      %v3658 = vld [vmem:[%s3651 + $0x18] sm:$0xf]
      %v3659 = vld [vmem:[%s3651 + $0x1c] sm:$0xf]
      %v3660 = vld [vmem:[%s3651 + $0x20] sm:$0xf]
      %v3661 = vld [vmem:[%s3651 + $0x24] sm:$0xf]
      %v3662 = vld [vmem:[%s3651 + $0x28] sm:$0xf]
      %v3663 = vld [vmem:[%s3651 + $0x2c] sm:$0xf]
      %v3664 = vld [vmem:[%s3651 + $0x30] sm:$0xf]
      %v3665 = vld [vmem:[%s3651 + $0x34] sm:$0xf]
      %v3666 = vld [vmem:[%s3651 + $0x38] sm:$0xf]
      %v3667 = vld [vmem:[%s3651 + $0x3c] sm:$0xf]
      %v3669 = vunpack.c.l.b16 %v3650
      %v3670 = vpack.c.b16 %v2808, %v3669
      %vm3671 = vcmask 1044480
      %v3672 = vrot.slane %v3670, 3
      %v3673 = vrot.slane %v2845, 3
      %v3674 = vsel %vm3671, %v3672, %v3673
      %v3675 = vrot.slane %v2846, 3
      %v3676 = vsel %vm3671, %v3673, %v3675
      %v3677 = vrot.slane %v2847, 3
      %v3678 = vsel %vm3671, %v3675, %v3677
      %v3679 = vrot.slane %v2848, 3
      %v3680 = vsel %vm3671, %v3677, %v3679
      %v3681 = vrot.slane %v2849, 3
      %v3682 = vsel %vm3671, %v3679, %v3681
      %v3683 = vrot.slane %v2850, 3
      %v3684 = vsel %vm3671, %v3681, %v3683
      %v3685 = vrot.slane %v2851, 3
      %v3686 = vsel %vm3671, %v3683, %v3685
      %v3687 = vrot.slane %v2852, 3
      %v3688 = vsel %vm3671, %v3685, %v3687
      %v3689 = vrot.slane %v2853, 3
      %v3690 = vsel %vm3671, %v3687, %v3689
      %v3691 = vrot.slane %v2854, 3
      %v3692 = vsel %vm3671, %v3689, %v3691
      %v3693 = vrot.slane %v2855, 3
      %v3694 = vsel %vm3671, %v3691, %v3693
      %v3695 = vrot.slane %v2856, 3
      %v3696 = vsel %vm3671, %v3693, %v3695
      %v3697 = vrot.slane %v2857, 3
      %v3698 = vsel %vm3671, %v3695, %v3697
      %v3699 = vrot.slane %v2858, 3
      %v3700 = vsel %vm3671, %v3697, %v3699
      %v3701 = vrot.slane %v2859, 3
      %v3702 = vsel %vm3671, %v3699, %v3701
      %v3703 = vrot.slane %v2860, 3
      %v3704 = vsel %vm3671, %v3701, %v3703
      %v3705 = vrot.slane %v2861, 3
      %v3706 = vsel %vm3671, %v3703, %v3705
      %v3707 = vrot.slane %v3199, 3
      %v3708 = vsel %vm3671, %v3705, %v3707
      %v3743 = vunpack.c.l.b16 %v3652
      %v3744 = vunpack.c.l.b16 %v3653
      %v3745 = vunpack.c.l.b16 %v3654
      %v3746 = vunpack.c.l.b16 %v3655
      %v3747 = vunpack.c.l.b16 %v3656
      %v3748 = vunpack.c.l.b16 %v3657
      %v3749 = vunpack.c.l.b16 %v3658
      %v3750 = vunpack.c.l.b16 %v3659
      %v3751 = vunpack.c.l.b16 %v3660
      %v3752 = vunpack.c.l.b16 %v3661
      %v3753 = vunpack.c.l.b16 %v3662
      %v3754 = vunpack.c.l.b16 %v3663
      %v3755 = vunpack.c.l.b16 %v3664
      %v3756 = vunpack.c.l.b16 %v3665
      %v3757 = vunpack.c.l.b16 %v3666
      %v3758 = vunpack.c.l.b16 %v3667
      %v3759 = vpack.c.b16 %v3744, %v3743
      %v3760 = vpack.c.b16 %v3746, %v3745
      %v3761 = vpack.c.b16 %v3748, %v3747
      %v3762 = vpack.c.b16 %v3750, %v3749
      %v3763 = vpack.c.b16 %v3752, %v3751
      %v3764 = vpack.c.b16 %v3754, %v3753
      %v3765 = vpack.c.b16 %v3756, %v3755
      %v3766 = vpack.c.b16 %v3758, %v3757
      %3775 = vmatprep.subr.bf16.mxu0 0
      %3776 = vmatpush1.bf16.msra.mxu0 %v3766
      %3777 = vmatprep.subr.bf16.mxu0 0
      %3778 = vmatpush1.bf16.msra.mxu0 %v3765
      %3779 = vmatprep.subr.bf16.mxu0 0
      %3780 = vmatpush1.bf16.msra.mxu0 %v3764
      %3781 = vmatprep.subr.bf16.mxu0 0
      %3782 = vmatpush1.bf16.msra.mxu0 %v3763
      %3783 = vmatprep.subr.bf16.mxu0 0
      %3784 = vmatpush1.bf16.msra.mxu0 %v3762
      %3785 = vmatprep.subr.bf16.mxu0 0
      %3786 = vmatpush1.bf16.msra.mxu0 %v3761
      %3787 = vmatprep.subr.bf16.mxu0 0
      %3788 = vmatpush1.bf16.msra.mxu0 %v3760
      %3789 = vmatprep.subr.bf16.mxu0 0
      %3790 = vmatpush1.bf16.msra.mxu0 %v3759
      %3791 = vmatprep.subr.bf16.mxu0 0
      %3792 = vmatpush2.bf16.msra.mxu0 0
      %3793 = vmatprep.subr.bf16.mxu0 0
      %3794 = vmatpush2.bf16.msra.mxu0 0
      %3795 = vmatprep.subr.bf16.mxu0 0
      %3796 = vmatpush2.bf16.msra.mxu0 0
      %3797 = vmatprep.subr.bf16.mxu0 0
      %3798 = vmatpush2.bf16.msra.mxu0 0
      %3799 = vmatprep.subr.bf16.mxu0 0
      %3800 = vmatpush2.bf16.msra.mxu0 0
      %3801 = vmatprep.subr.bf16.mxu0 0
      %3802 = vmatpush2.bf16.msra.mxu0 0
      %3803 = vmatprep.subr.bf16.mxu0 0
      %3804 = vmatpush2.bf16.msra.mxu0 0
      %3805 = vmatprep.subr.bf16.mxu0 0
      %3806 = vmatpush2.bf16.msra.mxu0 0
      %3807 = vmatprep.mubr.bf16.mxu0 0
      %3808 = vmatmul.mubr.bf16.gmra.mxu0 %v3674
      %v3809 = vpop.f32.mrf.mxu0
      %v3810 = vadd.f32 0.0, %v3809
      %v3811 = vpop.f32.mrf.mxu0
      %v3812 = vpop.f32.mrf.mxu0
      %v3813 = vadd.f32 0.0, %v3812
      %v3814 = vpop.f32.mrf.mxu0
      %3815 = vmatprep.mubr.bf16.mxu0 0
      %3816 = vmatmul.mubr.bf16.gmra.mxu0 %v3676
      %v3817 = vpop.f32.mrf.mxu0
      %v3818 = vadd.f32 0.0, %v3817
      %v3819 = vpop.f32.mrf.mxu0
      %v3820 = vpop.f32.mrf.mxu0
      %v3821 = vadd.f32 0.0, %v3820
      %v3822 = vpop.f32.mrf.mxu0
      %3823 = vmatprep.mubr.bf16.mxu0 0
      %3824 = vmatmul.mubr.bf16.gmra.mxu0 %v3678
      %v3825 = vpop.f32.mrf.mxu0
      %v3826 = vadd.f32 0.0, %v3825
      %v3827 = vpop.f32.mrf.mxu0
      %v3828 = vpop.f32.mrf.mxu0
      %v3829 = vadd.f32 0.0, %v3828
      %v3830 = vpop.f32.mrf.mxu0
      %3831 = vmatprep.mubr.bf16.mxu0 0
      %3832 = vmatmul.mubr.bf16.gmra.mxu0 %v3680
      %v3833 = vpop.f32.mrf.mxu0
      %v3834 = vadd.f32 0.0, %v3833
      %v3835 = vpop.f32.mrf.mxu0
      %v3836 = vpop.f32.mrf.mxu0
      %v3837 = vadd.f32 0.0, %v3836
      %v3838 = vpop.f32.mrf.mxu0
      %3839 = vmatprep.mubr.bf16.mxu0 0
      %3840 = vmatmul.mubr.bf16.gmra.mxu0 %v3682
      %v3841 = vpop.f32.mrf.mxu0
      %v3842 = vadd.f32 0.0, %v3841
      %v3843 = vpop.f32.mrf.mxu0
      %v3844 = vpop.f32.mrf.mxu0
      %v3845 = vadd.f32 0.0, %v3844
      %v3846 = vpop.f32.mrf.mxu0
      %3847 = vmatprep.mubr.bf16.mxu0 0
      %3848 = vmatmul.mubr.bf16.gmra.mxu0 %v3684
      %v3849 = vpop.f32.mrf.mxu0
      %v3850 = vadd.f32 0.0, %v3849
      %v3851 = vpop.f32.mrf.mxu0
      %v3852 = vpop.f32.mrf.mxu0
      %v3853 = vadd.f32 0.0, %v3852
      %v3854 = vpop.f32.mrf.mxu0
      %3855 = vmatprep.mubr.bf16.mxu0 0
      %3856 = vmatmul.mubr.bf16.gmra.mxu0 %v3686
      %v3857 = vpop.f32.mrf.mxu0
      %v3858 = vadd.f32 0.0, %v3857
      %v3859 = vpop.f32.mrf.mxu0
      %v3860 = vpop.f32.mrf.mxu0
      %v3861 = vadd.f32 0.0, %v3860
      %v3862 = vpop.f32.mrf.mxu0
      %3863 = vmatprep.mubr.bf16.mxu0 0
      %3864 = vmatmul.mubr.bf16.gmra.mxu0 %v3688
      %v3865 = vpop.f32.mrf.mxu0
      %v3866 = vadd.f32 0.0, %v3865
      %v3867 = vpop.f32.mrf.mxu0
      %v3868 = vpop.f32.mrf.mxu0
      %v3869 = vadd.f32 0.0, %v3868
      %v3870 = vpop.f32.mrf.mxu0
      %3871 = vmatprep.mubr.bf16.mxu0 0
      %3872 = vmatmul.mubr.bf16.gmra.mxu0 %v3690
      %v3873 = vpop.f32.mrf.mxu0
      %v3874 = vadd.f32 0.0, %v3873
      %v3875 = vpop.f32.mrf.mxu0
      %v3876 = vpop.f32.mrf.mxu0
      %v3877 = vadd.f32 0.0, %v3876
      %v3878 = vpop.f32.mrf.mxu0
      %3879 = vmatprep.mubr.bf16.mxu0 0
      %3880 = vmatmul.mubr.bf16.gmra.mxu0 %v3692
      %v3881 = vpop.f32.mrf.mxu0
      %v3882 = vadd.f32 0.0, %v3881
      %v3883 = vpop.f32.mrf.mxu0
      %v3884 = vpop.f32.mrf.mxu0
      %v3885 = vadd.f32 0.0, %v3884
      %v3886 = vpop.f32.mrf.mxu0
      %3887 = vmatprep.mubr.bf16.mxu0 0
      %3888 = vmatmul.mubr.bf16.gmra.mxu0 %v3694
      %v3889 = vpop.f32.mrf.mxu0
      %v3890 = vadd.f32 0.0, %v3889
      %v3891 = vpop.f32.mrf.mxu0
      %v3892 = vpop.f32.mrf.mxu0
      %v3893 = vadd.f32 0.0, %v3892
      %v3894 = vpop.f32.mrf.mxu0
      %3895 = vmatprep.mubr.bf16.mxu0 0
      %3896 = vmatmul.mubr.bf16.gmra.mxu0 %v3696
      %v3897 = vpop.f32.mrf.mxu0
      %v3898 = vadd.f32 0.0, %v3897
      %v3899 = vpop.f32.mrf.mxu0
      %v3900 = vpop.f32.mrf.mxu0
      %v3901 = vadd.f32 0.0, %v3900
      %v3902 = vpop.f32.mrf.mxu0
      %3903 = vmatprep.mubr.bf16.mxu0 0
      %3904 = vmatmul.mubr.bf16.gmra.mxu0 %v3698
      %v3905 = vpop.f32.mrf.mxu0
      %v3906 = vadd.f32 0.0, %v3905
      %v3907 = vpop.f32.mrf.mxu0
      %v3908 = vpop.f32.mrf.mxu0
      %v3909 = vadd.f32 0.0, %v3908
      %v3910 = vpop.f32.mrf.mxu0
      %3911 = vmatprep.mubr.bf16.mxu0 0
      %3912 = vmatmul.mubr.bf16.gmra.mxu0 %v3700
      %v3913 = vpop.f32.mrf.mxu0
      %v3914 = vadd.f32 0.0, %v3913
      %v3915 = vpop.f32.mrf.mxu0
      %v3916 = vpop.f32.mrf.mxu0
      %v3917 = vadd.f32 0.0, %v3916
      %v3918 = vpop.f32.mrf.mxu0
      %3919 = vmatprep.mubr.bf16.mxu0 0
      %3920 = vmatmul.mubr.bf16.gmra.mxu0 %v3702
      %v3921 = vpop.f32.mrf.mxu0
      %v3922 = vadd.f32 0.0, %v3921
      %v3923 = vpop.f32.mrf.mxu0
      %v3924 = vpop.f32.mrf.mxu0
      %v3925 = vadd.f32 0.0, %v3924
      %v3926 = vpop.f32.mrf.mxu0
      %3927 = vmatprep.mubr.bf16.mxu0 0
      %3928 = vmatmul.mubr.bf16.gmra.mxu0 %v3704
      %v3929 = vpop.f32.mrf.mxu0
      %v3930 = vadd.f32 0.0, %v3929
      %v3931 = vpop.f32.mrf.mxu0
      %v3932 = vpop.f32.mrf.mxu0
      %v3933 = vadd.f32 0.0, %v3932
      %v3934 = vpop.f32.mrf.mxu0
      %3935 = vmatprep.mubr.bf16.mxu0 0
      %3936 = vmatmul.mubr.bf16.gmra.mxu0 %v3706
      %v3937 = vpop.f32.mrf.mxu0
      %v3938 = vadd.f32 0.0, %v3937
      %v3939 = vpop.f32.mrf.mxu0
      %v3940 = vpop.f32.mrf.mxu0
      %v3941 = vadd.f32 0.0, %v3940
      %v3942 = vpop.f32.mrf.mxu0
      %3943 = vmatprep.mubr.bf16.mxu0 0
      %3944 = vmatmul.mubr.bf16.gmra.mxu0 %v3708
      %v3945 = vpop.f32.mrf.mxu0
      %v3946 = vadd.f32 0.0, %v3945
      %v3947 = vpop.f32.mrf.mxu0
      %v3948 = vpop.f32.mrf.mxu0
      %v3949 = vadd.f32 0.0, %v3948
      %v3950 = vpop.f32.mrf.mxu0
      %3951 = vdwg.mxu0
      %v3952 = vadd.f32 %v3614, %v3810
      %v3953 = vadd.f32 %v3615, %v3813
      %v3954 = vadd.f32 %v3616, %v3818
      %v3955 = vadd.f32 %v3617, %v3821
      %v3956 = vadd.f32 %v3618, %v3826
      %v3957 = vadd.f32 %v3619, %v3829
      %v3958 = vadd.f32 %v3620, %v3834
      %v3959 = vadd.f32 %v3621, %v3837
      %v3960 = vadd.f32 %v3622, %v3842
      %v3961 = vadd.f32 %v3623, %v3845
      %v3962 = vadd.f32 %v3624, %v3850
      %v3963 = vadd.f32 %v3625, %v3853
      %v3964 = vadd.f32 %v3626, %v3858
      %v3965 = vadd.f32 %v3627, %v3861
      %v3966 = vadd.f32 %v3628, %v3866
      %v3967 = vadd.f32 %v3629, %v3869
      %v3968 = vadd.f32 %v3630, %v3874
      %v3969 = vadd.f32 %v3631, %v3877
      %v3970 = vadd.f32 %v3632, %v3882
      %v3971 = vadd.f32 %v3633, %v3885
      %v3972 = vadd.f32 %v3634, %v3890
      %v3973 = vadd.f32 %v3635, %v3893
      %v3974 = vadd.f32 %v3636, %v3898
      %v3975 = vadd.f32 %v3637, %v3901
      %v3976 = vadd.f32 %v3638, %v3906
      %v3977 = vadd.f32 %v3639, %v3909
      %v3978 = vadd.f32 %v3640, %v3914
      %v3979 = vadd.f32 %v3641, %v3917
      %v3980 = vadd.f32 %v3642, %v3922
      %v3981 = vadd.f32 %v3643, %v3925
      %v3982 = vadd.f32 %v3644, %v3930
      %v3983 = vadd.f32 %v3645, %v3933
      %v3984 = vadd.f32 %v3646, %v3938
      %v3985 = vadd.f32 %v3647, %v3941
      %v3986 = vadd.f32 %v3648, %v3946
      %v3987 = vadd.f32 %v3649, %v3949
      %v3988 = vld [vmem:[%s2] sm:$0x1]
      %v3990 = vlaneseq
      %v3991 = vshrl.u32 %v3990, 7
      %v3992 = vsub.s32 0, %v3991
      %v3993 = vrot.slane %v3988, %v3992
      %v3995 = vadd.f32 %v3952, %v3993
      %v3996 = vadd.f32 %v3953, %v3993
      %v3997 = vadd.f32 %v3954, %v3993
      %v3998 = vadd.f32 %v3955, %v3993
      %v3999 = vadd.f32 %v3956, %v3993
      %v4000 = vadd.f32 %v3957, %v3993
      %v4001 = vadd.f32 %v3958, %v3993
      %v4002 = vadd.f32 %v3959, %v3993
      %v4003 = vadd.f32 %v3960, %v3993
      %v4004 = vadd.f32 %v3961, %v3993
      %v4005 = vadd.f32 %v3962, %v3993
      %v4006 = vadd.f32 %v3963, %v3993
      %v4007 = vadd.f32 %v3964, %v3993
      %v4008 = vadd.f32 %v3965, %v3993
      %v4009 = vadd.f32 %v3966, %v3993
      %v4010 = vadd.f32 %v3967, %v3993
      %v4011 = vadd.f32 %v3968, %v3993
      %v4012 = vadd.f32 %v3969, %v3993
      %v4013 = vadd.f32 %v3970, %v3993
      %v4014 = vadd.f32 %v3971, %v3993
      %v4015 = vadd.f32 %v3972, %v3993
      %v4016 = vadd.f32 %v3973, %v3993
      %v4017 = vadd.f32 %v3974, %v3993
      %v4018 = vadd.f32 %v3975, %v3993
      %v4019 = vadd.f32 %v3976, %v3993
      %v4020 = vadd.f32 %v3977, %v3993
      %v4021 = vadd.f32 %v3978, %v3993
      %v4022 = vadd.f32 %v3979, %v3993
      %v4023 = vadd.f32 %v3980, %v3993
      %v4024 = vadd.f32 %v3981, %v3993
      %v4025 = vadd.f32 %v3982, %v3993
      %v4026 = vadd.f32 %v3983, %v3993
      %v4027 = vadd.f32 %v3984, %v3993
      %v4028 = vadd.f32 %v3985, %v3993
      %v4029 = vadd.f32 %v3986, %v3993
      %v4030 = vadd.f32 %v3987, %v3993
      %v4031 = vmax.f32 %v3995, 0.0
      %v4032 = vmax.f32 %v3996, 0.0
      %v4033 = vmax.f32 %v3997, 0.0
      %v4034 = vmax.f32 %v3998, 0.0
      %v4035 = vmax.f32 %v3999, 0.0
      %v4036 = vmax.f32 %v4000, 0.0
      %v4037 = vmax.f32 %v4001, 0.0
      %v4038 = vmax.f32 %v4002, 0.0
      %v4039 = vmax.f32 %v4003, 0.0
      %v4040 = vmax.f32 %v4004, 0.0
      %v4041 = vmax.f32 %v4005, 0.0
      %v4042 = vmax.f32 %v4006, 0.0
      %v4043 = vmax.f32 %v4007, 0.0
      %v4044 = vmax.f32 %v4008, 0.0
      %v4045 = vmax.f32 %v4009, 0.0
      %v4046 = vmax.f32 %v4010, 0.0
      %v4047 = vmax.f32 %v4011, 0.0
      %v4048 = vmax.f32 %v4012, 0.0
      %v4049 = vmax.f32 %v4013, 0.0
      %v4050 = vmax.f32 %v4014, 0.0
      %v4051 = vmax.f32 %v4015, 0.0
      %v4052 = vmax.f32 %v4016, 0.0
      %v4053 = vmax.f32 %v4017, 0.0
      %v4054 = vmax.f32 %v4018, 0.0
      %v4055 = vmax.f32 %v4019, 0.0
      %v4056 = vmax.f32 %v4020, 0.0
      %v4057 = vmax.f32 %v4021, 0.0
      %v4058 = vmax.f32 %v4022, 0.0
      %v4059 = vmax.f32 %v4023, 0.0
      %v4060 = vmax.f32 %v4024, 0.0
      %v4061 = vmax.f32 %v4025, 0.0
      %v4062 = vmax.f32 %v4026, 0.0
      %v4063 = vmax.f32 %v4027, 0.0
      %v4064 = vmax.f32 %v4028, 0.0
      %v4065 = vmax.f32 %v4029, 0.0
      %v4066 = vmax.f32 %v4030, 0.0
      %vm4101 = vcmask 1045504
      %v4102 = vrot.slane %v4033, 2
      %v4103 = vrot.slane %v4034, 2
      %v4104 = vsel %vm4101, %v4102, %v4103
      %v4105 = vrot.slane %v4035, 2
      %v4106 = vsel %vm4101, %v4103, %v4105
      %v4107 = vrot.slane %v4036, 2
      %v4108 = vsel %vm4101, %v4105, %v4107
      %v4109 = vrot.slane %v4037, 2
      %v4110 = vsel %vm4101, %v4107, %v4109
      %v4111 = vrot.slane %v4038, 2
      %v4112 = vsel %vm4101, %v4109, %v4111
      %v4113 = vrot.slane %v4039, 2
      %v4114 = vsel %vm4101, %v4111, %v4113
      %v4115 = vrot.slane %v4040, 2
      %v4116 = vsel %vm4101, %v4113, %v4115
      %v4117 = vrot.slane %v4041, 2
      %v4118 = vsel %vm4101, %v4115, %v4117
      %v4119 = vrot.slane %v4042, 2
      %v4120 = vsel %vm4101, %v4117, %v4119
      %v4121 = vrot.slane %v4043, 2
      %v4122 = vsel %vm4101, %v4119, %v4121
      %v4123 = vrot.slane %v4044, 2
      %v4124 = vsel %vm4101, %v4121, %v4123
      %v4125 = vrot.slane %v4045, 2
      %v4126 = vsel %vm4101, %v4123, %v4125
      %v4127 = vrot.slane %v4046, 2
      %v4128 = vsel %vm4101, %v4125, %v4127
      %v4129 = vrot.slane %v4047, 2
      %v4130 = vsel %vm4101, %v4127, %v4129
      %v4131 = vrot.slane %v4048, 2
      %v4132 = vsel %vm4101, %v4129, %v4131
      %v4133 = vrot.slane %v4049, 2
      %v4134 = vsel %vm4101, %v4131, %v4133
      %v4135 = vrot.slane %v4050, 2
      %v4136 = vsel %vm4101, %v4133, %v4135
      %v4137 = vrot.slane %v4051, 2
      %v4138 = vsel %vm4101, %v4135, %v4137
      %v4139 = vrot.slane %v4052, 2
      %v4140 = vsel %vm4101, %v4137, %v4139
      %v4141 = vrot.slane %v4053, 2
      %v4142 = vsel %vm4101, %v4139, %v4141
      %v4143 = vrot.slane %v4054, 2
      %v4144 = vsel %vm4101, %v4141, %v4143
      %v4145 = vrot.slane %v4055, 2
      %v4146 = vsel %vm4101, %v4143, %v4145
      %v4147 = vrot.slane %v4056, 2
      %v4148 = vsel %vm4101, %v4145, %v4147
      %v4149 = vrot.slane %v4057, 2
      %v4150 = vsel %vm4101, %v4147, %v4149
      %v4151 = vrot.slane %v4058, 2
      %v4152 = vsel %vm4101, %v4149, %v4151
      %v4153 = vrot.slane %v4059, 2
      %v4154 = vsel %vm4101, %v4151, %v4153
      %v4155 = vrot.slane %v4060, 2
      %v4156 = vsel %vm4101, %v4153, %v4155
      %v4157 = vrot.slane %v4061, 2
      %v4158 = vsel %vm4101, %v4155, %v4157
      %v4159 = vrot.slane %v4062, 2
      %v4160 = vsel %vm4101, %v4157, %v4159
      %v4161 = vrot.slane %v4063, 2
      %v4162 = vsel %vm4101, %v4159, %v4161
      %v4163 = vrot.slane %v4064, 2
      %v4164 = vsel %vm4101, %v4161, %v4163
      %v4165 = vrot.slane %v4065, 2
      %v4166 = vsel %vm4101, %v4163, %v4165
      %v4167 = vrot.slane %v4066, 2
      %v4168 = vsel %vm4101, %v4165, %v4167
      %v4203 = vmax.f32 %v4031, %v4104
      %v4204 = vmax.f32 %v4032, %v4106
      %v4205 = vmax.f32 %v4033, %v4108
      %v4206 = vmax.f32 %v4034, %v4110
      %v4207 = vmax.f32 %v4035, %v4112
      %v4208 = vmax.f32 %v4036, %v4114
      %v4209 = vmax.f32 %v4037, %v4116
      %v4210 = vmax.f32 %v4038, %v4118
      %v4211 = vmax.f32 %v4039, %v4120
      %v4212 = vmax.f32 %v4040, %v4122
      %v4213 = vmax.f32 %v4041, %v4124
      %v4214 = vmax.f32 %v4042, %v4126
      %v4215 = vmax.f32 %v4043, %v4128
      %v4216 = vmax.f32 %v4044, %v4130
      %v4217 = vmax.f32 %v4045, %v4132
      %v4218 = vmax.f32 %v4046, %v4134
      %v4219 = vmax.f32 %v4047, %v4136
      %v4220 = vmax.f32 %v4048, %v4138
      %v4221 = vmax.f32 %v4049, %v4140
      %v4222 = vmax.f32 %v4050, %v4142
      %v4223 = vmax.f32 %v4051, %v4144
      %v4224 = vmax.f32 %v4052, %v4146
      %v4225 = vmax.f32 %v4053, %v4148
      %v4226 = vmax.f32 %v4054, %v4150
      %v4227 = vmax.f32 %v4055, %v4152
      %v4228 = vmax.f32 %v4056, %v4154
      %v4229 = vmax.f32 %v4057, %v4156
      %v4230 = vmax.f32 %v4058, %v4158
      %v4231 = vmax.f32 %v4059, %v4160
      %v4232 = vmax.f32 %v4060, %v4162
      %v4233 = vmax.f32 %v4061, %v4164
      %v4234 = vmax.f32 %v4062, %v4166
      %v4235 = vmax.f32 %v4063, %v4168
      %v4236 = vmax.f32 %v4064, %v4167
      %v4237 = vpack.c.bf16 %v4204, %v4203
      %v4238 = vpack.c.bf16 %v4206, %v4205
      %v4239 = vpack.c.bf16 %v4208, %v4207
      %v4240 = vpack.c.bf16 %v4210, %v4209
      %v4241 = vpack.c.bf16 %v4212, %v4211
      %v4242 = vpack.c.bf16 %v4214, %v4213
      %v4243 = vpack.c.bf16 %v4216, %v4215
      %v4244 = vpack.c.bf16 %v4218, %v4217
      %v4245 = vpack.c.bf16 %v4220, %v4219
      %v4246 = vpack.c.bf16 %v4222, %v4221
      %v4247 = vpack.c.bf16 %v4224, %v4223
      %v4248 = vpack.c.bf16 %v4226, %v4225
      %v4249 = vpack.c.bf16 %v4228, %v4227
      %v4250 = vpack.c.bf16 %v4230, %v4229
      %v4251 = vpack.c.bf16 %v4232, %v4231
      %v4252 = vpack.c.bf16 %v4234, %v4233
      %v4253 = vpack.c.bf16 %v4236, %v4235
      %v4254 = vld [vmem:[%s3] sm:$0xff]
      %v4255 = vld [vmem:[%s3 + $0x8] sm:$0xf]
      %v4256 = vld [vmem:[%s3 + $0xc] sm:$0xff]
      %v4257 = vld [vmem:[%s3 + $0x14] sm:$0xf]
      %v4258 = vld [vmem:[%s3 + $0x18] sm:$0xff]
      %v4259 = vld [vmem:[%s3 + $0x20] sm:$0xf]
      %v4260 = vld [vmem:[%s3 + $0x24] sm:$0xff]
      %v4261 = vld [vmem:[%s3 + $0x2c] sm:$0xf]
      %v4262 = vld [vmem:[%s3 + $0x30] sm:$0xff]
      %v4263 = vld [vmem:[%s3 + $0x38] sm:$0xf]
      %v4264 = vld [vmem:[%s3 + $0x3c] sm:$0xff]
      %v4265 = vld [vmem:[%s3 + $0x44] sm:$0xf]
      %v4266 = vld [vmem:[%s3 + $0x48] sm:$0xff]
      %v4267 = vld [vmem:[%s3 + $0x50] sm:$0xf]
      %v4268 = vld [vmem:[%s3 + $0x54] sm:$0xff]
      %v4269 = vld [vmem:[%s3 + $0x5c] sm:$0xf]
      %v4270 = vld [vmem:[%s3 + $0x60] sm:$0xff]
      %v4271 = vld [vmem:[%s3 + $0x68] sm:$0xf]
      %v4272 = vld [vmem:[%s3 + $0x6c] sm:$0xff]
      %v4273 = vld [vmem:[%s3 + $0x74] sm:$0xf]
      %v4274 = vld [vmem:[%s3 + $0x78] sm:$0xff]
      %v4275 = vld [vmem:[%s3 + $0x80] sm:$0xf]
      %v4276 = vld [vmem:[%s3 + $0x84] sm:$0xff]
      %v4277 = vld [vmem:[%s3 + $0x8c] sm:$0xf]
      %v4278 = vld [vmem:[%s3 + $0x90] sm:$0x33]
      %v4279 = vld [vmem:[%s3 + $0x98] sm:$0x3]
      %v4306 = vunpack.c.l.b16 %v4254
      %v4307 = vunpack.c.h.b16 %v4254
      %v4308 = vunpack.c.l.b16 %v4255
      %v4309 = vunpack.c.l.b16 %v4256
      %v4310 = vunpack.c.h.b16 %v4256
      %v4311 = vunpack.c.l.b16 %v4257
      %v4312 = vunpack.c.l.b16 %v4258
      %v4313 = vunpack.c.h.b16 %v4258
      %v4314 = vunpack.c.l.b16 %v4259
      %v4315 = vunpack.c.l.b16 %v4260
      %v4316 = vunpack.c.h.b16 %v4260
      %v4317 = vunpack.c.l.b16 %v4261
      %v4318 = vunpack.c.l.b16 %v4262
      %v4319 = vunpack.c.h.b16 %v4262
      %v4320 = vunpack.c.l.b16 %v4263
      %v4321 = vunpack.c.l.b16 %v4264
      %v4322 = vunpack.c.h.b16 %v4264
      %v4323 = vunpack.c.l.b16 %v4265
      %v4324 = vunpack.c.l.b16 %v4266
      %v4325 = vunpack.c.h.b16 %v4266
      %v4326 = vunpack.c.l.b16 %v4267
      %v4327 = vunpack.c.l.b16 %v4268
      %v4328 = vunpack.c.h.b16 %v4268
      %v4329 = vunpack.c.l.b16 %v4269
      %v4330 = vunpack.c.l.b16 %v4270
      %v4331 = vunpack.c.h.b16 %v4270
      %v4332 = vunpack.c.l.b16 %v4271
      %v4333 = vunpack.c.l.b16 %v4272
      %v4334 = vunpack.c.h.b16 %v4272
      %v4335 = vunpack.c.l.b16 %v4273
      %v4336 = vunpack.c.l.b16 %v4274
      %v4337 = vunpack.c.h.b16 %v4274
      %v4338 = vunpack.c.l.b16 %v4275
      %v4339 = vunpack.c.l.b16 %v4276
      %v4340 = vunpack.c.h.b16 %v4276
      %v4341 = vunpack.c.l.b16 %v4277
      %v4342 = vunpack.c.l.b16 %v4278
      %v4343 = vunpack.c.h.b16 %v4278
      %v4344 = vunpack.c.l.b16 %v4279
      %v4345 = vpack.c.b16 %v4309, %v4306
      %v4346 = vpack.c.b16 %v4310, %v4307
      %v4347 = vpack.c.b16 %v4311, %v4308
      %v4348 = vpack.c.b16 %v4315, %v4312
      %v4349 = vpack.c.b16 %v4316, %v4313
      %v4350 = vpack.c.b16 %v4317, %v4314
      %v4351 = vpack.c.b16 %v4321, %v4318
      %v4352 = vpack.c.b16 %v4322, %v4319
      %v4353 = vpack.c.b16 %v4323, %v4320
      %v4354 = vpack.c.b16 %v4327, %v4324
      %v4355 = vpack.c.b16 %v4328, %v4325
      %v4356 = vpack.c.b16 %v4329, %v4326
      %v4357 = vpack.c.b16 %v4333, %v4330
      %v4358 = vpack.c.b16 %v4334, %v4331
      %v4359 = vpack.c.b16 %v4335, %v4332
      %v4360 = vpack.c.b16 %v4339, %v4336
      %v4361 = vpack.c.b16 %v4340, %v4337
      %v4362 = vpack.c.b16 %v4341, %v4338
      %v4363 = vpack.c.b16 %v4342, %v4342
      %v4364 = vpack.c.b16 %v4343, %v4343
      %v4365 = vpack.c.b16 %v4344, %v4344
      %vm4380 = vcmask 97280
      %v4382 = vsel %vm4380, %v4347, 0
      %v4385 = vsel %vm4380, %v4350, 0
      %v4388 = vsel %vm4380, %v4353, 0
      %v4391 = vsel %vm4380, %v4356, 0
      %v4394 = vsel %vm4380, %v4359, 0
      %v4397 = vsel %vm4380, %v4362, 0
      %v4400 = vsel %vm4380, %v4365, 0
      %v4403 = vsel %vm4101, %v4253, 0
      %4405 = vmatprep.subr.bf16.mxu0 0
      %4406 = vmatpush1.bf16.msra.mxu0 %v4244
      %4407 = vmatprep.subr.bf16.mxu0 0
      %4408 = vmatpush1.bf16.msra.mxu0 %v4243
      %4409 = vmatprep.subr.bf16.mxu0 0
      %4410 = vmatpush1.bf16.msra.mxu0 %v4242
      %4411 = vmatprep.subr.bf16.mxu0 0
      %4412 = vmatpush1.bf16.msra.mxu0 %v4241
      %4413 = vmatprep.subr.bf16.mxu0 0
      %4414 = vmatpush1.bf16.msra.mxu0 %v4240
      %4415 = vmatprep.subr.bf16.mxu0 0
      %4416 = vmatpush1.bf16.msra.mxu0 %v4239
      %4417 = vmatprep.subr.bf16.mxu0 0
      %4418 = vmatpush1.bf16.msra.mxu0 %v4238
      %4419 = vmatprep.subr.bf16.mxu0 0
      %4420 = vmatpush1.bf16.msra.mxu0 %v4237
      %4421 = vmatprep.subr.bf16.mxu0 0
      %4422 = vmatpush2.bf16.msra.mxu0 %v4252
      %4423 = vmatprep.subr.bf16.mxu0 0
      %4424 = vmatpush2.bf16.msra.mxu0 %v4251
      %4425 = vmatprep.subr.bf16.mxu0 0
      %4426 = vmatpush2.bf16.msra.mxu0 %v4250
      %4427 = vmatprep.subr.bf16.mxu0 0
      %4428 = vmatpush2.bf16.msra.mxu0 %v4249
      %4429 = vmatprep.subr.bf16.mxu0 0
      %4430 = vmatpush2.bf16.msra.mxu0 %v4248
      %4431 = vmatprep.subr.bf16.mxu0 0
      %4432 = vmatpush2.bf16.msra.mxu0 %v4247
      %4433 = vmatprep.subr.bf16.mxu0 0
      %4434 = vmatpush2.bf16.msra.mxu0 %v4246
      %4435 = vmatprep.subr.bf16.mxu0 0
      %4436 = vmatpush2.bf16.msra.mxu0 %v4245
      %4437 = vmatprep.mubr.bf16.mxu0 %v4346
      %4438 = vmatmul.mubr.bf16.gmra.mxu0 %v4345
      %v4439 = vpop.f32.mrf.mxu0
      %v4440 = vadd.f32 0.0, %v4439
      %v4441 = vpop.f32.mrf.mxu0
      %v4442 = vpop.f32.mrf.mxu0
      %v4443 = vadd.f32 0.0, %v4442
      %v4444 = vpop.f32.mrf.mxu0
      %4445 = vmatprep.mubr.bf16.mxu0 %v4349
      %4446 = vmatmul.mubr.bf16.gmra.mxu0 %v4348
      %v4447 = vpop.f32.mrf.mxu0
      %v4448 = vadd.f32 0.0, %v4447
      %v4449 = vpop.f32.mrf.mxu0
      %v4450 = vpop.f32.mrf.mxu0
      %v4451 = vadd.f32 0.0, %v4450
      %v4452 = vpop.f32.mrf.mxu0
      %4453 = vmatprep.mubr.bf16.mxu0 %v4352
      %4454 = vmatmul.mubr.bf16.gmra.mxu0 %v4351
      %v4455 = vpop.f32.mrf.mxu0
      %v4456 = vadd.f32 0.0, %v4455
      %v4457 = vpop.f32.mrf.mxu0
      %v4458 = vpop.f32.mrf.mxu0
      %v4459 = vadd.f32 0.0, %v4458
      %v4460 = vpop.f32.mrf.mxu0
      %4461 = vmatprep.mubr.bf16.mxu0 %v4355
      %4462 = vmatmul.mubr.bf16.gmra.mxu0 %v4354
      %v4463 = vpop.f32.mrf.mxu0
      %v4464 = vadd.f32 0.0, %v4463
      %v4465 = vpop.f32.mrf.mxu0
      %v4466 = vpop.f32.mrf.mxu0
      %v4467 = vadd.f32 0.0, %v4466
      %v4468 = vpop.f32.mrf.mxu0
      %4469 = vmatprep.mubr.bf16.mxu0 %v4358
      %4470 = vmatmul.mubr.bf16.gmra.mxu0 %v4357
      %v4471 = vpop.f32.mrf.mxu0
      %v4472 = vadd.f32 0.0, %v4471
      %v4473 = vpop.f32.mrf.mxu0
      %v4474 = vpop.f32.mrf.mxu0
      %v4475 = vadd.f32 0.0, %v4474
      %v4476 = vpop.f32.mrf.mxu0
      %4477 = vmatprep.mubr.bf16.mxu0 %v4361
      %4478 = vmatmul.mubr.bf16.gmra.mxu0 %v4360
      %v4479 = vpop.f32.mrf.mxu0
      %v4480 = vadd.f32 0.0, %v4479
      %v4481 = vpop.f32.mrf.mxu0
      %v4482 = vpop.f32.mrf.mxu0
      %v4483 = vadd.f32 0.0, %v4482
      %v4484 = vpop.f32.mrf.mxu0
      %4485 = vmatprep.mubr.bf16.mxu0 %v4364
      %4486 = vmatmul.mubr.bf16.gmra.mxu0 %v4363
      %v4487 = vpop.f32.mrf.mxu0
      %v4488 = vadd.f32 0.0, %v4487
      %v4489 = vpop.f32.mrf.mxu0
      %v4490 = vpop.f32.mrf.mxu0
      %v4491 = vpop.f32.mrf.mxu0
      %4492 = vdwg.mxu0
      %4493 = vmatprep.subr.bf16.mxu0 0
      %4494 = vmatpush1.bf16.msra.mxu0 0
      %4495 = vmatprep.subr.bf16.mxu0 0
      %4496 = vmatpush1.bf16.msra.mxu0 0
      %4497 = vmatprep.subr.bf16.mxu0 0
      %4498 = vmatpush1.bf16.msra.mxu0 0
      %4499 = vmatprep.subr.bf16.mxu0 0
      %4500 = vmatpush1.bf16.msra.mxu0 0
      %4501 = vmatprep.subr.bf16.mxu0 0
      %4502 = vmatpush1.bf16.msra.mxu0 0
      %4503 = vmatprep.subr.bf16.mxu0 0
      %4504 = vmatpush1.bf16.msra.mxu0 0
      %4505 = vmatprep.subr.bf16.mxu0 0
      %4506 = vmatpush1.bf16.msra.mxu0 0
      %4507 = vmatprep.subr.bf16.mxu0 0
      %4508 = vmatpush1.bf16.msra.mxu0 %v4403
      %4509 = vmatprep.subr.bf16.mxu0 0
      %4510 = vmatpush2.bf16.msra.mxu0 0
      %4511 = vmatprep.subr.bf16.mxu0 0
      %4512 = vmatpush2.bf16.msra.mxu0 0
      %4513 = vmatprep.subr.bf16.mxu0 0
      %4514 = vmatpush2.bf16.msra.mxu0 0
      %4515 = vmatprep.subr.bf16.mxu0 0
      %4516 = vmatpush2.bf16.msra.mxu0 0
      %4517 = vmatprep.subr.bf16.mxu0 0
      %4518 = vmatpush2.bf16.msra.mxu0 0
      %4519 = vmatprep.subr.bf16.mxu0 0
      %4520 = vmatpush2.bf16.msra.mxu0 0
      %4521 = vmatprep.subr.bf16.mxu0 0
      %4522 = vmatpush2.bf16.msra.mxu0 0
      %4523 = vmatprep.subr.bf16.mxu0 0
      %4524 = vmatpush2.bf16.msra.mxu0 0
      %4525 = vmatprep.mubr.bf16.mxu0 0
      %4526 = vmatmul.mubr.bf16.gmra.mxu0 %v4382
      %v4527 = vpop.f32.mrf.mxu0
      %v4528 = vadd.f32 %v4440, %v4527
      %v4529 = vpop.f32.mrf.mxu0
      %v4530 = vpop.f32.mrf.mxu0
      %v4531 = vadd.f32 %v4443, %v4530
      %v4532 = vpop.f32.mrf.mxu0
      %4533 = vmatprep.mubr.bf16.mxu0 0
      %4534 = vmatmul.mubr.bf16.gmra.mxu0 %v4385
      %v4535 = vpop.f32.mrf.mxu0
      %v4536 = vadd.f32 %v4448, %v4535
      %v4537 = vpop.f32.mrf.mxu0
      %v4538 = vpop.f32.mrf.mxu0
      %v4539 = vadd.f32 %v4451, %v4538
      %v4540 = vpop.f32.mrf.mxu0
      %4541 = vmatprep.mubr.bf16.mxu0 0
      %4542 = vmatmul.mubr.bf16.gmra.mxu0 %v4388
      %v4543 = vpop.f32.mrf.mxu0
      %v4544 = vadd.f32 %v4456, %v4543
      %v4545 = vpop.f32.mrf.mxu0
      %v4546 = vpop.f32.mrf.mxu0
      %v4547 = vadd.f32 %v4459, %v4546
      %v4548 = vpop.f32.mrf.mxu0
      %4549 = vmatprep.mubr.bf16.mxu0 0
      %4550 = vmatmul.mubr.bf16.gmra.mxu0 %v4391
      %v4551 = vpop.f32.mrf.mxu0
      %v4552 = vadd.f32 %v4464, %v4551
      %v4553 = vpop.f32.mrf.mxu0
      %v4554 = vpop.f32.mrf.mxu0
      %v4555 = vadd.f32 %v4467, %v4554
      %v4556 = vpop.f32.mrf.mxu0
      %4557 = vmatprep.mubr.bf16.mxu0 0
      %4558 = vmatmul.mubr.bf16.gmra.mxu0 %v4394
      %v4559 = vpop.f32.mrf.mxu0
      %v4560 = vadd.f32 %v4472, %v4559
      %v4561 = vpop.f32.mrf.mxu0
      %v4562 = vpop.f32.mrf.mxu0
      %v4563 = vadd.f32 %v4475, %v4562
      %v4564 = vpop.f32.mrf.mxu0
      %4565 = vmatprep.mubr.bf16.mxu0 0
      %4566 = vmatmul.mubr.bf16.gmra.mxu0 %v4397
      %v4567 = vpop.f32.mrf.mxu0
      %v4568 = vadd.f32 %v4480, %v4567
      %v4569 = vpop.f32.mrf.mxu0
      %v4570 = vpop.f32.mrf.mxu0
      %v4571 = vadd.f32 %v4483, %v4570
      %v4572 = vpop.f32.mrf.mxu0
      %4573 = vmatprep.mubr.bf16.mxu0 0
      %4574 = vmatmul.mubr.bf16.gmra.mxu0 %v4400
      %v4575 = vpop.f32.mrf.mxu0
      %v4576 = vadd.f32 %v4488, %v4575
      %v4577 = vpop.f32.mrf.mxu0
      %v4578 = vpop.f32.mrf.mxu0
      %v4579 = vpop.f32.mrf.mxu0
      %4580 = vdwg.mxu0
      %s4581 = scalar_lea.vmem %s3, 156
      %v4582 = vld [vmem:[%s4581] sm:$0xff]
      %v4583 = vld [vmem:[%s4581 + $0x8] sm:$0xf]
      %v4584 = vld [vmem:[%s4581 + $0xc] sm:$0xff]
      %v4585 = vld [vmem:[%s4581 + $0x14] sm:$0xf]
      %v4586 = vld [vmem:[%s4581 + $0x18] sm:$0xff]
      %v4587 = vld [vmem:[%s4581 + $0x20] sm:$0xf]
      %v4588 = vld [vmem:[%s4581 + $0x24] sm:$0xff]
      %v4589 = vld [vmem:[%s4581 + $0x2c] sm:$0xf]
      %v4590 = vld [vmem:[%s4581 + $0x30] sm:$0xff]
      %v4591 = vld [vmem:[%s4581 + $0x38] sm:$0xf]
      %v4592 = vld [vmem:[%s4581 + $0x3c] sm:$0xff]
      %v4593 = vld [vmem:[%s4581 + $0x44] sm:$0xf]
      %v4594 = vld [vmem:[%s4581 + $0x48] sm:$0xff]
      %v4595 = vld [vmem:[%s4581 + $0x50] sm:$0xf]
      %v4596 = vld [vmem:[%s4581 + $0x54] sm:$0xff]
      %v4597 = vld [vmem:[%s4581 + $0x5c] sm:$0xf]
      %v4598 = vld [vmem:[%s4581 + $0x60] sm:$0xff]
      %v4599 = vld [vmem:[%s4581 + $0x68] sm:$0xf]
      %v4600 = vld [vmem:[%s4581 + $0x6c] sm:$0xff]
      %v4601 = vld [vmem:[%s4581 + $0x74] sm:$0xf]
      %v4602 = vld [vmem:[%s4581 + $0x78] sm:$0xff]
      %v4603 = vld [vmem:[%s4581 + $0x80] sm:$0xf]
      %v4604 = vld [vmem:[%s4581 + $0x84] sm:$0xff]
      %v4605 = vld [vmem:[%s4581 + $0x8c] sm:$0xf]
      %v4606 = vld [vmem:[%s4581 + $0x90] sm:$0x33]
      %v4607 = vld [vmem:[%s4581 + $0x98] sm:$0x3]
      %v4634 = vunpack.c.l.b16 %v4582
      %v4635 = vunpack.c.h.b16 %v4582
      %v4636 = vunpack.c.l.b16 %v4583
      %v4637 = vunpack.c.l.b16 %v4584
      %v4638 = vunpack.c.h.b16 %v4584
      %v4639 = vunpack.c.l.b16 %v4585
      %v4640 = vunpack.c.l.b16 %v4586
      %v4641 = vunpack.c.h.b16 %v4586
      %v4642 = vunpack.c.l.b16 %v4587
      %v4643 = vunpack.c.l.b16 %v4588
      %v4644 = vunpack.c.h.b16 %v4588
      %v4645 = vunpack.c.l.b16 %v4589
      %v4646 = vunpack.c.l.b16 %v4590
      %v4647 = vunpack.c.h.b16 %v4590
      %v4648 = vunpack.c.l.b16 %v4591
      %v4649 = vunpack.c.l.b16 %v4592
      %v4650 = vunpack.c.h.b16 %v4592
      %v4651 = vunpack.c.l.b16 %v4593
      %v4652 = vunpack.c.l.b16 %v4594
      %v4653 = vunpack.c.h.b16 %v4594
      %v4654 = vunpack.c.l.b16 %v4595
      %v4655 = vunpack.c.l.b16 %v4596
      %v4656 = vunpack.c.h.b16 %v4596
      %v4657 = vunpack.c.l.b16 %v4597
      %v4658 = vunpack.c.l.b16 %v4598
      %v4659 = vunpack.c.h.b16 %v4598
      %v4660 = vunpack.c.l.b16 %v4599
      %v4661 = vunpack.c.l.b16 %v4600
      %v4662 = vunpack.c.h.b16 %v4600
      %v4663 = vunpack.c.l.b16 %v4601
      %v4664 = vunpack.c.l.b16 %v4602
      %v4665 = vunpack.c.h.b16 %v4602
      %v4666 = vunpack.c.l.b16 %v4603
      %v4667 = vunpack.c.l.b16 %v4604
      %v4668 = vunpack.c.h.b16 %v4604
      %v4669 = vunpack.c.l.b16 %v4605
      %v4670 = vunpack.c.l.b16 %v4606
      %v4671 = vunpack.c.h.b16 %v4606
      %v4672 = vunpack.c.l.b16 %v4607
      %v4673 = vpack.c.b16 %v4637, %v4634
      %v4674 = vpack.c.b16 %v4638, %v4635
      %v4675 = vpack.c.b16 %v4639, %v4636
      %v4676 = vpack.c.b16 %v4643, %v4640
      %v4677 = vpack.c.b16 %v4644, %v4641
      %v4678 = vpack.c.b16 %v4645, %v4642
      %v4679 = vpack.c.b16 %v4649, %v4646
      %v4680 = vpack.c.b16 %v4650, %v4647
      %v4681 = vpack.c.b16 %v4651, %v4648
      %v4682 = vpack.c.b16 %v4655, %v4652
      %v4683 = vpack.c.b16 %v4656, %v4653
      %v4684 = vpack.c.b16 %v4657, %v4654
      %v4685 = vpack.c.b16 %v4661, %v4658
      %v4686 = vpack.c.b16 %v4662, %v4659
      %v4687 = vpack.c.b16 %v4663, %v4660
      %v4688 = vpack.c.b16 %v4667, %v4664
      %v4689 = vpack.c.b16 %v4668, %v4665
      %v4690 = vpack.c.b16 %v4669, %v4666
      %v4691 = vpack.c.b16 %v4670, %v4670
      %v4692 = vpack.c.b16 %v4671, %v4671
      %v4693 = vpack.c.b16 %v4672, %v4672
      %v4709 = vsel %vm4380, %v4675, 0
      %v4712 = vsel %vm4380, %v4678, 0
      %v4715 = vsel %vm4380, %v4681, 0
      %v4718 = vsel %vm4380, %v4684, 0
      %v4721 = vsel %vm4380, %v4687, 0
      %v4724 = vsel %vm4380, %v4690, 0
      %v4727 = vsel %vm4380, %v4693, 0
      %4729 = vmatprep.subr.bf16.mxu0 0
      %4730 = vmatpush1.bf16.msra.mxu0 %v4244
      %4731 = vmatprep.subr.bf16.mxu0 0
      %4732 = vmatpush1.bf16.msra.mxu0 %v4243
      %4733 = vmatprep.subr.bf16.mxu0 0
      %4734 = vmatpush1.bf16.msra.mxu0 %v4242
      %4735 = vmatprep.subr.bf16.mxu0 0
      %4736 = vmatpush1.bf16.msra.mxu0 %v4241
      %4737 = vmatprep.subr.bf16.mxu0 0
      %4738 = vmatpush1.bf16.msra.mxu0 %v4240
      %4739 = vmatprep.subr.bf16.mxu0 0
      %4740 = vmatpush1.bf16.msra.mxu0 %v4239
      %4741 = vmatprep.subr.bf16.mxu0 0
      %4742 = vmatpush1.bf16.msra.mxu0 %v4238
      %4743 = vmatprep.subr.bf16.mxu0 0
      %4744 = vmatpush1.bf16.msra.mxu0 %v4237
      %4745 = vmatprep.subr.bf16.mxu0 0
      %4746 = vmatpush2.bf16.msra.mxu0 %v4252
      %4747 = vmatprep.subr.bf16.mxu0 0
      %4748 = vmatpush2.bf16.msra.mxu0 %v4251
      %4749 = vmatprep.subr.bf16.mxu0 0
      %4750 = vmatpush2.bf16.msra.mxu0 %v4250
      %4751 = vmatprep.subr.bf16.mxu0 0
      %4752 = vmatpush2.bf16.msra.mxu0 %v4249
      %4753 = vmatprep.subr.bf16.mxu0 0
      %4754 = vmatpush2.bf16.msra.mxu0 %v4248
      %4755 = vmatprep.subr.bf16.mxu0 0
      %4756 = vmatpush2.bf16.msra.mxu0 %v4247
      %4757 = vmatprep.subr.bf16.mxu0 0
      %4758 = vmatpush2.bf16.msra.mxu0 %v4246
      %4759 = vmatprep.subr.bf16.mxu0 0
      %4760 = vmatpush2.bf16.msra.mxu0 %v4245
      %4761 = vmatprep.mubr.bf16.mxu0 %v4674
      %4762 = vmatmul.mubr.bf16.gmra.mxu0 %v4673
      %v4763 = vpop.f32.mrf.mxu0
      %v4764 = vadd.f32 0.0, %v4763
      %v4765 = vpop.f32.mrf.mxu0
      %v4766 = vpop.f32.mrf.mxu0
      %v4767 = vadd.f32 0.0, %v4766
      %v4768 = vpop.f32.mrf.mxu0
      %4769 = vmatprep.mubr.bf16.mxu0 %v4677
      %4770 = vmatmul.mubr.bf16.gmra.mxu0 %v4676
      %v4771 = vpop.f32.mrf.mxu0
      %v4772 = vadd.f32 0.0, %v4771
      %v4773 = vpop.f32.mrf.mxu0
      %v4774 = vpop.f32.mrf.mxu0
      %v4775 = vadd.f32 0.0, %v4774
      %v4776 = vpop.f32.mrf.mxu0
      %4777 = vmatprep.mubr.bf16.mxu0 %v4680
      %4778 = vmatmul.mubr.bf16.gmra.mxu0 %v4679
      %v4779 = vpop.f32.mrf.mxu0
      %v4780 = vadd.f32 0.0, %v4779
      %v4781 = vpop.f32.mrf.mxu0
      %v4782 = vpop.f32.mrf.mxu0
      %v4783 = vadd.f32 0.0, %v4782
      %v4784 = vpop.f32.mrf.mxu0
      %4785 = vmatprep.mubr.bf16.mxu0 %v4683
      %4786 = vmatmul.mubr.bf16.gmra.mxu0 %v4682
      %v4787 = vpop.f32.mrf.mxu0
      %v4788 = vadd.f32 0.0, %v4787
      %v4789 = vpop.f32.mrf.mxu0
      %v4790 = vpop.f32.mrf.mxu0
      %v4791 = vadd.f32 0.0, %v4790
      %v4792 = vpop.f32.mrf.mxu0
      %4793 = vmatprep.mubr.bf16.mxu0 %v4686
      %4794 = vmatmul.mubr.bf16.gmra.mxu0 %v4685
      %v4795 = vpop.f32.mrf.mxu0
      %v4796 = vadd.f32 0.0, %v4795
      %v4797 = vpop.f32.mrf.mxu0
      %v4798 = vpop.f32.mrf.mxu0
      %v4799 = vadd.f32 0.0, %v4798
      %v4800 = vpop.f32.mrf.mxu0
      %4801 = vmatprep.mubr.bf16.mxu0 %v4689
      %4802 = vmatmul.mubr.bf16.gmra.mxu0 %v4688
      %v4803 = vpop.f32.mrf.mxu0
      %v4804 = vadd.f32 0.0, %v4803
      %v4805 = vpop.f32.mrf.mxu0
      %v4806 = vpop.f32.mrf.mxu0
      %v4807 = vadd.f32 0.0, %v4806
      %v4808 = vpop.f32.mrf.mxu0
      %4809 = vmatprep.mubr.bf16.mxu0 %v4692
      %4810 = vmatmul.mubr.bf16.gmra.mxu0 %v4691
      %v4811 = vpop.f32.mrf.mxu0
      %v4812 = vadd.f32 0.0, %v4811
      %v4813 = vpop.f32.mrf.mxu0
      %v4814 = vpop.f32.mrf.mxu0
      %v4815 = vpop.f32.mrf.mxu0
      %4816 = vdwg.mxu0
      %4817 = vmatprep.subr.bf16.mxu0 0
      %4818 = vmatpush1.bf16.msra.mxu0 0
      %4819 = vmatprep.subr.bf16.mxu0 0
      %4820 = vmatpush1.bf16.msra.mxu0 0
      %4821 = vmatprep.subr.bf16.mxu0 0
      %4822 = vmatpush1.bf16.msra.mxu0 0
      %4823 = vmatprep.subr.bf16.mxu0 0
      %4824 = vmatpush1.bf16.msra.mxu0 0
      %4825 = vmatprep.subr.bf16.mxu0 0
      %4826 = vmatpush1.bf16.msra.mxu0 0
      %4827 = vmatprep.subr.bf16.mxu0 0
      %4828 = vmatpush1.bf16.msra.mxu0 0
      %4829 = vmatprep.subr.bf16.mxu0 0
      %4830 = vmatpush1.bf16.msra.mxu0 0
      %4831 = vmatprep.subr.bf16.mxu0 0
      %4832 = vmatpush1.bf16.msra.mxu0 %v4403
      %4833 = vmatprep.subr.bf16.mxu0 0
      %4834 = vmatpush2.bf16.msra.mxu0 0
      %4835 = vmatprep.subr.bf16.mxu0 0
      %4836 = vmatpush2.bf16.msra.mxu0 0
      %4837 = vmatprep.subr.bf16.mxu0 0
      %4838 = vmatpush2.bf16.msra.mxu0 0
      %4839 = vmatprep.subr.bf16.mxu0 0
      %4840 = vmatpush2.bf16.msra.mxu0 0
      %4841 = vmatprep.subr.bf16.mxu0 0
      %4842 = vmatpush2.bf16.msra.mxu0 0
      %4843 = vmatprep.subr.bf16.mxu0 0
      %4844 = vmatpush2.bf16.msra.mxu0 0
      %4845 = vmatprep.subr.bf16.mxu0 0
      %4846 = vmatpush2.bf16.msra.mxu0 0
      %4847 = vmatprep.subr.bf16.mxu0 0
      %4848 = vmatpush2.bf16.msra.mxu0 0
      %4849 = vmatprep.mubr.bf16.mxu0 0
      %4850 = vmatmul.mubr.bf16.gmra.mxu0 %v4709
      %v4851 = vpop.f32.mrf.mxu0
      %v4852 = vadd.f32 %v4764, %v4851
      %v4853 = vpop.f32.mrf.mxu0
      %v4854 = vpop.f32.mrf.mxu0
      %v4855 = vadd.f32 %v4767, %v4854
      %v4856 = vpop.f32.mrf.mxu0
      %4857 = vmatprep.mubr.bf16.mxu0 0
      %4858 = vmatmul.mubr.bf16.gmra.mxu0 %v4712
      %v4859 = vpop.f32.mrf.mxu0
      %v4860 = vadd.f32 %v4772, %v4859
      %v4861 = vpop.f32.mrf.mxu0
      %v4862 = vpop.f32.mrf.mxu0
      %v4863 = vadd.f32 %v4775, %v4862
      %v4864 = vpop.f32.mrf.mxu0
      %4865 = vmatprep.mubr.bf16.mxu0 0
      %4866 = vmatmul.mubr.bf16.gmra.mxu0 %v4715
      %v4867 = vpop.f32.mrf.mxu0
      %v4868 = vadd.f32 %v4780, %v4867
      %v4869 = vpop.f32.mrf.mxu0
      %v4870 = vpop.f32.mrf.mxu0
      %v4871 = vadd.f32 %v4783, %v4870
      %v4872 = vpop.f32.mrf.mxu0
      %4873 = vmatprep.mubr.bf16.mxu0 0
      %4874 = vmatmul.mubr.bf16.gmra.mxu0 %v4718
      %v4875 = vpop.f32.mrf.mxu0
      %v4876 = vadd.f32 %v4788, %v4875
      %v4877 = vpop.f32.mrf.mxu0
      %v4878 = vpop.f32.mrf.mxu0
      %v4879 = vadd.f32 %v4791, %v4878
      %v4880 = vpop.f32.mrf.mxu0
      %4881 = vmatprep.mubr.bf16.mxu0 0
      %4882 = vmatmul.mubr.bf16.gmra.mxu0 %v4721
      %v4883 = vpop.f32.mrf.mxu0
      %v4884 = vadd.f32 %v4796, %v4883
      %v4885 = vpop.f32.mrf.mxu0
      %v4886 = vpop.f32.mrf.mxu0
      %v4887 = vadd.f32 %v4799, %v4886
      %v4888 = vpop.f32.mrf.mxu0
      %4889 = vmatprep.mubr.bf16.mxu0 0
      %4890 = vmatmul.mubr.bf16.gmra.mxu0 %v4724
      %v4891 = vpop.f32.mrf.mxu0
      %v4892 = vadd.f32 %v4804, %v4891
      %v4893 = vpop.f32.mrf.mxu0
      %v4894 = vpop.f32.mrf.mxu0
      %v4895 = vadd.f32 %v4807, %v4894
      %v4896 = vpop.f32.mrf.mxu0
      %4897 = vmatprep.mubr.bf16.mxu0 0
      %4898 = vmatmul.mubr.bf16.gmra.mxu0 %v4727
      %v4899 = vpop.f32.mrf.mxu0
      %v4900 = vadd.f32 %v4812, %v4899
      %v4901 = vpop.f32.mrf.mxu0
      %v4902 = vpop.f32.mrf.mxu0
      %v4903 = vpop.f32.mrf.mxu0
      %4904 = vdwg.mxu0
      %v4905 = vmax.f32 %v4528, %v4852
      %v4906 = vmax.f32 %v4531, %v4855
      %v4907 = vmax.f32 %v4536, %v4860
      %v4908 = vmax.f32 %v4539, %v4863
      %v4909 = vmax.f32 %v4544, %v4868
      %v4910 = vmax.f32 %v4547, %v4871
      %v4911 = vmax.f32 %v4552, %v4876
      %v4912 = vmax.f32 %v4555, %v4879
      %v4913 = vmax.f32 %v4560, %v4884
      %v4914 = vmax.f32 %v4563, %v4887
      %v4915 = vmax.f32 %v4568, %v4892
      %v4916 = vmax.f32 %v4571, %v4895
      %v4917 = vmax.f32 %v4576, %v4900
      %v4918 = vpack.c.bf16 %v4906, %v4905
      %v4919 = vpack.c.bf16 %v4908, %v4907
      %v4920 = vpack.c.bf16 %v4910, %v4909
      %v4921 = vpack.c.bf16 %v4912, %v4911
      %v4922 = vpack.c.bf16 %v4914, %v4913
      %v4923 = vpack.c.bf16 %v4916, %v4915
      %v4924 = vpack.c.bf16 %v4917, %v4917
      %v4932 = vunpack.c.l.b16 %v4918
      %v4933 = vunpack.c.h.b16 %v4918
      %v4934 = vunpack.c.l.b16 %v4919
      %v4935 = vunpack.c.h.b16 %v4919
      %v4936 = vunpack.c.l.b16 %v4920
      %v4937 = vunpack.c.h.b16 %v4920
      %v4938 = vunpack.c.l.b16 %v4921
      %v4939 = vunpack.c.h.b16 %v4921
      %v4940 = vunpack.c.l.b16 %v4922
      %v4941 = vunpack.c.h.b16 %v4922
      %v4942 = vunpack.c.l.b16 %v4923
      %v4943 = vunpack.c.h.b16 %v4923
      %v4944 = vunpack.c.l.b16 %v4924
      %v4945 = vpack.c.b16 %v4932, %v4932
      %v4946 = vpack.c.b16 %v4933, %v4933
      %v4947 = vpack.c.b16 %v4934, %v4934
      %v4948 = vpack.c.b16 %v4935, %v4935
      %v4949 = vpack.c.b16 %v4936, %v4936
      %v4950 = vpack.c.b16 %v4937, %v4937
      %v4951 = vpack.c.b16 %v4938, %v4938
      %v4952 = vpack.c.b16 %v4939, %v4939
      %v4953 = vpack.c.b16 %v4940, %v4940
      %v4954 = vpack.c.b16 %v4941, %v4941
      %v4955 = vpack.c.b16 %v4942, %v4942
      %v4956 = vpack.c.b16 %v4943, %v4943
      %v4957 = vpack.c.b16 %v4944, %v4944
      %4971 = vst [vmem:[%s197] sm:$0xf] %v4945
      %4972 = vst [vmem:[%s197 + $0x4] sm:$0xf] %v4946
      %4973 = vst [vmem:[%s197 + $0x8] sm:$0xf] %v4947
      %4974 = vst [vmem:[%s197 + $0xc] sm:$0xf] %v4948
      %4975 = vst [vmem:[%s197 + $0x10] sm:$0xf] %v4949
      %4976 = vst [vmem:[%s197 + $0x14] sm:$0xf] %v4950
      %4977 = vst [vmem:[%s197 + $0x18] sm:$0xf] %v4951
      %4978 = vst [vmem:[%s197 + $0x1c] sm:$0xf] %v4952
      %4979 = vst [vmem:[%s197 + $0x20] sm:$0xf] %v4953
      %4980 = vst [vmem:[%s197 + $0x24] sm:$0xf] %v4954
      %4981 = vst [vmem:[%s197 + $0x28] sm:$0xf] %v4955
      %4982 = vst [vmem:[%s197 + $0x2c] sm:$0xf] %v4956
      %4983 = vst [vmem:[%s197 + $0x30] sm:$0x3] %v4957
      %p4984 = scmp.lt.s32.totalorder %s15, 7
      %s4985 = scalar_select %p4984, %s15, 7
      %s4986 = smul.addr %s4985, 13
      %s4987 = smul.addr %s4986, 4
      %s4988 = scalar_lea.vmem %s4, %s4987
      // Predicated region
      $region37: #{vgg_forward_pallas.9} parent=35 // pred_check
        %p4989 = pneg %p122
      $region38: #{vgg_forward_pallas.9} parent=35 // pred_check_branch
        %4991 = sbr.rel (%p4989) target = $region40
      $region39: #{vgg_forward_pallas.9} parent=35 // pred_region
        _
      $region40: #{vgg_forward_pallas.9} parent=35 // pred_fallthru
        _
    $region36: #{vgg_forward_pallas.9} parent=5 // pred_fallthru
      _
    %p4992 = scmp.le.s32.totalorder 2, %s10
    // Predicated region
    $region41: #{vgg_forward_pallas.9} parent=5 // pred_check
      %p4993 = pneg %p4992
    $region42: #{vgg_forward_pallas.9} parent=5 // pred_check_branch
      %4995 = sbr.rel (%p4993) target = $region44
    $region43: #{vgg_forward_pallas.9} parent=5 // pred_region
      %s4996 = ssub.s32 %s10, 2
      // Predicated region
      $region45: #{vgg_forward_pallas.9} parent=43 // pred_check
        %p4997 = pneg %p128
      $region46: #{vgg_forward_pallas.9} parent=43 // pred_check_branch
        %4999 = sbr.rel (%p4997) target = $region48
      $region47: #{vgg_forward_pallas.9} parent=43 // pred_region
        %p5000 = scmp.lt.s32.totalorder %s16, 7
        %s5001 = scalar_select %p5000, %s16, 7
        %s5002 = smul.addr %s5001, 13
        %s5003 = smul.addr %s5002, 4
        %s5004 = scalar_lea.vmem %s4, %s5003
      $region48: #{vgg_forward_pallas.9} parent=43 // pred_fallthru
        _
    $region44: #{vgg_forward_pallas.9} parent=5 // pred_fallthru
      _
  $region6: #{vgg_forward_pallas.9} parent=0 // loop_footer
    %s14 = sadd.s32 1, %s10
  $region7: #{vgg_forward_pallas.9} parent=0 // loop_footer_branch
    %9 = sbr.rel target = $region3
  $region8: #{vgg_forward_pallas.9} parent=0 // loop_exit
    _

// kernel: vgg_forward_pallas.17
$region0: #{vgg_forward_pallas.17}
  #allocation0 [shape = 'u32[]', space=smem, size = 0x4, offset = 0x4, fixed_abs, tag = 'smem constant byte address 0x4 - core index']
  #allocation1 [shape = 'u32[144,128]{1,0:T(1,128)}', space=vmem, size = 0x12000, scoped, tag = 'internal scratch']
  #allocation2 [shape = 'f32[8,128]{1,0:T(8,128)}', space=vmem, size = 0x1000, scoped, tag = 'scratch operand']
  %s0 = inlined_call_operand.vmem [shape: bf16[8,128], index: 0, kind: input, shape index: {}]
  %s1 = inlined_call_operand.vmem [shape: bf16[128,128], index: 1, kind: input, shape index: {}]
  %s2 = inlined_call_operand.vmem [shape: f32[1,128], index: 2, kind: input, shape index: {}]
  %s3 = inlined_call_operand.vmem [shape: f32[8,128], index: 3, kind: output, shape index: {}]
  %s4 = sld [smem:[#allocation0]]
  $region30: #{vgg_forward_pallas.17} parent=0
    _
  %s6 = ssub.s32 1, %s4
  %s7 = scalar_select 0, %s6, %s4
  // Predicated region
  $region2: #{vgg_forward_pallas.17} parent=0 // pred_check
    _
  $region3: #{vgg_forward_pallas.17} parent=0 // pred_check_branch
    %9 = sbr.rel (0) target = $region5
  $region4: #{vgg_forward_pallas.17} parent=0 // pred_region
    _
  $region5: #{vgg_forward_pallas.17} parent=0 // pred_fallthru
    _
  // Predicated region
  $region6: #{vgg_forward_pallas.17} parent=0 // pred_check
    _
  $region7: #{vgg_forward_pallas.17} parent=0 // pred_check_branch
    %11 = sbr.rel (0) target = $region9
  $region8: #{vgg_forward_pallas.17} parent=0 // pred_region
    _
  $region9: #{vgg_forward_pallas.17} parent=0 // pred_fallthru
    _
  // Predicated region
  $region10: #{vgg_forward_pallas.17} parent=0 // pred_check
    _
  $region11: #{vgg_forward_pallas.17} parent=0 // pred_check_branch
    %13 = sbr.rel (0) target = $region13
  $region12: #{vgg_forward_pallas.17} parent=0 // pred_region
    _
  $region13: #{vgg_forward_pallas.17} parent=0 // pred_fallthru
    _
  %p15 = scmp.eq.s32.totalorder 0, 0
  // Predicated region
  $region14: #{vgg_forward_pallas.17} parent=0 // pred_check
    %p16 = pneg %p15
  $region15: #{vgg_forward_pallas.17} parent=0 // pred_check_branch
    %18 = sbr.rel (%p16) target = $region17
  $region16: #{vgg_forward_pallas.17} parent=0 // pred_region
    %v19 = vld [vmem:[%s2] sm:$0x1]
    %v21 = vlaneseq
    %v22 = vshrl.u32 %v21, 7
    %v23 = vsub.s32 0, %v22
    %v24 = vrot.slane %v19, %v23
    %v26 = vadd.f32 %v24, 0.0
    %27 = vst [vmem:[#allocation2] sm:$0xff] %v26
  $region17: #{vgg_forward_pallas.17} parent=0 // pred_fallthru
    _
  %v28 = vld [vmem:[#allocation2] sm:$0xff]
  %v29 = vld [vmem:[%s0] sm:$0xf]
  %v30 = vld [vmem:[%s1] sm:$0xf]
  %v31 = vld [vmem:[%s1 + $0x4] sm:$0xf]
  %v32 = vld [vmem:[%s1 + $0x8] sm:$0xf]
  %v33 = vld [vmem:[%s1 + $0xc] sm:$0xf]
  %v34 = vld [vmem:[%s1 + $0x10] sm:$0xf]
  %v35 = vld [vmem:[%s1 + $0x14] sm:$0xf]
  %v36 = vld [vmem:[%s1 + $0x18] sm:$0xf]
  %v37 = vld [vmem:[%s1 + $0x1c] sm:$0xf]
  %v38 = vld [vmem:[%s1 + $0x20] sm:$0xf]
  %v39 = vld [vmem:[%s1 + $0x24] sm:$0xf]
  %v40 = vld [vmem:[%s1 + $0x28] sm:$0xf]
  %v41 = vld [vmem:[%s1 + $0x2c] sm:$0xf]
  %v42 = vld [vmem:[%s1 + $0x30] sm:$0xf]
  %v43 = vld [vmem:[%s1 + $0x34] sm:$0xf]
  %v44 = vld [vmem:[%s1 + $0x38] sm:$0xf]
  %v45 = vld [vmem:[%s1 + $0x3c] sm:$0xf]
  %v62 = vunpack.c.l.b16 %v30
  %v63 = vunpack.c.l.b16 %v31
  %v64 = vunpack.c.l.b16 %v32
  %v65 = vunpack.c.l.b16 %v33
  %v66 = vunpack.c.l.b16 %v34
  %v67 = vunpack.c.l.b16 %v35
  %v68 = vunpack.c.l.b16 %v36
  %v69 = vunpack.c.l.b16 %v37
  %v70 = vunpack.c.l.b16 %v38
  %v71 = vunpack.c.l.b16 %v39
  %v72 = vunpack.c.l.b16 %v40
  %v73 = vunpack.c.l.b16 %v41
  %v74 = vunpack.c.l.b16 %v42
  %v75 = vunpack.c.l.b16 %v43
  %v76 = vunpack.c.l.b16 %v44
  %v77 = vunpack.c.l.b16 %v45
  %v78 = vpack.c.b16 %v63, %v62
  %v79 = vpack.c.b16 %v65, %v64
  %v80 = vpack.c.b16 %v67, %v66
  %v81 = vpack.c.b16 %v69, %v68
  %v82 = vpack.c.b16 %v71, %v70
  %v83 = vpack.c.b16 %v73, %v72
  %v84 = vpack.c.b16 %v75, %v74
  %v85 = vpack.c.b16 %v77, %v76
  %94 = vmatprep.subr.bf16.mxu0 0
  %95 = vmatpush1.bf16.msra.mxu0 %v85
  %96 = vmatprep.subr.bf16.mxu0 0
  %97 = vmatpush1.bf16.msra.mxu0 %v84
  %98 = vmatprep.subr.bf16.mxu0 0
  %99 = vmatpush1.bf16.msra.mxu0 %v83
  %100 = vmatprep.subr.bf16.mxu0 0
  %101 = vmatpush1.bf16.msra.mxu0 %v82
  %102 = vmatprep.subr.bf16.mxu0 0
  %103 = vmatpush1.bf16.msra.mxu0 %v81
  %104 = vmatprep.subr.bf16.mxu0 0
  %105 = vmatpush1.bf16.msra.mxu0 %v80
  %106 = vmatprep.subr.bf16.mxu0 0
  %107 = vmatpush1.bf16.msra.mxu0 %v79
  %108 = vmatprep.subr.bf16.mxu0 0
  %109 = vmatpush1.bf16.msra.mxu0 %v78
  %110 = vmatprep.subr.bf16.mxu0 0
  %111 = vmatpush2.bf16.msra.mxu0 0
  %112 = vmatprep.subr.bf16.mxu0 0
  %113 = vmatpush2.bf16.msra.mxu0 0
  %114 = vmatprep.subr.bf16.mxu0 0
  %115 = vmatpush2.bf16.msra.mxu0 0
  %116 = vmatprep.subr.bf16.mxu0 0
  %117 = vmatpush2.bf16.msra.mxu0 0
  %118 = vmatprep.subr.bf16.mxu0 0
  %119 = vmatpush2.bf16.msra.mxu0 0
  %120 = vmatprep.subr.bf16.mxu0 0
  %121 = vmatpush2.bf16.msra.mxu0 0
  %122 = vmatprep.subr.bf16.mxu0 0
  %123 = vmatpush2.bf16.msra.mxu0 0
  %124 = vmatprep.subr.bf16.mxu0 0
  %125 = vmatpush2.bf16.msra.mxu0 0
  %126 = vmatprep.mubr.bf16.mxu0 0
  %127 = vmatmul.mubr.bf16.gmra.mxu0 %v29
  %v128 = vpop.f32.mrf.mxu0
  %v129 = vadd.f32 0.0, %v128
  %v130 = vpop.f32.mrf.mxu0
  %v131 = vpop.f32.mrf.mxu0
  %v132 = vpop.f32.mrf.mxu0
  %133 = vdwg.mxu0
  %v134 = vadd.f32 %v28, %v129
  %135 = vst [vmem:[#allocation2] sm:$0xff] %v134
  // Predicated region
  $region18: #{vgg_forward_pallas.17} parent=0 // pred_check
    %p136 = pneg %p15
  $region19: #{vgg_forward_pallas.17} parent=0 // pred_check_branch
    %138 = sbr.rel (%p136) target = $region21
  $region20: #{vgg_forward_pallas.17} parent=0 // pred_region
    %v139 = vld [vmem:[#allocation2] sm:$0xff]
    %140 = vst [vmem:[%s3] sm:$0xff] %v139
  $region21: #{vgg_forward_pallas.17} parent=0 // pred_fallthru
    _
  // Predicated region
  $region22: #{vgg_forward_pallas.17} parent=0 // pred_check
    _
  $region23: #{vgg_forward_pallas.17} parent=0 // pred_check_branch
    %142 = sbr.rel (0) target = $region25
  $region24: #{vgg_forward_pallas.17} parent=0 // pred_region
    _
  $region25: #{vgg_forward_pallas.17} parent=0 // pred_fallthru
    _
  // Predicated region
  $region26: #{vgg_forward_pallas.17} parent=0 // pred_check
    _
  $region27: #{vgg_forward_pallas.17} parent=0 // pred_check_branch
    %144 = sbr.rel (0) target = $region29
  $region28: #{vgg_forward_pallas.17} parent=0 // pred_region
    _
  $region29: #{vgg_forward_pallas.17} parent=0 // pred_fallthru
    _

</llo_original>
